<compile_context>
chip_gen: v5e
topology: v5e:2x2
jax: 0.10.0
libtpu: 0.0.40
codegen_flags: <defaults>
</compile_context>

<pallas_src>
import numpy as np
import jax
import jax.numpy as jnp
from jax.experimental import pallas as pl
from jax.experimental.pallas import tpu as pltpu


# Geometry fixed by the torch module (fc1 = Linear(20*10*10, 500) => 28x28 input).
_H = 28
_C1, _K1 = 10, 5            # conv1: 1 -> 10, 5x5   -> 24x24
_C2, _K2 = 20, 3            # conv2: 10 -> 20, 3x3  -> 10x10
_H1 = _H - _K1 + 1          # 24
_HP = _H1 // 2              # 12 (after 2x2 pool)
_H2 = _HP - _K2 + 1         # 10
_POOLW = 128                # padded pooled-row width (12*10 = 120 -> 128)
_C2ROW = 256                # padded conv2-row width  (10*20 = 200 -> 256)
_FLAT_PAD = _H2 * _C2ROW    # 2560 (fc1 K, padded)
_HID = 500
_HID_PAD = 512
_NCLS = 10


def _round_up(a, m):
    return (a + m - 1) // m * m


# ---------------------------------------------------------------------------
# The fused kernel (one batch tile of TQ images per grid step).
# ---------------------------------------------------------------------------
def _convnet_kernel(x_ref, w1_ref, b1_ref, w2_ref, b2_ref,
                    fw1_ref, fb1_ref, fw2_ref, fb2_ref,
                    o_ref, pool_scr, flat_scr):
    f32 = jnp.float32
    bf16 = jnp.bfloat16

    w1 = w1_ref[...]                                   # (168, 512) bf16
    b1 = b1_ref[...]                                   # (1, 512)   f32
    w2 = w2_ref[...]                                   # (384, 256) bf16
    b2 = b2_ref[...]                                   # (1, 256)   f32

    # --- conv1 + ReLU + 2x2 max-pool: ONE matmul per pooled row --------------
    # Window = 6 image rows (168 lanes); output lanes are pre-permuted so the
    # pool is two aligned maxima (256-lane halves, then 128-lane halves).
    for ip in range(_HP):                              # pooled row 0..11
        xin = x_ref[:, ip * 2 * _H:(ip * 2 + _K1 + 1) * _H].astype(bf16)   # (TQ,168)
        y = jnp.dot(xin, w1, preferred_element_type=f32) + b1              # (TQ,512)
        u = jnp.maximum(y[:, :2 * _POOLW], y[:, 2 * _POOLW:])   # pool over 2 conv rows
        p = jnp.maximum(u[:, :_POOLW], u[:, _POOLW:])           # pool over even/odd cols
        pool_scr[:, ip * _POOLW:(ip + 1) * _POOLW] = jnp.maximum(p, 0.0)   # ReLU (monotone)

    # --- conv2 + ReLU ---------------------------------------------------------
    # Window = 3 padded pooled rows = one contiguous aligned 384-lane slice.
    for i2 in range(_H2):                              # conv2 output row 0..9
        win = pool_scr[:, i2 * _POOLW:(i2 + _K2) * _POOLW].astype(bf16)    # (TQ,384)
        z = jnp.dot(win, w2, preferred_element_type=f32) + b2              # (TQ,256)
        flat_scr[:, i2 * _C2ROW:(i2 + 1) * _C2ROW] = jnp.maximum(z, 0.0)   # aligned store

    # --- fc1 (2560x512, padded) + ReLU, fc2 (512x10), log_softmax -------------
    h = jnp.dot(flat_scr[...].astype(bf16), fw1_ref[...],
                preferred_element_type=f32) + fb1_ref[...]                 # (TQ,512)
    h = jnp.maximum(h, 0.0)
    logits = jnp.dot(h.astype(bf16), fw2_ref[...],
                     preferred_element_type=f32) + fb2_ref[...]            # (TQ,10)
    m = jnp.max(logits, axis=-1, keepdims=True)
    zc = logits - m
    lse = jnp.log(jnp.sum(jnp.exp(zc), axis=-1, keepdims=True))
    o_ref[...] = (zc - lse).astype(o_ref.dtype)


# ---------------------------------------------------------------------------
# Wrapper: batch-tiled grid over the single fused kernel.
# ---------------------------------------------------------------------------
@jax.jit
def convnet_forward(x_nchw, prep):
    (w1big, b1big, w2big, b2big, fw1p, fb1p, fw2p, fb2p) = prep
    B = x_nchw.shape[0]
    x2d = x_nchw.reshape(B, _H * _H).astype(jnp.float32)    # C=1, so (h, w) order

    TQ = min(256, _round_up(B, 8))                # cap sized for v7x's 64 MiB VMEM
    # v7x has 2 TensorCores: when possible, size TQ so the grid has >= 2 steps.
    if _round_up(B, TQ) // TQ < 2 and B > 8:
        TQ = min(256, max(8, _round_up((B + 1) // 2, 8)))
    Bp = _round_up(B, TQ)
    if Bp != B:
        x2d = jnp.pad(x2d, ((0, Bp - B), (0, 0)))

    const = lambda i: (0, 0)
    grid_spec = pltpu.PrefetchScalarGridSpec(
        num_scalar_prefetch=0,
        grid=(Bp // TQ,),
        in_specs=[
            pl.BlockSpec((TQ, _H * _H), lambda i: (i, 0)),
            pl.BlockSpec(w1big.shape, const),
            pl.BlockSpec(b1big.shape, const),
            pl.BlockSpec(w2big.shape, const),
            pl.BlockSpec(b2big.shape, const),
            pl.BlockSpec(fw1p.shape, const),
            pl.BlockSpec(fb1p.shape, const),
            pl.BlockSpec(fw2p.shape, const),
            pl.BlockSpec(fb2p.shape, const),
        ],
        out_specs=pl.BlockSpec((TQ, _NCLS), lambda i: (i, 0)),
        scratch_shapes=[
            pltpu.VMEM((TQ, _HP * _POOLW), jnp.float32),   # pooled rows (TQ, 12*128)
            pltpu.VMEM((TQ, _FLAT_PAD), jnp.float32),      # conv2 output (TQ, 2560)
        ],
    )
    out = pl.pallas_call(
        _convnet_kernel,
        out_shape=jax.ShapeDtypeStruct((Bp, _NCLS), jnp.float32),
        grid_spec=grid_spec,
        compiler_params=pltpu.CompilerParams(
            dimension_semantics=("parallel",),
            vmem_limit_bytes=48 * 1024 * 1024),
    )(x2d, w1big, b1big, w2big, b2big, fw1p, fb1p, fw2p, fb2p)
    return out[:B]


# ---------------------------------------------------------------------------
# One-time weight preparation: all permutations / paddings baked in here.
# ---------------------------------------------------------------------------
def prepare_params(raw):
    w1, b1, w2, b2, fw1, fb1, fw2, fb2 = [np.asarray(p, np.float32) for p in raw]

    # conv1: both conv rows of one pooled row in a single (168, 512) matmul.
    #   input lane  = dh*28 + col        (dh in 0..5 window rows, col in 0..27)
    #   output lane = 256*r_off + 128*(ow%2) + 10*(ow//2) + c
    w1big = np.zeros(((_K1 + 1) * _H, 2 * 2 * _POOLW), np.float32)
    b1big = np.zeros((1, 2 * 2 * _POOLW), np.float32)
    for r_off in range(2):
        for ow in range(_H1):
            for c in range(_C1):
                col = 2 * _POOLW * r_off + _POOLW * (ow % 2) + _C1 * (ow // 2) + c
                b1big[0, col] = b1[c]
                for di in range(_K1):
                    for dj in range(_K1):
                        w1big[(r_off + di) * _H + ow + dj, col] = w1[c, 0, di, dj]

    # conv2: K = 3 padded pooled rows (3*128 = 384), N = padded conv2 row (256).
    #   input lane  = 128*di + 10*w' + ci   (pad lanes 120..127 per block are zero)
    #   output lane = 20*j + co             (lanes 200..255 zero-padded)
    w2big = np.zeros((_K2 * _POOLW, _C2ROW), np.float32)
    b2big = np.zeros((1, _C2ROW), np.float32)
    for j in range(_H2):
        for co in range(_C2):
            col = _C2 * j + co
            b2big[0, col] = b2[co]
            for ci in range(_C1):
                for di in range(_K2):
                    for dj in range(_K2):
                        w2big[_POOLW * di + _C1 * (j + dj) + ci, col] = w2[co, ci, di, dj]

    # fc1: input rows follow the flat_scr layout (256*i2 + 20*j + co); columns
    # permuted from torch (c, h, w) flatten order; padded to (2560, 512).
    fw1p = np.zeros((_FLAT_PAD, _HID_PAD), np.float32)
    fb1p = np.zeros((1, _HID_PAD), np.float32)
    fb1p[0, :_HID] = fb1
    for i2 in range(_H2):
        for j in range(_H2):
            for co in range(_C2):
                row = _C2ROW * i2 + _C2 * j + co
                old = co * _H2 * _H2 + i2 * _H2 + j
                fw1p[row, :_HID] = fw1[:, old]

    fw2p = np.zeros((_HID_PAD, _NCLS), np.float32)
    fw2p[:_HID, :] = fw2.T
    fb2p = fb2.reshape(1, _NCLS)

    bf = jnp.bfloat16   # weight matrices in bf16 (MXU), biases stay f32
    return (jnp.asarray(w1big, bf), jnp.asarray(b1big),
            jnp.asarray(w2big, bf), jnp.asarray(b2big),
            jnp.asarray(fw1p, bf), jnp.asarray(fb1p),
            jnp.asarray(fw2p, bf), jnp.asarray(fb2p))


def init_raw_params(key):
    ks = jax.random.split(key, 8)
    f32 = jnp.float32
    w1 = 0.1 * jax.random.normal(ks[0], (10, 1, 5, 5), f32)      # conv1 (torch layout)
    b1 = 0.1 * jax.random.normal(ks[1], (10,), f32)
    w2 = 0.1 * jax.random.normal(ks[2], (20, 10, 3, 3), f32)     # conv2
    b2 = 0.1 * jax.random.normal(ks[3], (20,), f32)
    fw1 = 0.02 * jax.random.normal(ks[4], (500, 2000), f32)      # fc1 (out, in)
    fb1 = 0.02 * jax.random.normal(ks[5], (500,), f32)
    fw2 = 0.02 * jax.random.normal(ks[6], (10, 500), f32)        # fc2 (out, in)
    fb2 = 0.02 * jax.random.normal(ks[7], (10,), f32)
    return (w1, b1, w2, b2, fw1, fb1, fw2, fb2)


# Pure-JAX reference (mirrors the torch forward) for a correctness check.
def _ref_forward(x_nchw, raw):
    w1, b1, w2, b2, fw1, fb1, fw2, fb2 = raw
    dn = ("NCHW", "OIHW", "NCHW")
    hi = jax.lax.Precision.HIGHEST
    y = jax.lax.conv_general_dilated(x_nchw, w1, (1, 1), "VALID",
                                     dimension_numbers=dn, precision=hi)
    y = jax.nn.relu(y + b1[None, :, None, None])
    y = jax.lax.reduce_window(y, -jnp.inf, jax.lax.max,
                              (1, 1, 2, 2), (1, 1, 2, 2), "VALID")
    y = jax.lax.conv_general_dilated(y, w2, (1, 1), "VALID",
                                     dimension_numbers=dn, precision=hi)
    y = jax.nn.relu(y + b2[None, :, None, None])
    y = y.reshape(x_nchw.shape[0], -1)
    y = jax.nn.relu(jnp.dot(y, fw1.T, precision=hi) + fb1)
    y = jnp.dot(y, fw2.T, precision=hi) + fb2
    return jax.nn.log_softmax(y, axis=-1)


if __name__ == "__main__":
    key = jax.random.PRNGKey(0)
    k_x, k_p = jax.random.split(key)
    # Spatial size is fixed at 28x28 by fc1's 20*10*10 input dimension.
    x = jax.random.normal(k_x, (2, 1, 28, 28), jnp.float32)
    raw = init_raw_params(k_p)
    prep = prepare_params(raw)

    out = jax.block_until_ready(convnet_forward(x, prep))
    assert out.shape == (2, 10)

    ref = jax.block_until_ready(_ref_forward(x, raw))
    # bf16 weights/activation casts -> slightly looser tolerance than the f32 ref.
    np.testing.assert_allclose(np.asarray(out), np.asarray(ref),
                               rtol=5e-2, atol=5e-2)
    assert np.allclose(np.exp(np.asarray(out)).sum(axis=1), 1.0, atol=1e-4)
    print("KERNEL_OK")
</pallas_src>

<mosaic_0001>
module attributes {stable_mosaic.version = 11 : i64} {
  func.func @_convnet_kernel(%arg0: i32, %arg1: memref<8x784xf32, #tpu.memory_space<vmem>>, %arg2: memref<168x512xbf16, #tpu.memory_space<vmem>>, %arg3: memref<1x512xf32, #tpu.memory_space<vmem>>, %arg4: memref<384x256xbf16, #tpu.memory_space<vmem>>, %arg5: memref<1x256xf32, #tpu.memory_space<vmem>>, %arg6: memref<2560x512xbf16, #tpu.memory_space<vmem>>, %arg7: memref<1x512xf32, #tpu.memory_space<vmem>>, %arg8: memref<512x10xbf16, #tpu.memory_space<vmem>>, %arg9: memref<1x10xf32, #tpu.memory_space<vmem>>, %arg10: memref<8x10xf32, #tpu.memory_space<vmem>>, %arg11: memref<8x1536xf32, #tpu.memory_space<vmem>>, %arg12: memref<8x2560xf32, #tpu.memory_space<vmem>>) attributes {dimension_semantics = [#tpu.dimension_semantics<parallel>], iteration_bounds = array<i64: 1>, scalar_prefetch = 0 : i64, scratch_operands = 2 : i64, tpu.core_type = #tpu.core_type<tc>, window_params = [{transform_indices = @transform_0, window_bounds = array<i64: 8, 784>}, {pipeline_mode = #tpu.pipeline_mode<synchronous>, transform_indices = @transform_1, window_bounds = array<i64: 168, 512>}, {pipeline_mode = #tpu.pipeline_mode<synchronous>, transform_indices = @transform_2, window_bounds = array<i64: 1, 512>}, {pipeline_mode = #tpu.pipeline_mode<synchronous>, transform_indices = @transform_3, window_bounds = array<i64: 384, 256>}, {pipeline_mode = #tpu.pipeline_mode<synchronous>, transform_indices = @transform_4, window_bounds = array<i64: 1, 256>}, {pipeline_mode = #tpu.pipeline_mode<synchronous>, transform_indices = @transform_5, window_bounds = array<i64: 2560, 512>}, {pipeline_mode = #tpu.pipeline_mode<synchronous>, transform_indices = @transform_6, window_bounds = array<i64: 1, 512>}, {pipeline_mode = #tpu.pipeline_mode<synchronous>, transform_indices = @transform_7, window_bounds = array<i64: 512, 10>}, {pipeline_mode = #tpu.pipeline_mode<synchronous>, transform_indices = @transform_8, window_bounds = array<i64: 1, 10>}, {transform_indices = @transform_9, window_bounds = array<i64: 8, 10>}]} {
    %c0 = arith.constant 0 : index
    %c0_0 = arith.constant 0 : index
    %0 = vector.load %arg2[%c0, %c0_0] : memref<168x512xbf16, #tpu.memory_space<vmem>>, vector<168x512xbf16>
    %c0_1 = arith.constant 0 : index
    %c0_2 = arith.constant 0 : index
    %1 = vector.load %arg3[%c0_1, %c0_2] : memref<1x512xf32, #tpu.memory_space<vmem>>, vector<1x512xf32>
    %c0_3 = arith.constant 0 : index
    %c0_4 = arith.constant 0 : index
    %2 = vector.load %arg4[%c0_3, %c0_4] : memref<384x256xbf16, #tpu.memory_space<vmem>>, vector<384x256xbf16>
    %c0_5 = arith.constant 0 : index
    %c0_6 = arith.constant 0 : index
    %3 = vector.load %arg5[%c0_5, %c0_6] : memref<1x256xf32, #tpu.memory_space<vmem>>, vector<1x256xf32>
    %c0_7 = arith.constant 0 : index
    %c0_8 = arith.constant 0 : index
    %4 = vector.load %arg1[%c0_7, %c0_8] : memref<8x784xf32, #tpu.memory_space<vmem>>, vector<8x168xf32>
    %5 = arith.truncf %4 : vector<8x168xf32> to vector<8x168xbf16>
    %cst = arith.constant dense<0.000000e+00> : vector<8x512xf32>
    %6 = tpu.matmul %5, %0, %cst {dimension_numbers = #tpu.dot_dimension_numbers<[1], [0], [0], [1], [0, 0, 1, 1], [], []>} : vector<8x168xbf16>, vector<168x512xbf16>, vector<8x512xf32> -> vector<8x512xf32>
    %7 = vector.broadcast %1 : vector<1x512xf32> to vector<8x512xf32>
    %8 = arith.addf %6, %7 : vector<8x512xf32>
    %9 = vector.extract_strided_slice %8 {offsets = [0, 0], sizes = [8, 256], strides = [1, 1]} : vector<8x512xf32> to vector<8x256xf32>
    %10 = vector.extract_strided_slice %8 {offsets = [0, 256], sizes = [8, 256], strides = [1, 1]} : vector<8x512xf32> to vector<8x256xf32>
    %11 = arith.maximumf %9, %10 : vector<8x256xf32>
    %12 = vector.extract_strided_slice %11 {offsets = [0, 0], sizes = [8, 128], strides = [1, 1]} : vector<8x256xf32> to vector<8x128xf32>
    %13 = vector.extract_strided_slice %11 {offsets = [0, 128], sizes = [8, 128], strides = [1, 1]} : vector<8x256xf32> to vector<8x128xf32>
    %14 = arith.maximumf %12, %13 : vector<8x128xf32>
    %cst_9 = arith.constant 0.000000e+00 : f32
    %15 = vector.broadcast %cst_9 : f32 to vector<8x128xf32>
    %16 = arith.maximumf %14, %15 : vector<8x128xf32>
    %c0_10 = arith.constant 0 : index
    %c0_11 = arith.constant 0 : index
    %17 = vector.load %arg11[%c0_10, %c0_11] : memref<8x1536xf32, #tpu.memory_space<vmem>>, vector<8x128xf32>
    tpu.vector_store %arg11[%c0_10, %c0_11], %16 {strides = array<i32>} : memref<8x1536xf32, #tpu.memory_space<vmem>>, vector<8x128xf32>,
    %c0_12 = arith.constant 0 : index
    %c56 = arith.constant 56 : index
    %18 = vector.load %arg1[%c0_12, %c56] : memref<8x784xf32, #tpu.memory_space<vmem>>, vector<8x168xf32>
    %19 = arith.truncf %18 : vector<8x168xf32> to vector<8x168xbf16>
    %cst_13 = arith.constant dense<0.000000e+00> : vector<8x512xf32>
    %20 = tpu.matmul %19, %0, %cst_13 {dimension_numbers = #tpu.dot_dimension_numbers<[1], [0], [0], [1], [0, 0, 1, 1], [], []>} : vector<8x168xbf16>, vector<168x512xbf16>, vector<8x512xf32> -> vector<8x512xf32>
    %21 = vector.broadcast %1 : vector<1x512xf32> to vector<8x512xf32>
    %22 = arith.addf %20, %21 : vector<8x512xf32>
    %23 = vector.extract_strided_slice %22 {offsets = [0, 0], sizes = [8, 256], strides = [1, 1]} : vector<8x512xf32> to vector<8x256xf32>
    %24 = vector.extract_strided_slice %22 {offsets = [0, 256], sizes = [8, 256], strides = [1, 1]} : vector<8x512xf32> to vector<8x256xf32>
    %25 = arith.maximumf %23, %24 : vector<8x256xf32>
    %26 = vector.extract_strided_slice %25 {offsets = [0, 0], sizes = [8, 128], strides = [1, 1]} : vector<8x256xf32> to vector<8x128xf32>
    %27 = vector.extract_strided_slice %25 {offsets = [0, 128], sizes = [8, 128], strides = [1, 1]} : vector<8x256xf32> to vector<8x128xf32>
    %28 = arith.maximumf %26, %27 : vector<8x128xf32>
    %cst_14 = arith.constant 0.000000e+00 : f32
    %29 = vector.broadcast %cst_14 : f32 to vector<8x128xf32>
    %30 = arith.maximumf %28, %29 : vector<8x128xf32>
    %c0_15 = arith.constant 0 : index
    %c128 = arith.constant 128 : index
    %31 = vector.load %arg11[%c0_15, %c128] : memref<8x1536xf32, #tpu.memory_space<vmem>>, vector<8x128xf32>
    tpu.vector_store %arg11[%c0_15, %c128], %30 {strides = array<i32>} : memref<8x1536xf32, #tpu.memory_space<vmem>>, vector<8x128xf32>,
    %c0_16 = arith.constant 0 : index
    %c112 = arith.constant 112 : index
    %32 = vector.load %arg1[%c0_16, %c112] : memref<8x784xf32, #tpu.memory_space<vmem>>, vector<8x168xf32>
    %33 = arith.truncf %32 : vector<8x168xf32> to vector<8x168xbf16>
    %cst_17 = arith.constant dense<0.000000e+00> : vector<8x512xf32>
    %34 = tpu.matmul %33, %0, %cst_17 {dimension_numbers = #tpu.dot_dimension_numbers<[1], [0], [0], [1], [0, 0, 1, 1], [], []>} : vector<8x168xbf16>, vector<168x512xbf16>, vector<8x512xf32> -> vector<8x512xf32>
    %35 = vector.broadcast %1 : vector<1x512xf32> to vector<8x512xf32>
    %36 = arith.addf %34, %35 : vector<8x512xf32>
    %37 = vector.extract_strided_slice %36 {offsets = [0, 0], sizes = [8, 256], strides = [1, 1]} : vector<8x512xf32> to vector<8x256xf32>
    %38 = vector.extract_strided_slice %36 {offsets = [0, 256], sizes = [8, 256], strides = [1, 1]} : vector<8x512xf32> to vector<8x256xf32>
    %39 = arith.maximumf %37, %38 : vector<8x256xf32>
    %40 = vector.extract_strided_slice %39 {offsets = [0, 0], sizes = [8, 128], strides = [1, 1]} : vector<8x256xf32> to vector<8x128xf32>
    %41 = vector.extract_strided_slice %39 {offsets = [0, 128], sizes = [8, 128], strides = [1, 1]} : vector<8x256xf32> to vector<8x128xf32>
    %42 = arith.maximumf %40, %41 : vector<8x128xf32>
    %cst_18 = arith.constant 0.000000e+00 : f32
    %43 = vector.broadcast %cst_18 : f32 to vector<8x128xf32>
    %44 = arith.maximumf %42, %43 : vector<8x128xf32>
    %c0_19 = arith.constant 0 : index
    %c256 = arith.constant 256 : index
    %45 = vector.load %arg11[%c0_19, %c256] : memref<8x1536xf32, #tpu.memory_space<vmem>>, vector<8x128xf32>
    tpu.vector_store %arg11[%c0_19, %c256], %44 {strides = array<i32>} : memref<8x1536xf32, #tpu.memory_space<vmem>>, vector<8x128xf32>,
    %c0_20 = arith.constant 0 : index
    %c168 = arith.constant 168 : index
    %46 = vector.load %arg1[%c0_20, %c168] : memref<8x784xf32, #tpu.memory_space<vmem>>, vector<8x168xf32>
    %47 = arith.truncf %46 : vector<8x168xf32> to vector<8x168xbf16>
    %cst_21 = arith.constant dense<0.000000e+00> : vector<8x512xf32>
    %48 = tpu.matmul %47, %0, %cst_21 {dimension_numbers = #tpu.dot_dimension_numbers<[1], [0], [0], [1], [0, 0, 1, 1], [], []>} : vector<8x168xbf16>, vector<168x512xbf16>, vector<8x512xf32> -> vector<8x512xf32>
    %49 = vector.broadcast %1 : vector<1x512xf32> to vector<8x512xf32>
    %50 = arith.addf %48, %49 : vector<8x512xf32>
    %51 = vector.extract_strided_slice %50 {offsets = [0, 0], sizes = [8, 256], strides = [1, 1]} : vector<8x512xf32> to vector<8x256xf32>
    %52 = vector.extract_strided_slice %50 {offsets = [0, 256], sizes = [8, 256], strides = [1, 1]} : vector<8x512xf32> to vector<8x256xf32>
    %53 = arith.maximumf %51, %52 : vector<8x256xf32>
    %54 = vector.extract_strided_slice %53 {offsets = [0, 0], sizes = [8, 128], strides = [1, 1]} : vector<8x256xf32> to vector<8x128xf32>
    %55 = vector.extract_strided_slice %53 {offsets = [0, 128], sizes = [8, 128], strides = [1, 1]} : vector<8x256xf32> to vector<8x128xf32>
    %56 = arith.maximumf %54, %55 : vector<8x128xf32>
    %cst_22 = arith.constant 0.000000e+00 : f32
    %57 = vector.broadcast %cst_22 : f32 to vector<8x128xf32>
    %58 = arith.maximumf %56, %57 : vector<8x128xf32>
    %c0_23 = arith.constant 0 : index
    %c384 = arith.constant 384 : index
    %59 = vector.load %arg11[%c0_23, %c384] : memref<8x1536xf32, #tpu.memory_space<vmem>>, vector<8x128xf32>
    tpu.vector_store %arg11[%c0_23, %c384], %58 {strides = array<i32>} : memref<8x1536xf32, #tpu.memory_space<vmem>>, vector<8x128xf32>,
    %c0_24 = arith.constant 0 : index
    %c224 = arith.constant 224 : index
    %60 = vector.load %arg1[%c0_24, %c224] : memref<8x784xf32, #tpu.memory_space<vmem>>, vector<8x168xf32>
    %61 = arith.truncf %60 : vector<8x168xf32> to vector<8x168xbf16>
    %cst_25 = arith.constant dense<0.000000e+00> : vector<8x512xf32>
    %62 = tpu.matmul %61, %0, %cst_25 {dimension_numbers = #tpu.dot_dimension_numbers<[1], [0], [0], [1], [0, 0, 1, 1], [], []>} : vector<8x168xbf16>, vector<168x512xbf16>, vector<8x512xf32> -> vector<8x512xf32>
    %63 = vector.broadcast %1 : vector<1x512xf32> to vector<8x512xf32>
    %64 = arith.addf %62, %63 : vector<8x512xf32>
    %65 = vector.extract_strided_slice %64 {offsets = [0, 0], sizes = [8, 256], strides = [1, 1]} : vector<8x512xf32> to vector<8x256xf32>
    %66 = vector.extract_strided_slice %64 {offsets = [0, 256], sizes = [8, 256], strides = [1, 1]} : vector<8x512xf32> to vector<8x256xf32>
    %67 = arith.maximumf %65, %66 : vector<8x256xf32>
    %68 = vector.extract_strided_slice %67 {offsets = [0, 0], sizes = [8, 128], strides = [1, 1]} : vector<8x256xf32> to vector<8x128xf32>
    %69 = vector.extract_strided_slice %67 {offsets = [0, 128], sizes = [8, 128], strides = [1, 1]} : vector<8x256xf32> to vector<8x128xf32>
    %70 = arith.maximumf %68, %69 : vector<8x128xf32>
    %cst_26 = arith.constant 0.000000e+00 : f32
    %71 = vector.broadcast %cst_26 : f32 to vector<8x128xf32>
    %72 = arith.maximumf %70, %71 : vector<8x128xf32>
    %c0_27 = arith.constant 0 : index
    %c512 = arith.constant 512 : index
    %73 = vector.load %arg11[%c0_27, %c512] : memref<8x1536xf32, #tpu.memory_space<vmem>>, vector<8x128xf32>
    tpu.vector_store %arg11[%c0_27, %c512], %72 {strides = array<i32>} : memref<8x1536xf32, #tpu.memory_space<vmem>>, vector<8x128xf32>,
    %c0_28 = arith.constant 0 : index
    %c280 = arith.constant 280 : index
    %74 = vector.load %arg1[%c0_28, %c280] : memref<8x784xf32, #tpu.memory_space<vmem>>, vector<8x168xf32>
    %75 = arith.truncf %74 : vector<8x168xf32> to vector<8x168xbf16>
    %cst_29 = arith.constant dense<0.000000e+00> : vector<8x512xf32>
    %76 = tpu.matmul %75, %0, %cst_29 {dimension_numbers = #tpu.dot_dimension_numbers<[1], [0], [0], [1], [0, 0, 1, 1], [], []>} : vector<8x168xbf16>, vector<168x512xbf16>, vector<8x512xf32> -> vector<8x512xf32>
    %77 = vector.broadcast %1 : vector<1x512xf32> to vector<8x512xf32>
    %78 = arith.addf %76, %77 : vector<8x512xf32>
    %79 = vector.extract_strided_slice %78 {offsets = [0, 0], sizes = [8, 256], strides = [1, 1]} : vector<8x512xf32> to vector<8x256xf32>
    %80 = vector.extract_strided_slice %78 {offsets = [0, 256], sizes = [8, 256], strides = [1, 1]} : vector<8x512xf32> to vector<8x256xf32>
    %81 = arith.maximumf %79, %80 : vector<8x256xf32>
    %82 = vector.extract_strided_slice %81 {offsets = [0, 0], sizes = [8, 128], strides = [1, 1]} : vector<8x256xf32> to vector<8x128xf32>
    %83 = vector.extract_strided_slice %81 {offsets = [0, 128], sizes = [8, 128], strides = [1, 1]} : vector<8x256xf32> to vector<8x128xf32>
    %84 = arith.maximumf %82, %83 : vector<8x128xf32>
    %cst_30 = arith.constant 0.000000e+00 : f32
    %85 = vector.broadcast %cst_30 : f32 to vector<8x128xf32>
    %86 = arith.maximumf %84, %85 : vector<8x128xf32>
    %c0_31 = arith.constant 0 : index
    %c640 = arith.constant 640 : index
    %87 = vector.load %arg11[%c0_31, %c640] : memref<8x1536xf32, #tpu.memory_space<vmem>>, vector<8x128xf32>
    tpu.vector_store %arg11[%c0_31, %c640], %86 {strides = array<i32>} : memref<8x1536xf32, #tpu.memory_space<vmem>>, vector<8x128xf32>,
    %c0_32 = arith.constant 0 : index
    %c336 = arith.constant 336 : index
    %88 = vector.load %arg1[%c0_32, %c336] : memref<8x784xf32, #tpu.memory_space<vmem>>, vector<8x168xf32>
    %89 = arith.truncf %88 : vector<8x168xf32> to vector<8x168xbf16>
    %cst_33 = arith.constant dense<0.000000e+00> : vector<8x512xf32>
    %90 = tpu.matmul %89, %0, %cst_33 {dimension_numbers = #tpu.dot_dimension_numbers<[1], [0], [0], [1], [0, 0, 1, 1], [], []>} : vector<8x168xbf16>, vector<168x512xbf16>, vector<8x512xf32> -> vector<8x512xf32>
    %91 = vector.broadcast %1 : vector<1x512xf32> to vector<8x512xf32>
    %92 = arith.addf %90, %91 : vector<8x512xf32>
    %93 = vector.extract_strided_slice %92 {offsets = [0, 0], sizes = [8, 256], strides = [1, 1]} : vector<8x512xf32> to vector<8x256xf32>
    %94 = vector.extract_strided_slice %92 {offsets = [0, 256], sizes = [8, 256], strides = [1, 1]} : vector<8x512xf32> to vector<8x256xf32>
    %95 = arith.maximumf %93, %94 : vector<8x256xf32>
    %96 = vector.extract_strided_slice %95 {offsets = [0, 0], sizes = [8, 128], strides = [1, 1]} : vector<8x256xf32> to vector<8x128xf32>
    %97 = vector.extract_strided_slice %95 {offsets = [0, 128], sizes = [8, 128], strides = [1, 1]} : vector<8x256xf32> to vector<8x128xf32>
    %98 = arith.maximumf %96, %97 : vector<8x128xf32>
    %cst_34 = arith.constant 0.000000e+00 : f32
    %99 = vector.broadcast %cst_34 : f32 to vector<8x128xf32>
    %100 = arith.maximumf %98, %99 : vector<8x128xf32>
    %c0_35 = arith.constant 0 : index
    %c768 = arith.constant 768 : index
    %101 = vector.load %arg11[%c0_35, %c768] : memref<8x1536xf32, #tpu.memory_space<vmem>>, vector<8x128xf32>
    tpu.vector_store %arg11[%c0_35, %c768], %100 {strides = array<i32>} : memref<8x1536xf32, #tpu.memory_space<vmem>>, vector<8x128xf32>,
    %c0_36 = arith.constant 0 : index
    %c392 = arith.constant 392 : index
    %102 = vector.load %arg1[%c0_36, %c392] : memref<8x784xf32, #tpu.memory_space<vmem>>, vector<8x168xf32>
    %103 = arith.truncf %102 : vector<8x168xf32> to vector<8x168xbf16>
    %cst_37 = arith.constant dense<0.000000e+00> : vector<8x512xf32>
    %104 = tpu.matmul %103, %0, %cst_37 {dimension_numbers = #tpu.dot_dimension_numbers<[1], [0], [0], [1], [0, 0, 1, 1], [], []>} : vector<8x168xbf16>, vector<168x512xbf16>, vector<8x512xf32> -> vector<8x512xf32>
    %105 = vector.broadcast %1 : vector<1x512xf32> to vector<8x512xf32>
    %106 = arith.addf %104, %105 : vector<8x512xf32>
    %107 = vector.extract_strided_slice %106 {offsets = [0, 0], sizes = [8, 256], strides = [1, 1]} : vector<8x512xf32> to vector<8x256xf32>
    %108 = vector.extract_strided_slice %106 {offsets = [0, 256], sizes = [8, 256], strides = [1, 1]} : vector<8x512xf32> to vector<8x256xf32>
    %109 = arith.maximumf %107, %108 : vector<8x256xf32>
    %110 = vector.extract_strided_slice %109 {offsets = [0, 0], sizes = [8, 128], strides = [1, 1]} : vector<8x256xf32> to vector<8x128xf32>
    %111 = vector.extract_strided_slice %109 {offsets = [0, 128], sizes = [8, 128], strides = [1, 1]} : vector<8x256xf32> to vector<8x128xf32>
    %112 = arith.maximumf %110, %111 : vector<8x128xf32>
    %cst_38 = arith.constant 0.000000e+00 : f32
    %113 = vector.broadcast %cst_38 : f32 to vector<8x128xf32>
    %114 = arith.maximumf %112, %113 : vector<8x128xf32>
    %c0_39 = arith.constant 0 : index
    %c896 = arith.constant 896 : index
    %115 = vector.load %arg11[%c0_39, %c896] : memref<8x1536xf32, #tpu.memory_space<vmem>>, vector<8x128xf32>
    tpu.vector_store %arg11[%c0_39, %c896], %114 {strides = array<i32>} : memref<8x1536xf32, #tpu.memory_space<vmem>>, vector<8x128xf32>,
    %c0_40 = arith.constant 0 : index
    %c448 = arith.constant 448 : index
    %116 = vector.load %arg1[%c0_40, %c448] : memref<8x784xf32, #tpu.memory_space<vmem>>, vector<8x168xf32>
    %117 = arith.truncf %116 : vector<8x168xf32> to vector<8x168xbf16>
    %cst_41 = arith.constant dense<0.000000e+00> : vector<8x512xf32>
    %118 = tpu.matmul %117, %0, %cst_41 {dimension_numbers = #tpu.dot_dimension_numbers<[1], [0], [0], [1], [0, 0, 1, 1], [], []>} : vector<8x168xbf16>, vector<168x512xbf16>, vector<8x512xf32> -> vector<8x512xf32>
    %119 = vector.broadcast %1 : vector<1x512xf32> to vector<8x512xf32>
    %120 = arith.addf %118, %119 : vector<8x512xf32>
    %121 = vector.extract_strided_slice %120 {offsets = [0, 0], sizes = [8, 256], strides = [1, 1]} : vector<8x512xf32> to vector<8x256xf32>
    %122 = vector.extract_strided_slice %120 {offsets = [0, 256], sizes = [8, 256], strides = [1, 1]} : vector<8x512xf32> to vector<8x256xf32>
    %123 = arith.maximumf %121, %122 : vector<8x256xf32>
    %124 = vector.extract_strided_slice %123 {offsets = [0, 0], sizes = [8, 128], strides = [1, 1]} : vector<8x256xf32> to vector<8x128xf32>
    %125 = vector.extract_strided_slice %123 {offsets = [0, 128], sizes = [8, 128], strides = [1, 1]} : vector<8x256xf32> to vector<8x128xf32>
    %126 = arith.maximumf %124, %125 : vector<8x128xf32>
    %cst_42 = arith.constant 0.000000e+00 : f32
    %127 = vector.broadcast %cst_42 : f32 to vector<8x128xf32>
    %128 = arith.maximumf %126, %127 : vector<8x128xf32>
    %c0_43 = arith.constant 0 : index
    %c1024 = arith.constant 1024 : index
    %129 = vector.load %arg11[%c0_43, %c1024] : memref<8x1536xf32, #tpu.memory_space<vmem>>, vector<8x128xf32>
    tpu.vector_store %arg11[%c0_43, %c1024], %128 {strides = array<i32>} : memref<8x1536xf32, #tpu.memory_space<vmem>>, vector<8x128xf32>,
    %c0_44 = arith.constant 0 : index
    %c504 = arith.constant 504 : index
    %130 = vector.load %arg1[%c0_44, %c504] : memref<8x784xf32, #tpu.memory_space<vmem>>, vector<8x168xf32>
    %131 = arith.truncf %130 : vector<8x168xf32> to vector<8x168xbf16>
    %cst_45 = arith.constant dense<0.000000e+00> : vector<8x512xf32>
    %132 = tpu.matmul %131, %0, %cst_45 {dimension_numbers = #tpu.dot_dimension_numbers<[1], [0], [0], [1], [0, 0, 1, 1], [], []>} : vector<8x168xbf16>, vector<168x512xbf16>, vector<8x512xf32> -> vector<8x512xf32>
    %133 = vector.broadcast %1 : vector<1x512xf32> to vector<8x512xf32>
    %134 = arith.addf %132, %133 : vector<8x512xf32>
    %135 = vector.extract_strided_slice %134 {offsets = [0, 0], sizes = [8, 256], strides = [1, 1]} : vector<8x512xf32> to vector<8x256xf32>
    %136 = vector.extract_strided_slice %134 {offsets = [0, 256], sizes = [8, 256], strides = [1, 1]} : vector<8x512xf32> to vector<8x256xf32>
    %137 = arith.maximumf %135, %136 : vector<8x256xf32>
    %138 = vector.extract_strided_slice %137 {offsets = [0, 0], sizes = [8, 128], strides = [1, 1]} : vector<8x256xf32> to vector<8x128xf32>
    %139 = vector.extract_strided_slice %137 {offsets = [0, 128], sizes = [8, 128], strides = [1, 1]} : vector<8x256xf32> to vector<8x128xf32>
    %140 = arith.maximumf %138, %139 : vector<8x128xf32>
    %cst_46 = arith.constant 0.000000e+00 : f32
    %141 = vector.broadcast %cst_46 : f32 to vector<8x128xf32>
    %142 = arith.maximumf %140, %141 : vector<8x128xf32>
    %c0_47 = arith.constant 0 : index
    %c1152 = arith.constant 1152 : index
    %143 = vector.load %arg11[%c0_47, %c1152] : memref<8x1536xf32, #tpu.memory_space<vmem>>, vector<8x128xf32>
    tpu.vector_store %arg11[%c0_47, %c1152], %142 {strides = array<i32>} : memref<8x1536xf32, #tpu.memory_space<vmem>>, vector<8x128xf32>,
    %c0_48 = arith.constant 0 : index
    %c560 = arith.constant 560 : index
    %144 = vector.load %arg1[%c0_48, %c560] : memref<8x784xf32, #tpu.memory_space<vmem>>, vector<8x168xf32>
    %145 = arith.truncf %144 : vector<8x168xf32> to vector<8x168xbf16>
    %cst_49 = arith.constant dense<0.000000e+00> : vector<8x512xf32>
    %146 = tpu.matmul %145, %0, %cst_49 {dimension_numbers = #tpu.dot_dimension_numbers<[1], [0], [0], [1], [0, 0, 1, 1], [], []>} : vector<8x168xbf16>, vector<168x512xbf16>, vector<8x512xf32> -> vector<8x512xf32>
    %147 = vector.broadcast %1 : vector<1x512xf32> to vector<8x512xf32>
    %148 = arith.addf %146, %147 : vector<8x512xf32>
    %149 = vector.extract_strided_slice %148 {offsets = [0, 0], sizes = [8, 256], strides = [1, 1]} : vector<8x512xf32> to vector<8x256xf32>
    %150 = vector.extract_strided_slice %148 {offsets = [0, 256], sizes = [8, 256], strides = [1, 1]} : vector<8x512xf32> to vector<8x256xf32>
    %151 = arith.maximumf %149, %150 : vector<8x256xf32>
    %152 = vector.extract_strided_slice %151 {offsets = [0, 0], sizes = [8, 128], strides = [1, 1]} : vector<8x256xf32> to vector<8x128xf32>
    %153 = vector.extract_strided_slice %151 {offsets = [0, 128], sizes = [8, 128], strides = [1, 1]} : vector<8x256xf32> to vector<8x128xf32>
    %154 = arith.maximumf %152, %153 : vector<8x128xf32>
    %cst_50 = arith.constant 0.000000e+00 : f32
    %155 = vector.broadcast %cst_50 : f32 to vector<8x128xf32>
    %156 = arith.maximumf %154, %155 : vector<8x128xf32>
    %c0_51 = arith.constant 0 : index
    %c1280 = arith.constant 1280 : index
    %157 = vector.load %arg11[%c0_51, %c1280] : memref<8x1536xf32, #tpu.memory_space<vmem>>, vector<8x128xf32>
    tpu.vector_store %arg11[%c0_51, %c1280], %156 {strides = array<i32>} : memref<8x1536xf32, #tpu.memory_space<vmem>>, vector<8x128xf32>,
    %c0_52 = arith.constant 0 : index
    %c616 = arith.constant 616 : index
    %158 = vector.load %arg1[%c0_52, %c616] : memref<8x784xf32, #tpu.memory_space<vmem>>, vector<8x168xf32>
    %159 = arith.truncf %158 : vector<8x168xf32> to vector<8x168xbf16>
    %cst_53 = arith.constant dense<0.000000e+00> : vector<8x512xf32>
    %160 = tpu.matmul %159, %0, %cst_53 {dimension_numbers = #tpu.dot_dimension_numbers<[1], [0], [0], [1], [0, 0, 1, 1], [], []>} : vector<8x168xbf16>, vector<168x512xbf16>, vector<8x512xf32> -> vector<8x512xf32>
    %161 = vector.broadcast %1 : vector<1x512xf32> to vector<8x512xf32>
    %162 = arith.addf %160, %161 : vector<8x512xf32>
    %163 = vector.extract_strided_slice %162 {offsets = [0, 0], sizes = [8, 256], strides = [1, 1]} : vector<8x512xf32> to vector<8x256xf32>
    %164 = vector.extract_strided_slice %162 {offsets = [0, 256], sizes = [8, 256], strides = [1, 1]} : vector<8x512xf32> to vector<8x256xf32>
    %165 = arith.maximumf %163, %164 : vector<8x256xf32>
    %166 = vector.extract_strided_slice %165 {offsets = [0, 0], sizes = [8, 128], strides = [1, 1]} : vector<8x256xf32> to vector<8x128xf32>
    %167 = vector.extract_strided_slice %165 {offsets = [0, 128], sizes = [8, 128], strides = [1, 1]} : vector<8x256xf32> to vector<8x128xf32>
    %168 = arith.maximumf %166, %167 : vector<8x128xf32>
    %cst_54 = arith.constant 0.000000e+00 : f32
    %169 = vector.broadcast %cst_54 : f32 to vector<8x128xf32>
    %170 = arith.maximumf %168, %169 : vector<8x128xf32>
    %c0_55 = arith.constant 0 : index
    %c1408 = arith.constant 1408 : index
    %171 = vector.load %arg11[%c0_55, %c1408] : memref<8x1536xf32, #tpu.memory_space<vmem>>, vector<8x128xf32>
    tpu.vector_store %arg11[%c0_55, %c1408], %170 {strides = array<i32>} : memref<8x1536xf32, #tpu.memory_space<vmem>>, vector<8x128xf32>,
    %c0_56 = arith.constant 0 : index
    %c0_57 = arith.constant 0 : index
    %172 = vector.load %arg11[%c0_56, %c0_57] : memref<8x1536xf32, #tpu.memory_space<vmem>>, vector<8x384xf32>
    %173 = arith.truncf %172 : vector<8x384xf32> to vector<8x384xbf16>
    %cst_58 = arith.constant dense<0.000000e+00> : vector<8x256xf32>
    %174 = tpu.matmul %173, %2, %cst_58 {dimension_numbers = #tpu.dot_dimension_numbers<[1], [0], [0], [1], [0, 0, 1, 1], [], []>} : vector<8x384xbf16>, vector<384x256xbf16>, vector<8x256xf32> -> vector<8x256xf32>
    %175 = vector.broadcast %3 : vector<1x256xf32> to vector<8x256xf32>
    %176 = arith.addf %174, %175 : vector<8x256xf32>
    %cst_59 = arith.constant 0.000000e+00 : f32
    %177 = vector.broadcast %cst_59 : f32 to vector<8x256xf32>
    %178 = arith.maximumf %176, %177 : vector<8x256xf32>
    %c0_60 = arith.constant 0 : index
    %c0_61 = arith.constant 0 : index
    %179 = vector.load %arg12[%c0_60, %c0_61] : memref<8x2560xf32, #tpu.memory_space<vmem>>, vector<8x256xf32>
    tpu.vector_store %arg12[%c0_60, %c0_61], %178 {strides = array<i32>} : memref<8x2560xf32, #tpu.memory_space<vmem>>, vector<8x256xf32>,
    %c0_62 = arith.constant 0 : index
    %c128_63 = arith.constant 128 : index
    %180 = vector.load %arg11[%c0_62, %c128_63] : memref<8x1536xf32, #tpu.memory_space<vmem>>, vector<8x384xf32>
    %181 = arith.truncf %180 : vector<8x384xf32> to vector<8x384xbf16>
    %cst_64 = arith.constant dense<0.000000e+00> : vector<8x256xf32>
    %182 = tpu.matmul %181, %2, %cst_64 {dimension_numbers = #tpu.dot_dimension_numbers<[1], [0], [0], [1], [0, 0, 1, 1], [], []>} : vector<8x384xbf16>, vector<384x256xbf16>, vector<8x256xf32> -> vector<8x256xf32>
    %183 = vector.broadcast %3 : vector<1x256xf32> to vector<8x256xf32>
    %184 = arith.addf %182, %183 : vector<8x256xf32>
    %cst_65 = arith.constant 0.000000e+00 : f32
    %185 = vector.broadcast %cst_65 : f32 to vector<8x256xf32>
    %186 = arith.maximumf %184, %185 : vector<8x256xf32>
    %c0_66 = arith.constant 0 : index
    %c256_67 = arith.constant 256 : index
    %187 = vector.load %arg12[%c0_66, %c256_67] : memref<8x2560xf32, #tpu.memory_space<vmem>>, vector<8x256xf32>
    tpu.vector_store %arg12[%c0_66, %c256_67], %186 {strides = array<i32>} : memref<8x2560xf32, #tpu.memory_space<vmem>>, vector<8x256xf32>,
    %c0_68 = arith.constant 0 : index
    %c256_69 = arith.constant 256 : index
    %188 = vector.load %arg11[%c0_68, %c256_69] : memref<8x1536xf32, #tpu.memory_space<vmem>>, vector<8x384xf32>
    %189 = arith.truncf %188 : vector<8x384xf32> to vector<8x384xbf16>
    %cst_70 = arith.constant dense<0.000000e+00> : vector<8x256xf32>
    %190 = tpu.matmul %189, %2, %cst_70 {dimension_numbers = #tpu.dot_dimension_numbers<[1], [0], [0], [1], [0, 0, 1, 1], [], []>} : vector<8x384xbf16>, vector<384x256xbf16>, vector<8x256xf32> -> vector<8x256xf32>
    %191 = vector.broadcast %3 : vector<1x256xf32> to vector<8x256xf32>
    %192 = arith.addf %190, %191 : vector<8x256xf32>
    %cst_71 = arith.constant 0.000000e+00 : f32
    %193 = vector.broadcast %cst_71 : f32 to vector<8x256xf32>
    %194 = arith.maximumf %192, %193 : vector<8x256xf32>
    %c0_72 = arith.constant 0 : index
    %c512_73 = arith.constant 512 : index
    %195 = vector.load %arg12[%c0_72, %c512_73] : memref<8x2560xf32, #tpu.memory_space<vmem>>, vector<8x256xf32>
    tpu.vector_store %arg12[%c0_72, %c512_73], %194 {strides = array<i32>} : memref<8x2560xf32, #tpu.memory_space<vmem>>, vector<8x256xf32>,
    %c0_74 = arith.constant 0 : index
    %c384_75 = arith.constant 384 : index
    %196 = vector.load %arg11[%c0_74, %c384_75] : memref<8x1536xf32, #tpu.memory_space<vmem>>, vector<8x384xf32>
    %197 = arith.truncf %196 : vector<8x384xf32> to vector<8x384xbf16>
    %cst_76 = arith.constant dense<0.000000e+00> : vector<8x256xf32>
    %198 = tpu.matmul %197, %2, %cst_76 {dimension_numbers = #tpu.dot_dimension_numbers<[1], [0], [0], [1], [0, 0, 1, 1], [], []>} : vector<8x384xbf16>, vector<384x256xbf16>, vector<8x256xf32> -> vector<8x256xf32>
    %199 = vector.broadcast %3 : vector<1x256xf32> to vector<8x256xf32>
    %200 = arith.addf %198, %199 : vector<8x256xf32>
    %cst_77 = arith.constant 0.000000e+00 : f32
    %201 = vector.broadcast %cst_77 : f32 to vector<8x256xf32>
    %202 = arith.maximumf %200, %201 : vector<8x256xf32>
    %c0_78 = arith.constant 0 : index
    %c768_79 = arith.constant 768 : index
    %203 = vector.load %arg12[%c0_78, %c768_79] : memref<8x2560xf32, #tpu.memory_space<vmem>>, vector<8x256xf32>
    tpu.vector_store %arg12[%c0_78, %c768_79], %202 {strides = array<i32>} : memref<8x2560xf32, #tpu.memory_space<vmem>>, vector<8x256xf32>,
    %c0_80 = arith.constant 0 : index
    %c512_81 = arith.constant 512 : index
    %204 = vector.load %arg11[%c0_80, %c512_81] : memref<8x1536xf32, #tpu.memory_space<vmem>>, vector<8x384xf32>
    %205 = arith.truncf %204 : vector<8x384xf32> to vector<8x384xbf16>
    %cst_82 = arith.constant dense<0.000000e+00> : vector<8x256xf32>
    %206 = tpu.matmul %205, %2, %cst_82 {dimension_numbers = #tpu.dot_dimension_numbers<[1], [0], [0], [1], [0, 0, 1, 1], [], []>} : vector<8x384xbf16>, vector<384x256xbf16>, vector<8x256xf32> -> vector<8x256xf32>
    %207 = vector.broadcast %3 : vector<1x256xf32> to vector<8x256xf32>
    %208 = arith.addf %206, %207 : vector<8x256xf32>
    %cst_83 = arith.constant 0.000000e+00 : f32
    %209 = vector.broadcast %cst_83 : f32 to vector<8x256xf32>
    %210 = arith.maximumf %208, %209 : vector<8x256xf32>
    %c0_84 = arith.constant 0 : index
    %c1024_85 = arith.constant 1024 : index
    %211 = vector.load %arg12[%c0_84, %c1024_85] : memref<8x2560xf32, #tpu.memory_space<vmem>>, vector<8x256xf32>
    tpu.vector_store %arg12[%c0_84, %c1024_85], %210 {strides = array<i32>} : memref<8x2560xf32, #tpu.memory_space<vmem>>, vector<8x256xf32>,
    %c0_86 = arith.constant 0 : index
    %c640_87 = arith.constant 640 : index
    %212 = vector.load %arg11[%c0_86, %c640_87] : memref<8x1536xf32, #tpu.memory_space<vmem>>, vector<8x384xf32>
    %213 = arith.truncf %212 : vector<8x384xf32> to vector<8x384xbf16>
    %cst_88 = arith.constant dense<0.000000e+00> : vector<8x256xf32>
    %214 = tpu.matmul %213, %2, %cst_88 {dimension_numbers = #tpu.dot_dimension_numbers<[1], [0], [0], [1], [0, 0, 1, 1], [], []>} : vector<8x384xbf16>, vector<384x256xbf16>, vector<8x256xf32> -> vector<8x256xf32>
    %215 = vector.broadcast %3 : vector<1x256xf32> to vector<8x256xf32>
    %216 = arith.addf %214, %215 : vector<8x256xf32>
    %cst_89 = arith.constant 0.000000e+00 : f32
    %217 = vector.broadcast %cst_89 : f32 to vector<8x256xf32>
    %218 = arith.maximumf %216, %217 : vector<8x256xf32>
    %c0_90 = arith.constant 0 : index
    %c1280_91 = arith.constant 1280 : index
    %219 = vector.load %arg12[%c0_90, %c1280_91] : memref<8x2560xf32, #tpu.memory_space<vmem>>, vector<8x256xf32>
    tpu.vector_store %arg12[%c0_90, %c1280_91], %218 {strides = array<i32>} : memref<8x2560xf32, #tpu.memory_space<vmem>>, vector<8x256xf32>,
    %c0_92 = arith.constant 0 : index
    %c768_93 = arith.constant 768 : index
    %220 = vector.load %arg11[%c0_92, %c768_93] : memref<8x1536xf32, #tpu.memory_space<vmem>>, vector<8x384xf32>
    %221 = arith.truncf %220 : vector<8x384xf32> to vector<8x384xbf16>
    %cst_94 = arith.constant dense<0.000000e+00> : vector<8x256xf32>
    %222 = tpu.matmul %221, %2, %cst_94 {dimension_numbers = #tpu.dot_dimension_numbers<[1], [0], [0], [1], [0, 0, 1, 1], [], []>} : vector<8x384xbf16>, vector<384x256xbf16>, vector<8x256xf32> -> vector<8x256xf32>
    %223 = vector.broadcast %3 : vector<1x256xf32> to vector<8x256xf32>
    %224 = arith.addf %222, %223 : vector<8x256xf32>
    %cst_95 = arith.constant 0.000000e+00 : f32
    %225 = vector.broadcast %cst_95 : f32 to vector<8x256xf32>
    %226 = arith.maximumf %224, %225 : vector<8x256xf32>
    %c0_96 = arith.constant 0 : index
    %c1536 = arith.constant 1536 : index
    %227 = vector.load %arg12[%c0_96, %c1536] : memref<8x2560xf32, #tpu.memory_space<vmem>>, vector<8x256xf32>
    tpu.vector_store %arg12[%c0_96, %c1536], %226 {strides = array<i32>} : memref<8x2560xf32, #tpu.memory_space<vmem>>, vector<8x256xf32>,
    %c0_97 = arith.constant 0 : index
    %c896_98 = arith.constant 896 : index
    %228 = vector.load %arg11[%c0_97, %c896_98] : memref<8x1536xf32, #tpu.memory_space<vmem>>, vector<8x384xf32>
    %229 = arith.truncf %228 : vector<8x384xf32> to vector<8x384xbf16>
    %cst_99 = arith.constant dense<0.000000e+00> : vector<8x256xf32>
    %230 = tpu.matmul %229, %2, %cst_99 {dimension_numbers = #tpu.dot_dimension_numbers<[1], [0], [0], [1], [0, 0, 1, 1], [], []>} : vector<8x384xbf16>, vector<384x256xbf16>, vector<8x256xf32> -> vector<8x256xf32>
    %231 = vector.broadcast %3 : vector<1x256xf32> to vector<8x256xf32>
    %232 = arith.addf %230, %231 : vector<8x256xf32>
    %cst_100 = arith.constant 0.000000e+00 : f32
    %233 = vector.broadcast %cst_100 : f32 to vector<8x256xf32>
    %234 = arith.maximumf %232, %233 : vector<8x256xf32>
    %c0_101 = arith.constant 0 : index
    %c1792 = arith.constant 1792 : index
    %235 = vector.load %arg12[%c0_101, %c1792] : memref<8x2560xf32, #tpu.memory_space<vmem>>, vector<8x256xf32>
    tpu.vector_store %arg12[%c0_101, %c1792], %234 {strides = array<i32>} : memref<8x2560xf32, #tpu.memory_space<vmem>>, vector<8x256xf32>,
    %c0_102 = arith.constant 0 : index
    %c1024_103 = arith.constant 1024 : index
    %236 = vector.load %arg11[%c0_102, %c1024_103] : memref<8x1536xf32, #tpu.memory_space<vmem>>, vector<8x384xf32>
    %237 = arith.truncf %236 : vector<8x384xf32> to vector<8x384xbf16>
    %cst_104 = arith.constant dense<0.000000e+00> : vector<8x256xf32>
    %238 = tpu.matmul %237, %2, %cst_104 {dimension_numbers = #tpu.dot_dimension_numbers<[1], [0], [0], [1], [0, 0, 1, 1], [], []>} : vector<8x384xbf16>, vector<384x256xbf16>, vector<8x256xf32> -> vector<8x256xf32>
    %239 = vector.broadcast %3 : vector<1x256xf32> to vector<8x256xf32>
    %240 = arith.addf %238, %239 : vector<8x256xf32>
    %cst_105 = arith.constant 0.000000e+00 : f32
    %241 = vector.broadcast %cst_105 : f32 to vector<8x256xf32>
    %242 = arith.maximumf %240, %241 : vector<8x256xf32>
    %c0_106 = arith.constant 0 : index
    %c2048 = arith.constant 2048 : index
    %243 = vector.load %arg12[%c0_106, %c2048] : memref<8x2560xf32, #tpu.memory_space<vmem>>, vector<8x256xf32>
    tpu.vector_store %arg12[%c0_106, %c2048], %242 {strides = array<i32>} : memref<8x2560xf32, #tpu.memory_space<vmem>>, vector<8x256xf32>,
    %c0_107 = arith.constant 0 : index
    %c1152_108 = arith.constant 1152 : index
    %244 = vector.load %arg11[%c0_107, %c1152_108] : memref<8x1536xf32, #tpu.memory_space<vmem>>, vector<8x384xf32>
    %245 = arith.truncf %244 : vector<8x384xf32> to vector<8x384xbf16>
    %cst_109 = arith.constant dense<0.000000e+00> : vector<8x256xf32>
    %246 = tpu.matmul %245, %2, %cst_109 {dimension_numbers = #tpu.dot_dimension_numbers<[1], [0], [0], [1], [0, 0, 1, 1], [], []>} : vector<8x384xbf16>, vector<384x256xbf16>, vector<8x256xf32> -> vector<8x256xf32>
    %247 = vector.broadcast %3 : vector<1x256xf32> to vector<8x256xf32>
    %248 = arith.addf %246, %247 : vector<8x256xf32>
    %cst_110 = arith.constant 0.000000e+00 : f32
    %249 = vector.broadcast %cst_110 : f32 to vector<8x256xf32>
    %250 = arith.maximumf %248, %249 : vector<8x256xf32>
    %c0_111 = arith.constant 0 : index
    %c2304 = arith.constant 2304 : index
    %251 = vector.load %arg12[%c0_111, %c2304] : memref<8x2560xf32, #tpu.memory_space<vmem>>, vector<8x256xf32>
    tpu.vector_store %arg12[%c0_111, %c2304], %250 {strides = array<i32>} : memref<8x2560xf32, #tpu.memory_space<vmem>>, vector<8x256xf32>,
    %c0_112 = arith.constant 0 : index
    %c0_113 = arith.constant 0 : index
    %252 = vector.load %arg12[%c0_112, %c0_113] : memref<8x2560xf32, #tpu.memory_space<vmem>>, vector<8x2560xf32>
    %253 = arith.truncf %252 : vector<8x2560xf32> to vector<8x2560xbf16>
    %c0_114 = arith.constant 0 : index
    %c0_115 = arith.constant 0 : index
    %254 = vector.load %arg6[%c0_114, %c0_115] : memref<2560x512xbf16, #tpu.memory_space<vmem>>, vector<2560x512xbf16>
    %cst_116 = arith.constant dense<0.000000e+00> : vector<8x512xf32>
    %255 = tpu.matmul %253, %254, %cst_116 {dimension_numbers = #tpu.dot_dimension_numbers<[1], [0], [0], [1], [0, 0, 1, 1], [], []>} : vector<8x2560xbf16>, vector<2560x512xbf16>, vector<8x512xf32> -> vector<8x512xf32>
    %c0_117 = arith.constant 0 : index
    %c0_118 = arith.constant 0 : index
    %256 = vector.load %arg7[%c0_117, %c0_118] : memref<1x512xf32, #tpu.memory_space<vmem>>, vector<1x512xf32>
    %257 = vector.broadcast %256 : vector<1x512xf32> to vector<8x512xf32>
    %258 = arith.addf %255, %257 : vector<8x512xf32>
    %cst_119 = arith.constant 0.000000e+00 : f32
    %259 = vector.broadcast %cst_119 : f32 to vector<8x512xf32>
    %260 = arith.maximumf %258, %259 : vector<8x512xf32>
    %261 = arith.truncf %260 : vector<8x512xf32> to vector<8x512xbf16>
    %c0_120 = arith.constant 0 : index
    %c0_121 = arith.constant 0 : index
    %262 = vector.load %arg8[%c0_120, %c0_121] : memref<512x10xbf16, #tpu.memory_space<vmem>>, vector<512x10xbf16>
    %cst_122 = arith.constant dense<0.000000e+00> : vector<8x10xf32>
    %263 = tpu.matmul %261, %262, %cst_122 {dimension_numbers = #tpu.dot_dimension_numbers<[1], [0], [0], [1], [0, 0, 1, 1], [], []>} : vector<8x512xbf16>, vector<512x10xbf16>, vector<8x10xf32> -> vector<8x10xf32>
    %c0_123 = arith.constant 0 : index
    %c0_124 = arith.constant 0 : index
    %264 = vector.load %arg9[%c0_123, %c0_124] : memref<1x10xf32, #tpu.memory_space<vmem>>, vector<1x10xf32>
    %265 = vector.broadcast %264 : vector<1x10xf32> to vector<8x10xf32>
    %266 = arith.addf %263, %265 : vector<8x10xf32>
    %cst_125 = arith.constant dense<0xFF800000> : vector<8xf32>
    %267 = vector.multi_reduction <maximumf>, %266, %cst_125 [1] : vector<8x10xf32> to vector<8xf32>
    %268 = vector.shape_cast %267 : vector<8xf32> to vector<8x1xf32>
    %269 = vector.broadcast %268 : vector<8x1xf32> to vector<8x10xf32>
    %270 = arith.subf %266, %269 : vector<8x10xf32>
    %271 = math.exp %270 : vector<8x10xf32>
    %cst_126 = arith.constant dense<0.000000e+00> : vector<8xf32>
    %272 = vector.multi_reduction <add>, %271, %cst_126 [1] : vector<8x10xf32> to vector<8xf32>
    %273 = vector.shape_cast %272 : vector<8xf32> to vector<8x1xf32>
    %274 = math.log %273 : vector<8x1xf32>
    %275 = vector.broadcast %274 : vector<8x1xf32> to vector<8x10xf32>
    %276 = arith.subf %270, %275 : vector<8x10xf32>
    %c0_127 = arith.constant 0 : index
    %c0_128 = arith.constant 0 : index
    %277 = vector.load %arg10[%c0_127, %c0_128] : memref<8x10xf32, #tpu.memory_space<vmem>>, vector<8x10xf32>
    tpu.vector_store %arg10[%c0_127, %c0_128], %276 {strides = array<i32>} : memref<8x10xf32, #tpu.memory_space<vmem>>, vector<8x10xf32>,
    return
  }
  func.func @transform_0(%arg0: i32) -> (i32, i32) {
    %c0_i32 = arith.constant 0 : i32
    %c0_i32_0 = arith.constant 0 : i32
    return %arg0, %c0_i32 : i32, i32
  }
  func.func @transform_1(%arg0: i32) -> (i32, i32) {
    %c0_i32 = arith.constant 0 : i32
    %c0_i32_0 = arith.constant 0 : i32
    %c0_i32_1 = arith.constant 0 : i32
    return %c0_i32, %c0_i32_0 : i32, i32
  }
  func.func @transform_2(%arg0: i32) -> (i32, i32) {
    %c0_i32 = arith.constant 0 : i32
    %c0_i32_0 = arith.constant 0 : i32
    %c0_i32_1 = arith.constant 0 : i32
    return %c0_i32, %c0_i32_0 : i32, i32
  }
  func.func @transform_3(%arg0: i32) -> (i32, i32) {
    %c0_i32 = arith.constant 0 : i32
    %c0_i32_0 = arith.constant 0 : i32
    %c0_i32_1 = arith.constant 0 : i32
    return %c0_i32, %c0_i32_0 : i32, i32
  }
  func.func @transform_4(%arg0: i32) -> (i32, i32) {
    %c0_i32 = arith.constant 0 : i32
    %c0_i32_0 = arith.constant 0 : i32
    %c0_i32_1 = arith.constant 0 : i32
    return %c0_i32, %c0_i32_0 : i32, i32
  }
  func.func @transform_5(%arg0: i32) -> (i32, i32) {
    %c0_i32 = arith.constant 0 : i32
    %c0_i32_0 = arith.constant 0 : i32
    %c0_i32_1 = arith.constant 0 : i32
    return %c0_i32, %c0_i32_0 : i32, i32
  }
  func.func @transform_6(%arg0: i32) -> (i32, i32) {
    %c0_i32 = arith.constant 0 : i32
    %c0_i32_0 = arith.constant 0 : i32
    %c0_i32_1 = arith.constant 0 : i32
    return %c0_i32, %c0_i32_0 : i32, i32
  }
  func.func @transform_7(%arg0: i32) -> (i32, i32) {
    %c0_i32 = arith.constant 0 : i32
    %c0_i32_0 = arith.constant 0 : i32
    %c0_i32_1 = arith.constant 0 : i32
    return %c0_i32, %c0_i32_0 : i32, i32
  }
  func.func @transform_8(%arg0: i32) -> (i32, i32) {
    %c0_i32 = arith.constant 0 : i32
    %c0_i32_0 = arith.constant 0 : i32
    %c0_i32_1 = arith.constant 0 : i32
    return %c0_i32, %c0_i32_0 : i32, i32
  }
  func.func @transform_9(%arg0: i32) -> (i32, i32) {
    %c0_i32 = arith.constant 0 : i32
    %c0_i32_0 = arith.constant 0 : i32
    return %arg0, %c0_i32 : i32, i32
  }
}

</mosaic_0001>

<llo_original>
// kernel: convnet_forward.1
$region0: #{convnet_forward.1}
  #allocation0 [shape = 'u32[]', space=smem, size = 0x4, offset = 0x4, fixed_abs, tag = 'smem constant byte address 0x4 - core index']
  #allocation1 [shape = 'u32[72,128]{1,0:T(1,128)}', space=vmem, size = 0x9000, scoped, tag = 'internal scratch']
  #allocation2 [shape = 'f32[8,1536]{1,0:T(8,128)}', space=vmem, size = 0xc000, scoped, tag = 'scratch operand']
  #allocation3 [shape = 'f32[8,2560]{1,0:T(8,128)}', space=vmem, size = 0x14000, scoped, tag = 'scratch operand']
  %s0 = inlined_call_operand.vmem [shape: f32[8,784], index: 0, kind: input, shape index: {}]
  %s1 = inlined_call_operand.hbm [shape: bf16[168,512], index: 1, kind: input, shape index: {}]
  %s2 = inlined_call_operand.hbm [shape: f32[1,512], index: 2, kind: input, shape index: {}]
  %s3 = inlined_call_operand.hbm [shape: bf16[384,256], index: 3, kind: input, shape index: {}]
  %s4 = inlined_call_operand.hbm [shape: f32[1,256], index: 4, kind: input, shape index: {}]
  %s5 = inlined_call_operand.hbm [shape: bf16[2560,512], index: 5, kind: input, shape index: {}]
  %s6 = inlined_call_operand.hbm [shape: f32[1,512], index: 6, kind: input, shape index: {}]
  %s7 = inlined_call_operand.vmem [shape: bf16[512,10], index: 7, kind: input, shape index: {}]
  %s8 = inlined_call_operand.hbm [shape: f32[1,10], index: 8, kind: input, shape index: {}]
  %s9 = inlined_call_operand.vmem [shape: f32[8,10], index: 9, kind: output, shape index: {}]
  %s10 = sld [smem:[#allocation0]]
  $region74: #{convnet_forward.1} parent=0
    _
  %s12 = ssub.s32 1, %s10
  %s13 = scalar_select 0, %s12, %s10
  $region1: #{convnet_forward.1} parent=0
    #allocation4 [shape = 'u8[172032]{0}', space=vmem, size = 0x2a000, scoped, tag = 'input window, operand 1, single buffered']
    #allocation5 [shape = 's32[1]{0}', space=sflag, size = 0x4, scoped, tag = 'scoped memory for convnet_forward.1']
    #allocation6 [shape = 'u8[2048]{0}', space=vmem, size = 0x800, scoped, tag = 'input window, operand 2, single buffered']
    #allocation7 [shape = 's32[1]{0}', space=sflag, size = 0x4, scoped, tag = 'scoped memory for convnet_forward.1']
    #allocation8 [shape = 'u8[196608]{0}', space=vmem, size = 0x30000, scoped, tag = 'input window, operand 3, single buffered']
    #allocation9 [shape = 'u8[1024]{0}', space=vmem, size = 0x400, scoped, tag = 'input window, operand 4, single buffered']
    #allocation10 [shape = 's32[1]{0}', space=sflag, size = 0x4, scoped, tag = 'scoped memory for convnet_forward.1']
    #allocation11 [shape = 'u8[2621440]{0}', space=vmem, size = 0x280000, scoped, tag = 'input window, operand 5, single buffered']
    #allocation12 [shape = 'u8[2048]{0}', space=vmem, size = 0x800, scoped, tag = 'input window, operand 6, single buffered']
    #allocation13 [shape = 's32[1]{0}', space=sflag, size = 0x4, scoped, tag = 'scoped memory for convnet_forward.1']
    #allocation14 [shape = 'u8[512]{0}', space=vmem, size = 0x400, scoped, tag = 'input window, operand 8, single buffered']
    %14 = vsyncpa [#allocation5], 0
    %15 = vsyncpa [#allocation7], 0
    %16 = vsyncpa [#allocation10], 0
    %17 = vsyncpa [#allocation13], 0
    // Predicated region
    $region2: #{convnet_forward.1} parent=1 // pred_check
      _
    $region3: #{convnet_forward.1} parent=1 // pred_check_branch
      %19 = sbr.rel (0) target = $region5
    $region4: #{convnet_forward.1} parent=1 // pred_region
      _
    $region5: #{convnet_forward.1} parent=1 // pred_fallthru
      _
    // Predicated region
    $region6: #{convnet_forward.1} parent=1 // pred_check
      _
    $region7: #{convnet_forward.1} parent=1 // pred_check_branch
      %21 = sbr.rel (0) target = $region9
    $region8: #{convnet_forward.1} parent=1 // pred_region
      %23 = vsyncadd [#allocation5], 0
      %s24 = sshll.u32 %s1, 4
      %s25 = int_to_ptr.hbm [resolvable:$true] %s24
      %s26 = sshll.u32 [#allocation4], 4
      %s27 = int_to_ptr.vmem [resolvable:$true] %s26
      %32 = dma.hbm_to_vmem [thread:$0]  %s25, 5376, %s27, [#allocation5], 256, 256, 16
    $region9: #{convnet_forward.1} parent=1 // pred_fallthru
      _
    // Predicated region
    $region10: #{convnet_forward.1} parent=1 // pred_check
      _
    $region11: #{convnet_forward.1} parent=1 // pred_check_branch
      %34 = sbr.rel (0) target = $region13
    $region12: #{convnet_forward.1} parent=1 // pred_region
      %36 = vsyncadd [#allocation7], 0
      %s38 = sshll.u32 %s2, 4
      %s39 = int_to_ptr.hbm [resolvable:$true] %s38
      %s40 = sshll.u32 [#allocation6], 4
      %s41 = int_to_ptr.vmem [resolvable:$true] %s40
      %43 = dma.hbm_to_vmem [thread:$0]  %s39, 64, %s41, [#allocation7]
    $region13: #{convnet_forward.1} parent=1 // pred_fallthru
      _
    // Predicated region
    $region14: #{convnet_forward.1} parent=1 // pred_check
      _
    $region15: #{convnet_forward.1} parent=1 // pred_check_branch
      %45 = sbr.rel (0) target = $region17
    $region16: #{convnet_forward.1} parent=1 // pred_region
      %47 = vsyncadd [#allocation7], 0
      %s48 = sshll.u32 %s3, 4
      %s49 = int_to_ptr.hbm [resolvable:$true] %s48
      %s50 = sshll.u32 [#allocation8], 4
      %s51 = int_to_ptr.vmem [resolvable:$true] %s50
      %56 = dma.hbm_to_vmem [thread:$0]  %s49, 6144, %s51, [#allocation7], 128, 128, 8
    $region17: #{convnet_forward.1} parent=1 // pred_fallthru
      _
    // Predicated region
    $region18: #{convnet_forward.1} parent=1 // pred_check
      _
    $region19: #{convnet_forward.1} parent=1 // pred_check_branch
      %58 = sbr.rel (0) target = $region21
    $region20: #{convnet_forward.1} parent=1 // pred_region
      %60 = vsyncadd [#allocation10], 0
      %s62 = sshll.u32 %s4, 4
      %s63 = int_to_ptr.hbm [resolvable:$true] %s62
      %s64 = sshll.u32 [#allocation9], 4
      %s65 = int_to_ptr.vmem [resolvable:$true] %s64
      %67 = dma.hbm_to_vmem [thread:$0]  %s63, 32, %s65, [#allocation10]
    $region21: #{convnet_forward.1} parent=1 // pred_fallthru
      _
    // Predicated region
    $region22: #{convnet_forward.1} parent=1 // pred_check
      _
    $region23: #{convnet_forward.1} parent=1 // pred_check_branch
      %69 = sbr.rel (0) target = $region25
    $region24: #{convnet_forward.1} parent=1 // pred_region
      %71 = vsyncadd [#allocation10], 0
      %s72 = sshll.u32 %s5, 4
      %s73 = int_to_ptr.hbm [resolvable:$true] %s72
      %s74 = sshll.u32 [#allocation11], 4
      %s75 = int_to_ptr.vmem [resolvable:$true] %s74
      %80 = dma.hbm_to_vmem [thread:$0]  %s73, 81920, %s75, [#allocation10], 256, 256, 16
    $region25: #{convnet_forward.1} parent=1 // pred_fallthru
      _
    // Predicated region
    $region26: #{convnet_forward.1} parent=1 // pred_check
      _
    $region27: #{convnet_forward.1} parent=1 // pred_check_branch
      %82 = sbr.rel (0) target = $region29
    $region28: #{convnet_forward.1} parent=1 // pred_region
      %84 = vsyncadd [#allocation13], 0
      %s86 = sshll.u32 %s6, 4
      %s87 = int_to_ptr.hbm [resolvable:$true] %s86
      %s88 = sshll.u32 [#allocation12], 4
      %s89 = int_to_ptr.vmem [resolvable:$true] %s88
      %91 = dma.hbm_to_vmem [thread:$0]  %s87, 64, %s89, [#allocation13]
    $region29: #{convnet_forward.1} parent=1 // pred_fallthru
      _
    // Predicated region
    $region30: #{convnet_forward.1} parent=1 // pred_check
      _
    $region31: #{convnet_forward.1} parent=1 // pred_check_branch
      %93 = sbr.rel (0) target = $region33
    $region32: #{convnet_forward.1} parent=1 // pred_region
      _
    $region33: #{convnet_forward.1} parent=1 // pred_fallthru
      _
    // Predicated region
    $region34: #{convnet_forward.1} parent=1 // pred_check
      _
    $region35: #{convnet_forward.1} parent=1 // pred_check_branch
      %95 = sbr.rel (0) target = $region37
    $region36: #{convnet_forward.1} parent=1 // pred_region
      %97 = vsyncadd [#allocation13], 0
      %s99 = sshll.u32 %s8, 4
      %s100 = int_to_ptr.hbm [resolvable:$true] %s99
      %s101 = sshll.u32 [#allocation14], 4
      %s102 = int_to_ptr.vmem [resolvable:$true] %s101
      %104 = dma.hbm_to_vmem [thread:$0]  %s100, 16, %s102, [#allocation13]
    $region37: #{convnet_forward.1} parent=1 // pred_fallthru
      _
    // Predicated region
    $region38: #{convnet_forward.1} parent=1 // pred_check
      _
    $region39: #{convnet_forward.1} parent=1 // pred_check_branch
      %106 = sbr.rel (0) target = $region41
    $region40: #{convnet_forward.1} parent=1 // pred_region
      %108 = dma.done [#allocation5], 5376
    $region41: #{convnet_forward.1} parent=1 // pred_fallthru
      _
    // Predicated region
    $region42: #{convnet_forward.1} parent=1 // pred_check
      _
    $region43: #{convnet_forward.1} parent=1 // pred_check_branch
      %110 = sbr.rel (0) target = $region45
    $region44: #{convnet_forward.1} parent=1 // pred_region
      %112 = dma.done [#allocation7], 64
    $region45: #{convnet_forward.1} parent=1 // pred_fallthru
      _
    // Predicated region
    $region46: #{convnet_forward.1} parent=1 // pred_check
      _
    $region47: #{convnet_forward.1} parent=1 // pred_check_branch
      %114 = sbr.rel (0) target = $region49
    $region48: #{convnet_forward.1} parent=1 // pred_region
      %116 = dma.done [#allocation7], 6144
    $region49: #{convnet_forward.1} parent=1 // pred_fallthru
      _
    // Predicated region
    $region50: #{convnet_forward.1} parent=1 // pred_check
      _
    $region51: #{convnet_forward.1} parent=1 // pred_check_branch
      %118 = sbr.rel (0) target = $region53
    $region52: #{convnet_forward.1} parent=1 // pred_region
      %120 = dma.done [#allocation10], 32
    $region53: #{convnet_forward.1} parent=1 // pred_fallthru
      _
    // Predicated region
    $region54: #{convnet_forward.1} parent=1 // pred_check
      _
    $region55: #{convnet_forward.1} parent=1 // pred_check_branch
      %122 = sbr.rel (0) target = $region57
    $region56: #{convnet_forward.1} parent=1 // pred_region
      %124 = dma.done [#allocation10], 81920
    $region57: #{convnet_forward.1} parent=1 // pred_fallthru
      _
    // Predicated region
    $region58: #{convnet_forward.1} parent=1 // pred_check
      _
    $region59: #{convnet_forward.1} parent=1 // pred_check_branch
      %126 = sbr.rel (0) target = $region61
    $region60: #{convnet_forward.1} parent=1 // pred_region
      %128 = dma.done [#allocation13], 64
    $region61: #{convnet_forward.1} parent=1 // pred_fallthru
      _
    // Predicated region
    $region62: #{convnet_forward.1} parent=1 // pred_check
      _
    $region63: #{convnet_forward.1} parent=1 // pred_check_branch
      %130 = sbr.rel (0) target = $region65
    $region64: #{convnet_forward.1} parent=1 // pred_region
      %132 = dma.done [#allocation13], 16
    $region65: #{convnet_forward.1} parent=1 // pred_fallthru
      _
    %v134 = vld [vmem:[#allocation4] sm:$0xff]
    %v135 = vld [vmem:[#allocation4 + $0x8] sm:$0xff]
    %v136 = vld [vmem:[#allocation4 + $0x10] sm:$0xff]
    %v137 = vld [vmem:[#allocation4 + $0x18] sm:$0xff]
    %v138 = vld [vmem:[#allocation4 + $0x20] sm:$0xff]
    %v139 = vld [vmem:[#allocation4 + $0x28] sm:$0xff]
    %v140 = vld [vmem:[#allocation4 + $0x30] sm:$0xff]
    %v141 = vld [vmem:[#allocation4 + $0x38] sm:$0xff]
    %v142 = vld [vmem:[#allocation4 + $0x40] sm:$0xff]
    %v143 = vld [vmem:[#allocation4 + $0x48] sm:$0xff]
    %v144 = vld [vmem:[#allocation4 + $0x50] sm:$0xff]
    %v145 = vld [vmem:[#allocation4 + $0x58] sm:$0xff]
    %v146 = vld [vmem:[#allocation4 + $0x60] sm:$0xff]
    %v147 = vld [vmem:[#allocation4 + $0x68] sm:$0xff]
    %v148 = vld [vmem:[#allocation4 + $0x70] sm:$0xff]
    %v149 = vld [vmem:[#allocation4 + $0x78] sm:$0xff]
    %v150 = vld [vmem:[#allocation4 + $0x80] sm:$0xff]
    %v151 = vld [vmem:[#allocation4 + $0x88] sm:$0xff]
    %v152 = vld [vmem:[#allocation4 + $0x90] sm:$0xff]
    %v153 = vld [vmem:[#allocation4 + $0x98] sm:$0xff]
    %v154 = vld [vmem:[#allocation4 + $0xa0] sm:$0xff]
    %v155 = vld [vmem:[#allocation4 + $0xa8] sm:$0xff]
    %v156 = vld [vmem:[#allocation4 + $0xb0] sm:$0xff]
    %v157 = vld [vmem:[#allocation4 + $0xb8] sm:$0xff]
    %v158 = vld [vmem:[#allocation4 + $0xc0] sm:$0xff]
    %v159 = vld [vmem:[#allocation4 + $0xc8] sm:$0xff]
    %v160 = vld [vmem:[#allocation4 + $0xd0] sm:$0xff]
    %v161 = vld [vmem:[#allocation4 + $0xd8] sm:$0xff]
    %v162 = vld [vmem:[#allocation4 + $0xe0] sm:$0xff]
    %v163 = vld [vmem:[#allocation4 + $0xe8] sm:$0xff]
    %v164 = vld [vmem:[#allocation4 + $0xf0] sm:$0xff]
    %v165 = vld [vmem:[#allocation4 + $0xf8] sm:$0xff]
    %v166 = vld [vmem:[#allocation4 + $0x100] sm:$0xff]
    %v167 = vld [vmem:[#allocation4 + $0x108] sm:$0xff]
    %v168 = vld [vmem:[#allocation4 + $0x110] sm:$0xff]
    %v169 = vld [vmem:[#allocation4 + $0x118] sm:$0xff]
    %v170 = vld [vmem:[#allocation4 + $0x120] sm:$0xff]
    %v171 = vld [vmem:[#allocation4 + $0x128] sm:$0xff]
    %v172 = vld [vmem:[#allocation4 + $0x130] sm:$0xff]
    %v173 = vld [vmem:[#allocation4 + $0x138] sm:$0xff]
    %v174 = vld [vmem:[#allocation4 + $0x140] sm:$0xff]
    %v175 = vld [vmem:[#allocation4 + $0x148] sm:$0xff]
    %v176 = vld [vmem:[#allocation6] sm:$0xf]
    %v177 = vld [vmem:[#allocation8] sm:$0xff]
    %v178 = vld [vmem:[#allocation8 + $0x8] sm:$0xff]
    %v179 = vld [vmem:[#allocation8 + $0x10] sm:$0xff]
    %v180 = vld [vmem:[#allocation8 + $0x18] sm:$0xff]
    %v181 = vld [vmem:[#allocation8 + $0x20] sm:$0xff]
    %v182 = vld [vmem:[#allocation8 + $0x28] sm:$0xff]
    %v183 = vld [vmem:[#allocation8 + $0x30] sm:$0xff]
    %v184 = vld [vmem:[#allocation8 + $0x38] sm:$0xff]
    %v185 = vld [vmem:[#allocation8 + $0x40] sm:$0xff]
    %v186 = vld [vmem:[#allocation8 + $0x48] sm:$0xff]
    %v187 = vld [vmem:[#allocation8 + $0x50] sm:$0xff]
    %v188 = vld [vmem:[#allocation8 + $0x58] sm:$0xff]
    %v189 = vld [vmem:[#allocation8 + $0x60] sm:$0xff]
    %v190 = vld [vmem:[#allocation8 + $0x68] sm:$0xff]
    %v191 = vld [vmem:[#allocation8 + $0x70] sm:$0xff]
    %v192 = vld [vmem:[#allocation8 + $0x78] sm:$0xff]
    %v193 = vld [vmem:[#allocation8 + $0x80] sm:$0xff]
    %v194 = vld [vmem:[#allocation8 + $0x88] sm:$0xff]
    %v195 = vld [vmem:[#allocation8 + $0x90] sm:$0xff]
    %v196 = vld [vmem:[#allocation8 + $0x98] sm:$0xff]
    %v197 = vld [vmem:[#allocation8 + $0xa0] sm:$0xff]
    %v198 = vld [vmem:[#allocation8 + $0xa8] sm:$0xff]
    %v199 = vld [vmem:[#allocation8 + $0xb0] sm:$0xff]
    %v200 = vld [vmem:[#allocation8 + $0xb8] sm:$0xff]
    %v201 = vld [vmem:[#allocation8 + $0xc0] sm:$0xff]
    %v202 = vld [vmem:[#allocation8 + $0xc8] sm:$0xff]
    %v203 = vld [vmem:[#allocation8 + $0xd0] sm:$0xff]
    %v204 = vld [vmem:[#allocation8 + $0xd8] sm:$0xff]
    %v205 = vld [vmem:[#allocation8 + $0xe0] sm:$0xff]
    %v206 = vld [vmem:[#allocation8 + $0xe8] sm:$0xff]
    %v207 = vld [vmem:[#allocation8 + $0xf0] sm:$0xff]
    %v208 = vld [vmem:[#allocation8 + $0xf8] sm:$0xff]
    %v209 = vld [vmem:[#allocation8 + $0x100] sm:$0xff]
    %v210 = vld [vmem:[#allocation8 + $0x108] sm:$0xff]
    %v211 = vld [vmem:[#allocation8 + $0x110] sm:$0xff]
    %v212 = vld [vmem:[#allocation8 + $0x118] sm:$0xff]
    %v213 = vld [vmem:[#allocation8 + $0x120] sm:$0xff]
    %v214 = vld [vmem:[#allocation8 + $0x128] sm:$0xff]
    %v215 = vld [vmem:[#allocation8 + $0x130] sm:$0xff]
    %v216 = vld [vmem:[#allocation8 + $0x138] sm:$0xff]
    %v217 = vld [vmem:[#allocation8 + $0x140] sm:$0xff]
    %v218 = vld [vmem:[#allocation8 + $0x148] sm:$0xff]
    %v219 = vld [vmem:[#allocation8 + $0x150] sm:$0xff]
    %v220 = vld [vmem:[#allocation8 + $0x158] sm:$0xff]
    %v221 = vld [vmem:[#allocation8 + $0x160] sm:$0xff]
    %v222 = vld [vmem:[#allocation8 + $0x168] sm:$0xff]
    %v223 = vld [vmem:[#allocation8 + $0x170] sm:$0xff]
    %v224 = vld [vmem:[#allocation8 + $0x178] sm:$0xff]
    %v225 = vld [vmem:[#allocation9] sm:$0x3]
    %v226 = vld [vmem:[%s0] sm:$0xff]
    %v227 = vld [vmem:[%s0 + $0x8] sm:$0xff]
    %v228 = vpack.c.bf16 %v226, %v226
    %v229 = vpack.c.bf16 %v227, %v227
    %v231 = vperm.slane %v176, 0
    %v232 = vperm.slane %v176, 1
    %v233 = vperm.slane %v176, 2
    %v234 = vperm.slane %v176, 3
    %v281 = vunpack.c.l.b16 %v134
    %v282 = vunpack.c.h.b16 %v134
    %v283 = vunpack.c.l.b16 %v135
    %v284 = vunpack.c.h.b16 %v135
    %v285 = vunpack.c.l.b16 %v136
    %v286 = vunpack.c.h.b16 %v136
    %v287 = vunpack.c.l.b16 %v137
    %v288 = vunpack.c.h.b16 %v137
    %v289 = vunpack.c.l.b16 %v138
    %v290 = vunpack.c.h.b16 %v138
    %v291 = vunpack.c.l.b16 %v139
    %v292 = vunpack.c.h.b16 %v139
    %v293 = vunpack.c.l.b16 %v140
    %v294 = vunpack.c.h.b16 %v140
    %v295 = vunpack.c.l.b16 %v141
    %v296 = vunpack.c.h.b16 %v141
    %v297 = vunpack.c.l.b16 %v142
    %v298 = vunpack.c.h.b16 %v142
    %v299 = vunpack.c.l.b16 %v143
    %v300 = vunpack.c.h.b16 %v143
    %v301 = vunpack.c.l.b16 %v144
    %v302 = vunpack.c.h.b16 %v144
    %v303 = vunpack.c.l.b16 %v145
    %v304 = vunpack.c.h.b16 %v145
    %v305 = vunpack.c.l.b16 %v146
    %v306 = vunpack.c.h.b16 %v146
    %v307 = vunpack.c.l.b16 %v147
    %v308 = vunpack.c.h.b16 %v147
    %v309 = vunpack.c.l.b16 %v148
    %v310 = vunpack.c.h.b16 %v148
    %v311 = vunpack.c.l.b16 %v149
    %v312 = vunpack.c.h.b16 %v149
    %v313 = vunpack.c.l.b16 %v150
    %v314 = vunpack.c.h.b16 %v150
    %v315 = vunpack.c.l.b16 %v151
    %v316 = vunpack.c.h.b16 %v151
    %v317 = vunpack.c.l.b16 %v152
    %v318 = vunpack.c.h.b16 %v152
    %v319 = vunpack.c.l.b16 %v153
    %v320 = vunpack.c.h.b16 %v153
    %v321 = vunpack.c.l.b16 %v154
    %v322 = vunpack.c.h.b16 %v154
    %v323 = vunpack.c.l.b16 %v155
    %v324 = vunpack.c.h.b16 %v155
    %v325 = vunpack.c.l.b16 %v156
    %v326 = vunpack.c.h.b16 %v156
    %v327 = vunpack.c.l.b16 %v157
    %v328 = vunpack.c.h.b16 %v157
    %v329 = vunpack.c.l.b16 %v158
    %v330 = vunpack.c.h.b16 %v158
    %v331 = vunpack.c.l.b16 %v159
    %v332 = vunpack.c.h.b16 %v159
    %v333 = vunpack.c.l.b16 %v160
    %v334 = vunpack.c.h.b16 %v160
    %v335 = vunpack.c.l.b16 %v161
    %v336 = vunpack.c.h.b16 %v161
    %v337 = vunpack.c.l.b16 %v162
    %v338 = vunpack.c.h.b16 %v162
    %v339 = vunpack.c.l.b16 %v163
    %v340 = vunpack.c.h.b16 %v163
    %v341 = vunpack.c.l.b16 %v164
    %v342 = vunpack.c.h.b16 %v164
    %v343 = vunpack.c.l.b16 %v165
    %v344 = vunpack.c.h.b16 %v165
    %v345 = vunpack.c.l.b16 %v166
    %v346 = vunpack.c.h.b16 %v166
    %v347 = vunpack.c.l.b16 %v167
    %v348 = vunpack.c.h.b16 %v167
    %v349 = vunpack.c.l.b16 %v168
    %v350 = vunpack.c.h.b16 %v168
    %v351 = vunpack.c.l.b16 %v169
    %v352 = vunpack.c.h.b16 %v169
    %v353 = vunpack.c.l.b16 %v170
    %v354 = vunpack.c.h.b16 %v170
    %v355 = vunpack.c.l.b16 %v171
    %v356 = vunpack.c.h.b16 %v171
    %v357 = vunpack.c.l.b16 %v172
    %v358 = vunpack.c.h.b16 %v172
    %v359 = vunpack.c.l.b16 %v173
    %v360 = vunpack.c.h.b16 %v173
    %v361 = vunpack.c.l.b16 %v174
    %v362 = vunpack.c.h.b16 %v174
    %v363 = vunpack.c.l.b16 %v175
    %v364 = vunpack.c.h.b16 %v175
    %v365 = vpack.c.b16 %v285, %v281
    %v366 = vpack.c.b16 %v286, %v282
    %v367 = vpack.c.b16 %v287, %v283
    %v368 = vpack.c.b16 %v288, %v284
    %v369 = vpack.c.b16 %v293, %v289
    %v370 = vpack.c.b16 %v294, %v290
    %v371 = vpack.c.b16 %v295, %v291
    %v372 = vpack.c.b16 %v296, %v292
    %v373 = vpack.c.b16 %v301, %v297
    %v374 = vpack.c.b16 %v302, %v298
    %v375 = vpack.c.b16 %v303, %v299
    %v376 = vpack.c.b16 %v304, %v300
    %v377 = vpack.c.b16 %v309, %v305
    %v378 = vpack.c.b16 %v310, %v306
    %v379 = vpack.c.b16 %v311, %v307
    %v380 = vpack.c.b16 %v312, %v308
    %v381 = vpack.c.b16 %v317, %v313
    %v382 = vpack.c.b16 %v318, %v314
    %v383 = vpack.c.b16 %v319, %v315
    %v384 = vpack.c.b16 %v320, %v316
    %v385 = vpack.c.b16 %v325, %v321
    %v386 = vpack.c.b16 %v326, %v322
    %v387 = vpack.c.b16 %v327, %v323
    %v388 = vpack.c.b16 %v328, %v324
    %v389 = vpack.c.b16 %v333, %v329
    %v390 = vpack.c.b16 %v334, %v330
    %v391 = vpack.c.b16 %v335, %v331
    %v392 = vpack.c.b16 %v336, %v332
    %v393 = vpack.c.b16 %v341, %v337
    %v394 = vpack.c.b16 %v342, %v338
    %v395 = vpack.c.b16 %v343, %v339
    %v396 = vpack.c.b16 %v344, %v340
    %v397 = vpack.c.b16 %v349, %v345
    %v398 = vpack.c.b16 %v350, %v346
    %v399 = vpack.c.b16 %v351, %v347
    %v400 = vpack.c.b16 %v352, %v348
    %v401 = vpack.c.b16 %v357, %v353
    %v402 = vpack.c.b16 %v358, %v354
    %v403 = vpack.c.b16 %v359, %v355
    %v404 = vpack.c.b16 %v360, %v356
    %v405 = vpack.c.b16 %v361, %v361
    %v406 = vpack.c.b16 %v362, %v362
    %v407 = vpack.c.b16 %v363, %v363
    %v408 = vpack.c.b16 %v364, %v364
    %vm449 = vcmask 326656
    %v451 = vsel %vm449, %v229, 0
    %vm453 = vcmask 1043456
    %v455 = vsel %vm453, %v405, 0
    %v458 = vsel %vm453, %v406, 0
    %v461 = vsel %vm453, %v407, 0
    %v464 = vsel %vm453, %v408, 0
    %466 = vmatpush.bf16.msra.mxu0 %v393
    %467 = vmatpush.bf16.msra.mxu0 %v389
    %468 = vmatpush.bf16.msra.mxu0 %v385
    %469 = vmatpush.bf16.msra.mxu0 %v381
    %470 = vmatpush.bf16.msra.mxu0 %v377
    %471 = vmatpush.bf16.msra.mxu0 %v373
    %472 = vmatpush.bf16.msra.mxu0 %v369
    %473 = vmatpush.bf16.msra.mxu0 %v365
    %474 = vmatmul.bf16.gmra.mxu0 %v228
    %v475 = vpop.f32.mrf.mxu0
    %v476 = vadd.f32 %v231, %v475
    %v477 = vpop.f32.mrf.mxu0
    %478 = vdwg.mxu0
    %479 = vmatpush.bf16.msra.mxu0 0
    %480 = vmatpush.bf16.msra.mxu0 0
    %481 = vmatpush.bf16.msra.mxu0 0
    %482 = vmatpush.bf16.msra.mxu0 0
    %483 = vmatpush.bf16.msra.mxu0 0
    %484 = vmatpush.bf16.msra.mxu0 %v455
    %485 = vmatpush.bf16.msra.mxu0 %v401
    %486 = vmatpush.bf16.msra.mxu0 %v397
    %487 = vmatmul.bf16.gmra.mxu0 %v451
    %v488 = vpop.f32.mrf.mxu0
    %v489 = vadd.f32 %v476, %v488
    %v490 = vpop.f32.mrf.mxu0
    %491 = vdwg.mxu0
    %492 = vmatpush.bf16.msra.mxu0 %v394
    %493 = vmatpush.bf16.msra.mxu0 %v390
    %494 = vmatpush.bf16.msra.mxu0 %v386
    %495 = vmatpush.bf16.msra.mxu0 %v382
    %496 = vmatpush.bf16.msra.mxu0 %v378
    %497 = vmatpush.bf16.msra.mxu0 %v374
    %498 = vmatpush.bf16.msra.mxu0 %v370
    %499 = vmatpush.bf16.msra.mxu0 %v366
    %500 = vmatmul.bf16.gmra.mxu0 %v228
    %v501 = vpop.f32.mrf.mxu0
    %v502 = vadd.f32 %v232, %v501
    %v503 = vpop.f32.mrf.mxu0
    %504 = vdwg.mxu0
    %505 = vmatpush.bf16.msra.mxu0 0
    %506 = vmatpush.bf16.msra.mxu0 0
    %507 = vmatpush.bf16.msra.mxu0 0
    %508 = vmatpush.bf16.msra.mxu0 0
    %509 = vmatpush.bf16.msra.mxu0 0
    %510 = vmatpush.bf16.msra.mxu0 %v458
    %511 = vmatpush.bf16.msra.mxu0 %v402
    %512 = vmatpush.bf16.msra.mxu0 %v398
    %513 = vmatmul.bf16.gmra.mxu0 %v451
    %v514 = vpop.f32.mrf.mxu0
    %v515 = vadd.f32 %v502, %v514
    %v516 = vpop.f32.mrf.mxu0
    %517 = vdwg.mxu0
    %518 = vmatpush.bf16.msra.mxu0 %v395
    %519 = vmatpush.bf16.msra.mxu0 %v391
    %520 = vmatpush.bf16.msra.mxu0 %v387
    %521 = vmatpush.bf16.msra.mxu0 %v383
    %522 = vmatpush.bf16.msra.mxu0 %v379
    %523 = vmatpush.bf16.msra.mxu0 %v375
    %524 = vmatpush.bf16.msra.mxu0 %v371
    %525 = vmatpush.bf16.msra.mxu0 %v367
    %526 = vmatmul.bf16.gmra.mxu0 %v228
    %v527 = vpop.f32.mrf.mxu0
    %v528 = vadd.f32 %v233, %v527
    %v529 = vpop.f32.mrf.mxu0
    %530 = vdwg.mxu0
    %531 = vmatpush.bf16.msra.mxu0 0
    %532 = vmatpush.bf16.msra.mxu0 0
    %533 = vmatpush.bf16.msra.mxu0 0
    %534 = vmatpush.bf16.msra.mxu0 0
    %535 = vmatpush.bf16.msra.mxu0 0
    %536 = vmatpush.bf16.msra.mxu0 %v461
    %537 = vmatpush.bf16.msra.mxu0 %v403
    %538 = vmatpush.bf16.msra.mxu0 %v399
    %539 = vmatmul.bf16.gmra.mxu0 %v451
    %v540 = vpop.f32.mrf.mxu0
    %v541 = vadd.f32 %v528, %v540
    %v542 = vpop.f32.mrf.mxu0
    %543 = vdwg.mxu0
    %544 = vmatpush.bf16.msra.mxu0 %v396
    %545 = vmatpush.bf16.msra.mxu0 %v392
    %546 = vmatpush.bf16.msra.mxu0 %v388
    %547 = vmatpush.bf16.msra.mxu0 %v384
    %548 = vmatpush.bf16.msra.mxu0 %v380
    %549 = vmatpush.bf16.msra.mxu0 %v376
    %550 = vmatpush.bf16.msra.mxu0 %v372
    %551 = vmatpush.bf16.msra.mxu0 %v368
    %552 = vmatmul.bf16.gmra.mxu0 %v228
    %v553 = vpop.f32.mrf.mxu0
    %v554 = vadd.f32 %v234, %v553
    %v555 = vpop.f32.mrf.mxu0
    %556 = vdwg.mxu0
    %557 = vmatpush.bf16.msra.mxu0 0
    %558 = vmatpush.bf16.msra.mxu0 0
    %559 = vmatpush.bf16.msra.mxu0 0
    %560 = vmatpush.bf16.msra.mxu0 0
    %561 = vmatpush.bf16.msra.mxu0 0
    %562 = vmatpush.bf16.msra.mxu0 %v464
    %563 = vmatpush.bf16.msra.mxu0 %v404
    %564 = vmatpush.bf16.msra.mxu0 %v400
    %565 = vmatmul.bf16.gmra.mxu0 %v451
    %v566 = vpop.f32.mrf.mxu0
    %v567 = vadd.f32 %v554, %v566
    %v568 = vpop.f32.mrf.mxu0
    %569 = vdwg.mxu0
    %v570 = vmax.f32 %v489, %v541
    %v571 = vmax.f32 %v515, %v567
    %v572 = vmax.f32 %v570, %v571
    %v573 = vmax.f32 %v572, 0.0
    %574 = vst [vmem:[#allocation2] sm:$0xff] %v573
    %v575 = vld [vmem:[%s0] sm:$0xff]
    %v576 = vld [vmem:[%s0 + $0x8] sm:$0xff]
    %v577 = vpack.c.bf16 %v575, %v575
    %v578 = vpack.c.bf16 %v576, %v576
    %581 = vrot.lane.b32.xlu0 %v577, 72
    %v582 = vpop.permute.xlu0 %581
    %583 = vrot.lane.b32.xlu0 %v578, 72
    %v584 = vpop.permute.xlu0 %583
    %vm585 = vcmask 588800
    %v586 = vsel %vm585, %v582, %v584
    %v589 = vsel %vm449, %v584, 0
    %591 = vmatpush.bf16.msra.mxu0 %v393
    %592 = vmatpush.bf16.msra.mxu0 %v389
    %593 = vmatpush.bf16.msra.mxu0 %v385
    %594 = vmatpush.bf16.msra.mxu0 %v381
    %595 = vmatpush.bf16.msra.mxu0 %v377
    %596 = vmatpush.bf16.msra.mxu0 %v373
    %597 = vmatpush.bf16.msra.mxu0 %v369
    %598 = vmatpush.bf16.msra.mxu0 %v365
    %599 = vmatmul.bf16.gmra.mxu0 %v586
    %v600 = vpop.f32.mrf.mxu0
    %v601 = vadd.f32 %v231, %v600
    %v602 = vpop.f32.mrf.mxu0
    %603 = vdwg.mxu0
    %604 = vmatpush.bf16.msra.mxu0 0
    %605 = vmatpush.bf16.msra.mxu0 0
    %606 = vmatpush.bf16.msra.mxu0 0
    %607 = vmatpush.bf16.msra.mxu0 0
    %608 = vmatpush.bf16.msra.mxu0 0
    %609 = vmatpush.bf16.msra.mxu0 %v455
    %610 = vmatpush.bf16.msra.mxu0 %v401
    %611 = vmatpush.bf16.msra.mxu0 %v397
    %612 = vmatmul.bf16.gmra.mxu0 %v589
    %v613 = vpop.f32.mrf.mxu0
    %v614 = vadd.f32 %v601, %v613
    %v615 = vpop.f32.mrf.mxu0
    %616 = vdwg.mxu0
    %617 = vmatpush.bf16.msra.mxu0 %v394
    %618 = vmatpush.bf16.msra.mxu0 %v390
    %619 = vmatpush.bf16.msra.mxu0 %v386
    %620 = vmatpush.bf16.msra.mxu0 %v382
    %621 = vmatpush.bf16.msra.mxu0 %v378
    %622 = vmatpush.bf16.msra.mxu0 %v374
    %623 = vmatpush.bf16.msra.mxu0 %v370
    %624 = vmatpush.bf16.msra.mxu0 %v366
    %625 = vmatmul.bf16.gmra.mxu0 %v586
    %v626 = vpop.f32.mrf.mxu0
    %v627 = vadd.f32 %v232, %v626
    %v628 = vpop.f32.mrf.mxu0
    %629 = vdwg.mxu0
    %630 = vmatpush.bf16.msra.mxu0 0
    %631 = vmatpush.bf16.msra.mxu0 0
    %632 = vmatpush.bf16.msra.mxu0 0
    %633 = vmatpush.bf16.msra.mxu0 0
    %634 = vmatpush.bf16.msra.mxu0 0
    %635 = vmatpush.bf16.msra.mxu0 %v458
    %636 = vmatpush.bf16.msra.mxu0 %v402
    %637 = vmatpush.bf16.msra.mxu0 %v398
    %638 = vmatmul.bf16.gmra.mxu0 %v589
    %v639 = vpop.f32.mrf.mxu0
    %v640 = vadd.f32 %v627, %v639
    %v641 = vpop.f32.mrf.mxu0
    %642 = vdwg.mxu0
    %643 = vmatpush.bf16.msra.mxu0 %v395
    %644 = vmatpush.bf16.msra.mxu0 %v391
    %645 = vmatpush.bf16.msra.mxu0 %v387
    %646 = vmatpush.bf16.msra.mxu0 %v383
    %647 = vmatpush.bf16.msra.mxu0 %v379
    %648 = vmatpush.bf16.msra.mxu0 %v375
    %649 = vmatpush.bf16.msra.mxu0 %v371
    %650 = vmatpush.bf16.msra.mxu0 %v367
    %651 = vmatmul.bf16.gmra.mxu0 %v586
    %v652 = vpop.f32.mrf.mxu0
    %v653 = vadd.f32 %v233, %v652
    %v654 = vpop.f32.mrf.mxu0
    %655 = vdwg.mxu0
    %656 = vmatpush.bf16.msra.mxu0 0
    %657 = vmatpush.bf16.msra.mxu0 0
    %658 = vmatpush.bf16.msra.mxu0 0
    %659 = vmatpush.bf16.msra.mxu0 0
    %660 = vmatpush.bf16.msra.mxu0 0
    %661 = vmatpush.bf16.msra.mxu0 %v461
    %662 = vmatpush.bf16.msra.mxu0 %v403
    %663 = vmatpush.bf16.msra.mxu0 %v399
    %664 = vmatmul.bf16.gmra.mxu0 %v589
    %v665 = vpop.f32.mrf.mxu0
    %v666 = vadd.f32 %v653, %v665
    %v667 = vpop.f32.mrf.mxu0
    %668 = vdwg.mxu0
    %669 = vmatpush.bf16.msra.mxu0 %v396
    %670 = vmatpush.bf16.msra.mxu0 %v392
    %671 = vmatpush.bf16.msra.mxu0 %v388
    %672 = vmatpush.bf16.msra.mxu0 %v384
    %673 = vmatpush.bf16.msra.mxu0 %v380
    %674 = vmatpush.bf16.msra.mxu0 %v376
    %675 = vmatpush.bf16.msra.mxu0 %v372
    %676 = vmatpush.bf16.msra.mxu0 %v368
    %677 = vmatmul.bf16.gmra.mxu0 %v586
    %v678 = vpop.f32.mrf.mxu0
    %v679 = vadd.f32 %v234, %v678
    %v680 = vpop.f32.mrf.mxu0
    %681 = vdwg.mxu0
    %682 = vmatpush.bf16.msra.mxu0 0
    %683 = vmatpush.bf16.msra.mxu0 0
    %684 = vmatpush.bf16.msra.mxu0 0
    %685 = vmatpush.bf16.msra.mxu0 0
    %686 = vmatpush.bf16.msra.mxu0 0
    %687 = vmatpush.bf16.msra.mxu0 %v464
    %688 = vmatpush.bf16.msra.mxu0 %v404
    %689 = vmatpush.bf16.msra.mxu0 %v400
    %690 = vmatmul.bf16.gmra.mxu0 %v589
    %v691 = vpop.f32.mrf.mxu0
    %v692 = vadd.f32 %v679, %v691
    %v693 = vpop.f32.mrf.mxu0
    %694 = vdwg.mxu0
    %v695 = vmax.f32 %v614, %v666
    %v696 = vmax.f32 %v640, %v692
    %v697 = vmax.f32 %v695, %v696
    %v698 = vmax.f32 %v697, 0.0
    %699 = vst [vmem:[#allocation2 + $0x8] sm:$0xff] %v698
    %v700 = vld [vmem:[%s0] sm:$0xff]
    %v701 = vld [vmem:[%s0 + $0x8] sm:$0xff]
    %v702 = vld [vmem:[%s0 + $0x10] sm:$0xff]
    %v703 = vpack.c.bf16 %v700, %v700
    %v704 = vpack.c.bf16 %v701, %v701
    %v705 = vpack.c.bf16 %v702, %v702
    %709 = vrot.lane.b32.xlu0 %v703, 16
    %v710 = vpop.permute.xlu0 %709
    %711 = vrot.lane.b32.xlu0 %v704, 16
    %v712 = vpop.permute.xlu0 %711
    %713 = vrot.lane.b32.xlu0 %v705, 16
    %v714 = vpop.permute.xlu0 %713
    %vm715 = vcmask 130048
    %v716 = vsel %vm715, %v710, %v712
    %v717 = vsel %vm715, %v712, %v714
    %v720 = vsel %vm449, %v717, 0
    %722 = vmatpush.bf16.msra.mxu0 %v393
    %723 = vmatpush.bf16.msra.mxu0 %v389
    %724 = vmatpush.bf16.msra.mxu0 %v385
    %725 = vmatpush.bf16.msra.mxu0 %v381
    %726 = vmatpush.bf16.msra.mxu0 %v377
    %727 = vmatpush.bf16.msra.mxu0 %v373
    %728 = vmatpush.bf16.msra.mxu0 %v369
    %729 = vmatpush.bf16.msra.mxu0 %v365
    %730 = vmatmul.bf16.gmra.mxu0 %v716
    %v731 = vpop.f32.mrf.mxu0
    %v732 = vadd.f32 %v231, %v731
    %v733 = vpop.f32.mrf.mxu0
    %734 = vdwg.mxu0
    %735 = vmatpush.bf16.msra.mxu0 0
    %736 = vmatpush.bf16.msra.mxu0 0
    %737 = vmatpush.bf16.msra.mxu0 0
    %738 = vmatpush.bf16.msra.mxu0 0
    %739 = vmatpush.bf16.msra.mxu0 0
    %740 = vmatpush.bf16.msra.mxu0 %v455
    %741 = vmatpush.bf16.msra.mxu0 %v401
    %742 = vmatpush.bf16.msra.mxu0 %v397
    %743 = vmatmul.bf16.gmra.mxu0 %v720
    %v744 = vpop.f32.mrf.mxu0
    %v745 = vadd.f32 %v732, %v744
    %v746 = vpop.f32.mrf.mxu0
    %747 = vdwg.mxu0
    %748 = vmatpush.bf16.msra.mxu0 %v394
    %749 = vmatpush.bf16.msra.mxu0 %v390
    %750 = vmatpush.bf16.msra.mxu0 %v386
    %751 = vmatpush.bf16.msra.mxu0 %v382
    %752 = vmatpush.bf16.msra.mxu0 %v378
    %753 = vmatpush.bf16.msra.mxu0 %v374
    %754 = vmatpush.bf16.msra.mxu0 %v370
    %755 = vmatpush.bf16.msra.mxu0 %v366
    %756 = vmatmul.bf16.gmra.mxu0 %v716
    %v757 = vpop.f32.mrf.mxu0
    %v758 = vadd.f32 %v232, %v757
    %v759 = vpop.f32.mrf.mxu0
    %760 = vdwg.mxu0
    %761 = vmatpush.bf16.msra.mxu0 0
    %762 = vmatpush.bf16.msra.mxu0 0
    %763 = vmatpush.bf16.msra.mxu0 0
    %764 = vmatpush.bf16.msra.mxu0 0
    %765 = vmatpush.bf16.msra.mxu0 0
    %766 = vmatpush.bf16.msra.mxu0 %v458
    %767 = vmatpush.bf16.msra.mxu0 %v402
    %768 = vmatpush.bf16.msra.mxu0 %v398
    %769 = vmatmul.bf16.gmra.mxu0 %v720
    %v770 = vpop.f32.mrf.mxu0
    %v771 = vadd.f32 %v758, %v770
    %v772 = vpop.f32.mrf.mxu0
    %773 = vdwg.mxu0
    %774 = vmatpush.bf16.msra.mxu0 %v395
    %775 = vmatpush.bf16.msra.mxu0 %v391
    %776 = vmatpush.bf16.msra.mxu0 %v387
    %777 = vmatpush.bf16.msra.mxu0 %v383
    %778 = vmatpush.bf16.msra.mxu0 %v379
    %779 = vmatpush.bf16.msra.mxu0 %v375
    %780 = vmatpush.bf16.msra.mxu0 %v371
    %781 = vmatpush.bf16.msra.mxu0 %v367
    %782 = vmatmul.bf16.gmra.mxu0 %v716
    %v783 = vpop.f32.mrf.mxu0
    %v784 = vadd.f32 %v233, %v783
    %v785 = vpop.f32.mrf.mxu0
    %786 = vdwg.mxu0
    %787 = vmatpush.bf16.msra.mxu0 0
    %788 = vmatpush.bf16.msra.mxu0 0
    %789 = vmatpush.bf16.msra.mxu0 0
    %790 = vmatpush.bf16.msra.mxu0 0
    %791 = vmatpush.bf16.msra.mxu0 0
    %792 = vmatpush.bf16.msra.mxu0 %v461
    %793 = vmatpush.bf16.msra.mxu0 %v403
    %794 = vmatpush.bf16.msra.mxu0 %v399
    %795 = vmatmul.bf16.gmra.mxu0 %v720
    %v796 = vpop.f32.mrf.mxu0
    %v797 = vadd.f32 %v784, %v796
    %v798 = vpop.f32.mrf.mxu0
    %799 = vdwg.mxu0
    %800 = vmatpush.bf16.msra.mxu0 %v396
    %801 = vmatpush.bf16.msra.mxu0 %v392
    %802 = vmatpush.bf16.msra.mxu0 %v388
    %803 = vmatpush.bf16.msra.mxu0 %v384
    %804 = vmatpush.bf16.msra.mxu0 %v380
    %805 = vmatpush.bf16.msra.mxu0 %v376
    %806 = vmatpush.bf16.msra.mxu0 %v372
    %807 = vmatpush.bf16.msra.mxu0 %v368
    %808 = vmatmul.bf16.gmra.mxu0 %v716
    %v809 = vpop.f32.mrf.mxu0
    %v810 = vadd.f32 %v234, %v809
    %v811 = vpop.f32.mrf.mxu0
    %812 = vdwg.mxu0
    %813 = vmatpush.bf16.msra.mxu0 0
    %814 = vmatpush.bf16.msra.mxu0 0
    %815 = vmatpush.bf16.msra.mxu0 0
    %816 = vmatpush.bf16.msra.mxu0 0
    %817 = vmatpush.bf16.msra.mxu0 0
    %818 = vmatpush.bf16.msra.mxu0 %v464
    %819 = vmatpush.bf16.msra.mxu0 %v404
    %820 = vmatpush.bf16.msra.mxu0 %v400
    %821 = vmatmul.bf16.gmra.mxu0 %v720
    %v822 = vpop.f32.mrf.mxu0
    %v823 = vadd.f32 %v810, %v822
    %v824 = vpop.f32.mrf.mxu0
    %825 = vdwg.mxu0
    %v826 = vmax.f32 %v745, %v797
    %v827 = vmax.f32 %v771, %v823
    %v828 = vmax.f32 %v826, %v827
    %v829 = vmax.f32 %v828, 0.0
    %830 = vst [vmem:[#allocation2 + $0x10] sm:$0xff] %v829
    %v831 = vld [vmem:[%s0 + $0x8] sm:$0xff]
    %v832 = vld [vmem:[%s0 + $0x10] sm:$0xff]
    %v833 = vpack.c.bf16 %v831, %v831
    %v834 = vpack.c.bf16 %v832, %v832
    %837 = vrot.lane.b32.xlu0 %v833, 88
    %v838 = vpop.permute.xlu0 %837
    %839 = vrot.lane.b32.xlu0 %v834, 88
    %v840 = vpop.permute.xlu0 %839
    %vm841 = vcmask 719872
    %v842 = vsel %vm841, %v838, %v840
    %v845 = vsel %vm449, %v840, 0
    %847 = vmatpush.bf16.msra.mxu0 %v393
    %848 = vmatpush.bf16.msra.mxu0 %v389
    %849 = vmatpush.bf16.msra.mxu0 %v385
    %850 = vmatpush.bf16.msra.mxu0 %v381
    %851 = vmatpush.bf16.msra.mxu0 %v377
    %852 = vmatpush.bf16.msra.mxu0 %v373
    %853 = vmatpush.bf16.msra.mxu0 %v369
    %854 = vmatpush.bf16.msra.mxu0 %v365
    %855 = vmatmul.bf16.gmra.mxu0 %v842
    %v856 = vpop.f32.mrf.mxu0
    %v857 = vadd.f32 %v231, %v856
    %v858 = vpop.f32.mrf.mxu0
    %859 = vdwg.mxu0
    %860 = vmatpush.bf16.msra.mxu0 0
    %861 = vmatpush.bf16.msra.mxu0 0
    %862 = vmatpush.bf16.msra.mxu0 0
    %863 = vmatpush.bf16.msra.mxu0 0
    %864 = vmatpush.bf16.msra.mxu0 0
    %865 = vmatpush.bf16.msra.mxu0 %v455
    %866 = vmatpush.bf16.msra.mxu0 %v401
    %867 = vmatpush.bf16.msra.mxu0 %v397
    %868 = vmatmul.bf16.gmra.mxu0 %v845
    %v869 = vpop.f32.mrf.mxu0
    %v870 = vadd.f32 %v857, %v869
    %v871 = vpop.f32.mrf.mxu0
    %872 = vdwg.mxu0
    %873 = vmatpush.bf16.msra.mxu0 %v394
    %874 = vmatpush.bf16.msra.mxu0 %v390
    %875 = vmatpush.bf16.msra.mxu0 %v386
    %876 = vmatpush.bf16.msra.mxu0 %v382
    %877 = vmatpush.bf16.msra.mxu0 %v378
    %878 = vmatpush.bf16.msra.mxu0 %v374
    %879 = vmatpush.bf16.msra.mxu0 %v370
    %880 = vmatpush.bf16.msra.mxu0 %v366
    %881 = vmatmul.bf16.gmra.mxu0 %v842
    %v882 = vpop.f32.mrf.mxu0
    %v883 = vadd.f32 %v232, %v882
    %v884 = vpop.f32.mrf.mxu0
    %885 = vdwg.mxu0
    %886 = vmatpush.bf16.msra.mxu0 0
    %887 = vmatpush.bf16.msra.mxu0 0
    %888 = vmatpush.bf16.msra.mxu0 0
    %889 = vmatpush.bf16.msra.mxu0 0
    %890 = vmatpush.bf16.msra.mxu0 0
    %891 = vmatpush.bf16.msra.mxu0 %v458
    %892 = vmatpush.bf16.msra.mxu0 %v402
    %893 = vmatpush.bf16.msra.mxu0 %v398
    %894 = vmatmul.bf16.gmra.mxu0 %v845
    %v895 = vpop.f32.mrf.mxu0
    %v896 = vadd.f32 %v883, %v895
    %v897 = vpop.f32.mrf.mxu0
    %898 = vdwg.mxu0
    %899 = vmatpush.bf16.msra.mxu0 %v395
    %900 = vmatpush.bf16.msra.mxu0 %v391
    %901 = vmatpush.bf16.msra.mxu0 %v387
    %902 = vmatpush.bf16.msra.mxu0 %v383
    %903 = vmatpush.bf16.msra.mxu0 %v379
    %904 = vmatpush.bf16.msra.mxu0 %v375
    %905 = vmatpush.bf16.msra.mxu0 %v371
    %906 = vmatpush.bf16.msra.mxu0 %v367
    %907 = vmatmul.bf16.gmra.mxu0 %v842
    %v908 = vpop.f32.mrf.mxu0
    %v909 = vadd.f32 %v233, %v908
    %v910 = vpop.f32.mrf.mxu0
    %911 = vdwg.mxu0
    %912 = vmatpush.bf16.msra.mxu0 0
    %913 = vmatpush.bf16.msra.mxu0 0
    %914 = vmatpush.bf16.msra.mxu0 0
    %915 = vmatpush.bf16.msra.mxu0 0
    %916 = vmatpush.bf16.msra.mxu0 0
    %917 = vmatpush.bf16.msra.mxu0 %v461
    %918 = vmatpush.bf16.msra.mxu0 %v403
    %919 = vmatpush.bf16.msra.mxu0 %v399
    %920 = vmatmul.bf16.gmra.mxu0 %v845
    %v921 = vpop.f32.mrf.mxu0
    %v922 = vadd.f32 %v909, %v921
    %v923 = vpop.f32.mrf.mxu0
    %924 = vdwg.mxu0
    %925 = vmatpush.bf16.msra.mxu0 %v396
    %926 = vmatpush.bf16.msra.mxu0 %v392
    %927 = vmatpush.bf16.msra.mxu0 %v388
    %928 = vmatpush.bf16.msra.mxu0 %v384
    %929 = vmatpush.bf16.msra.mxu0 %v380
    %930 = vmatpush.bf16.msra.mxu0 %v376
    %931 = vmatpush.bf16.msra.mxu0 %v372
    %932 = vmatpush.bf16.msra.mxu0 %v368
    %933 = vmatmul.bf16.gmra.mxu0 %v842
    %v934 = vpop.f32.mrf.mxu0
    %v935 = vadd.f32 %v234, %v934
    %v936 = vpop.f32.mrf.mxu0
    %937 = vdwg.mxu0
    %938 = vmatpush.bf16.msra.mxu0 0
    %939 = vmatpush.bf16.msra.mxu0 0
    %940 = vmatpush.bf16.msra.mxu0 0
    %941 = vmatpush.bf16.msra.mxu0 0
    %942 = vmatpush.bf16.msra.mxu0 0
    %943 = vmatpush.bf16.msra.mxu0 %v464
    %944 = vmatpush.bf16.msra.mxu0 %v404
    %945 = vmatpush.bf16.msra.mxu0 %v400
    %946 = vmatmul.bf16.gmra.mxu0 %v845
    %v947 = vpop.f32.mrf.mxu0
    %v948 = vadd.f32 %v935, %v947
    %v949 = vpop.f32.mrf.mxu0
    %950 = vdwg.mxu0
    %v951 = vmax.f32 %v870, %v922
    %v952 = vmax.f32 %v896, %v948
    %v953 = vmax.f32 %v951, %v952
    %v954 = vmax.f32 %v953, 0.0
    %955 = vst [vmem:[#allocation2 + $0x18] sm:$0xff] %v954
    %v956 = vld [vmem:[%s0 + $0x8] sm:$0xff]
    %v957 = vld [vmem:[%s0 + $0x10] sm:$0xff]
    %v958 = vld [vmem:[%s0 + $0x18] sm:$0xff]
    %v959 = vpack.c.bf16 %v956, %v956
    %v960 = vpack.c.bf16 %v957, %v957
    %v961 = vpack.c.bf16 %v958, %v958
    %965 = vrot.lane.b32.xlu0 %v959, 32
    %v966 = vpop.permute.xlu0 %965
    %967 = vrot.lane.b32.xlu0 %v960, 32
    %v968 = vpop.permute.xlu0 %967
    %969 = vrot.lane.b32.xlu0 %v961, 32
    %v970 = vpop.permute.xlu0 %969
    %vm971 = vcmask 261120
    %v972 = vsel %vm971, %v966, %v968
    %v973 = vsel %vm971, %v968, %v970
    %v976 = vsel %vm449, %v973, 0
    %978 = vmatpush.bf16.msra.mxu0 %v393
    %979 = vmatpush.bf16.msra.mxu0 %v389
    %980 = vmatpush.bf16.msra.mxu0 %v385
    %981 = vmatpush.bf16.msra.mxu0 %v381
    %982 = vmatpush.bf16.msra.mxu0 %v377
    %983 = vmatpush.bf16.msra.mxu0 %v373
    %984 = vmatpush.bf16.msra.mxu0 %v369
    %985 = vmatpush.bf16.msra.mxu0 %v365
    %986 = vmatmul.bf16.gmra.mxu0 %v972
    %v987 = vpop.f32.mrf.mxu0
    %v988 = vadd.f32 %v231, %v987
    %v989 = vpop.f32.mrf.mxu0
    %990 = vdwg.mxu0
    %991 = vmatpush.bf16.msra.mxu0 0
    %992 = vmatpush.bf16.msra.mxu0 0
    %993 = vmatpush.bf16.msra.mxu0 0
    %994 = vmatpush.bf16.msra.mxu0 0
    %995 = vmatpush.bf16.msra.mxu0 0
    %996 = vmatpush.bf16.msra.mxu0 %v455
    %997 = vmatpush.bf16.msra.mxu0 %v401
    %998 = vmatpush.bf16.msra.mxu0 %v397
    %999 = vmatmul.bf16.gmra.mxu0 %v976
    %v1000 = vpop.f32.mrf.mxu0
    %v1001 = vadd.f32 %v988, %v1000
    %v1002 = vpop.f32.mrf.mxu0
    %1003 = vdwg.mxu0
    %1004 = vmatpush.bf16.msra.mxu0 %v394
    %1005 = vmatpush.bf16.msra.mxu0 %v390
    %1006 = vmatpush.bf16.msra.mxu0 %v386
    %1007 = vmatpush.bf16.msra.mxu0 %v382
    %1008 = vmatpush.bf16.msra.mxu0 %v378
    %1009 = vmatpush.bf16.msra.mxu0 %v374
    %1010 = vmatpush.bf16.msra.mxu0 %v370
    %1011 = vmatpush.bf16.msra.mxu0 %v366
    %1012 = vmatmul.bf16.gmra.mxu0 %v972
    %v1013 = vpop.f32.mrf.mxu0
    %v1014 = vadd.f32 %v232, %v1013
    %v1015 = vpop.f32.mrf.mxu0
    %1016 = vdwg.mxu0
    %1017 = vmatpush.bf16.msra.mxu0 0
    %1018 = vmatpush.bf16.msra.mxu0 0
    %1019 = vmatpush.bf16.msra.mxu0 0
    %1020 = vmatpush.bf16.msra.mxu0 0
    %1021 = vmatpush.bf16.msra.mxu0 0
    %1022 = vmatpush.bf16.msra.mxu0 %v458
    %1023 = vmatpush.bf16.msra.mxu0 %v402
    %1024 = vmatpush.bf16.msra.mxu0 %v398
    %1025 = vmatmul.bf16.gmra.mxu0 %v976
    %v1026 = vpop.f32.mrf.mxu0
    %v1027 = vadd.f32 %v1014, %v1026
    %v1028 = vpop.f32.mrf.mxu0
    %1029 = vdwg.mxu0
    %1030 = vmatpush.bf16.msra.mxu0 %v395
    %1031 = vmatpush.bf16.msra.mxu0 %v391
    %1032 = vmatpush.bf16.msra.mxu0 %v387
    %1033 = vmatpush.bf16.msra.mxu0 %v383
    %1034 = vmatpush.bf16.msra.mxu0 %v379
    %1035 = vmatpush.bf16.msra.mxu0 %v375
    %1036 = vmatpush.bf16.msra.mxu0 %v371
    %1037 = vmatpush.bf16.msra.mxu0 %v367
    %1038 = vmatmul.bf16.gmra.mxu0 %v972
    %v1039 = vpop.f32.mrf.mxu0
    %v1040 = vadd.f32 %v233, %v1039
    %v1041 = vpop.f32.mrf.mxu0
    %1042 = vdwg.mxu0
    %1043 = vmatpush.bf16.msra.mxu0 0
    %1044 = vmatpush.bf16.msra.mxu0 0
    %1045 = vmatpush.bf16.msra.mxu0 0
    %1046 = vmatpush.bf16.msra.mxu0 0
    %1047 = vmatpush.bf16.msra.mxu0 0
    %1048 = vmatpush.bf16.msra.mxu0 %v461
    %1049 = vmatpush.bf16.msra.mxu0 %v403
    %1050 = vmatpush.bf16.msra.mxu0 %v399
    %1051 = vmatmul.bf16.gmra.mxu0 %v976
    %v1052 = vpop.f32.mrf.mxu0
    %v1053 = vadd.f32 %v1040, %v1052
    %v1054 = vpop.f32.mrf.mxu0
    %1055 = vdwg.mxu0
    %1056 = vmatpush.bf16.msra.mxu0 %v396
    %1057 = vmatpush.bf16.msra.mxu0 %v392
    %1058 = vmatpush.bf16.msra.mxu0 %v388
    %1059 = vmatpush.bf16.msra.mxu0 %v384
    %1060 = vmatpush.bf16.msra.mxu0 %v380
    %1061 = vmatpush.bf16.msra.mxu0 %v376
    %1062 = vmatpush.bf16.msra.mxu0 %v372
    %1063 = vmatpush.bf16.msra.mxu0 %v368
    %1064 = vmatmul.bf16.gmra.mxu0 %v972
    %v1065 = vpop.f32.mrf.mxu0
    %v1066 = vadd.f32 %v234, %v1065
    %v1067 = vpop.f32.mrf.mxu0
    %1068 = vdwg.mxu0
    %1069 = vmatpush.bf16.msra.mxu0 0
    %1070 = vmatpush.bf16.msra.mxu0 0
    %1071 = vmatpush.bf16.msra.mxu0 0
    %1072 = vmatpush.bf16.msra.mxu0 0
    %1073 = vmatpush.bf16.msra.mxu0 0
    %1074 = vmatpush.bf16.msra.mxu0 %v464
    %1075 = vmatpush.bf16.msra.mxu0 %v404
    %1076 = vmatpush.bf16.msra.mxu0 %v400
    %1077 = vmatmul.bf16.gmra.mxu0 %v976
    %v1078 = vpop.f32.mrf.mxu0
    %v1079 = vadd.f32 %v1066, %v1078
    %v1080 = vpop.f32.mrf.mxu0
    %1081 = vdwg.mxu0
    %v1082 = vmax.f32 %v1001, %v1053
    %v1083 = vmax.f32 %v1027, %v1079
    %v1084 = vmax.f32 %v1082, %v1083
    %v1085 = vmax.f32 %v1084, 0.0
    %1086 = vst [vmem:[#allocation2 + $0x20] sm:$0xff] %v1085
    %v1087 = vld [vmem:[%s0 + $0x10] sm:$0xff]
    %v1088 = vld [vmem:[%s0 + $0x18] sm:$0xff]
    %v1089 = vpack.c.bf16 %v1087, %v1087
    %v1090 = vpack.c.bf16 %v1088, %v1088
    %1093 = vrot.lane.b32.xlu0 %v1089, 104
    %v1094 = vpop.permute.xlu0 %1093
    %1095 = vrot.lane.b32.xlu0 %v1090, 104
    %v1096 = vpop.permute.xlu0 %1095
    %vm1097 = vcmask 850944
    %v1098 = vsel %vm1097, %v1094, %v1096
    %v1101 = vsel %vm449, %v1096, 0
    %1103 = vmatpush.bf16.msra.mxu0 %v393
    %1104 = vmatpush.bf16.msra.mxu0 %v389
    %1105 = vmatpush.bf16.msra.mxu0 %v385
    %1106 = vmatpush.bf16.msra.mxu0 %v381
    %1107 = vmatpush.bf16.msra.mxu0 %v377
    %1108 = vmatpush.bf16.msra.mxu0 %v373
    %1109 = vmatpush.bf16.msra.mxu0 %v369
    %1110 = vmatpush.bf16.msra.mxu0 %v365
    %1111 = vmatmul.bf16.gmra.mxu0 %v1098
    %v1112 = vpop.f32.mrf.mxu0
    %v1113 = vadd.f32 %v231, %v1112
    %v1114 = vpop.f32.mrf.mxu0
    %1115 = vdwg.mxu0
    %1116 = vmatpush.bf16.msra.mxu0 0
    %1117 = vmatpush.bf16.msra.mxu0 0
    %1118 = vmatpush.bf16.msra.mxu0 0
    %1119 = vmatpush.bf16.msra.mxu0 0
    %1120 = vmatpush.bf16.msra.mxu0 0
    %1121 = vmatpush.bf16.msra.mxu0 %v455
    %1122 = vmatpush.bf16.msra.mxu0 %v401
    %1123 = vmatpush.bf16.msra.mxu0 %v397
    %1124 = vmatmul.bf16.gmra.mxu0 %v1101
    %v1125 = vpop.f32.mrf.mxu0
    %v1126 = vadd.f32 %v1113, %v1125
    %v1127 = vpop.f32.mrf.mxu0
    %1128 = vdwg.mxu0
    %1129 = vmatpush.bf16.msra.mxu0 %v394
    %1130 = vmatpush.bf16.msra.mxu0 %v390
    %1131 = vmatpush.bf16.msra.mxu0 %v386
    %1132 = vmatpush.bf16.msra.mxu0 %v382
    %1133 = vmatpush.bf16.msra.mxu0 %v378
    %1134 = vmatpush.bf16.msra.mxu0 %v374
    %1135 = vmatpush.bf16.msra.mxu0 %v370
    %1136 = vmatpush.bf16.msra.mxu0 %v366
    %1137 = vmatmul.bf16.gmra.mxu0 %v1098
    %v1138 = vpop.f32.mrf.mxu0
    %v1139 = vadd.f32 %v232, %v1138
    %v1140 = vpop.f32.mrf.mxu0
    %1141 = vdwg.mxu0
    %1142 = vmatpush.bf16.msra.mxu0 0
    %1143 = vmatpush.bf16.msra.mxu0 0
    %1144 = vmatpush.bf16.msra.mxu0 0
    %1145 = vmatpush.bf16.msra.mxu0 0
    %1146 = vmatpush.bf16.msra.mxu0 0
    %1147 = vmatpush.bf16.msra.mxu0 %v458
    %1148 = vmatpush.bf16.msra.mxu0 %v402
    %1149 = vmatpush.bf16.msra.mxu0 %v398
    %1150 = vmatmul.bf16.gmra.mxu0 %v1101
    %v1151 = vpop.f32.mrf.mxu0
    %v1152 = vadd.f32 %v1139, %v1151
    %v1153 = vpop.f32.mrf.mxu0
    %1154 = vdwg.mxu0
    %1155 = vmatpush.bf16.msra.mxu0 %v395
    %1156 = vmatpush.bf16.msra.mxu0 %v391
    %1157 = vmatpush.bf16.msra.mxu0 %v387
    %1158 = vmatpush.bf16.msra.mxu0 %v383
    %1159 = vmatpush.bf16.msra.mxu0 %v379
    %1160 = vmatpush.bf16.msra.mxu0 %v375
    %1161 = vmatpush.bf16.msra.mxu0 %v371
    %1162 = vmatpush.bf16.msra.mxu0 %v367
    %1163 = vmatmul.bf16.gmra.mxu0 %v1098
    %v1164 = vpop.f32.mrf.mxu0
    %v1165 = vadd.f32 %v233, %v1164
    %v1166 = vpop.f32.mrf.mxu0
    %1167 = vdwg.mxu0
    %1168 = vmatpush.bf16.msra.mxu0 0
    %1169 = vmatpush.bf16.msra.mxu0 0
    %1170 = vmatpush.bf16.msra.mxu0 0
    %1171 = vmatpush.bf16.msra.mxu0 0
    %1172 = vmatpush.bf16.msra.mxu0 0
    %1173 = vmatpush.bf16.msra.mxu0 %v461
    %1174 = vmatpush.bf16.msra.mxu0 %v403
    %1175 = vmatpush.bf16.msra.mxu0 %v399
    %1176 = vmatmul.bf16.gmra.mxu0 %v1101
    %v1177 = vpop.f32.mrf.mxu0
    %v1178 = vadd.f32 %v1165, %v1177
    %v1179 = vpop.f32.mrf.mxu0
    %1180 = vdwg.mxu0
    %1181 = vmatpush.bf16.msra.mxu0 %v396
    %1182 = vmatpush.bf16.msra.mxu0 %v392
    %1183 = vmatpush.bf16.msra.mxu0 %v388
    %1184 = vmatpush.bf16.msra.mxu0 %v384
    %1185 = vmatpush.bf16.msra.mxu0 %v380
    %1186 = vmatpush.bf16.msra.mxu0 %v376
    %1187 = vmatpush.bf16.msra.mxu0 %v372
    %1188 = vmatpush.bf16.msra.mxu0 %v368
    %1189 = vmatmul.bf16.gmra.mxu0 %v1098
    %v1190 = vpop.f32.mrf.mxu0
    %v1191 = vadd.f32 %v234, %v1190
    %v1192 = vpop.f32.mrf.mxu0
    %1193 = vdwg.mxu0
    %1194 = vmatpush.bf16.msra.mxu0 0
    %1195 = vmatpush.bf16.msra.mxu0 0
    %1196 = vmatpush.bf16.msra.mxu0 0
    %1197 = vmatpush.bf16.msra.mxu0 0
    %1198 = vmatpush.bf16.msra.mxu0 0
    %1199 = vmatpush.bf16.msra.mxu0 %v464
    %1200 = vmatpush.bf16.msra.mxu0 %v404
    %1201 = vmatpush.bf16.msra.mxu0 %v400
    %1202 = vmatmul.bf16.gmra.mxu0 %v1101
    %v1203 = vpop.f32.mrf.mxu0
    %v1204 = vadd.f32 %v1191, %v1203
    %v1205 = vpop.f32.mrf.mxu0
    %1206 = vdwg.mxu0
    %v1207 = vmax.f32 %v1126, %v1178
    %v1208 = vmax.f32 %v1152, %v1204
    %v1209 = vmax.f32 %v1207, %v1208
    %v1210 = vmax.f32 %v1209, 0.0
    %1211 = vst [vmem:[#allocation2 + $0x28] sm:$0xff] %v1210
    %v1212 = vld [vmem:[%s0 + $0x10] sm:$0xff]
    %v1213 = vld [vmem:[%s0 + $0x18] sm:$0xff]
    %v1214 = vpack.c.bf16 %v1212, %v1212
    %v1215 = vpack.c.bf16 %v1213, %v1213
    %1218 = vrot.lane.b32.xlu0 %v1214, 48
    %v1219 = vpop.permute.xlu0 %1218
    %1220 = vrot.lane.b32.xlu0 %v1215, 48
    %v1221 = vpop.permute.xlu0 %1220
    %vm1222 = vcmask 392192
    %v1223 = vsel %vm1222, %v1219, %v1221
    %v1226 = vsel %vm449, %v1221, 0
    %1228 = vmatpush.bf16.msra.mxu0 %v393
    %1229 = vmatpush.bf16.msra.mxu0 %v389
    %1230 = vmatpush.bf16.msra.mxu0 %v385
    %1231 = vmatpush.bf16.msra.mxu0 %v381
    %1232 = vmatpush.bf16.msra.mxu0 %v377
    %1233 = vmatpush.bf16.msra.mxu0 %v373
    %1234 = vmatpush.bf16.msra.mxu0 %v369
    %1235 = vmatpush.bf16.msra.mxu0 %v365
    %1236 = vmatmul.bf16.gmra.mxu0 %v1223
    %v1237 = vpop.f32.mrf.mxu0
    %v1238 = vadd.f32 %v231, %v1237
    %v1239 = vpop.f32.mrf.mxu0
    %1240 = vdwg.mxu0
    %1241 = vmatpush.bf16.msra.mxu0 0
    %1242 = vmatpush.bf16.msra.mxu0 0
    %1243 = vmatpush.bf16.msra.mxu0 0
    %1244 = vmatpush.bf16.msra.mxu0 0
    %1245 = vmatpush.bf16.msra.mxu0 0
    %1246 = vmatpush.bf16.msra.mxu0 %v455
    %1247 = vmatpush.bf16.msra.mxu0 %v401
    %1248 = vmatpush.bf16.msra.mxu0 %v397
    %1249 = vmatmul.bf16.gmra.mxu0 %v1226
    %v1250 = vpop.f32.mrf.mxu0
    %v1251 = vadd.f32 %v1238, %v1250
    %v1252 = vpop.f32.mrf.mxu0
    %1253 = vdwg.mxu0
    %1254 = vmatpush.bf16.msra.mxu0 %v394
    %1255 = vmatpush.bf16.msra.mxu0 %v390
    %1256 = vmatpush.bf16.msra.mxu0 %v386
    %1257 = vmatpush.bf16.msra.mxu0 %v382
    %1258 = vmatpush.bf16.msra.mxu0 %v378
    %1259 = vmatpush.bf16.msra.mxu0 %v374
    %1260 = vmatpush.bf16.msra.mxu0 %v370
    %1261 = vmatpush.bf16.msra.mxu0 %v366
    %1262 = vmatmul.bf16.gmra.mxu0 %v1223
    %v1263 = vpop.f32.mrf.mxu0
    %v1264 = vadd.f32 %v232, %v1263
    %v1265 = vpop.f32.mrf.mxu0
    %1266 = vdwg.mxu0
    %1267 = vmatpush.bf16.msra.mxu0 0
    %1268 = vmatpush.bf16.msra.mxu0 0
    %1269 = vmatpush.bf16.msra.mxu0 0
    %1270 = vmatpush.bf16.msra.mxu0 0
    %1271 = vmatpush.bf16.msra.mxu0 0
    %1272 = vmatpush.bf16.msra.mxu0 %v458
    %1273 = vmatpush.bf16.msra.mxu0 %v402
    %1274 = vmatpush.bf16.msra.mxu0 %v398
    %1275 = vmatmul.bf16.gmra.mxu0 %v1226
    %v1276 = vpop.f32.mrf.mxu0
    %v1277 = vadd.f32 %v1264, %v1276
    %v1278 = vpop.f32.mrf.mxu0
    %1279 = vdwg.mxu0
    %1280 = vmatpush.bf16.msra.mxu0 %v395
    %1281 = vmatpush.bf16.msra.mxu0 %v391
    %1282 = vmatpush.bf16.msra.mxu0 %v387
    %1283 = vmatpush.bf16.msra.mxu0 %v383
    %1284 = vmatpush.bf16.msra.mxu0 %v379
    %1285 = vmatpush.bf16.msra.mxu0 %v375
    %1286 = vmatpush.bf16.msra.mxu0 %v371
    %1287 = vmatpush.bf16.msra.mxu0 %v367
    %1288 = vmatmul.bf16.gmra.mxu0 %v1223
    %v1289 = vpop.f32.mrf.mxu0
    %v1290 = vadd.f32 %v233, %v1289
    %v1291 = vpop.f32.mrf.mxu0
    %1292 = vdwg.mxu0
    %1293 = vmatpush.bf16.msra.mxu0 0
    %1294 = vmatpush.bf16.msra.mxu0 0
    %1295 = vmatpush.bf16.msra.mxu0 0
    %1296 = vmatpush.bf16.msra.mxu0 0
    %1297 = vmatpush.bf16.msra.mxu0 0
    %1298 = vmatpush.bf16.msra.mxu0 %v461
    %1299 = vmatpush.bf16.msra.mxu0 %v403
    %1300 = vmatpush.bf16.msra.mxu0 %v399
    %1301 = vmatmul.bf16.gmra.mxu0 %v1226
    %v1302 = vpop.f32.mrf.mxu0
    %v1303 = vadd.f32 %v1290, %v1302
    %v1304 = vpop.f32.mrf.mxu0
    %1305 = vdwg.mxu0
    %1306 = vmatpush.bf16.msra.mxu0 %v396
    %1307 = vmatpush.bf16.msra.mxu0 %v392
    %1308 = vmatpush.bf16.msra.mxu0 %v388
    %1309 = vmatpush.bf16.msra.mxu0 %v384
    %1310 = vmatpush.bf16.msra.mxu0 %v380
    %1311 = vmatpush.bf16.msra.mxu0 %v376
    %1312 = vmatpush.bf16.msra.mxu0 %v372
    %1313 = vmatpush.bf16.msra.mxu0 %v368
    %1314 = vmatmul.bf16.gmra.mxu0 %v1223
    %v1315 = vpop.f32.mrf.mxu0
    %v1316 = vadd.f32 %v234, %v1315
    %v1317 = vpop.f32.mrf.mxu0
    %1318 = vdwg.mxu0
    %1319 = vmatpush.bf16.msra.mxu0 0
    %1320 = vmatpush.bf16.msra.mxu0 0
    %1321 = vmatpush.bf16.msra.mxu0 0
    %1322 = vmatpush.bf16.msra.mxu0 0
    %1323 = vmatpush.bf16.msra.mxu0 0
    %1324 = vmatpush.bf16.msra.mxu0 %v464
    %1325 = vmatpush.bf16.msra.mxu0 %v404
    %1326 = vmatpush.bf16.msra.mxu0 %v400
    %1327 = vmatmul.bf16.gmra.mxu0 %v1226
    %v1328 = vpop.f32.mrf.mxu0
    %v1329 = vadd.f32 %v1316, %v1328
    %v1330 = vpop.f32.mrf.mxu0
    %1331 = vdwg.mxu0
    %v1332 = vmax.f32 %v1251, %v1303
    %v1333 = vmax.f32 %v1277, %v1329
    %v1334 = vmax.f32 %v1332, %v1333
    %v1335 = vmax.f32 %v1334, 0.0
    %1336 = vst [vmem:[#allocation2 + $0x30] sm:$0xff] %v1335
    %v1337 = vld [vmem:[%s0 + $0x18] sm:$0xff]
    %v1338 = vld [vmem:[%s0 + $0x20] sm:$0xff]
    %v1339 = vpack.c.bf16 %v1337, %v1337
    %v1340 = vpack.c.bf16 %v1338, %v1338
    %1343 = vrot.lane.b32.xlu0 %v1339, 120
    %v1344 = vpop.permute.xlu0 %1343
    %1345 = vrot.lane.b32.xlu0 %v1340, 120
    %v1346 = vpop.permute.xlu0 %1345
    %vm1347 = vcmask 982016
    %v1348 = vsel %vm1347, %v1344, %v1346
    %v1351 = vsel %vm449, %v1346, 0
    %1353 = vmatpush.bf16.msra.mxu0 %v393
    %1354 = vmatpush.bf16.msra.mxu0 %v389
    %1355 = vmatpush.bf16.msra.mxu0 %v385
    %1356 = vmatpush.bf16.msra.mxu0 %v381
    %1357 = vmatpush.bf16.msra.mxu0 %v377
    %1358 = vmatpush.bf16.msra.mxu0 %v373
    %1359 = vmatpush.bf16.msra.mxu0 %v369
    %1360 = vmatpush.bf16.msra.mxu0 %v365
    %1361 = vmatmul.bf16.gmra.mxu0 %v1348
    %v1362 = vpop.f32.mrf.mxu0
    %v1363 = vadd.f32 %v231, %v1362
    %v1364 = vpop.f32.mrf.mxu0
    %1365 = vdwg.mxu0
    %1366 = vmatpush.bf16.msra.mxu0 0
    %1367 = vmatpush.bf16.msra.mxu0 0
    %1368 = vmatpush.bf16.msra.mxu0 0
    %1369 = vmatpush.bf16.msra.mxu0 0
    %1370 = vmatpush.bf16.msra.mxu0 0
    %1371 = vmatpush.bf16.msra.mxu0 %v455
    %1372 = vmatpush.bf16.msra.mxu0 %v401
    %1373 = vmatpush.bf16.msra.mxu0 %v397
    %1374 = vmatmul.bf16.gmra.mxu0 %v1351
    %v1375 = vpop.f32.mrf.mxu0
    %v1376 = vadd.f32 %v1363, %v1375
    %v1377 = vpop.f32.mrf.mxu0
    %1378 = vdwg.mxu0
    %1379 = vmatpush.bf16.msra.mxu0 %v394
    %1380 = vmatpush.bf16.msra.mxu0 %v390
    %1381 = vmatpush.bf16.msra.mxu0 %v386
    %1382 = vmatpush.bf16.msra.mxu0 %v382
    %1383 = vmatpush.bf16.msra.mxu0 %v378
    %1384 = vmatpush.bf16.msra.mxu0 %v374
    %1385 = vmatpush.bf16.msra.mxu0 %v370
    %1386 = vmatpush.bf16.msra.mxu0 %v366
    %1387 = vmatmul.bf16.gmra.mxu0 %v1348
    %v1388 = vpop.f32.mrf.mxu0
    %v1389 = vadd.f32 %v232, %v1388
    %v1390 = vpop.f32.mrf.mxu0
    %1391 = vdwg.mxu0
    %1392 = vmatpush.bf16.msra.mxu0 0
    %1393 = vmatpush.bf16.msra.mxu0 0
    %1394 = vmatpush.bf16.msra.mxu0 0
    %1395 = vmatpush.bf16.msra.mxu0 0
    %1396 = vmatpush.bf16.msra.mxu0 0
    %1397 = vmatpush.bf16.msra.mxu0 %v458
    %1398 = vmatpush.bf16.msra.mxu0 %v402
    %1399 = vmatpush.bf16.msra.mxu0 %v398
    %1400 = vmatmul.bf16.gmra.mxu0 %v1351
    %v1401 = vpop.f32.mrf.mxu0
    %v1402 = vadd.f32 %v1389, %v1401
    %v1403 = vpop.f32.mrf.mxu0
    %1404 = vdwg.mxu0
    %1405 = vmatpush.bf16.msra.mxu0 %v395
    %1406 = vmatpush.bf16.msra.mxu0 %v391
    %1407 = vmatpush.bf16.msra.mxu0 %v387
    %1408 = vmatpush.bf16.msra.mxu0 %v383
    %1409 = vmatpush.bf16.msra.mxu0 %v379
    %1410 = vmatpush.bf16.msra.mxu0 %v375
    %1411 = vmatpush.bf16.msra.mxu0 %v371
    %1412 = vmatpush.bf16.msra.mxu0 %v367
    %1413 = vmatmul.bf16.gmra.mxu0 %v1348
    %v1414 = vpop.f32.mrf.mxu0
    %v1415 = vadd.f32 %v233, %v1414
    %v1416 = vpop.f32.mrf.mxu0
    %1417 = vdwg.mxu0
    %1418 = vmatpush.bf16.msra.mxu0 0
    %1419 = vmatpush.bf16.msra.mxu0 0
    %1420 = vmatpush.bf16.msra.mxu0 0
    %1421 = vmatpush.bf16.msra.mxu0 0
    %1422 = vmatpush.bf16.msra.mxu0 0
    %1423 = vmatpush.bf16.msra.mxu0 %v461
    %1424 = vmatpush.bf16.msra.mxu0 %v403
    %1425 = vmatpush.bf16.msra.mxu0 %v399
    %1426 = vmatmul.bf16.gmra.mxu0 %v1351
    %v1427 = vpop.f32.mrf.mxu0
    %v1428 = vadd.f32 %v1415, %v1427
    %v1429 = vpop.f32.mrf.mxu0
    %1430 = vdwg.mxu0
    %1431 = vmatpush.bf16.msra.mxu0 %v396
    %1432 = vmatpush.bf16.msra.mxu0 %v392
    %1433 = vmatpush.bf16.msra.mxu0 %v388
    %1434 = vmatpush.bf16.msra.mxu0 %v384
    %1435 = vmatpush.bf16.msra.mxu0 %v380
    %1436 = vmatpush.bf16.msra.mxu0 %v376
    %1437 = vmatpush.bf16.msra.mxu0 %v372
    %1438 = vmatpush.bf16.msra.mxu0 %v368
    %1439 = vmatmul.bf16.gmra.mxu0 %v1348
    %v1440 = vpop.f32.mrf.mxu0
    %v1441 = vadd.f32 %v234, %v1440
    %v1442 = vpop.f32.mrf.mxu0
    %1443 = vdwg.mxu0
    %1444 = vmatpush.bf16.msra.mxu0 0
    %1445 = vmatpush.bf16.msra.mxu0 0
    %1446 = vmatpush.bf16.msra.mxu0 0
    %1447 = vmatpush.bf16.msra.mxu0 0
    %1448 = vmatpush.bf16.msra.mxu0 0
    %1449 = vmatpush.bf16.msra.mxu0 %v464
    %1450 = vmatpush.bf16.msra.mxu0 %v404
    %1451 = vmatpush.bf16.msra.mxu0 %v400
    %1452 = vmatmul.bf16.gmra.mxu0 %v1351
    %v1453 = vpop.f32.mrf.mxu0
    %v1454 = vadd.f32 %v1441, %v1453
    %v1455 = vpop.f32.mrf.mxu0
    %1456 = vdwg.mxu0
    %v1457 = vmax.f32 %v1376, %v1428
    %v1458 = vmax.f32 %v1402, %v1454
    %v1459 = vmax.f32 %v1457, %v1458
    %v1460 = vmax.f32 %v1459, 0.0
    %1461 = vst [vmem:[#allocation2 + $0x38] sm:$0xff] %v1460
    %v1462 = vld [vmem:[%s0 + $0x18] sm:$0xff]
    %v1463 = vld [vmem:[%s0 + $0x20] sm:$0xff]
    %v1464 = vpack.c.bf16 %v1462, %v1462
    %v1465 = vpack.c.bf16 %v1463, %v1463
    %1468 = vrot.lane.b32.xlu0 %v1464, 64
    %v1469 = vpop.permute.xlu0 %1468
    %1470 = vrot.lane.b32.xlu0 %v1465, 64
    %v1471 = vpop.permute.xlu0 %1470
    %vm1472 = vcmask 523264
    %v1473 = vsel %vm1472, %v1469, %v1471
    %v1476 = vsel %vm449, %v1471, 0
    %1478 = vmatpush.bf16.msra.mxu0 %v393
    %1479 = vmatpush.bf16.msra.mxu0 %v389
    %1480 = vmatpush.bf16.msra.mxu0 %v385
    %1481 = vmatpush.bf16.msra.mxu0 %v381
    %1482 = vmatpush.bf16.msra.mxu0 %v377
    %1483 = vmatpush.bf16.msra.mxu0 %v373
    %1484 = vmatpush.bf16.msra.mxu0 %v369
    %1485 = vmatpush.bf16.msra.mxu0 %v365
    %1486 = vmatmul.bf16.gmra.mxu0 %v1473
    %v1487 = vpop.f32.mrf.mxu0
    %v1488 = vadd.f32 %v231, %v1487
    %v1489 = vpop.f32.mrf.mxu0
    %1490 = vdwg.mxu0
    %1491 = vmatpush.bf16.msra.mxu0 0
    %1492 = vmatpush.bf16.msra.mxu0 0
    %1493 = vmatpush.bf16.msra.mxu0 0
    %1494 = vmatpush.bf16.msra.mxu0 0
    %1495 = vmatpush.bf16.msra.mxu0 0
    %1496 = vmatpush.bf16.msra.mxu0 %v455
    %1497 = vmatpush.bf16.msra.mxu0 %v401
    %1498 = vmatpush.bf16.msra.mxu0 %v397
    %1499 = vmatmul.bf16.gmra.mxu0 %v1476
    %v1500 = vpop.f32.mrf.mxu0
    %v1501 = vadd.f32 %v1488, %v1500
    %v1502 = vpop.f32.mrf.mxu0
    %1503 = vdwg.mxu0
    %1504 = vmatpush.bf16.msra.mxu0 %v394
    %1505 = vmatpush.bf16.msra.mxu0 %v390
    %1506 = vmatpush.bf16.msra.mxu0 %v386
    %1507 = vmatpush.bf16.msra.mxu0 %v382
    %1508 = vmatpush.bf16.msra.mxu0 %v378
    %1509 = vmatpush.bf16.msra.mxu0 %v374
    %1510 = vmatpush.bf16.msra.mxu0 %v370
    %1511 = vmatpush.bf16.msra.mxu0 %v366
    %1512 = vmatmul.bf16.gmra.mxu0 %v1473
    %v1513 = vpop.f32.mrf.mxu0
    %v1514 = vadd.f32 %v232, %v1513
    %v1515 = vpop.f32.mrf.mxu0
    %1516 = vdwg.mxu0
    %1517 = vmatpush.bf16.msra.mxu0 0
    %1518 = vmatpush.bf16.msra.mxu0 0
    %1519 = vmatpush.bf16.msra.mxu0 0
    %1520 = vmatpush.bf16.msra.mxu0 0
    %1521 = vmatpush.bf16.msra.mxu0 0
    %1522 = vmatpush.bf16.msra.mxu0 %v458
    %1523 = vmatpush.bf16.msra.mxu0 %v402
    %1524 = vmatpush.bf16.msra.mxu0 %v398
    %1525 = vmatmul.bf16.gmra.mxu0 %v1476
    %v1526 = vpop.f32.mrf.mxu0
    %v1527 = vadd.f32 %v1514, %v1526
    %v1528 = vpop.f32.mrf.mxu0
    %1529 = vdwg.mxu0
    %1530 = vmatpush.bf16.msra.mxu0 %v395
    %1531 = vmatpush.bf16.msra.mxu0 %v391
    %1532 = vmatpush.bf16.msra.mxu0 %v387
    %1533 = vmatpush.bf16.msra.mxu0 %v383
    %1534 = vmatpush.bf16.msra.mxu0 %v379
    %1535 = vmatpush.bf16.msra.mxu0 %v375
    %1536 = vmatpush.bf16.msra.mxu0 %v371
    %1537 = vmatpush.bf16.msra.mxu0 %v367
    %1538 = vmatmul.bf16.gmra.mxu0 %v1473
    %v1539 = vpop.f32.mrf.mxu0
    %v1540 = vadd.f32 %v233, %v1539
    %v1541 = vpop.f32.mrf.mxu0
    %1542 = vdwg.mxu0
    %1543 = vmatpush.bf16.msra.mxu0 0
    %1544 = vmatpush.bf16.msra.mxu0 0
    %1545 = vmatpush.bf16.msra.mxu0 0
    %1546 = vmatpush.bf16.msra.mxu0 0
    %1547 = vmatpush.bf16.msra.mxu0 0
    %1548 = vmatpush.bf16.msra.mxu0 %v461
    %1549 = vmatpush.bf16.msra.mxu0 %v403
    %1550 = vmatpush.bf16.msra.mxu0 %v399
    %1551 = vmatmul.bf16.gmra.mxu0 %v1476
    %v1552 = vpop.f32.mrf.mxu0
    %v1553 = vadd.f32 %v1540, %v1552
    %v1554 = vpop.f32.mrf.mxu0
    %1555 = vdwg.mxu0
    %1556 = vmatpush.bf16.msra.mxu0 %v396
    %1557 = vmatpush.bf16.msra.mxu0 %v392
    %1558 = vmatpush.bf16.msra.mxu0 %v388
    %1559 = vmatpush.bf16.msra.mxu0 %v384
    %1560 = vmatpush.bf16.msra.mxu0 %v380
    %1561 = vmatpush.bf16.msra.mxu0 %v376
    %1562 = vmatpush.bf16.msra.mxu0 %v372
    %1563 = vmatpush.bf16.msra.mxu0 %v368
    %1564 = vmatmul.bf16.gmra.mxu0 %v1473
    %v1565 = vpop.f32.mrf.mxu0
    %v1566 = vadd.f32 %v234, %v1565
    %v1567 = vpop.f32.mrf.mxu0
    %1568 = vdwg.mxu0
    %1569 = vmatpush.bf16.msra.mxu0 0
    %1570 = vmatpush.bf16.msra.mxu0 0
    %1571 = vmatpush.bf16.msra.mxu0 0
    %1572 = vmatpush.bf16.msra.mxu0 0
    %1573 = vmatpush.bf16.msra.mxu0 0
    %1574 = vmatpush.bf16.msra.mxu0 %v464
    %1575 = vmatpush.bf16.msra.mxu0 %v404
    %1576 = vmatpush.bf16.msra.mxu0 %v400
    %1577 = vmatmul.bf16.gmra.mxu0 %v1476
    %v1578 = vpop.f32.mrf.mxu0
    %v1579 = vadd.f32 %v1566, %v1578
    %v1580 = vpop.f32.mrf.mxu0
    %1581 = vdwg.mxu0
    %v1582 = vmax.f32 %v1501, %v1553
    %v1583 = vmax.f32 %v1527, %v1579
    %v1584 = vmax.f32 %v1582, %v1583
    %v1585 = vmax.f32 %v1584, 0.0
    %1586 = vst [vmem:[#allocation2 + $0x40] sm:$0xff] %v1585
    %v1587 = vld [vmem:[%s0 + $0x18] sm:$0xff]
    %v1588 = vld [vmem:[%s0 + $0x20] sm:$0xff]
    %v1589 = vld [vmem:[%s0 + $0x28] sm:$0xff]
    %v1590 = vpack.c.bf16 %v1587, %v1587
    %v1591 = vpack.c.bf16 %v1588, %v1588
    %v1592 = vpack.c.bf16 %v1589, %v1589
    %1596 = vrot.lane.b32.xlu0 %v1590, 8
    %v1597 = vpop.permute.xlu0 %1596
    %1598 = vrot.lane.b32.xlu0 %v1591, 8
    %v1599 = vpop.permute.xlu0 %1598
    %1600 = vrot.lane.b32.xlu0 %v1592, 8
    %v1601 = vpop.permute.xlu0 %1600
    %vm1602 = vcmask 64512
    %v1603 = vsel %vm1602, %v1597, %v1599
    %v1604 = vsel %vm1602, %v1599, %v1601
    %v1607 = vsel %vm449, %v1604, 0
    %1609 = vmatpush.bf16.msra.mxu0 %v393
    %1610 = vmatpush.bf16.msra.mxu0 %v389
    %1611 = vmatpush.bf16.msra.mxu0 %v385
    %1612 = vmatpush.bf16.msra.mxu0 %v381
    %1613 = vmatpush.bf16.msra.mxu0 %v377
    %1614 = vmatpush.bf16.msra.mxu0 %v373
    %1615 = vmatpush.bf16.msra.mxu0 %v369
    %1616 = vmatpush.bf16.msra.mxu0 %v365
    %1617 = vmatmul.bf16.gmra.mxu0 %v1603
    %v1618 = vpop.f32.mrf.mxu0
    %v1619 = vadd.f32 %v231, %v1618
    %v1620 = vpop.f32.mrf.mxu0
    %1621 = vdwg.mxu0
    %1622 = vmatpush.bf16.msra.mxu0 0
    %1623 = vmatpush.bf16.msra.mxu0 0
    %1624 = vmatpush.bf16.msra.mxu0 0
    %1625 = vmatpush.bf16.msra.mxu0 0
    %1626 = vmatpush.bf16.msra.mxu0 0
    %1627 = vmatpush.bf16.msra.mxu0 %v455
    %1628 = vmatpush.bf16.msra.mxu0 %v401
    %1629 = vmatpush.bf16.msra.mxu0 %v397
    %1630 = vmatmul.bf16.gmra.mxu0 %v1607
    %v1631 = vpop.f32.mrf.mxu0
    %v1632 = vadd.f32 %v1619, %v1631
    %v1633 = vpop.f32.mrf.mxu0
    %1634 = vdwg.mxu0
    %1635 = vmatpush.bf16.msra.mxu0 %v394
    %1636 = vmatpush.bf16.msra.mxu0 %v390
    %1637 = vmatpush.bf16.msra.mxu0 %v386
    %1638 = vmatpush.bf16.msra.mxu0 %v382
    %1639 = vmatpush.bf16.msra.mxu0 %v378
    %1640 = vmatpush.bf16.msra.mxu0 %v374
    %1641 = vmatpush.bf16.msra.mxu0 %v370
    %1642 = vmatpush.bf16.msra.mxu0 %v366
    %1643 = vmatmul.bf16.gmra.mxu0 %v1603
    %v1644 = vpop.f32.mrf.mxu0
    %v1645 = vadd.f32 %v232, %v1644
    %v1646 = vpop.f32.mrf.mxu0
    %1647 = vdwg.mxu0
    %1648 = vmatpush.bf16.msra.mxu0 0
    %1649 = vmatpush.bf16.msra.mxu0 0
    %1650 = vmatpush.bf16.msra.mxu0 0
    %1651 = vmatpush.bf16.msra.mxu0 0
    %1652 = vmatpush.bf16.msra.mxu0 0
    %1653 = vmatpush.bf16.msra.mxu0 %v458
    %1654 = vmatpush.bf16.msra.mxu0 %v402
    %1655 = vmatpush.bf16.msra.mxu0 %v398
    %1656 = vmatmul.bf16.gmra.mxu0 %v1607
    %v1657 = vpop.f32.mrf.mxu0
    %v1658 = vadd.f32 %v1645, %v1657
    %v1659 = vpop.f32.mrf.mxu0
    %1660 = vdwg.mxu0
    %1661 = vmatpush.bf16.msra.mxu0 %v395
    %1662 = vmatpush.bf16.msra.mxu0 %v391
    %1663 = vmatpush.bf16.msra.mxu0 %v387
    %1664 = vmatpush.bf16.msra.mxu0 %v383
    %1665 = vmatpush.bf16.msra.mxu0 %v379
    %1666 = vmatpush.bf16.msra.mxu0 %v375
    %1667 = vmatpush.bf16.msra.mxu0 %v371
    %1668 = vmatpush.bf16.msra.mxu0 %v367
    %1669 = vmatmul.bf16.gmra.mxu0 %v1603
    %v1670 = vpop.f32.mrf.mxu0
    %v1671 = vadd.f32 %v233, %v1670
    %v1672 = vpop.f32.mrf.mxu0
    %1673 = vdwg.mxu0
    %1674 = vmatpush.bf16.msra.mxu0 0
    %1675 = vmatpush.bf16.msra.mxu0 0
    %1676 = vmatpush.bf16.msra.mxu0 0
    %1677 = vmatpush.bf16.msra.mxu0 0
    %1678 = vmatpush.bf16.msra.mxu0 0
    %1679 = vmatpush.bf16.msra.mxu0 %v461
    %1680 = vmatpush.bf16.msra.mxu0 %v403
    %1681 = vmatpush.bf16.msra.mxu0 %v399
    %1682 = vmatmul.bf16.gmra.mxu0 %v1607
    %v1683 = vpop.f32.mrf.mxu0
    %v1684 = vadd.f32 %v1671, %v1683
    %v1685 = vpop.f32.mrf.mxu0
    %1686 = vdwg.mxu0
    %1687 = vmatpush.bf16.msra.mxu0 %v396
    %1688 = vmatpush.bf16.msra.mxu0 %v392
    %1689 = vmatpush.bf16.msra.mxu0 %v388
    %1690 = vmatpush.bf16.msra.mxu0 %v384
    %1691 = vmatpush.bf16.msra.mxu0 %v380
    %1692 = vmatpush.bf16.msra.mxu0 %v376
    %1693 = vmatpush.bf16.msra.mxu0 %v372
    %1694 = vmatpush.bf16.msra.mxu0 %v368
    %1695 = vmatmul.bf16.gmra.mxu0 %v1603
    %v1696 = vpop.f32.mrf.mxu0
    %v1697 = vadd.f32 %v234, %v1696
    %v1698 = vpop.f32.mrf.mxu0
    %1699 = vdwg.mxu0
    %1700 = vmatpush.bf16.msra.mxu0 0
    %1701 = vmatpush.bf16.msra.mxu0 0
    %1702 = vmatpush.bf16.msra.mxu0 0
    %1703 = vmatpush.bf16.msra.mxu0 0
    %1704 = vmatpush.bf16.msra.mxu0 0
    %1705 = vmatpush.bf16.msra.mxu0 %v464
    %1706 = vmatpush.bf16.msra.mxu0 %v404
    %1707 = vmatpush.bf16.msra.mxu0 %v400
    %1708 = vmatmul.bf16.gmra.mxu0 %v1607
    %v1709 = vpop.f32.mrf.mxu0
    %v1710 = vadd.f32 %v1697, %v1709
    %v1711 = vpop.f32.mrf.mxu0
    %1712 = vdwg.mxu0
    %v1713 = vmax.f32 %v1632, %v1684
    %v1714 = vmax.f32 %v1658, %v1710
    %v1715 = vmax.f32 %v1713, %v1714
    %v1716 = vmax.f32 %v1715, 0.0
    %1717 = vst [vmem:[#allocation2 + $0x48] sm:$0xff] %v1716
    %v1718 = vld [vmem:[%s0 + $0x20] sm:$0xff]
    %v1719 = vld [vmem:[%s0 + $0x28] sm:$0xff]
    %v1720 = vpack.c.bf16 %v1718, %v1718
    %v1721 = vpack.c.bf16 %v1719, %v1719
    %1724 = vrot.lane.b32.xlu0 %v1720, 80
    %v1725 = vpop.permute.xlu0 %1724
    %1726 = vrot.lane.b32.xlu0 %v1721, 80
    %v1727 = vpop.permute.xlu0 %1726
    %vm1728 = vcmask 654336
    %v1729 = vsel %vm1728, %v1725, %v1727
    %v1732 = vsel %vm449, %v1727, 0
    %1734 = vmatpush.bf16.msra.mxu0 %v393
    %1735 = vmatpush.bf16.msra.mxu0 %v389
    %1736 = vmatpush.bf16.msra.mxu0 %v385
    %1737 = vmatpush.bf16.msra.mxu0 %v381
    %1738 = vmatpush.bf16.msra.mxu0 %v377
    %1739 = vmatpush.bf16.msra.mxu0 %v373
    %1740 = vmatpush.bf16.msra.mxu0 %v369
    %1741 = vmatpush.bf16.msra.mxu0 %v365
    %1742 = vmatmul.bf16.gmra.mxu0 %v1729
    %v1743 = vpop.f32.mrf.mxu0
    %v1744 = vadd.f32 %v231, %v1743
    %v1745 = vpop.f32.mrf.mxu0
    %1746 = vdwg.mxu0
    %1747 = vmatpush.bf16.msra.mxu0 0
    %1748 = vmatpush.bf16.msra.mxu0 0
    %1749 = vmatpush.bf16.msra.mxu0 0
    %1750 = vmatpush.bf16.msra.mxu0 0
    %1751 = vmatpush.bf16.msra.mxu0 0
    %1752 = vmatpush.bf16.msra.mxu0 %v455
    %1753 = vmatpush.bf16.msra.mxu0 %v401
    %1754 = vmatpush.bf16.msra.mxu0 %v397
    %1755 = vmatmul.bf16.gmra.mxu0 %v1732
    %v1756 = vpop.f32.mrf.mxu0
    %v1757 = vadd.f32 %v1744, %v1756
    %v1758 = vpop.f32.mrf.mxu0
    %1759 = vdwg.mxu0
    %1760 = vmatpush.bf16.msra.mxu0 %v394
    %1761 = vmatpush.bf16.msra.mxu0 %v390
    %1762 = vmatpush.bf16.msra.mxu0 %v386
    %1763 = vmatpush.bf16.msra.mxu0 %v382
    %1764 = vmatpush.bf16.msra.mxu0 %v378
    %1765 = vmatpush.bf16.msra.mxu0 %v374
    %1766 = vmatpush.bf16.msra.mxu0 %v370
    %1767 = vmatpush.bf16.msra.mxu0 %v366
    %1768 = vmatmul.bf16.gmra.mxu0 %v1729
    %v1769 = vpop.f32.mrf.mxu0
    %v1770 = vadd.f32 %v232, %v1769
    %v1771 = vpop.f32.mrf.mxu0
    %1772 = vdwg.mxu0
    %1773 = vmatpush.bf16.msra.mxu0 0
    %1774 = vmatpush.bf16.msra.mxu0 0
    %1775 = vmatpush.bf16.msra.mxu0 0
    %1776 = vmatpush.bf16.msra.mxu0 0
    %1777 = vmatpush.bf16.msra.mxu0 0
    %1778 = vmatpush.bf16.msra.mxu0 %v458
    %1779 = vmatpush.bf16.msra.mxu0 %v402
    %1780 = vmatpush.bf16.msra.mxu0 %v398
    %1781 = vmatmul.bf16.gmra.mxu0 %v1732
    %v1782 = vpop.f32.mrf.mxu0
    %v1783 = vadd.f32 %v1770, %v1782
    %v1784 = vpop.f32.mrf.mxu0
    %1785 = vdwg.mxu0
    %1786 = vmatpush.bf16.msra.mxu0 %v395
    %1787 = vmatpush.bf16.msra.mxu0 %v391
    %1788 = vmatpush.bf16.msra.mxu0 %v387
    %1789 = vmatpush.bf16.msra.mxu0 %v383
    %1790 = vmatpush.bf16.msra.mxu0 %v379
    %1791 = vmatpush.bf16.msra.mxu0 %v375
    %1792 = vmatpush.bf16.msra.mxu0 %v371
    %1793 = vmatpush.bf16.msra.mxu0 %v367
    %1794 = vmatmul.bf16.gmra.mxu0 %v1729
    %v1795 = vpop.f32.mrf.mxu0
    %v1796 = vadd.f32 %v233, %v1795
    %v1797 = vpop.f32.mrf.mxu0
    %1798 = vdwg.mxu0
    %1799 = vmatpush.bf16.msra.mxu0 0
    %1800 = vmatpush.bf16.msra.mxu0 0
    %1801 = vmatpush.bf16.msra.mxu0 0
    %1802 = vmatpush.bf16.msra.mxu0 0
    %1803 = vmatpush.bf16.msra.mxu0 0
    %1804 = vmatpush.bf16.msra.mxu0 %v461
    %1805 = vmatpush.bf16.msra.mxu0 %v403
    %1806 = vmatpush.bf16.msra.mxu0 %v399
    %1807 = vmatmul.bf16.gmra.mxu0 %v1732
    %v1808 = vpop.f32.mrf.mxu0
    %v1809 = vadd.f32 %v1796, %v1808
    %v1810 = vpop.f32.mrf.mxu0
    %1811 = vdwg.mxu0
    %1812 = vmatpush.bf16.msra.mxu0 %v396
    %1813 = vmatpush.bf16.msra.mxu0 %v392
    %1814 = vmatpush.bf16.msra.mxu0 %v388
    %1815 = vmatpush.bf16.msra.mxu0 %v384
    %1816 = vmatpush.bf16.msra.mxu0 %v380
    %1817 = vmatpush.bf16.msra.mxu0 %v376
    %1818 = vmatpush.bf16.msra.mxu0 %v372
    %1819 = vmatpush.bf16.msra.mxu0 %v368
    %1820 = vmatmul.bf16.gmra.mxu0 %v1729
    %v1821 = vpop.f32.mrf.mxu0
    %v1822 = vadd.f32 %v234, %v1821
    %v1823 = vpop.f32.mrf.mxu0
    %1824 = vdwg.mxu0
    %1825 = vmatpush.bf16.msra.mxu0 0
    %1826 = vmatpush.bf16.msra.mxu0 0
    %1827 = vmatpush.bf16.msra.mxu0 0
    %1828 = vmatpush.bf16.msra.mxu0 0
    %1829 = vmatpush.bf16.msra.mxu0 0
    %1830 = vmatpush.bf16.msra.mxu0 %v464
    %1831 = vmatpush.bf16.msra.mxu0 %v404
    %1832 = vmatpush.bf16.msra.mxu0 %v400
    %1833 = vmatmul.bf16.gmra.mxu0 %v1732
    %v1834 = vpop.f32.mrf.mxu0
    %v1835 = vadd.f32 %v1822, %v1834
    %v1836 = vpop.f32.mrf.mxu0
    %1837 = vdwg.mxu0
    %v1838 = vmax.f32 %v1757, %v1809
    %v1839 = vmax.f32 %v1783, %v1835
    %v1840 = vmax.f32 %v1838, %v1839
    %v1841 = vmax.f32 %v1840, 0.0
    %1842 = vst [vmem:[#allocation2 + $0x50] sm:$0xff] %v1841
    %v1843 = vld [vmem:[%s0 + $0x20] sm:$0xff]
    %v1844 = vld [vmem:[%s0 + $0x28] sm:$0xff]
    %v1845 = vld [vmem:[%s0 + $0x30] sm:$0xff]
    %v1846 = vpack.c.bf16 %v1843, %v1843
    %v1847 = vpack.c.bf16 %v1844, %v1844
    %v1848 = vpack.c.bf16 %v1845, %v1845
    %1852 = vrot.lane.b32.xlu0 %v1846, 24
    %v1853 = vpop.permute.xlu0 %1852
    %1854 = vrot.lane.b32.xlu0 %v1847, 24
    %v1855 = vpop.permute.xlu0 %1854
    %1856 = vrot.lane.b32.xlu0 %v1848, 24
    %v1857 = vpop.permute.xlu0 %1856
    %vm1858 = vcmask 195584
    %v1859 = vsel %vm1858, %v1853, %v1855
    %v1860 = vsel %vm1858, %v1855, %v1857
    %v1863 = vsel %vm449, %v1860, 0
    %1865 = vmatpush.bf16.msra.mxu0 %v393
    %1866 = vmatpush.bf16.msra.mxu0 %v389
    %1867 = vmatpush.bf16.msra.mxu0 %v385
    %1868 = vmatpush.bf16.msra.mxu0 %v381
    %1869 = vmatpush.bf16.msra.mxu0 %v377
    %1870 = vmatpush.bf16.msra.mxu0 %v373
    %1871 = vmatpush.bf16.msra.mxu0 %v369
    %1872 = vmatpush.bf16.msra.mxu0 %v365
    %1873 = vmatmul.bf16.gmra.mxu0 %v1859
    %v1874 = vpop.f32.mrf.mxu0
    %v1875 = vadd.f32 %v231, %v1874
    %v1876 = vpop.f32.mrf.mxu0
    %1877 = vdwg.mxu0
    %1878 = vmatpush.bf16.msra.mxu0 0
    %1879 = vmatpush.bf16.msra.mxu0 0
    %1880 = vmatpush.bf16.msra.mxu0 0
    %1881 = vmatpush.bf16.msra.mxu0 0
    %1882 = vmatpush.bf16.msra.mxu0 0
    %1883 = vmatpush.bf16.msra.mxu0 %v455
    %1884 = vmatpush.bf16.msra.mxu0 %v401
    %1885 = vmatpush.bf16.msra.mxu0 %v397
    %1886 = vmatmul.bf16.gmra.mxu0 %v1863
    %v1887 = vpop.f32.mrf.mxu0
    %v1888 = vadd.f32 %v1875, %v1887
    %v1889 = vpop.f32.mrf.mxu0
    %1890 = vdwg.mxu0
    %1891 = vmatpush.bf16.msra.mxu0 %v394
    %1892 = vmatpush.bf16.msra.mxu0 %v390
    %1893 = vmatpush.bf16.msra.mxu0 %v386
    %1894 = vmatpush.bf16.msra.mxu0 %v382
    %1895 = vmatpush.bf16.msra.mxu0 %v378
    %1896 = vmatpush.bf16.msra.mxu0 %v374
    %1897 = vmatpush.bf16.msra.mxu0 %v370
    %1898 = vmatpush.bf16.msra.mxu0 %v366
    %1899 = vmatmul.bf16.gmra.mxu0 %v1859
    %v1900 = vpop.f32.mrf.mxu0
    %v1901 = vadd.f32 %v232, %v1900
    %v1902 = vpop.f32.mrf.mxu0
    %1903 = vdwg.mxu0
    %1904 = vmatpush.bf16.msra.mxu0 0
    %1905 = vmatpush.bf16.msra.mxu0 0
    %1906 = vmatpush.bf16.msra.mxu0 0
    %1907 = vmatpush.bf16.msra.mxu0 0
    %1908 = vmatpush.bf16.msra.mxu0 0
    %1909 = vmatpush.bf16.msra.mxu0 %v458
    %1910 = vmatpush.bf16.msra.mxu0 %v402
    %1911 = vmatpush.bf16.msra.mxu0 %v398
    %1912 = vmatmul.bf16.gmra.mxu0 %v1863
    %v1913 = vpop.f32.mrf.mxu0
    %v1914 = vadd.f32 %v1901, %v1913
    %v1915 = vpop.f32.mrf.mxu0
    %1916 = vdwg.mxu0
    %1917 = vmatpush.bf16.msra.mxu0 %v395
    %1918 = vmatpush.bf16.msra.mxu0 %v391
    %1919 = vmatpush.bf16.msra.mxu0 %v387
    %1920 = vmatpush.bf16.msra.mxu0 %v383
    %1921 = vmatpush.bf16.msra.mxu0 %v379
    %1922 = vmatpush.bf16.msra.mxu0 %v375
    %1923 = vmatpush.bf16.msra.mxu0 %v371
    %1924 = vmatpush.bf16.msra.mxu0 %v367
    %1925 = vmatmul.bf16.gmra.mxu0 %v1859
    %v1926 = vpop.f32.mrf.mxu0
    %v1927 = vadd.f32 %v233, %v1926
    %v1928 = vpop.f32.mrf.mxu0
    %1929 = vdwg.mxu0
    %1930 = vmatpush.bf16.msra.mxu0 0
    %1931 = vmatpush.bf16.msra.mxu0 0
    %1932 = vmatpush.bf16.msra.mxu0 0
    %1933 = vmatpush.bf16.msra.mxu0 0
    %1934 = vmatpush.bf16.msra.mxu0 0
    %1935 = vmatpush.bf16.msra.mxu0 %v461
    %1936 = vmatpush.bf16.msra.mxu0 %v403
    %1937 = vmatpush.bf16.msra.mxu0 %v399
    %1938 = vmatmul.bf16.gmra.mxu0 %v1863
    %v1939 = vpop.f32.mrf.mxu0
    %v1940 = vadd.f32 %v1927, %v1939
    %v1941 = vpop.f32.mrf.mxu0
    %1942 = vdwg.mxu0
    %1943 = vmatpush.bf16.msra.mxu0 %v396
    %1944 = vmatpush.bf16.msra.mxu0 %v392
    %1945 = vmatpush.bf16.msra.mxu0 %v388
    %1946 = vmatpush.bf16.msra.mxu0 %v384
    %1947 = vmatpush.bf16.msra.mxu0 %v380
    %1948 = vmatpush.bf16.msra.mxu0 %v376
    %1949 = vmatpush.bf16.msra.mxu0 %v372
    %1950 = vmatpush.bf16.msra.mxu0 %v368
    %1951 = vmatmul.bf16.gmra.mxu0 %v1859
    %v1952 = vpop.f32.mrf.mxu0
    %v1953 = vadd.f32 %v234, %v1952
    %v1954 = vpop.f32.mrf.mxu0
    %1955 = vdwg.mxu0
    %1956 = vmatpush.bf16.msra.mxu0 0
    %1957 = vmatpush.bf16.msra.mxu0 0
    %1958 = vmatpush.bf16.msra.mxu0 0
    %1959 = vmatpush.bf16.msra.mxu0 0
    %1960 = vmatpush.bf16.msra.mxu0 0
    %1961 = vmatpush.bf16.msra.mxu0 %v464
    %1962 = vmatpush.bf16.msra.mxu0 %v404
    %1963 = vmatpush.bf16.msra.mxu0 %v400
    %1964 = vmatmul.bf16.gmra.mxu0 %v1863
    %v1965 = vpop.f32.mrf.mxu0
    %v1966 = vadd.f32 %v1953, %v1965
    %v1967 = vpop.f32.mrf.mxu0
    %1968 = vdwg.mxu0
    %v1969 = vmax.f32 %v1888, %v1940
    %v1970 = vmax.f32 %v1914, %v1966
    %v1971 = vmax.f32 %v1969, %v1970
    %v1972 = vmax.f32 %v1971, 0.0
    %1973 = vst [vmem:[#allocation2 + $0x58] sm:$0xff] %v1972
    %v1974 = vld [vmem:[#allocation2] sm:$0xff]
    %v1975 = vld [vmem:[#allocation2 + $0x8] sm:$0xff]
    %v1976 = vld [vmem:[#allocation2 + $0x10] sm:$0xff]
    %v1977 = vpack.c.bf16 %v1974, %v1974
    %v1978 = vpack.c.bf16 %v1975, %v1975
    %v1979 = vpack.c.bf16 %v1976, %v1976
    %v1981 = vperm.slane %v225, 0
    %v1982 = vperm.slane %v225, 1
    %v2033 = vunpack.c.l.b16 %v177
    %v2034 = vunpack.c.h.b16 %v177
    %v2035 = vunpack.c.l.b16 %v178
    %v2036 = vunpack.c.h.b16 %v178
    %v2037 = vunpack.c.l.b16 %v179
    %v2038 = vunpack.c.h.b16 %v179
    %v2039 = vunpack.c.l.b16 %v180
    %v2040 = vunpack.c.h.b16 %v180
    %v2041 = vunpack.c.l.b16 %v181
    %v2042 = vunpack.c.h.b16 %v181
    %v2043 = vunpack.c.l.b16 %v182
    %v2044 = vunpack.c.h.b16 %v182
    %v2045 = vunpack.c.l.b16 %v183
    %v2046 = vunpack.c.h.b16 %v183
    %v2047 = vunpack.c.l.b16 %v184
    %v2048 = vunpack.c.h.b16 %v184
    %v2049 = vunpack.c.l.b16 %v185
    %v2050 = vunpack.c.h.b16 %v185
    %v2051 = vunpack.c.l.b16 %v186
    %v2052 = vunpack.c.h.b16 %v186
    %v2053 = vunpack.c.l.b16 %v187
    %v2054 = vunpack.c.h.b16 %v187
    %v2055 = vunpack.c.l.b16 %v188
    %v2056 = vunpack.c.h.b16 %v188
    %v2057 = vunpack.c.l.b16 %v189
    %v2058 = vunpack.c.h.b16 %v189
    %v2059 = vunpack.c.l.b16 %v190
    %v2060 = vunpack.c.h.b16 %v190
    %v2061 = vunpack.c.l.b16 %v191
    %v2062 = vunpack.c.h.b16 %v191
    %v2063 = vunpack.c.l.b16 %v192
    %v2064 = vunpack.c.h.b16 %v192
    %v2065 = vunpack.c.l.b16 %v193
    %v2066 = vunpack.c.h.b16 %v193
    %v2067 = vunpack.c.l.b16 %v194
    %v2068 = vunpack.c.h.b16 %v194
    %v2069 = vunpack.c.l.b16 %v195
    %v2070 = vunpack.c.h.b16 %v195
    %v2071 = vunpack.c.l.b16 %v196
    %v2072 = vunpack.c.h.b16 %v196
    %v2073 = vunpack.c.l.b16 %v197
    %v2074 = vunpack.c.h.b16 %v197
    %v2075 = vunpack.c.l.b16 %v198
    %v2076 = vunpack.c.h.b16 %v198
    %v2077 = vunpack.c.l.b16 %v199
    %v2078 = vunpack.c.h.b16 %v199
    %v2079 = vunpack.c.l.b16 %v200
    %v2080 = vunpack.c.h.b16 %v200
    %v2081 = vunpack.c.l.b16 %v201
    %v2082 = vunpack.c.h.b16 %v201
    %v2083 = vunpack.c.l.b16 %v202
    %v2084 = vunpack.c.h.b16 %v202
    %v2085 = vunpack.c.l.b16 %v203
    %v2086 = vunpack.c.h.b16 %v203
    %v2087 = vunpack.c.l.b16 %v204
    %v2088 = vunpack.c.h.b16 %v204
    %v2089 = vunpack.c.l.b16 %v205
    %v2090 = vunpack.c.h.b16 %v205
    %v2091 = vunpack.c.l.b16 %v206
    %v2092 = vunpack.c.h.b16 %v206
    %v2093 = vunpack.c.l.b16 %v207
    %v2094 = vunpack.c.h.b16 %v207
    %v2095 = vunpack.c.l.b16 %v208
    %v2096 = vunpack.c.h.b16 %v208
    %v2097 = vunpack.c.l.b16 %v209
    %v2098 = vunpack.c.h.b16 %v209
    %v2099 = vunpack.c.l.b16 %v210
    %v2100 = vunpack.c.h.b16 %v210
    %v2101 = vunpack.c.l.b16 %v211
    %v2102 = vunpack.c.h.b16 %v211
    %v2103 = vunpack.c.l.b16 %v212
    %v2104 = vunpack.c.h.b16 %v212
    %v2105 = vunpack.c.l.b16 %v213
    %v2106 = vunpack.c.h.b16 %v213
    %v2107 = vunpack.c.l.b16 %v214
    %v2108 = vunpack.c.h.b16 %v214
    %v2109 = vunpack.c.l.b16 %v215
    %v2110 = vunpack.c.h.b16 %v215
    %v2111 = vunpack.c.l.b16 %v216
    %v2112 = vunpack.c.h.b16 %v216
    %v2113 = vunpack.c.l.b16 %v217
    %v2114 = vunpack.c.h.b16 %v217
    %v2115 = vunpack.c.l.b16 %v218
    %v2116 = vunpack.c.h.b16 %v218
    %v2117 = vunpack.c.l.b16 %v219
    %v2118 = vunpack.c.h.b16 %v219
    %v2119 = vunpack.c.l.b16 %v220
    %v2120 = vunpack.c.h.b16 %v220
    %v2121 = vunpack.c.l.b16 %v221
    %v2122 = vunpack.c.h.b16 %v221
    %v2123 = vunpack.c.l.b16 %v222
    %v2124 = vunpack.c.h.b16 %v222
    %v2125 = vunpack.c.l.b16 %v223
    %v2126 = vunpack.c.h.b16 %v223
    %v2127 = vunpack.c.l.b16 %v224
    %v2128 = vunpack.c.h.b16 %v224
    %v2129 = vpack.c.b16 %v2035, %v2033
    %v2130 = vpack.c.b16 %v2036, %v2034
    %v2131 = vpack.c.b16 %v2039, %v2037
    %v2132 = vpack.c.b16 %v2040, %v2038
    %v2133 = vpack.c.b16 %v2043, %v2041
    %v2134 = vpack.c.b16 %v2044, %v2042
    %v2135 = vpack.c.b16 %v2047, %v2045
    %v2136 = vpack.c.b16 %v2048, %v2046
    %v2137 = vpack.c.b16 %v2051, %v2049
    %v2138 = vpack.c.b16 %v2052, %v2050
    %v2139 = vpack.c.b16 %v2055, %v2053
    %v2140 = vpack.c.b16 %v2056, %v2054
    %v2141 = vpack.c.b16 %v2059, %v2057
    %v2142 = vpack.c.b16 %v2060, %v2058
    %v2143 = vpack.c.b16 %v2063, %v2061
    %v2144 = vpack.c.b16 %v2064, %v2062
    %v2145 = vpack.c.b16 %v2067, %v2065
    %v2146 = vpack.c.b16 %v2068, %v2066
    %v2147 = vpack.c.b16 %v2071, %v2069
    %v2148 = vpack.c.b16 %v2072, %v2070
    %v2149 = vpack.c.b16 %v2075, %v2073
    %v2150 = vpack.c.b16 %v2076, %v2074
    %v2151 = vpack.c.b16 %v2079, %v2077
    %v2152 = vpack.c.b16 %v2080, %v2078
    %v2153 = vpack.c.b16 %v2083, %v2081
    %v2154 = vpack.c.b16 %v2084, %v2082
    %v2155 = vpack.c.b16 %v2087, %v2085
    %v2156 = vpack.c.b16 %v2088, %v2086
    %v2157 = vpack.c.b16 %v2091, %v2089
    %v2158 = vpack.c.b16 %v2092, %v2090
    %v2159 = vpack.c.b16 %v2095, %v2093
    %v2160 = vpack.c.b16 %v2096, %v2094
    %v2161 = vpack.c.b16 %v2099, %v2097
    %v2162 = vpack.c.b16 %v2100, %v2098
    %v2163 = vpack.c.b16 %v2103, %v2101
    %v2164 = vpack.c.b16 %v2104, %v2102
    %v2165 = vpack.c.b16 %v2107, %v2105
    %v2166 = vpack.c.b16 %v2108, %v2106
    %v2167 = vpack.c.b16 %v2111, %v2109
    %v2168 = vpack.c.b16 %v2112, %v2110
    %v2169 = vpack.c.b16 %v2115, %v2113
    %v2170 = vpack.c.b16 %v2116, %v2114
    %v2171 = vpack.c.b16 %v2119, %v2117
    %v2172 = vpack.c.b16 %v2120, %v2118
    %v2173 = vpack.c.b16 %v2123, %v2121
    %v2174 = vpack.c.b16 %v2124, %v2122
    %v2175 = vpack.c.b16 %v2127, %v2125
    %v2176 = vpack.c.b16 %v2128, %v2126
    %2225 = vmatpush.bf16.msra.mxu0 %v2143
    %2226 = vmatpush.bf16.msra.mxu0 %v2141
    %2227 = vmatpush.bf16.msra.mxu0 %v2139
    %2228 = vmatpush.bf16.msra.mxu0 %v2137
    %2229 = vmatpush.bf16.msra.mxu0 %v2135
    %2230 = vmatpush.bf16.msra.mxu0 %v2133
    %2231 = vmatpush.bf16.msra.mxu0 %v2131
    %2232 = vmatpush.bf16.msra.mxu0 %v2129
    %2233 = vmatmul.bf16.gmra.mxu0 %v1977
    %v2234 = vpop.f32.mrf.mxu0
    %v2235 = vadd.f32 %v1981, %v2234
    %v2236 = vpop.f32.mrf.mxu0
    %2237 = vdwg.mxu0
    %2238 = vmatpush.bf16.msra.mxu0 %v2159
    %2239 = vmatpush.bf16.msra.mxu0 %v2157
    %2240 = vmatpush.bf16.msra.mxu0 %v2155
    %2241 = vmatpush.bf16.msra.mxu0 %v2153
    %2242 = vmatpush.bf16.msra.mxu0 %v2151
    %2243 = vmatpush.bf16.msra.mxu0 %v2149
    %2244 = vmatpush.bf16.msra.mxu0 %v2147
    %2245 = vmatpush.bf16.msra.mxu0 %v2145
    %2246 = vmatmul.bf16.gmra.mxu0 %v1978
    %v2247 = vpop.f32.mrf.mxu0
    %v2248 = vadd.f32 %v2235, %v2247
    %v2249 = vpop.f32.mrf.mxu0
    %2250 = vdwg.mxu0
    %2251 = vmatpush.bf16.msra.mxu0 %v2175
    %2252 = vmatpush.bf16.msra.mxu0 %v2173
    %2253 = vmatpush.bf16.msra.mxu0 %v2171
    %2254 = vmatpush.bf16.msra.mxu0 %v2169
    %2255 = vmatpush.bf16.msra.mxu0 %v2167
    %2256 = vmatpush.bf16.msra.mxu0 %v2165
    %2257 = vmatpush.bf16.msra.mxu0 %v2163
    %2258 = vmatpush.bf16.msra.mxu0 %v2161
    %2259 = vmatmul.bf16.gmra.mxu0 %v1979
    %v2260 = vpop.f32.mrf.mxu0
    %v2261 = vadd.f32 %v2248, %v2260
    %v2262 = vpop.f32.mrf.mxu0
    %2263 = vdwg.mxu0
    %2264 = vmatpush.bf16.msra.mxu0 %v2144
    %2265 = vmatpush.bf16.msra.mxu0 %v2142
    %2266 = vmatpush.bf16.msra.mxu0 %v2140
    %2267 = vmatpush.bf16.msra.mxu0 %v2138
    %2268 = vmatpush.bf16.msra.mxu0 %v2136
    %2269 = vmatpush.bf16.msra.mxu0 %v2134
    %2270 = vmatpush.bf16.msra.mxu0 %v2132
    %2271 = vmatpush.bf16.msra.mxu0 %v2130
    %2272 = vmatmul.bf16.gmra.mxu0 %v1977
    %v2273 = vpop.f32.mrf.mxu0
    %v2274 = vadd.f32 %v1982, %v2273
    %v2275 = vpop.f32.mrf.mxu0
    %2276 = vdwg.mxu0
    %2277 = vmatpush.bf16.msra.mxu0 %v2160
    %2278 = vmatpush.bf16.msra.mxu0 %v2158
    %2279 = vmatpush.bf16.msra.mxu0 %v2156
    %2280 = vmatpush.bf16.msra.mxu0 %v2154
    %2281 = vmatpush.bf16.msra.mxu0 %v2152
    %2282 = vmatpush.bf16.msra.mxu0 %v2150
    %2283 = vmatpush.bf16.msra.mxu0 %v2148
    %2284 = vmatpush.bf16.msra.mxu0 %v2146
    %2285 = vmatmul.bf16.gmra.mxu0 %v1978
    %v2286 = vpop.f32.mrf.mxu0
    %v2287 = vadd.f32 %v2274, %v2286
    %v2288 = vpop.f32.mrf.mxu0
    %2289 = vdwg.mxu0
    %2290 = vmatpush.bf16.msra.mxu0 %v2176
    %2291 = vmatpush.bf16.msra.mxu0 %v2174
    %2292 = vmatpush.bf16.msra.mxu0 %v2172
    %2293 = vmatpush.bf16.msra.mxu0 %v2170
    %2294 = vmatpush.bf16.msra.mxu0 %v2168
    %2295 = vmatpush.bf16.msra.mxu0 %v2166
    %2296 = vmatpush.bf16.msra.mxu0 %v2164
    %2297 = vmatpush.bf16.msra.mxu0 %v2162
    %2298 = vmatmul.bf16.gmra.mxu0 %v1979
    %v2299 = vpop.f32.mrf.mxu0
    %v2300 = vadd.f32 %v2287, %v2299
    %v2301 = vpop.f32.mrf.mxu0
    %2302 = vdwg.mxu0
    %v2303 = vmax.f32 %v2261, 0.0
    %v2304 = vmax.f32 %v2300, 0.0
    %2305 = vst [vmem:[#allocation3] sm:$0xff] %v2303
    %2306 = vst [vmem:[#allocation3 + $0x8] sm:$0xff] %v2304
    %v2307 = vld [vmem:[#allocation2 + $0x8] sm:$0xff]
    %v2308 = vld [vmem:[#allocation2 + $0x10] sm:$0xff]
    %v2309 = vld [vmem:[#allocation2 + $0x18] sm:$0xff]
    %v2310 = vpack.c.bf16 %v2307, %v2307
    %v2311 = vpack.c.bf16 %v2308, %v2308
    %v2312 = vpack.c.bf16 %v2309, %v2309
    %2313 = vmatpush.bf16.msra.mxu0 %v2143
    %2314 = vmatpush.bf16.msra.mxu0 %v2141
    %2315 = vmatpush.bf16.msra.mxu0 %v2139
    %2316 = vmatpush.bf16.msra.mxu0 %v2137
    %2317 = vmatpush.bf16.msra.mxu0 %v2135
    %2318 = vmatpush.bf16.msra.mxu0 %v2133
    %2319 = vmatpush.bf16.msra.mxu0 %v2131
    %2320 = vmatpush.bf16.msra.mxu0 %v2129
    %2321 = vmatmul.bf16.gmra.mxu0 %v2310
    %v2322 = vpop.f32.mrf.mxu0
    %v2323 = vadd.f32 %v1981, %v2322
    %v2324 = vpop.f32.mrf.mxu0
    %2325 = vdwg.mxu0
    %2326 = vmatpush.bf16.msra.mxu0 %v2159
    %2327 = vmatpush.bf16.msra.mxu0 %v2157
    %2328 = vmatpush.bf16.msra.mxu0 %v2155
    %2329 = vmatpush.bf16.msra.mxu0 %v2153
    %2330 = vmatpush.bf16.msra.mxu0 %v2151
    %2331 = vmatpush.bf16.msra.mxu0 %v2149
    %2332 = vmatpush.bf16.msra.mxu0 %v2147
    %2333 = vmatpush.bf16.msra.mxu0 %v2145
    %2334 = vmatmul.bf16.gmra.mxu0 %v2311
    %v2335 = vpop.f32.mrf.mxu0
    %v2336 = vadd.f32 %v2323, %v2335
    %v2337 = vpop.f32.mrf.mxu0
    %2338 = vdwg.mxu0
    %2339 = vmatpush.bf16.msra.mxu0 %v2175
    %2340 = vmatpush.bf16.msra.mxu0 %v2173
    %2341 = vmatpush.bf16.msra.mxu0 %v2171
    %2342 = vmatpush.bf16.msra.mxu0 %v2169
    %2343 = vmatpush.bf16.msra.mxu0 %v2167
    %2344 = vmatpush.bf16.msra.mxu0 %v2165
    %2345 = vmatpush.bf16.msra.mxu0 %v2163
    %2346 = vmatpush.bf16.msra.mxu0 %v2161
    %2347 = vmatmul.bf16.gmra.mxu0 %v2312
    %v2348 = vpop.f32.mrf.mxu0
    %v2349 = vadd.f32 %v2336, %v2348
    %v2350 = vpop.f32.mrf.mxu0
    %2351 = vdwg.mxu0
    %2352 = vmatpush.bf16.msra.mxu0 %v2144
    %2353 = vmatpush.bf16.msra.mxu0 %v2142
    %2354 = vmatpush.bf16.msra.mxu0 %v2140
    %2355 = vmatpush.bf16.msra.mxu0 %v2138
    %2356 = vmatpush.bf16.msra.mxu0 %v2136
    %2357 = vmatpush.bf16.msra.mxu0 %v2134
    %2358 = vmatpush.bf16.msra.mxu0 %v2132
    %2359 = vmatpush.bf16.msra.mxu0 %v2130
    %2360 = vmatmul.bf16.gmra.mxu0 %v2310
    %v2361 = vpop.f32.mrf.mxu0
    %v2362 = vadd.f32 %v1982, %v2361
    %v2363 = vpop.f32.mrf.mxu0
    %2364 = vdwg.mxu0
    %2365 = vmatpush.bf16.msra.mxu0 %v2160
    %2366 = vmatpush.bf16.msra.mxu0 %v2158
    %2367 = vmatpush.bf16.msra.mxu0 %v2156
    %2368 = vmatpush.bf16.msra.mxu0 %v2154
    %2369 = vmatpush.bf16.msra.mxu0 %v2152
    %2370 = vmatpush.bf16.msra.mxu0 %v2150
    %2371 = vmatpush.bf16.msra.mxu0 %v2148
    %2372 = vmatpush.bf16.msra.mxu0 %v2146
    %2373 = vmatmul.bf16.gmra.mxu0 %v2311
    %v2374 = vpop.f32.mrf.mxu0
    %v2375 = vadd.f32 %v2362, %v2374
    %v2376 = vpop.f32.mrf.mxu0
    %2377 = vdwg.mxu0
    %2378 = vmatpush.bf16.msra.mxu0 %v2176
    %2379 = vmatpush.bf16.msra.mxu0 %v2174
    %2380 = vmatpush.bf16.msra.mxu0 %v2172
    %2381 = vmatpush.bf16.msra.mxu0 %v2170
    %2382 = vmatpush.bf16.msra.mxu0 %v2168
    %2383 = vmatpush.bf16.msra.mxu0 %v2166
    %2384 = vmatpush.bf16.msra.mxu0 %v2164
    %2385 = vmatpush.bf16.msra.mxu0 %v2162
    %2386 = vmatmul.bf16.gmra.mxu0 %v2312
    %v2387 = vpop.f32.mrf.mxu0
    %v2388 = vadd.f32 %v2375, %v2387
    %v2389 = vpop.f32.mrf.mxu0
    %2390 = vdwg.mxu0
    %v2391 = vmax.f32 %v2349, 0.0
    %v2392 = vmax.f32 %v2388, 0.0
    %2393 = vst [vmem:[#allocation3 + $0x10] sm:$0xff] %v2391
    %2394 = vst [vmem:[#allocation3 + $0x18] sm:$0xff] %v2392
    %v2395 = vld [vmem:[#allocation2 + $0x10] sm:$0xff]
    %v2396 = vld [vmem:[#allocation2 + $0x18] sm:$0xff]
    %v2397 = vld [vmem:[#allocation2 + $0x20] sm:$0xff]
    %v2398 = vpack.c.bf16 %v2395, %v2395
    %v2399 = vpack.c.bf16 %v2396, %v2396
    %v2400 = vpack.c.bf16 %v2397, %v2397
    %2401 = vmatpush.bf16.msra.mxu0 %v2143
    %2402 = vmatpush.bf16.msra.mxu0 %v2141
    %2403 = vmatpush.bf16.msra.mxu0 %v2139
    %2404 = vmatpush.bf16.msra.mxu0 %v2137
    %2405 = vmatpush.bf16.msra.mxu0 %v2135
    %2406 = vmatpush.bf16.msra.mxu0 %v2133
    %2407 = vmatpush.bf16.msra.mxu0 %v2131
    %2408 = vmatpush.bf16.msra.mxu0 %v2129
    %2409 = vmatmul.bf16.gmra.mxu0 %v2398
    %v2410 = vpop.f32.mrf.mxu0
    %v2411 = vadd.f32 %v1981, %v2410
    %v2412 = vpop.f32.mrf.mxu0
    %2413 = vdwg.mxu0
    %2414 = vmatpush.bf16.msra.mxu0 %v2159
    %2415 = vmatpush.bf16.msra.mxu0 %v2157
    %2416 = vmatpush.bf16.msra.mxu0 %v2155
    %2417 = vmatpush.bf16.msra.mxu0 %v2153
    %2418 = vmatpush.bf16.msra.mxu0 %v2151
    %2419 = vmatpush.bf16.msra.mxu0 %v2149
    %2420 = vmatpush.bf16.msra.mxu0 %v2147
    %2421 = vmatpush.bf16.msra.mxu0 %v2145
    %2422 = vmatmul.bf16.gmra.mxu0 %v2399
    %v2423 = vpop.f32.mrf.mxu0
    %v2424 = vadd.f32 %v2411, %v2423
    %v2425 = vpop.f32.mrf.mxu0
    %2426 = vdwg.mxu0
    %2427 = vmatpush.bf16.msra.mxu0 %v2175
    %2428 = vmatpush.bf16.msra.mxu0 %v2173
    %2429 = vmatpush.bf16.msra.mxu0 %v2171
    %2430 = vmatpush.bf16.msra.mxu0 %v2169
    %2431 = vmatpush.bf16.msra.mxu0 %v2167
    %2432 = vmatpush.bf16.msra.mxu0 %v2165
    %2433 = vmatpush.bf16.msra.mxu0 %v2163
    %2434 = vmatpush.bf16.msra.mxu0 %v2161
    %2435 = vmatmul.bf16.gmra.mxu0 %v2400
    %v2436 = vpop.f32.mrf.mxu0
    %v2437 = vadd.f32 %v2424, %v2436
    %v2438 = vpop.f32.mrf.mxu0
    %2439 = vdwg.mxu0
    %2440 = vmatpush.bf16.msra.mxu0 %v2144
    %2441 = vmatpush.bf16.msra.mxu0 %v2142
    %2442 = vmatpush.bf16.msra.mxu0 %v2140
    %2443 = vmatpush.bf16.msra.mxu0 %v2138
    %2444 = vmatpush.bf16.msra.mxu0 %v2136
    %2445 = vmatpush.bf16.msra.mxu0 %v2134
    %2446 = vmatpush.bf16.msra.mxu0 %v2132
    %2447 = vmatpush.bf16.msra.mxu0 %v2130
    %2448 = vmatmul.bf16.gmra.mxu0 %v2398
    %v2449 = vpop.f32.mrf.mxu0
    %v2450 = vadd.f32 %v1982, %v2449
    %v2451 = vpop.f32.mrf.mxu0
    %2452 = vdwg.mxu0
    %2453 = vmatpush.bf16.msra.mxu0 %v2160
    %2454 = vmatpush.bf16.msra.mxu0 %v2158
    %2455 = vmatpush.bf16.msra.mxu0 %v2156
    %2456 = vmatpush.bf16.msra.mxu0 %v2154
    %2457 = vmatpush.bf16.msra.mxu0 %v2152
    %2458 = vmatpush.bf16.msra.mxu0 %v2150
    %2459 = vmatpush.bf16.msra.mxu0 %v2148
    %2460 = vmatpush.bf16.msra.mxu0 %v2146
    %2461 = vmatmul.bf16.gmra.mxu0 %v2399
    %v2462 = vpop.f32.mrf.mxu0
    %v2463 = vadd.f32 %v2450, %v2462
    %v2464 = vpop.f32.mrf.mxu0
    %2465 = vdwg.mxu0
    %2466 = vmatpush.bf16.msra.mxu0 %v2176
    %2467 = vmatpush.bf16.msra.mxu0 %v2174
    %2468 = vmatpush.bf16.msra.mxu0 %v2172
    %2469 = vmatpush.bf16.msra.mxu0 %v2170
    %2470 = vmatpush.bf16.msra.mxu0 %v2168
    %2471 = vmatpush.bf16.msra.mxu0 %v2166
    %2472 = vmatpush.bf16.msra.mxu0 %v2164
    %2473 = vmatpush.bf16.msra.mxu0 %v2162
    %2474 = vmatmul.bf16.gmra.mxu0 %v2400
    %v2475 = vpop.f32.mrf.mxu0
    %v2476 = vadd.f32 %v2463, %v2475
    %v2477 = vpop.f32.mrf.mxu0
    %2478 = vdwg.mxu0
    %v2479 = vmax.f32 %v2437, 0.0
    %v2480 = vmax.f32 %v2476, 0.0
    %2481 = vst [vmem:[#allocation3 + $0x20] sm:$0xff] %v2479
    %2482 = vst [vmem:[#allocation3 + $0x28] sm:$0xff] %v2480
    %v2483 = vld [vmem:[#allocation2 + $0x18] sm:$0xff]
    %v2484 = vld [vmem:[#allocation2 + $0x20] sm:$0xff]
    %v2485 = vld [vmem:[#allocation2 + $0x28] sm:$0xff]
    %v2486 = vpack.c.bf16 %v2483, %v2483
    %v2487 = vpack.c.bf16 %v2484, %v2484
    %v2488 = vpack.c.bf16 %v2485, %v2485
    %2489 = vmatpush.bf16.msra.mxu0 %v2143
    %2490 = vmatpush.bf16.msra.mxu0 %v2141
    %2491 = vmatpush.bf16.msra.mxu0 %v2139
    %2492 = vmatpush.bf16.msra.mxu0 %v2137
    %2493 = vmatpush.bf16.msra.mxu0 %v2135
    %2494 = vmatpush.bf16.msra.mxu0 %v2133
    %2495 = vmatpush.bf16.msra.mxu0 %v2131
    %2496 = vmatpush.bf16.msra.mxu0 %v2129
    %2497 = vmatmul.bf16.gmra.mxu0 %v2486
    %v2498 = vpop.f32.mrf.mxu0
    %v2499 = vadd.f32 %v1981, %v2498
    %v2500 = vpop.f32.mrf.mxu0
    %2501 = vdwg.mxu0
    %2502 = vmatpush.bf16.msra.mxu0 %v2159
    %2503 = vmatpush.bf16.msra.mxu0 %v2157
    %2504 = vmatpush.bf16.msra.mxu0 %v2155
    %2505 = vmatpush.bf16.msra.mxu0 %v2153
    %2506 = vmatpush.bf16.msra.mxu0 %v2151
    %2507 = vmatpush.bf16.msra.mxu0 %v2149
    %2508 = vmatpush.bf16.msra.mxu0 %v2147
    %2509 = vmatpush.bf16.msra.mxu0 %v2145
    %2510 = vmatmul.bf16.gmra.mxu0 %v2487
    %v2511 = vpop.f32.mrf.mxu0
    %v2512 = vadd.f32 %v2499, %v2511
    %v2513 = vpop.f32.mrf.mxu0
    %2514 = vdwg.mxu0
    %2515 = vmatpush.bf16.msra.mxu0 %v2175
    %2516 = vmatpush.bf16.msra.mxu0 %v2173
    %2517 = vmatpush.bf16.msra.mxu0 %v2171
    %2518 = vmatpush.bf16.msra.mxu0 %v2169
    %2519 = vmatpush.bf16.msra.mxu0 %v2167
    %2520 = vmatpush.bf16.msra.mxu0 %v2165
    %2521 = vmatpush.bf16.msra.mxu0 %v2163
    %2522 = vmatpush.bf16.msra.mxu0 %v2161
    %2523 = vmatmul.bf16.gmra.mxu0 %v2488
    %v2524 = vpop.f32.mrf.mxu0
    %v2525 = vadd.f32 %v2512, %v2524
    %v2526 = vpop.f32.mrf.mxu0
    %2527 = vdwg.mxu0
    %2528 = vmatpush.bf16.msra.mxu0 %v2144
    %2529 = vmatpush.bf16.msra.mxu0 %v2142
    %2530 = vmatpush.bf16.msra.mxu0 %v2140
    %2531 = vmatpush.bf16.msra.mxu0 %v2138
    %2532 = vmatpush.bf16.msra.mxu0 %v2136
    %2533 = vmatpush.bf16.msra.mxu0 %v2134
    %2534 = vmatpush.bf16.msra.mxu0 %v2132
    %2535 = vmatpush.bf16.msra.mxu0 %v2130
    %2536 = vmatmul.bf16.gmra.mxu0 %v2486
    %v2537 = vpop.f32.mrf.mxu0
    %v2538 = vadd.f32 %v1982, %v2537
    %v2539 = vpop.f32.mrf.mxu0
    %2540 = vdwg.mxu0
    %2541 = vmatpush.bf16.msra.mxu0 %v2160
    %2542 = vmatpush.bf16.msra.mxu0 %v2158
    %2543 = vmatpush.bf16.msra.mxu0 %v2156
    %2544 = vmatpush.bf16.msra.mxu0 %v2154
    %2545 = vmatpush.bf16.msra.mxu0 %v2152
    %2546 = vmatpush.bf16.msra.mxu0 %v2150
    %2547 = vmatpush.bf16.msra.mxu0 %v2148
    %2548 = vmatpush.bf16.msra.mxu0 %v2146
    %2549 = vmatmul.bf16.gmra.mxu0 %v2487
    %v2550 = vpop.f32.mrf.mxu0
    %v2551 = vadd.f32 %v2538, %v2550
    %v2552 = vpop.f32.mrf.mxu0
    %2553 = vdwg.mxu0
    %2554 = vmatpush.bf16.msra.mxu0 %v2176
    %2555 = vmatpush.bf16.msra.mxu0 %v2174
    %2556 = vmatpush.bf16.msra.mxu0 %v2172
    %2557 = vmatpush.bf16.msra.mxu0 %v2170
    %2558 = vmatpush.bf16.msra.mxu0 %v2168
    %2559 = vmatpush.bf16.msra.mxu0 %v2166
    %2560 = vmatpush.bf16.msra.mxu0 %v2164
    %2561 = vmatpush.bf16.msra.mxu0 %v2162
    %2562 = vmatmul.bf16.gmra.mxu0 %v2488
    %v2563 = vpop.f32.mrf.mxu0
    %v2564 = vadd.f32 %v2551, %v2563
    %v2565 = vpop.f32.mrf.mxu0
    %2566 = vdwg.mxu0
    %v2567 = vmax.f32 %v2525, 0.0
    %v2568 = vmax.f32 %v2564, 0.0
    %2569 = vst [vmem:[#allocation3 + $0x30] sm:$0xff] %v2567
    %2570 = vst [vmem:[#allocation3 + $0x38] sm:$0xff] %v2568
    %v2571 = vld [vmem:[#allocation2 + $0x20] sm:$0xff]
    %v2572 = vld [vmem:[#allocation2 + $0x28] sm:$0xff]
    %v2573 = vld [vmem:[#allocation2 + $0x30] sm:$0xff]
    %v2574 = vpack.c.bf16 %v2571, %v2571
    %v2575 = vpack.c.bf16 %v2572, %v2572
    %v2576 = vpack.c.bf16 %v2573, %v2573
    %2577 = vmatpush.bf16.msra.mxu0 %v2143
    %2578 = vmatpush.bf16.msra.mxu0 %v2141
    %2579 = vmatpush.bf16.msra.mxu0 %v2139
    %2580 = vmatpush.bf16.msra.mxu0 %v2137
    %2581 = vmatpush.bf16.msra.mxu0 %v2135
    %2582 = vmatpush.bf16.msra.mxu0 %v2133
    %2583 = vmatpush.bf16.msra.mxu0 %v2131
    %2584 = vmatpush.bf16.msra.mxu0 %v2129
    %2585 = vmatmul.bf16.gmra.mxu0 %v2574
    %v2586 = vpop.f32.mrf.mxu0
    %v2587 = vadd.f32 %v1981, %v2586
    %v2588 = vpop.f32.mrf.mxu0
    %2589 = vdwg.mxu0
    %2590 = vmatpush.bf16.msra.mxu0 %v2159
    %2591 = vmatpush.bf16.msra.mxu0 %v2157
    %2592 = vmatpush.bf16.msra.mxu0 %v2155
    %2593 = vmatpush.bf16.msra.mxu0 %v2153
    %2594 = vmatpush.bf16.msra.mxu0 %v2151
    %2595 = vmatpush.bf16.msra.mxu0 %v2149
    %2596 = vmatpush.bf16.msra.mxu0 %v2147
    %2597 = vmatpush.bf16.msra.mxu0 %v2145
    %2598 = vmatmul.bf16.gmra.mxu0 %v2575
    %v2599 = vpop.f32.mrf.mxu0
    %v2600 = vadd.f32 %v2587, %v2599
    %v2601 = vpop.f32.mrf.mxu0
    %2602 = vdwg.mxu0
    %2603 = vmatpush.bf16.msra.mxu0 %v2175
    %2604 = vmatpush.bf16.msra.mxu0 %v2173
    %2605 = vmatpush.bf16.msra.mxu0 %v2171
    %2606 = vmatpush.bf16.msra.mxu0 %v2169
    %2607 = vmatpush.bf16.msra.mxu0 %v2167
    %2608 = vmatpush.bf16.msra.mxu0 %v2165
    %2609 = vmatpush.bf16.msra.mxu0 %v2163
    %2610 = vmatpush.bf16.msra.mxu0 %v2161
    %2611 = vmatmul.bf16.gmra.mxu0 %v2576
    %v2612 = vpop.f32.mrf.mxu0
    %v2613 = vadd.f32 %v2600, %v2612
    %v2614 = vpop.f32.mrf.mxu0
    %2615 = vdwg.mxu0
    %2616 = vmatpush.bf16.msra.mxu0 %v2144
    %2617 = vmatpush.bf16.msra.mxu0 %v2142
    %2618 = vmatpush.bf16.msra.mxu0 %v2140
    %2619 = vmatpush.bf16.msra.mxu0 %v2138
    %2620 = vmatpush.bf16.msra.mxu0 %v2136
    %2621 = vmatpush.bf16.msra.mxu0 %v2134
    %2622 = vmatpush.bf16.msra.mxu0 %v2132
    %2623 = vmatpush.bf16.msra.mxu0 %v2130
    %2624 = vmatmul.bf16.gmra.mxu0 %v2574
    %v2625 = vpop.f32.mrf.mxu0
    %v2626 = vadd.f32 %v1982, %v2625
    %v2627 = vpop.f32.mrf.mxu0
    %2628 = vdwg.mxu0
    %2629 = vmatpush.bf16.msra.mxu0 %v2160
    %2630 = vmatpush.bf16.msra.mxu0 %v2158
    %2631 = vmatpush.bf16.msra.mxu0 %v2156
    %2632 = vmatpush.bf16.msra.mxu0 %v2154
    %2633 = vmatpush.bf16.msra.mxu0 %v2152
    %2634 = vmatpush.bf16.msra.mxu0 %v2150
    %2635 = vmatpush.bf16.msra.mxu0 %v2148
    %2636 = vmatpush.bf16.msra.mxu0 %v2146
    %2637 = vmatmul.bf16.gmra.mxu0 %v2575
    %v2638 = vpop.f32.mrf.mxu0
    %v2639 = vadd.f32 %v2626, %v2638
    %v2640 = vpop.f32.mrf.mxu0
    %2641 = vdwg.mxu0
    %2642 = vmatpush.bf16.msra.mxu0 %v2176
    %2643 = vmatpush.bf16.msra.mxu0 %v2174
    %2644 = vmatpush.bf16.msra.mxu0 %v2172
    %2645 = vmatpush.bf16.msra.mxu0 %v2170
    %2646 = vmatpush.bf16.msra.mxu0 %v2168
    %2647 = vmatpush.bf16.msra.mxu0 %v2166
    %2648 = vmatpush.bf16.msra.mxu0 %v2164
    %2649 = vmatpush.bf16.msra.mxu0 %v2162
    %2650 = vmatmul.bf16.gmra.mxu0 %v2576
    %v2651 = vpop.f32.mrf.mxu0
    %v2652 = vadd.f32 %v2639, %v2651
    %v2653 = vpop.f32.mrf.mxu0
    %2654 = vdwg.mxu0
    %v2655 = vmax.f32 %v2613, 0.0
    %v2656 = vmax.f32 %v2652, 0.0
    %2657 = vst [vmem:[#allocation3 + $0x40] sm:$0xff] %v2655
    %2658 = vst [vmem:[#allocation3 + $0x48] sm:$0xff] %v2656
    %v2659 = vld [vmem:[#allocation2 + $0x28] sm:$0xff]
    %v2660 = vld [vmem:[#allocation2 + $0x30] sm:$0xff]
    %v2661 = vld [vmem:[#allocation2 + $0x38] sm:$0xff]
    %v2662 = vpack.c.bf16 %v2659, %v2659
    %v2663 = vpack.c.bf16 %v2660, %v2660
    %v2664 = vpack.c.bf16 %v2661, %v2661
    %2665 = vmatpush.bf16.msra.mxu0 %v2143
    %2666 = vmatpush.bf16.msra.mxu0 %v2141
    %2667 = vmatpush.bf16.msra.mxu0 %v2139
    %2668 = vmatpush.bf16.msra.mxu0 %v2137
    %2669 = vmatpush.bf16.msra.mxu0 %v2135
    %2670 = vmatpush.bf16.msra.mxu0 %v2133
    %2671 = vmatpush.bf16.msra.mxu0 %v2131
    %2672 = vmatpush.bf16.msra.mxu0 %v2129
    %2673 = vmatmul.bf16.gmra.mxu0 %v2662
    %v2674 = vpop.f32.mrf.mxu0
    %v2675 = vadd.f32 %v1981, %v2674
    %v2676 = vpop.f32.mrf.mxu0
    %2677 = vdwg.mxu0
    %2678 = vmatpush.bf16.msra.mxu0 %v2159
    %2679 = vmatpush.bf16.msra.mxu0 %v2157
    %2680 = vmatpush.bf16.msra.mxu0 %v2155
    %2681 = vmatpush.bf16.msra.mxu0 %v2153
    %2682 = vmatpush.bf16.msra.mxu0 %v2151
    %2683 = vmatpush.bf16.msra.mxu0 %v2149
    %2684 = vmatpush.bf16.msra.mxu0 %v2147
    %2685 = vmatpush.bf16.msra.mxu0 %v2145
    %2686 = vmatmul.bf16.gmra.mxu0 %v2663
    %v2687 = vpop.f32.mrf.mxu0
    %v2688 = vadd.f32 %v2675, %v2687
    %v2689 = vpop.f32.mrf.mxu0
    %2690 = vdwg.mxu0
    %2691 = vmatpush.bf16.msra.mxu0 %v2175
    %2692 = vmatpush.bf16.msra.mxu0 %v2173
    %2693 = vmatpush.bf16.msra.mxu0 %v2171
    %2694 = vmatpush.bf16.msra.mxu0 %v2169
    %2695 = vmatpush.bf16.msra.mxu0 %v2167
    %2696 = vmatpush.bf16.msra.mxu0 %v2165
    %2697 = vmatpush.bf16.msra.mxu0 %v2163
    %2698 = vmatpush.bf16.msra.mxu0 %v2161
    %2699 = vmatmul.bf16.gmra.mxu0 %v2664
    %v2700 = vpop.f32.mrf.mxu0
    %v2701 = vadd.f32 %v2688, %v2700
    %v2702 = vpop.f32.mrf.mxu0
    %2703 = vdwg.mxu0
    %2704 = vmatpush.bf16.msra.mxu0 %v2144
    %2705 = vmatpush.bf16.msra.mxu0 %v2142
    %2706 = vmatpush.bf16.msra.mxu0 %v2140
    %2707 = vmatpush.bf16.msra.mxu0 %v2138
    %2708 = vmatpush.bf16.msra.mxu0 %v2136
    %2709 = vmatpush.bf16.msra.mxu0 %v2134
    %2710 = vmatpush.bf16.msra.mxu0 %v2132
    %2711 = vmatpush.bf16.msra.mxu0 %v2130
    %2712 = vmatmul.bf16.gmra.mxu0 %v2662
    %v2713 = vpop.f32.mrf.mxu0
    %v2714 = vadd.f32 %v1982, %v2713
    %v2715 = vpop.f32.mrf.mxu0
    %2716 = vdwg.mxu0
    %2717 = vmatpush.bf16.msra.mxu0 %v2160
    %2718 = vmatpush.bf16.msra.mxu0 %v2158
    %2719 = vmatpush.bf16.msra.mxu0 %v2156
    %2720 = vmatpush.bf16.msra.mxu0 %v2154
    %2721 = vmatpush.bf16.msra.mxu0 %v2152
    %2722 = vmatpush.bf16.msra.mxu0 %v2150
    %2723 = vmatpush.bf16.msra.mxu0 %v2148
    %2724 = vmatpush.bf16.msra.mxu0 %v2146
    %2725 = vmatmul.bf16.gmra.mxu0 %v2663
    %v2726 = vpop.f32.mrf.mxu0
    %v2727 = vadd.f32 %v2714, %v2726
    %v2728 = vpop.f32.mrf.mxu0
    %2729 = vdwg.mxu0
    %2730 = vmatpush.bf16.msra.mxu0 %v2176
    %2731 = vmatpush.bf16.msra.mxu0 %v2174
    %2732 = vmatpush.bf16.msra.mxu0 %v2172
    %2733 = vmatpush.bf16.msra.mxu0 %v2170
    %2734 = vmatpush.bf16.msra.mxu0 %v2168
    %2735 = vmatpush.bf16.msra.mxu0 %v2166
    %2736 = vmatpush.bf16.msra.mxu0 %v2164
    %2737 = vmatpush.bf16.msra.mxu0 %v2162
    %2738 = vmatmul.bf16.gmra.mxu0 %v2664
    %v2739 = vpop.f32.mrf.mxu0
    %v2740 = vadd.f32 %v2727, %v2739
    %v2741 = vpop.f32.mrf.mxu0
    %2742 = vdwg.mxu0
    %v2743 = vmax.f32 %v2701, 0.0
    %v2744 = vmax.f32 %v2740, 0.0
    %2745 = vst [vmem:[#allocation3 + $0x50] sm:$0xff] %v2743
    %2746 = vst [vmem:[#allocation3 + $0x58] sm:$0xff] %v2744
    %v2747 = vld [vmem:[#allocation2 + $0x30] sm:$0xff]
    %v2748 = vld [vmem:[#allocation2 + $0x38] sm:$0xff]
    %v2749 = vld [vmem:[#allocation2 + $0x40] sm:$0xff]
    %v2750 = vpack.c.bf16 %v2747, %v2747
    %v2751 = vpack.c.bf16 %v2748, %v2748
    %v2752 = vpack.c.bf16 %v2749, %v2749
    %2753 = vmatpush.bf16.msra.mxu0 %v2143
    %2754 = vmatpush.bf16.msra.mxu0 %v2141
    %2755 = vmatpush.bf16.msra.mxu0 %v2139
    %2756 = vmatpush.bf16.msra.mxu0 %v2137
    %2757 = vmatpush.bf16.msra.mxu0 %v2135
    %2758 = vmatpush.bf16.msra.mxu0 %v2133
    %2759 = vmatpush.bf16.msra.mxu0 %v2131
    %2760 = vmatpush.bf16.msra.mxu0 %v2129
    %2761 = vmatmul.bf16.gmra.mxu0 %v2750
    %v2762 = vpop.f32.mrf.mxu0
    %v2763 = vadd.f32 %v1981, %v2762
    %v2764 = vpop.f32.mrf.mxu0
    %2765 = vdwg.mxu0
    %2766 = vmatpush.bf16.msra.mxu0 %v2159
    %2767 = vmatpush.bf16.msra.mxu0 %v2157
    %2768 = vmatpush.bf16.msra.mxu0 %v2155
    %2769 = vmatpush.bf16.msra.mxu0 %v2153
    %2770 = vmatpush.bf16.msra.mxu0 %v2151
    %2771 = vmatpush.bf16.msra.mxu0 %v2149
    %2772 = vmatpush.bf16.msra.mxu0 %v2147
    %2773 = vmatpush.bf16.msra.mxu0 %v2145
    %2774 = vmatmul.bf16.gmra.mxu0 %v2751
    %v2775 = vpop.f32.mrf.mxu0
    %v2776 = vadd.f32 %v2763, %v2775
    %v2777 = vpop.f32.mrf.mxu0
    %2778 = vdwg.mxu0
    %2779 = vmatpush.bf16.msra.mxu0 %v2175
    %2780 = vmatpush.bf16.msra.mxu0 %v2173
    %2781 = vmatpush.bf16.msra.mxu0 %v2171
    %2782 = vmatpush.bf16.msra.mxu0 %v2169
    %2783 = vmatpush.bf16.msra.mxu0 %v2167
    %2784 = vmatpush.bf16.msra.mxu0 %v2165
    %2785 = vmatpush.bf16.msra.mxu0 %v2163
    %2786 = vmatpush.bf16.msra.mxu0 %v2161
    %2787 = vmatmul.bf16.gmra.mxu0 %v2752
    %v2788 = vpop.f32.mrf.mxu0
    %v2789 = vadd.f32 %v2776, %v2788
    %v2790 = vpop.f32.mrf.mxu0
    %2791 = vdwg.mxu0
    %2792 = vmatpush.bf16.msra.mxu0 %v2144
    %2793 = vmatpush.bf16.msra.mxu0 %v2142
    %2794 = vmatpush.bf16.msra.mxu0 %v2140
    %2795 = vmatpush.bf16.msra.mxu0 %v2138
    %2796 = vmatpush.bf16.msra.mxu0 %v2136
    %2797 = vmatpush.bf16.msra.mxu0 %v2134
    %2798 = vmatpush.bf16.msra.mxu0 %v2132
    %2799 = vmatpush.bf16.msra.mxu0 %v2130
    %2800 = vmatmul.bf16.gmra.mxu0 %v2750
    %v2801 = vpop.f32.mrf.mxu0
    %v2802 = vadd.f32 %v1982, %v2801
    %v2803 = vpop.f32.mrf.mxu0
    %2804 = vdwg.mxu0
    %2805 = vmatpush.bf16.msra.mxu0 %v2160
    %2806 = vmatpush.bf16.msra.mxu0 %v2158
    %2807 = vmatpush.bf16.msra.mxu0 %v2156
    %2808 = vmatpush.bf16.msra.mxu0 %v2154
    %2809 = vmatpush.bf16.msra.mxu0 %v2152
    %2810 = vmatpush.bf16.msra.mxu0 %v2150
    %2811 = vmatpush.bf16.msra.mxu0 %v2148
    %2812 = vmatpush.bf16.msra.mxu0 %v2146
    %2813 = vmatmul.bf16.gmra.mxu0 %v2751
    %v2814 = vpop.f32.mrf.mxu0
    %v2815 = vadd.f32 %v2802, %v2814
    %v2816 = vpop.f32.mrf.mxu0
    %2817 = vdwg.mxu0
    %2818 = vmatpush.bf16.msra.mxu0 %v2176
    %2819 = vmatpush.bf16.msra.mxu0 %v2174
    %2820 = vmatpush.bf16.msra.mxu0 %v2172
    %2821 = vmatpush.bf16.msra.mxu0 %v2170
    %2822 = vmatpush.bf16.msra.mxu0 %v2168
    %2823 = vmatpush.bf16.msra.mxu0 %v2166
    %2824 = vmatpush.bf16.msra.mxu0 %v2164
    %2825 = vmatpush.bf16.msra.mxu0 %v2162
    %2826 = vmatmul.bf16.gmra.mxu0 %v2752
    %v2827 = vpop.f32.mrf.mxu0
    %v2828 = vadd.f32 %v2815, %v2827
    %v2829 = vpop.f32.mrf.mxu0
    %2830 = vdwg.mxu0
    %v2831 = vmax.f32 %v2789, 0.0
    %v2832 = vmax.f32 %v2828, 0.0
    %2833 = vst [vmem:[#allocation3 + $0x60] sm:$0xff] %v2831
    %2834 = vst [vmem:[#allocation3 + $0x68] sm:$0xff] %v2832
    %v2835 = vld [vmem:[#allocation2 + $0x38] sm:$0xff]
    %v2836 = vld [vmem:[#allocation2 + $0x40] sm:$0xff]
    %v2837 = vld [vmem:[#allocation2 + $0x48] sm:$0xff]
    %v2838 = vpack.c.bf16 %v2835, %v2835
    %v2839 = vpack.c.bf16 %v2836, %v2836
    %v2840 = vpack.c.bf16 %v2837, %v2837
    %2841 = vmatpush.bf16.msra.mxu0 %v2143
    %2842 = vmatpush.bf16.msra.mxu0 %v2141
    %2843 = vmatpush.bf16.msra.mxu0 %v2139
    %2844 = vmatpush.bf16.msra.mxu0 %v2137
    %2845 = vmatpush.bf16.msra.mxu0 %v2135
    %2846 = vmatpush.bf16.msra.mxu0 %v2133
    %2847 = vmatpush.bf16.msra.mxu0 %v2131
    %2848 = vmatpush.bf16.msra.mxu0 %v2129
    %2849 = vmatmul.bf16.gmra.mxu0 %v2838
    %v2850 = vpop.f32.mrf.mxu0
    %v2851 = vadd.f32 %v1981, %v2850
    %v2852 = vpop.f32.mrf.mxu0
    %2853 = vdwg.mxu0
    %2854 = vmatpush.bf16.msra.mxu0 %v2159
    %2855 = vmatpush.bf16.msra.mxu0 %v2157
    %2856 = vmatpush.bf16.msra.mxu0 %v2155
    %2857 = vmatpush.bf16.msra.mxu0 %v2153
    %2858 = vmatpush.bf16.msra.mxu0 %v2151
    %2859 = vmatpush.bf16.msra.mxu0 %v2149
    %2860 = vmatpush.bf16.msra.mxu0 %v2147
    %2861 = vmatpush.bf16.msra.mxu0 %v2145
    %2862 = vmatmul.bf16.gmra.mxu0 %v2839
    %v2863 = vpop.f32.mrf.mxu0
    %v2864 = vadd.f32 %v2851, %v2863
    %v2865 = vpop.f32.mrf.mxu0
    %2866 = vdwg.mxu0
    %2867 = vmatpush.bf16.msra.mxu0 %v2175
    %2868 = vmatpush.bf16.msra.mxu0 %v2173
    %2869 = vmatpush.bf16.msra.mxu0 %v2171
    %2870 = vmatpush.bf16.msra.mxu0 %v2169
    %2871 = vmatpush.bf16.msra.mxu0 %v2167
    %2872 = vmatpush.bf16.msra.mxu0 %v2165
    %2873 = vmatpush.bf16.msra.mxu0 %v2163
    %2874 = vmatpush.bf16.msra.mxu0 %v2161
    %2875 = vmatmul.bf16.gmra.mxu0 %v2840
    %v2876 = vpop.f32.mrf.mxu0
    %v2877 = vadd.f32 %v2864, %v2876
    %v2878 = vpop.f32.mrf.mxu0
    %2879 = vdwg.mxu0
    %2880 = vmatpush.bf16.msra.mxu0 %v2144
    %2881 = vmatpush.bf16.msra.mxu0 %v2142
    %2882 = vmatpush.bf16.msra.mxu0 %v2140
    %2883 = vmatpush.bf16.msra.mxu0 %v2138
    %2884 = vmatpush.bf16.msra.mxu0 %v2136
    %2885 = vmatpush.bf16.msra.mxu0 %v2134
    %2886 = vmatpush.bf16.msra.mxu0 %v2132
    %2887 = vmatpush.bf16.msra.mxu0 %v2130
    %2888 = vmatmul.bf16.gmra.mxu0 %v2838
    %v2889 = vpop.f32.mrf.mxu0
    %v2890 = vadd.f32 %v1982, %v2889
    %v2891 = vpop.f32.mrf.mxu0
    %2892 = vdwg.mxu0
    %2893 = vmatpush.bf16.msra.mxu0 %v2160
    %2894 = vmatpush.bf16.msra.mxu0 %v2158
    %2895 = vmatpush.bf16.msra.mxu0 %v2156
    %2896 = vmatpush.bf16.msra.mxu0 %v2154
    %2897 = vmatpush.bf16.msra.mxu0 %v2152
    %2898 = vmatpush.bf16.msra.mxu0 %v2150
    %2899 = vmatpush.bf16.msra.mxu0 %v2148
    %2900 = vmatpush.bf16.msra.mxu0 %v2146
    %2901 = vmatmul.bf16.gmra.mxu0 %v2839
    %v2902 = vpop.f32.mrf.mxu0
    %v2903 = vadd.f32 %v2890, %v2902
    %v2904 = vpop.f32.mrf.mxu0
    %2905 = vdwg.mxu0
    %2906 = vmatpush.bf16.msra.mxu0 %v2176
    %2907 = vmatpush.bf16.msra.mxu0 %v2174
    %2908 = vmatpush.bf16.msra.mxu0 %v2172
    %2909 = vmatpush.bf16.msra.mxu0 %v2170
    %2910 = vmatpush.bf16.msra.mxu0 %v2168
    %2911 = vmatpush.bf16.msra.mxu0 %v2166
    %2912 = vmatpush.bf16.msra.mxu0 %v2164
    %2913 = vmatpush.bf16.msra.mxu0 %v2162
    %2914 = vmatmul.bf16.gmra.mxu0 %v2840
    %v2915 = vpop.f32.mrf.mxu0
    %v2916 = vadd.f32 %v2903, %v2915
    %v2917 = vpop.f32.mrf.mxu0
    %2918 = vdwg.mxu0
    %v2919 = vmax.f32 %v2877, 0.0
    %v2920 = vmax.f32 %v2916, 0.0
    %2921 = vst [vmem:[#allocation3 + $0x70] sm:$0xff] %v2919
    %2922 = vst [vmem:[#allocation3 + $0x78] sm:$0xff] %v2920
    %v2923 = vld [vmem:[#allocation2 + $0x40] sm:$0xff]
    %v2924 = vld [vmem:[#allocation2 + $0x48] sm:$0xff]
    %v2925 = vld [vmem:[#allocation2 + $0x50] sm:$0xff]
    %v2926 = vpack.c.bf16 %v2923, %v2923
    %v2927 = vpack.c.bf16 %v2924, %v2924
    %v2928 = vpack.c.bf16 %v2925, %v2925
    %2929 = vmatpush.bf16.msra.mxu0 %v2143
    %2930 = vmatpush.bf16.msra.mxu0 %v2141
    %2931 = vmatpush.bf16.msra.mxu0 %v2139
    %2932 = vmatpush.bf16.msra.mxu0 %v2137
    %2933 = vmatpush.bf16.msra.mxu0 %v2135
    %2934 = vmatpush.bf16.msra.mxu0 %v2133
    %2935 = vmatpush.bf16.msra.mxu0 %v2131
    %2936 = vmatpush.bf16.msra.mxu0 %v2129
    %2937 = vmatmul.bf16.gmra.mxu0 %v2926
    %v2938 = vpop.f32.mrf.mxu0
    %v2939 = vadd.f32 %v1981, %v2938
    %v2940 = vpop.f32.mrf.mxu0
    %2941 = vdwg.mxu0
    %2942 = vmatpush.bf16.msra.mxu0 %v2159
    %2943 = vmatpush.bf16.msra.mxu0 %v2157
    %2944 = vmatpush.bf16.msra.mxu0 %v2155
    %2945 = vmatpush.bf16.msra.mxu0 %v2153
    %2946 = vmatpush.bf16.msra.mxu0 %v2151
    %2947 = vmatpush.bf16.msra.mxu0 %v2149
    %2948 = vmatpush.bf16.msra.mxu0 %v2147
    %2949 = vmatpush.bf16.msra.mxu0 %v2145
    %2950 = vmatmul.bf16.gmra.mxu0 %v2927
    %v2951 = vpop.f32.mrf.mxu0
    %v2952 = vadd.f32 %v2939, %v2951
    %v2953 = vpop.f32.mrf.mxu0
    %2954 = vdwg.mxu0
    %2955 = vmatpush.bf16.msra.mxu0 %v2175
    %2956 = vmatpush.bf16.msra.mxu0 %v2173
    %2957 = vmatpush.bf16.msra.mxu0 %v2171
    %2958 = vmatpush.bf16.msra.mxu0 %v2169
    %2959 = vmatpush.bf16.msra.mxu0 %v2167
    %2960 = vmatpush.bf16.msra.mxu0 %v2165
    %2961 = vmatpush.bf16.msra.mxu0 %v2163
    %2962 = vmatpush.bf16.msra.mxu0 %v2161
    %2963 = vmatmul.bf16.gmra.mxu0 %v2928
    %v2964 = vpop.f32.mrf.mxu0
    %v2965 = vadd.f32 %v2952, %v2964
    %v2966 = vpop.f32.mrf.mxu0
    %2967 = vdwg.mxu0
    %2968 = vmatpush.bf16.msra.mxu0 %v2144
    %2969 = vmatpush.bf16.msra.mxu0 %v2142
    %2970 = vmatpush.bf16.msra.mxu0 %v2140
    %2971 = vmatpush.bf16.msra.mxu0 %v2138
    %2972 = vmatpush.bf16.msra.mxu0 %v2136
    %2973 = vmatpush.bf16.msra.mxu0 %v2134
    %2974 = vmatpush.bf16.msra.mxu0 %v2132
    %2975 = vmatpush.bf16.msra.mxu0 %v2130
    %2976 = vmatmul.bf16.gmra.mxu0 %v2926
    %v2977 = vpop.f32.mrf.mxu0
    %v2978 = vadd.f32 %v1982, %v2977
    %v2979 = vpop.f32.mrf.mxu0
    %2980 = vdwg.mxu0
    %2981 = vmatpush.bf16.msra.mxu0 %v2160
    %2982 = vmatpush.bf16.msra.mxu0 %v2158
    %2983 = vmatpush.bf16.msra.mxu0 %v2156
    %2984 = vmatpush.bf16.msra.mxu0 %v2154
    %2985 = vmatpush.bf16.msra.mxu0 %v2152
    %2986 = vmatpush.bf16.msra.mxu0 %v2150
    %2987 = vmatpush.bf16.msra.mxu0 %v2148
    %2988 = vmatpush.bf16.msra.mxu0 %v2146
    %2989 = vmatmul.bf16.gmra.mxu0 %v2927
    %v2990 = vpop.f32.mrf.mxu0
    %v2991 = vadd.f32 %v2978, %v2990
    %v2992 = vpop.f32.mrf.mxu0
    %2993 = vdwg.mxu0
    %2994 = vmatpush.bf16.msra.mxu0 %v2176
    %2995 = vmatpush.bf16.msra.mxu0 %v2174
    %2996 = vmatpush.bf16.msra.mxu0 %v2172
    %2997 = vmatpush.bf16.msra.mxu0 %v2170
    %2998 = vmatpush.bf16.msra.mxu0 %v2168
    %2999 = vmatpush.bf16.msra.mxu0 %v2166
    %3000 = vmatpush.bf16.msra.mxu0 %v2164
    %3001 = vmatpush.bf16.msra.mxu0 %v2162
    %3002 = vmatmul.bf16.gmra.mxu0 %v2928
    %v3003 = vpop.f32.mrf.mxu0
    %v3004 = vadd.f32 %v2991, %v3003
    %v3005 = vpop.f32.mrf.mxu0
    %3006 = vdwg.mxu0
    %v3007 = vmax.f32 %v2965, 0.0
    %v3008 = vmax.f32 %v3004, 0.0
    %3009 = vst [vmem:[#allocation3 + $0x80] sm:$0xff] %v3007
    %3010 = vst [vmem:[#allocation3 + $0x88] sm:$0xff] %v3008
    %v3011 = vld [vmem:[#allocation2 + $0x48] sm:$0xff]
    %v3012 = vld [vmem:[#allocation2 + $0x50] sm:$0xff]
    %v3013 = vld [vmem:[#allocation2 + $0x58] sm:$0xff]
    %v3014 = vpack.c.bf16 %v3011, %v3011
    %v3015 = vpack.c.bf16 %v3012, %v3012
    %v3016 = vpack.c.bf16 %v3013, %v3013
    %3017 = vmatpush.bf16.msra.mxu0 %v2143
    %3018 = vmatpush.bf16.msra.mxu0 %v2141
    %3019 = vmatpush.bf16.msra.mxu0 %v2139
    %3020 = vmatpush.bf16.msra.mxu0 %v2137
    %3021 = vmatpush.bf16.msra.mxu0 %v2135
    %3022 = vmatpush.bf16.msra.mxu0 %v2133
    %3023 = vmatpush.bf16.msra.mxu0 %v2131
    %3024 = vmatpush.bf16.msra.mxu0 %v2129
    %3025 = vmatmul.bf16.gmra.mxu0 %v3014
    %v3026 = vpop.f32.mrf.mxu0
    %v3027 = vadd.f32 %v1981, %v3026
    %v3028 = vpop.f32.mrf.mxu0
    %3029 = vdwg.mxu0
    %3030 = vmatpush.bf16.msra.mxu0 %v2159
    %3031 = vmatpush.bf16.msra.mxu0 %v2157
    %3032 = vmatpush.bf16.msra.mxu0 %v2155
    %3033 = vmatpush.bf16.msra.mxu0 %v2153
    %3034 = vmatpush.bf16.msra.mxu0 %v2151
    %3035 = vmatpush.bf16.msra.mxu0 %v2149
    %3036 = vmatpush.bf16.msra.mxu0 %v2147
    %3037 = vmatpush.bf16.msra.mxu0 %v2145
    %3038 = vmatmul.bf16.gmra.mxu0 %v3015
    %v3039 = vpop.f32.mrf.mxu0
    %v3040 = vadd.f32 %v3027, %v3039
    %v3041 = vpop.f32.mrf.mxu0
    %3042 = vdwg.mxu0
    %3043 = vmatpush.bf16.msra.mxu0 %v2175
    %3044 = vmatpush.bf16.msra.mxu0 %v2173
    %3045 = vmatpush.bf16.msra.mxu0 %v2171
    %3046 = vmatpush.bf16.msra.mxu0 %v2169
    %3047 = vmatpush.bf16.msra.mxu0 %v2167
    %3048 = vmatpush.bf16.msra.mxu0 %v2165
    %3049 = vmatpush.bf16.msra.mxu0 %v2163
    %3050 = vmatpush.bf16.msra.mxu0 %v2161
    %3051 = vmatmul.bf16.gmra.mxu0 %v3016
    %v3052 = vpop.f32.mrf.mxu0
    %v3053 = vadd.f32 %v3040, %v3052
    %v3054 = vpop.f32.mrf.mxu0
    %3055 = vdwg.mxu0
    %3056 = vmatpush.bf16.msra.mxu0 %v2144
    %3057 = vmatpush.bf16.msra.mxu0 %v2142
    %3058 = vmatpush.bf16.msra.mxu0 %v2140
    %3059 = vmatpush.bf16.msra.mxu0 %v2138
    %3060 = vmatpush.bf16.msra.mxu0 %v2136
    %3061 = vmatpush.bf16.msra.mxu0 %v2134
    %3062 = vmatpush.bf16.msra.mxu0 %v2132
    %3063 = vmatpush.bf16.msra.mxu0 %v2130
    %3064 = vmatmul.bf16.gmra.mxu0 %v3014
    %v3065 = vpop.f32.mrf.mxu0
    %v3066 = vadd.f32 %v1982, %v3065
    %v3067 = vpop.f32.mrf.mxu0
    %3068 = vdwg.mxu0
    %3069 = vmatpush.bf16.msra.mxu0 %v2160
    %3070 = vmatpush.bf16.msra.mxu0 %v2158
    %3071 = vmatpush.bf16.msra.mxu0 %v2156
    %3072 = vmatpush.bf16.msra.mxu0 %v2154
    %3073 = vmatpush.bf16.msra.mxu0 %v2152
    %3074 = vmatpush.bf16.msra.mxu0 %v2150
    %3075 = vmatpush.bf16.msra.mxu0 %v2148
    %3076 = vmatpush.bf16.msra.mxu0 %v2146
    %3077 = vmatmul.bf16.gmra.mxu0 %v3015
    %v3078 = vpop.f32.mrf.mxu0
    %v3079 = vadd.f32 %v3066, %v3078
    %v3080 = vpop.f32.mrf.mxu0
    %3081 = vdwg.mxu0
    %3082 = vmatpush.bf16.msra.mxu0 %v2176
    %3083 = vmatpush.bf16.msra.mxu0 %v2174
    %3084 = vmatpush.bf16.msra.mxu0 %v2172
    %3085 = vmatpush.bf16.msra.mxu0 %v2170
    %3086 = vmatpush.bf16.msra.mxu0 %v2168
    %3087 = vmatpush.bf16.msra.mxu0 %v2166
    %3088 = vmatpush.bf16.msra.mxu0 %v2164
    %3089 = vmatpush.bf16.msra.mxu0 %v2162
    %3090 = vmatmul.bf16.gmra.mxu0 %v3016
    %v3091 = vpop.f32.mrf.mxu0
    %v3092 = vadd.f32 %v3079, %v3091
    %v3093 = vpop.f32.mrf.mxu0
    %3094 = vdwg.mxu0
    %v3095 = vmax.f32 %v3053, 0.0
    %v3096 = vmax.f32 %v3092, 0.0
    %3097 = vst [vmem:[#allocation3 + $0x90] sm:$0xff] %v3095
    %3098 = vst [vmem:[#allocation3 + $0x98] sm:$0xff] %v3096
    %v3099 = vld [vmem:[#allocation3] sm:$0xff]
    %v3100 = vld [vmem:[#allocation3 + $0x8] sm:$0xff]
    %v3101 = vld [vmem:[#allocation3 + $0x10] sm:$0xff]
    %v3102 = vld [vmem:[#allocation3 + $0x18] sm:$0xff]
    %v3103 = vld [vmem:[#allocation3 + $0x20] sm:$0xff]
    %v3104 = vld [vmem:[#allocation3 + $0x28] sm:$0xff]
    %v3105 = vld [vmem:[#allocation3 + $0x30] sm:$0xff]
    %v3106 = vld [vmem:[#allocation3 + $0x38] sm:$0xff]
    %v3107 = vld [vmem:[#allocation3 + $0x40] sm:$0xff]
    %v3108 = vld [vmem:[#allocation3 + $0x48] sm:$0xff]
    %v3109 = vld [vmem:[#allocation3 + $0x50] sm:$0xff]
    %v3110 = vld [vmem:[#allocation3 + $0x58] sm:$0xff]
    %v3111 = vld [vmem:[#allocation3 + $0x60] sm:$0xff]
    %v3112 = vld [vmem:[#allocation3 + $0x68] sm:$0xff]
    %v3113 = vld [vmem:[#allocation3 + $0x70] sm:$0xff]
    %v3114 = vld [vmem:[#allocation3 + $0x78] sm:$0xff]
    %v3115 = vld [vmem:[#allocation3 + $0x80] sm:$0xff]
    %v3116 = vld [vmem:[#allocation3 + $0x88] sm:$0xff]
    %v3117 = vld [vmem:[#allocation3 + $0x90] sm:$0xff]
    %v3118 = vld [vmem:[#allocation3 + $0x98] sm:$0xff]
    %v3119 = vpack.c.bf16 %v3099, %v3099
    %v3120 = vpack.c.bf16 %v3100, %v3100
    %v3121 = vpack.c.bf16 %v3101, %v3101
    %v3122 = vpack.c.bf16 %v3102, %v3102
    %v3123 = vpack.c.bf16 %v3103, %v3103
    %v3124 = vpack.c.bf16 %v3104, %v3104
    %v3125 = vpack.c.bf16 %v3105, %v3105
    %v3126 = vpack.c.bf16 %v3106, %v3106
    %v3127 = vpack.c.bf16 %v3107, %v3107
    %v3128 = vpack.c.bf16 %v3108, %v3108
    %v3129 = vpack.c.bf16 %v3109, %v3109
    %v3130 = vpack.c.bf16 %v3110, %v3110
    %v3131 = vpack.c.bf16 %v3111, %v3111
    %v3132 = vpack.c.bf16 %v3112, %v3112
    %v3133 = vpack.c.bf16 %v3113, %v3113
    %v3134 = vpack.c.bf16 %v3114, %v3114
    %v3135 = vpack.c.bf16 %v3115, %v3115
    %v3136 = vpack.c.bf16 %v3116, %v3116
    %v3137 = vpack.c.bf16 %v3117, %v3117
    %v3138 = vpack.c.bf16 %v3118, %v3118
    %v3139 = vld [vmem:[#allocation11] sm:$0xff]
    %v3140 = vld [vmem:[#allocation11 + $0x8] sm:$0xff]
    %v3141 = vld [vmem:[#allocation11 + $0x10] sm:$0xff]
    %v3142 = vld [vmem:[#allocation11 + $0x18] sm:$0xff]
    %v3143 = vld [vmem:[#allocation11 + $0x20] sm:$0xff]
    %v3144 = vld [vmem:[#allocation11 + $0x28] sm:$0xff]
    %v3145 = vld [vmem:[#allocation11 + $0x30] sm:$0xff]
    %v3146 = vld [vmem:[#allocation11 + $0x38] sm:$0xff]
    %v3147 = vld [vmem:[#allocation11 + $0x40] sm:$0xff]
    %v3148 = vld [vmem:[#allocation11 + $0x48] sm:$0xff]
    %v3149 = vld [vmem:[#allocation11 + $0x50] sm:$0xff]
    %v3150 = vld [vmem:[#allocation11 + $0x58] sm:$0xff]
    %v3151 = vld [vmem:[#allocation11 + $0x60] sm:$0xff]
    %v3152 = vld [vmem:[#allocation11 + $0x68] sm:$0xff]
    %v3153 = vld [vmem:[#allocation11 + $0x70] sm:$0xff]
    %v3154 = vld [vmem:[#allocation11 + $0x78] sm:$0xff]
    %v3155 = vld [vmem:[#allocation11 + $0x80] sm:$0xff]
    %v3156 = vld [vmem:[#allocation11 + $0x88] sm:$0xff]
    %v3157 = vld [vmem:[#allocation11 + $0x90] sm:$0xff]
    %v3158 = vld [vmem:[#allocation11 + $0x98] sm:$0xff]
    %v3159 = vld [vmem:[#allocation11 + $0xa0] sm:$0xff]
    %v3160 = vld [vmem:[#allocation11 + $0xa8] sm:$0xff]
    %v3161 = vld [vmem:[#allocation11 + $0xb0] sm:$0xff]
    %v3162 = vld [vmem:[#allocation11 + $0xb8] sm:$0xff]
    %v3163 = vld [vmem:[#allocation11 + $0xc0] sm:$0xff]
    %v3164 = vld [vmem:[#allocation11 + $0xc8] sm:$0xff]
    %v3165 = vld [vmem:[#allocation11 + $0xd0] sm:$0xff]
    %v3166 = vld [vmem:[#allocation11 + $0xd8] sm:$0xff]
    %v3167 = vld [vmem:[#allocation11 + $0xe0] sm:$0xff]
    %v3168 = vld [vmem:[#allocation11 + $0xe8] sm:$0xff]
    %v3169 = vld [vmem:[#allocation11 + $0xf0] sm:$0xff]
    %v3170 = vld [vmem:[#allocation11 + $0xf8] sm:$0xff]
    %v3171 = vld [vmem:[#allocation11 + $0x100] sm:$0xff]
    %v3172 = vld [vmem:[#allocation11 + $0x108] sm:$0xff]
    %v3173 = vld [vmem:[#allocation11 + $0x110] sm:$0xff]
    %v3174 = vld [vmem:[#allocation11 + $0x118] sm:$0xff]
    %v3175 = vld [vmem:[#allocation11 + $0x120] sm:$0xff]
    %v3176 = vld [vmem:[#allocation11 + $0x128] sm:$0xff]
    %v3177 = vld [vmem:[#allocation11 + $0x130] sm:$0xff]
    %v3178 = vld [vmem:[#allocation11 + $0x138] sm:$0xff]
    %v3179 = vld [vmem:[#allocation11 + $0x140] sm:$0xff]
    %v3180 = vld [vmem:[#allocation11 + $0x148] sm:$0xff]
    %v3181 = vld [vmem:[#allocation11 + $0x150] sm:$0xff]
    %v3182 = vld [vmem:[#allocation11 + $0x158] sm:$0xff]
    %v3183 = vld [vmem:[#allocation11 + $0x160] sm:$0xff]
    %v3184 = vld [vmem:[#allocation11 + $0x168] sm:$0xff]
    %v3185 = vld [vmem:[#allocation11 + $0x170] sm:$0xff]
    %v3186 = vld [vmem:[#allocation11 + $0x178] sm:$0xff]
    %v3187 = vld [vmem:[#allocation11 + $0x180] sm:$0xff]
    %v3188 = vld [vmem:[#allocation11 + $0x188] sm:$0xff]
    %v3189 = vld [vmem:[#allocation11 + $0x190] sm:$0xff]
    %v3190 = vld [vmem:[#allocation11 + $0x198] sm:$0xff]
    %v3191 = vld [vmem:[#allocation11 + $0x1a0] sm:$0xff]
    %v3192 = vld [vmem:[#allocation11 + $0x1a8] sm:$0xff]
    %v3193 = vld [vmem:[#allocation11 + $0x1b0] sm:$0xff]
    %v3194 = vld [vmem:[#allocation11 + $0x1b8] sm:$0xff]
    %v3195 = vld [vmem:[#allocation11 + $0x1c0] sm:$0xff]
    %v3196 = vld [vmem:[#allocation11 + $0x1c8] sm:$0xff]
    %v3197 = vld [vmem:[#allocation11 + $0x1d0] sm:$0xff]
    %v3198 = vld [vmem:[#allocation11 + $0x1d8] sm:$0xff]
    %v3199 = vld [vmem:[#allocation11 + $0x1e0] sm:$0xff]
    %v3200 = vld [vmem:[#allocation11 + $0x1e8] sm:$0xff]
    %v3201 = vld [vmem:[#allocation11 + $0x1f0] sm:$0xff]
    %v3202 = vld [vmem:[#allocation11 + $0x1f8] sm:$0xff]
    %v3203 = vld [vmem:[#allocation11 + $0x200] sm:$0xff]
    %v3204 = vld [vmem:[#allocation11 + $0x208] sm:$0xff]
    %v3205 = vld [vmem:[#allocation11 + $0x210] sm:$0xff]
    %v3206 = vld [vmem:[#allocation11 + $0x218] sm:$0xff]
    %v3207 = vld [vmem:[#allocation11 + $0x220] sm:$0xff]
    %v3208 = vld [vmem:[#allocation11 + $0x228] sm:$0xff]
    %v3209 = vld [vmem:[#allocation11 + $0x230] sm:$0xff]
    %v3210 = vld [vmem:[#allocation11 + $0x238] sm:$0xff]
    %v3211 = vld [vmem:[#allocation11 + $0x240] sm:$0xff]
    %v3212 = vld [vmem:[#allocation11 + $0x248] sm:$0xff]
    %v3213 = vld [vmem:[#allocation11 + $0x250] sm:$0xff]
    %v3214 = vld [vmem:[#allocation11 + $0x258] sm:$0xff]
    %v3215 = vld [vmem:[#allocation11 + $0x260] sm:$0xff]
    %v3216 = vld [vmem:[#allocation11 + $0x268] sm:$0xff]
    %v3217 = vld [vmem:[#allocation11 + $0x270] sm:$0xff]
    %v3218 = vld [vmem:[#allocation11 + $0x278] sm:$0xff]
    %v3219 = vld [vmem:[#allocation11 + $0x280] sm:$0xff]
    %v3220 = vld [vmem:[#allocation11 + $0x288] sm:$0xff]
    %v3221 = vld [vmem:[#allocation11 + $0x290] sm:$0xff]
    %v3222 = vld [vmem:[#allocation11 + $0x298] sm:$0xff]
    %v3223 = vld [vmem:[#allocation11 + $0x2a0] sm:$0xff]
    %v3224 = vld [vmem:[#allocation11 + $0x2a8] sm:$0xff]
    %v3225 = vld [vmem:[#allocation11 + $0x2b0] sm:$0xff]
    %v3226 = vld [vmem:[#allocation11 + $0x2b8] sm:$0xff]
    %v3227 = vld [vmem:[#allocation11 + $0x2c0] sm:$0xff]
    %v3228 = vld [vmem:[#allocation11 + $0x2c8] sm:$0xff]
    %v3229 = vld [vmem:[#allocation11 + $0x2d0] sm:$0xff]
    %v3230 = vld [vmem:[#allocation11 + $0x2d8] sm:$0xff]
    %v3231 = vld [vmem:[#allocation11 + $0x2e0] sm:$0xff]
    %v3232 = vld [vmem:[#allocation11 + $0x2e8] sm:$0xff]
    %v3233 = vld [vmem:[#allocation11 + $0x2f0] sm:$0xff]
    %v3234 = vld [vmem:[#allocation11 + $0x2f8] sm:$0xff]
    %v3235 = vld [vmem:[#allocation11 + $0x300] sm:$0xff]
    %v3236 = vld [vmem:[#allocation11 + $0x308] sm:$0xff]
    %v3237 = vld [vmem:[#allocation11 + $0x310] sm:$0xff]
    %v3238 = vld [vmem:[#allocation11 + $0x318] sm:$0xff]
    %v3239 = vld [vmem:[#allocation11 + $0x320] sm:$0xff]
    %v3240 = vld [vmem:[#allocation11 + $0x328] sm:$0xff]
    %v3241 = vld [vmem:[#allocation11 + $0x330] sm:$0xff]
    %v3242 = vld [vmem:[#allocation11 + $0x338] sm:$0xff]
    %v3243 = vld [vmem:[#allocation11 + $0x340] sm:$0xff]
    %v3244 = vld [vmem:[#allocation11 + $0x348] sm:$0xff]
    %v3245 = vld [vmem:[#allocation11 + $0x350] sm:$0xff]
    %v3246 = vld [vmem:[#allocation11 + $0x358] sm:$0xff]
    %v3247 = vld [vmem:[#allocation11 + $0x360] sm:$0xff]
    %v3248 = vld [vmem:[#allocation11 + $0x368] sm:$0xff]
    %v3249 = vld [vmem:[#allocation11 + $0x370] sm:$0xff]
    %v3250 = vld [vmem:[#allocation11 + $0x378] sm:$0xff]
    %v3251 = vld [vmem:[#allocation11 + $0x380] sm:$0xff]
    %v3252 = vld [vmem:[#allocation11 + $0x388] sm:$0xff]
    %v3253 = vld [vmem:[#allocation11 + $0x390] sm:$0xff]
    %v3254 = vld [vmem:[#allocation11 + $0x398] sm:$0xff]
    %v3255 = vld [vmem:[#allocation11 + $0x3a0] sm:$0xff]
    %v3256 = vld [vmem:[#allocation11 + $0x3a8] sm:$0xff]
    %v3257 = vld [vmem:[#allocation11 + $0x3b0] sm:$0xff]
    %v3258 = vld [vmem:[#allocation11 + $0x3b8] sm:$0xff]
    %v3259 = vld [vmem:[#allocation11 + $0x3c0] sm:$0xff]
    %v3260 = vld [vmem:[#allocation11 + $0x3c8] sm:$0xff]
    %v3261 = vld [vmem:[#allocation11 + $0x3d0] sm:$0xff]
    %v3262 = vld [vmem:[#allocation11 + $0x3d8] sm:$0xff]
    %v3263 = vld [vmem:[#allocation11 + $0x3e0] sm:$0xff]
    %v3264 = vld [vmem:[#allocation11 + $0x3e8] sm:$0xff]
    %v3265 = vld [vmem:[#allocation11 + $0x3f0] sm:$0xff]
    %v3266 = vld [vmem:[#allocation11 + $0x3f8] sm:$0xff]
    %v3267 = vld [vmem:[#allocation11 + $0x400] sm:$0xff]
    %v3268 = vld [vmem:[#allocation11 + $0x408] sm:$0xff]
    %v3269 = vld [vmem:[#allocation11 + $0x410] sm:$0xff]
    %v3270 = vld [vmem:[#allocation11 + $0x418] sm:$0xff]
    %v3271 = vld [vmem:[#allocation11 + $0x420] sm:$0xff]
    %v3272 = vld [vmem:[#allocation11 + $0x428] sm:$0xff]
    %v3273 = vld [vmem:[#allocation11 + $0x430] sm:$0xff]
    %v3274 = vld [vmem:[#allocation11 + $0x438] sm:$0xff]
    %v3275 = vld [vmem:[#allocation11 + $0x440] sm:$0xff]
    %v3276 = vld [vmem:[#allocation11 + $0x448] sm:$0xff]
    %v3277 = vld [vmem:[#allocation11 + $0x450] sm:$0xff]
    %v3278 = vld [vmem:[#allocation11 + $0x458] sm:$0xff]
    %v3279 = vld [vmem:[#allocation11 + $0x460] sm:$0xff]
    %v3280 = vld [vmem:[#allocation11 + $0x468] sm:$0xff]
    %v3281 = vld [vmem:[#allocation11 + $0x470] sm:$0xff]
    %v3282 = vld [vmem:[#allocation11 + $0x478] sm:$0xff]
    %v3283 = vld [vmem:[#allocation11 + $0x480] sm:$0xff]
    %v3284 = vld [vmem:[#allocation11 + $0x488] sm:$0xff]
    %v3285 = vld [vmem:[#allocation11 + $0x490] sm:$0xff]
    %v3286 = vld [vmem:[#allocation11 + $0x498] sm:$0xff]
    %v3287 = vld [vmem:[#allocation11 + $0x4a0] sm:$0xff]
    %v3288 = vld [vmem:[#allocation11 + $0x4a8] sm:$0xff]
    %v3289 = vld [vmem:[#allocation11 + $0x4b0] sm:$0xff]
    %v3290 = vld [vmem:[#allocation11 + $0x4b8] sm:$0xff]
    %v3291 = vld [vmem:[#allocation11 + $0x4c0] sm:$0xff]
    %v3292 = vld [vmem:[#allocation11 + $0x4c8] sm:$0xff]
    %v3293 = vld [vmem:[#allocation11 + $0x4d0] sm:$0xff]
    %v3294 = vld [vmem:[#allocation11 + $0x4d8] sm:$0xff]
    %v3295 = vld [vmem:[#allocation11 + $0x4e0] sm:$0xff]
    %v3296 = vld [vmem:[#allocation11 + $0x4e8] sm:$0xff]
    %v3297 = vld [vmem:[#allocation11 + $0x4f0] sm:$0xff]
    %v3298 = vld [vmem:[#allocation11 + $0x4f8] sm:$0xff]
    %v3299 = vld [vmem:[#allocation11 + $0x500] sm:$0xff]
    %v3300 = vld [vmem:[#allocation11 + $0x508] sm:$0xff]
    %v3301 = vld [vmem:[#allocation11 + $0x510] sm:$0xff]
    %v3302 = vld [vmem:[#allocation11 + $0x518] sm:$0xff]
    %v3303 = vld [vmem:[#allocation11 + $0x520] sm:$0xff]
    %v3304 = vld [vmem:[#allocation11 + $0x528] sm:$0xff]
    %v3305 = vld [vmem:[#allocation11 + $0x530] sm:$0xff]
    %v3306 = vld [vmem:[#allocation11 + $0x538] sm:$0xff]
    %v3307 = vld [vmem:[#allocation11 + $0x540] sm:$0xff]
    %v3308 = vld [vmem:[#allocation11 + $0x548] sm:$0xff]
    %v3309 = vld [vmem:[#allocation11 + $0x550] sm:$0xff]
    %v3310 = vld [vmem:[#allocation11 + $0x558] sm:$0xff]
    %v3311 = vld [vmem:[#allocation11 + $0x560] sm:$0xff]
    %v3312 = vld [vmem:[#allocation11 + $0x568] sm:$0xff]
    %v3313 = vld [vmem:[#allocation11 + $0x570] sm:$0xff]
    %v3314 = vld [vmem:[#allocation11 + $0x578] sm:$0xff]
    %v3315 = vld [vmem:[#allocation11 + $0x580] sm:$0xff]
    %v3316 = vld [vmem:[#allocation11 + $0x588] sm:$0xff]
    %v3317 = vld [vmem:[#allocation11 + $0x590] sm:$0xff]
    %v3318 = vld [vmem:[#allocation11 + $0x598] sm:$0xff]
    %v3319 = vld [vmem:[#allocation11 + $0x5a0] sm:$0xff]
    %v3320 = vld [vmem:[#allocation11 + $0x5a8] sm:$0xff]
    %v3321 = vld [vmem:[#allocation11 + $0x5b0] sm:$0xff]
    %v3322 = vld [vmem:[#allocation11 + $0x5b8] sm:$0xff]
    %v3323 = vld [vmem:[#allocation11 + $0x5c0] sm:$0xff]
    %v3324 = vld [vmem:[#allocation11 + $0x5c8] sm:$0xff]
    %v3325 = vld [vmem:[#allocation11 + $0x5d0] sm:$0xff]
    %v3326 = vld [vmem:[#allocation11 + $0x5d8] sm:$0xff]
    %v3327 = vld [vmem:[#allocation11 + $0x5e0] sm:$0xff]
    %v3328 = vld [vmem:[#allocation11 + $0x5e8] sm:$0xff]
    %v3329 = vld [vmem:[#allocation11 + $0x5f0] sm:$0xff]
    %v3330 = vld [vmem:[#allocation11 + $0x5f8] sm:$0xff]
    %v3331 = vld [vmem:[#allocation11 + $0x600] sm:$0xff]
    %v3332 = vld [vmem:[#allocation11 + $0x608] sm:$0xff]
    %v3333 = vld [vmem:[#allocation11 + $0x610] sm:$0xff]
    %v3334 = vld [vmem:[#allocation11 + $0x618] sm:$0xff]
    %v3335 = vld [vmem:[#allocation11 + $0x620] sm:$0xff]
    %v3336 = vld [vmem:[#allocation11 + $0x628] sm:$0xff]
    %v3337 = vld [vmem:[#allocation11 + $0x630] sm:$0xff]
    %v3338 = vld [vmem:[#allocation11 + $0x638] sm:$0xff]
    %v3339 = vld [vmem:[#allocation11 + $0x640] sm:$0xff]
    %v3340 = vld [vmem:[#allocation11 + $0x648] sm:$0xff]
    %v3341 = vld [vmem:[#allocation11 + $0x650] sm:$0xff]
    %v3342 = vld [vmem:[#allocation11 + $0x658] sm:$0xff]
    %v3343 = vld [vmem:[#allocation11 + $0x660] sm:$0xff]
    %v3344 = vld [vmem:[#allocation11 + $0x668] sm:$0xff]
    %v3345 = vld [vmem:[#allocation11 + $0x670] sm:$0xff]
    %v3346 = vld [vmem:[#allocation11 + $0x678] sm:$0xff]
    %v3347 = vld [vmem:[#allocation11 + $0x680] sm:$0xff]
    %v3348 = vld [vmem:[#allocation11 + $0x688] sm:$0xff]
    %v3349 = vld [vmem:[#allocation11 + $0x690] sm:$0xff]
    %v3350 = vld [vmem:[#allocation11 + $0x698] sm:$0xff]
    %v3351 = vld [vmem:[#allocation11 + $0x6a0] sm:$0xff]
    %v3352 = vld [vmem:[#allocation11 + $0x6a8] sm:$0xff]
    %v3353 = vld [vmem:[#allocation11 + $0x6b0] sm:$0xff]
    %v3354 = vld [vmem:[#allocation11 + $0x6b8] sm:$0xff]
    %v3355 = vld [vmem:[#allocation11 + $0x6c0] sm:$0xff]
    %v3356 = vld [vmem:[#allocation11 + $0x6c8] sm:$0xff]
    %v3357 = vld [vmem:[#allocation11 + $0x6d0] sm:$0xff]
    %v3358 = vld [vmem:[#allocation11 + $0x6d8] sm:$0xff]
    %v3359 = vld [vmem:[#allocation11 + $0x6e0] sm:$0xff]
    %v3360 = vld [vmem:[#allocation11 + $0x6e8] sm:$0xff]
    %v3361 = vld [vmem:[#allocation11 + $0x6f0] sm:$0xff]
    %v3362 = vld [vmem:[#allocation11 + $0x6f8] sm:$0xff]
    %v3363 = vld [vmem:[#allocation11 + $0x700] sm:$0xff]
    %v3364 = vld [vmem:[#allocation11 + $0x708] sm:$0xff]
    %v3365 = vld [vmem:[#allocation11 + $0x710] sm:$0xff]
    %v3366 = vld [vmem:[#allocation11 + $0x718] sm:$0xff]
    %v3367 = vld [vmem:[#allocation11 + $0x720] sm:$0xff]
    %v3368 = vld [vmem:[#allocation11 + $0x728] sm:$0xff]
    %v3369 = vld [vmem:[#allocation11 + $0x730] sm:$0xff]
    %v3370 = vld [vmem:[#allocation11 + $0x738] sm:$0xff]
    %v3371 = vld [vmem:[#allocation11 + $0x740] sm:$0xff]
    %v3372 = vld [vmem:[#allocation11 + $0x748] sm:$0xff]
    %v3373 = vld [vmem:[#allocation11 + $0x750] sm:$0xff]
    %v3374 = vld [vmem:[#allocation11 + $0x758] sm:$0xff]
    %v3375 = vld [vmem:[#allocation11 + $0x760] sm:$0xff]
    %v3376 = vld [vmem:[#allocation11 + $0x768] sm:$0xff]
    %v3377 = vld [vmem:[#allocation11 + $0x770] sm:$0xff]
    %v3378 = vld [vmem:[#allocation11 + $0x778] sm:$0xff]
    %v3379 = vld [vmem:[#allocation11 + $0x780] sm:$0xff]
    %v3380 = vld [vmem:[#allocation11 + $0x788] sm:$0xff]
    %v3381 = vld [vmem:[#allocation11 + $0x790] sm:$0xff]
    %v3382 = vld [vmem:[#allocation11 + $0x798] sm:$0xff]
    %v3383 = vld [vmem:[#allocation11 + $0x7a0] sm:$0xff]
    %v3384 = vld [vmem:[#allocation11 + $0x7a8] sm:$0xff]
    %v3385 = vld [vmem:[#allocation11 + $0x7b0] sm:$0xff]
    %v3386 = vld [vmem:[#allocation11 + $0x7b8] sm:$0xff]
    %v3387 = vld [vmem:[#allocation11 + $0x7c0] sm:$0xff]
    %v3388 = vld [vmem:[#allocation11 + $0x7c8] sm:$0xff]
    %v3389 = vld [vmem:[#allocation11 + $0x7d0] sm:$0xff]
    %v3390 = vld [vmem:[#allocation11 + $0x7d8] sm:$0xff]
    %v3391 = vld [vmem:[#allocation11 + $0x7e0] sm:$0xff]
    %v3392 = vld [vmem:[#allocation11 + $0x7e8] sm:$0xff]
    %v3393 = vld [vmem:[#allocation11 + $0x7f0] sm:$0xff]
    %v3394 = vld [vmem:[#allocation11 + $0x7f8] sm:$0xff]
    %v3395 = vld [vmem:[#allocation11 + $0x800] sm:$0xff]
    %v3396 = vld [vmem:[#allocation11 + $0x808] sm:$0xff]
    %v3397 = vld [vmem:[#allocation11 + $0x810] sm:$0xff]
    %v3398 = vld [vmem:[#allocation11 + $0x818] sm:$0xff]
    %v3399 = vld [vmem:[#allocation11 + $0x820] sm:$0xff]
    %v3400 = vld [vmem:[#allocation11 + $0x828] sm:$0xff]
    %v3401 = vld [vmem:[#allocation11 + $0x830] sm:$0xff]
    %v3402 = vld [vmem:[#allocation11 + $0x838] sm:$0xff]
    %v3403 = vld [vmem:[#allocation11 + $0x840] sm:$0xff]
    %v3404 = vld [vmem:[#allocation11 + $0x848] sm:$0xff]
    %v3405 = vld [vmem:[#allocation11 + $0x850] sm:$0xff]
    %v3406 = vld [vmem:[#allocation11 + $0x858] sm:$0xff]
    %v3407 = vld [vmem:[#allocation11 + $0x860] sm:$0xff]
    %v3408 = vld [vmem:[#allocation11 + $0x868] sm:$0xff]
    %v3409 = vld [vmem:[#allocation11 + $0x870] sm:$0xff]
    %v3410 = vld [vmem:[#allocation11 + $0x878] sm:$0xff]
    %v3411 = vld [vmem:[#allocation11 + $0x880] sm:$0xff]
    %v3412 = vld [vmem:[#allocation11 + $0x888] sm:$0xff]
    %v3413 = vld [vmem:[#allocation11 + $0x890] sm:$0xff]
    %v3414 = vld [vmem:[#allocation11 + $0x898] sm:$0xff]
    %v3415 = vld [vmem:[#allocation11 + $0x8a0] sm:$0xff]
    %v3416 = vld [vmem:[#allocation11 + $0x8a8] sm:$0xff]
    %v3417 = vld [vmem:[#allocation11 + $0x8b0] sm:$0xff]
    %v3418 = vld [vmem:[#allocation11 + $0x8b8] sm:$0xff]
    %v3419 = vld [vmem:[#allocation11 + $0x8c0] sm:$0xff]
    %v3420 = vld [vmem:[#allocation11 + $0x8c8] sm:$0xff]
    %v3421 = vld [vmem:[#allocation11 + $0x8d0] sm:$0xff]
    %v3422 = vld [vmem:[#allocation11 + $0x8d8] sm:$0xff]
    %v3423 = vld [vmem:[#allocation11 + $0x8e0] sm:$0xff]
    %v3424 = vld [vmem:[#allocation11 + $0x8e8] sm:$0xff]
    %v3425 = vld [vmem:[#allocation11 + $0x8f0] sm:$0xff]
    %v3426 = vld [vmem:[#allocation11 + $0x8f8] sm:$0xff]
    %v3427 = vld [vmem:[#allocation11 + $0x900] sm:$0xff]
    %v3428 = vld [vmem:[#allocation11 + $0x908] sm:$0xff]
    %v3429 = vld [vmem:[#allocation11 + $0x910] sm:$0xff]
    %v3430 = vld [vmem:[#allocation11 + $0x918] sm:$0xff]
    %v3431 = vld [vmem:[#allocation11 + $0x920] sm:$0xff]
    %v3432 = vld [vmem:[#allocation11 + $0x928] sm:$0xff]
    %v3433 = vld [vmem:[#allocation11 + $0x930] sm:$0xff]
    %v3434 = vld [vmem:[#allocation11 + $0x938] sm:$0xff]
    %v3435 = vld [vmem:[#allocation11 + $0x940] sm:$0xff]
    %v3436 = vld [vmem:[#allocation11 + $0x948] sm:$0xff]
    %v3437 = vld [vmem:[#allocation11 + $0x950] sm:$0xff]
    %v3438 = vld [vmem:[#allocation11 + $0x958] sm:$0xff]
    %v3439 = vld [vmem:[#allocation11 + $0x960] sm:$0xff]
    %v3440 = vld [vmem:[#allocation11 + $0x968] sm:$0xff]
    %v3441 = vld [vmem:[#allocation11 + $0x970] sm:$0xff]
    %v3442 = vld [vmem:[#allocation11 + $0x978] sm:$0xff]
    %v3443 = vld [vmem:[#allocation11 + $0x980] sm:$0xff]
    %v3444 = vld [vmem:[#allocation11 + $0x988] sm:$0xff]
    %v3445 = vld [vmem:[#allocation11 + $0x990] sm:$0xff]
    %v3446 = vld [vmem:[#allocation11 + $0x998] sm:$0xff]
    %v3447 = vld [vmem:[#allocation11 + $0x9a0] sm:$0xff]
    %v3448 = vld [vmem:[#allocation11 + $0x9a8] sm:$0xff]
    %v3449 = vld [vmem:[#allocation11 + $0x9b0] sm:$0xff]
    %v3450 = vld [vmem:[#allocation11 + $0x9b8] sm:$0xff]
    %v3451 = vld [vmem:[#allocation11 + $0x9c0] sm:$0xff]
    %v3452 = vld [vmem:[#allocation11 + $0x9c8] sm:$0xff]
    %v3453 = vld [vmem:[#allocation11 + $0x9d0] sm:$0xff]
    %v3454 = vld [vmem:[#allocation11 + $0x9d8] sm:$0xff]
    %v3455 = vld [vmem:[#allocation11 + $0x9e0] sm:$0xff]
    %v3456 = vld [vmem:[#allocation11 + $0x9e8] sm:$0xff]
    %v3457 = vld [vmem:[#allocation11 + $0x9f0] sm:$0xff]
    %v3458 = vld [vmem:[#allocation11 + $0x9f8] sm:$0xff]
    %v3459 = vld [vmem:[#allocation11 + $0xa00] sm:$0xff]
    %v3460 = vld [vmem:[#allocation11 + $0xa08] sm:$0xff]
    %v3461 = vld [vmem:[#allocation11 + $0xa10] sm:$0xff]
    %v3462 = vld [vmem:[#allocation11 + $0xa18] sm:$0xff]
    %v3463 = vld [vmem:[#allocation11 + $0xa20] sm:$0xff]
    %v3464 = vld [vmem:[#allocation11 + $0xa28] sm:$0xff]
    %v3465 = vld [vmem:[#allocation11 + $0xa30] sm:$0xff]
    %v3466 = vld [vmem:[#allocation11 + $0xa38] sm:$0xff]
    %v3467 = vld [vmem:[#allocation11 + $0xa40] sm:$0xff]
    %v3468 = vld [vmem:[#allocation11 + $0xa48] sm:$0xff]
    %v3469 = vld [vmem:[#allocation11 + $0xa50] sm:$0xff]
    %v3470 = vld [vmem:[#allocation11 + $0xa58] sm:$0xff]
    %v3471 = vld [vmem:[#allocation11 + $0xa60] sm:$0xff]
    %v3472 = vld [vmem:[#allocation11 + $0xa68] sm:$0xff]
    %v3473 = vld [vmem:[#allocation11 + $0xa70] sm:$0xff]
    %v3474 = vld [vmem:[#allocation11 + $0xa78] sm:$0xff]
    %v3475 = vld [vmem:[#allocation11 + $0xa80] sm:$0xff]
    %v3476 = vld [vmem:[#allocation11 + $0xa88] sm:$0xff]
    %v3477 = vld [vmem:[#allocation11 + $0xa90] sm:$0xff]
    %v3478 = vld [vmem:[#allocation11 + $0xa98] sm:$0xff]
    %v3479 = vld [vmem:[#allocation11 + $0xaa0] sm:$0xff]
    %v3480 = vld [vmem:[#allocation11 + $0xaa8] sm:$0xff]
    %v3481 = vld [vmem:[#allocation11 + $0xab0] sm:$0xff]
    %v3482 = vld [vmem:[#allocation11 + $0xab8] sm:$0xff]
    %v3483 = vld [vmem:[#allocation11 + $0xac0] sm:$0xff]
    %v3484 = vld [vmem:[#allocation11 + $0xac8] sm:$0xff]
    %v3485 = vld [vmem:[#allocation11 + $0xad0] sm:$0xff]
    %v3486 = vld [vmem:[#allocation11 + $0xad8] sm:$0xff]
    %v3487 = vld [vmem:[#allocation11 + $0xae0] sm:$0xff]
    %v3488 = vld [vmem:[#allocation11 + $0xae8] sm:$0xff]
    %v3489 = vld [vmem:[#allocation11 + $0xaf0] sm:$0xff]
    %v3490 = vld [vmem:[#allocation11 + $0xaf8] sm:$0xff]
    %v3491 = vld [vmem:[#allocation11 + $0xb00] sm:$0xff]
    %v3492 = vld [vmem:[#allocation11 + $0xb08] sm:$0xff]
    %v3493 = vld [vmem:[#allocation11 + $0xb10] sm:$0xff]
    %v3494 = vld [vmem:[#allocation11 + $0xb18] sm:$0xff]
    %v3495 = vld [vmem:[#allocation11 + $0xb20] sm:$0xff]
    %v3496 = vld [vmem:[#allocation11 + $0xb28] sm:$0xff]
    %v3497 = vld [vmem:[#allocation11 + $0xb30] sm:$0xff]
    %v3498 = vld [vmem:[#allocation11 + $0xb38] sm:$0xff]
    %v3499 = vld [vmem:[#allocation11 + $0xb40] sm:$0xff]
    %v3500 = vld [vmem:[#allocation11 + $0xb48] sm:$0xff]
    %v3501 = vld [vmem:[#allocation11 + $0xb50] sm:$0xff]
    %v3502 = vld [vmem:[#allocation11 + $0xb58] sm:$0xff]
    %v3503 = vld [vmem:[#allocation11 + $0xb60] sm:$0xff]
    %v3504 = vld [vmem:[#allocation11 + $0xb68] sm:$0xff]
    %v3505 = vld [vmem:[#allocation11 + $0xb70] sm:$0xff]
    %v3506 = vld [vmem:[#allocation11 + $0xb78] sm:$0xff]
    %v3507 = vld [vmem:[#allocation11 + $0xb80] sm:$0xff]
    %v3508 = vld [vmem:[#allocation11 + $0xb88] sm:$0xff]
    %v3509 = vld [vmem:[#allocation11 + $0xb90] sm:$0xff]
    %v3510 = vld [vmem:[#allocation11 + $0xb98] sm:$0xff]
    %v3511 = vld [vmem:[#allocation11 + $0xba0] sm:$0xff]
    %v3512 = vld [vmem:[#allocation11 + $0xba8] sm:$0xff]
    %v3513 = vld [vmem:[#allocation11 + $0xbb0] sm:$0xff]
    %v3514 = vld [vmem:[#allocation11 + $0xbb8] sm:$0xff]
    %v3515 = vld [vmem:[#allocation11 + $0xbc0] sm:$0xff]
    %v3516 = vld [vmem:[#allocation11 + $0xbc8] sm:$0xff]
    %v3517 = vld [vmem:[#allocation11 + $0xbd0] sm:$0xff]
    %v3518 = vld [vmem:[#allocation11 + $0xbd8] sm:$0xff]
    %v3519 = vld [vmem:[#allocation11 + $0xbe0] sm:$0xff]
    %v3520 = vld [vmem:[#allocation11 + $0xbe8] sm:$0xff]
    %v3521 = vld [vmem:[#allocation11 + $0xbf0] sm:$0xff]
    %v3522 = vld [vmem:[#allocation11 + $0xbf8] sm:$0xff]
    %v3523 = vld [vmem:[#allocation11 + $0xc00] sm:$0xff]
    %v3524 = vld [vmem:[#allocation11 + $0xc08] sm:$0xff]
    %v3525 = vld [vmem:[#allocation11 + $0xc10] sm:$0xff]
    %v3526 = vld [vmem:[#allocation11 + $0xc18] sm:$0xff]
    %v3527 = vld [vmem:[#allocation11 + $0xc20] sm:$0xff]
    %v3528 = vld [vmem:[#allocation11 + $0xc28] sm:$0xff]
    %v3529 = vld [vmem:[#allocation11 + $0xc30] sm:$0xff]
    %v3530 = vld [vmem:[#allocation11 + $0xc38] sm:$0xff]
    %v3531 = vld [vmem:[#allocation11 + $0xc40] sm:$0xff]
    %v3532 = vld [vmem:[#allocation11 + $0xc48] sm:$0xff]
    %v3533 = vld [vmem:[#allocation11 + $0xc50] sm:$0xff]
    %v3534 = vld [vmem:[#allocation11 + $0xc58] sm:$0xff]
    %v3535 = vld [vmem:[#allocation11 + $0xc60] sm:$0xff]
    %v3536 = vld [vmem:[#allocation11 + $0xc68] sm:$0xff]
    %v3537 = vld [vmem:[#allocation11 + $0xc70] sm:$0xff]
    %v3538 = vld [vmem:[#allocation11 + $0xc78] sm:$0xff]
    %v3539 = vld [vmem:[#allocation11 + $0xc80] sm:$0xff]
    %v3540 = vld [vmem:[#allocation11 + $0xc88] sm:$0xff]
    %v3541 = vld [vmem:[#allocation11 + $0xc90] sm:$0xff]
    %v3542 = vld [vmem:[#allocation11 + $0xc98] sm:$0xff]
    %v3543 = vld [vmem:[#allocation11 + $0xca0] sm:$0xff]
    %v3544 = vld [vmem:[#allocation11 + $0xca8] sm:$0xff]
    %v3545 = vld [vmem:[#allocation11 + $0xcb0] sm:$0xff]
    %v3546 = vld [vmem:[#allocation11 + $0xcb8] sm:$0xff]
    %v3547 = vld [vmem:[#allocation11 + $0xcc0] sm:$0xff]
    %v3548 = vld [vmem:[#allocation11 + $0xcc8] sm:$0xff]
    %v3549 = vld [vmem:[#allocation11 + $0xcd0] sm:$0xff]
    %v3550 = vld [vmem:[#allocation11 + $0xcd8] sm:$0xff]
    %v3551 = vld [vmem:[#allocation11 + $0xce0] sm:$0xff]
    %v3552 = vld [vmem:[#allocation11 + $0xce8] sm:$0xff]
    %v3553 = vld [vmem:[#allocation11 + $0xcf0] sm:$0xff]
    %v3554 = vld [vmem:[#allocation11 + $0xcf8] sm:$0xff]
    %v3555 = vld [vmem:[#allocation11 + $0xd00] sm:$0xff]
    %v3556 = vld [vmem:[#allocation11 + $0xd08] sm:$0xff]
    %v3557 = vld [vmem:[#allocation11 + $0xd10] sm:$0xff]
    %v3558 = vld [vmem:[#allocation11 + $0xd18] sm:$0xff]
    %v3559 = vld [vmem:[#allocation11 + $0xd20] sm:$0xff]
    %v3560 = vld [vmem:[#allocation11 + $0xd28] sm:$0xff]
    %v3561 = vld [vmem:[#allocation11 + $0xd30] sm:$0xff]
    %v3562 = vld [vmem:[#allocation11 + $0xd38] sm:$0xff]
    %v3563 = vld [vmem:[#allocation11 + $0xd40] sm:$0xff]
    %v3564 = vld [vmem:[#allocation11 + $0xd48] sm:$0xff]
    %v3565 = vld [vmem:[#allocation11 + $0xd50] sm:$0xff]
    %v3566 = vld [vmem:[#allocation11 + $0xd58] sm:$0xff]
    %v3567 = vld [vmem:[#allocation11 + $0xd60] sm:$0xff]
    %v3568 = vld [vmem:[#allocation11 + $0xd68] sm:$0xff]
    %v3569 = vld [vmem:[#allocation11 + $0xd70] sm:$0xff]
    %v3570 = vld [vmem:[#allocation11 + $0xd78] sm:$0xff]
    %v3571 = vld [vmem:[#allocation11 + $0xd80] sm:$0xff]
    %v3572 = vld [vmem:[#allocation11 + $0xd88] sm:$0xff]
    %v3573 = vld [vmem:[#allocation11 + $0xd90] sm:$0xff]
    %v3574 = vld [vmem:[#allocation11 + $0xd98] sm:$0xff]
    %v3575 = vld [vmem:[#allocation11 + $0xda0] sm:$0xff]
    %v3576 = vld [vmem:[#allocation11 + $0xda8] sm:$0xff]
    %v3577 = vld [vmem:[#allocation11 + $0xdb0] sm:$0xff]
    %v3578 = vld [vmem:[#allocation11 + $0xdb8] sm:$0xff]
    %v3579 = vld [vmem:[#allocation11 + $0xdc0] sm:$0xff]
    %v3580 = vld [vmem:[#allocation11 + $0xdc8] sm:$0xff]
    %v3581 = vld [vmem:[#allocation11 + $0xdd0] sm:$0xff]
    %v3582 = vld [vmem:[#allocation11 + $0xdd8] sm:$0xff]
    %v3583 = vld [vmem:[#allocation11 + $0xde0] sm:$0xff]
    %v3584 = vld [vmem:[#allocation11 + $0xde8] sm:$0xff]
    %v3585 = vld [vmem:[#allocation11 + $0xdf0] sm:$0xff]
    %v3586 = vld [vmem:[#allocation11 + $0xdf8] sm:$0xff]
    %v3587 = vld [vmem:[#allocation11 + $0xe00] sm:$0xff]
    %v3588 = vld [vmem:[#allocation11 + $0xe08] sm:$0xff]
    %v3589 = vld [vmem:[#allocation11 + $0xe10] sm:$0xff]
    %v3590 = vld [vmem:[#allocation11 + $0xe18] sm:$0xff]
    %v3591 = vld [vmem:[#allocation11 + $0xe20] sm:$0xff]
    %v3592 = vld [vmem:[#allocation11 + $0xe28] sm:$0xff]
    %v3593 = vld [vmem:[#allocation11 + $0xe30] sm:$0xff]
    %v3594 = vld [vmem:[#allocation11 + $0xe38] sm:$0xff]
    %v3595 = vld [vmem:[#allocation11 + $0xe40] sm:$0xff]
    %v3596 = vld [vmem:[#allocation11 + $0xe48] sm:$0xff]
    %v3597 = vld [vmem:[#allocation11 + $0xe50] sm:$0xff]
    %v3598 = vld [vmem:[#allocation11 + $0xe58] sm:$0xff]
    %v3599 = vld [vmem:[#allocation11 + $0xe60] sm:$0xff]
    %v3600 = vld [vmem:[#allocation11 + $0xe68] sm:$0xff]
    %v3601 = vld [vmem:[#allocation11 + $0xe70] sm:$0xff]
    %v3602 = vld [vmem:[#allocation11 + $0xe78] sm:$0xff]
    %v3603 = vld [vmem:[#allocation11 + $0xe80] sm:$0xff]
    %v3604 = vld [vmem:[#allocation11 + $0xe88] sm:$0xff]
    %v3605 = vld [vmem:[#allocation11 + $0xe90] sm:$0xff]
    %v3606 = vld [vmem:[#allocation11 + $0xe98] sm:$0xff]
    %v3607 = vld [vmem:[#allocation11 + $0xea0] sm:$0xff]
    %v3608 = vld [vmem:[#allocation11 + $0xea8] sm:$0xff]
    %v3609 = vld [vmem:[#allocation11 + $0xeb0] sm:$0xff]
    %v3610 = vld [vmem:[#allocation11 + $0xeb8] sm:$0xff]
    %v3611 = vld [vmem:[#allocation11 + $0xec0] sm:$0xff]
    %v3612 = vld [vmem:[#allocation11 + $0xec8] sm:$0xff]
    %v3613 = vld [vmem:[#allocation11 + $0xed0] sm:$0xff]
    %v3614 = vld [vmem:[#allocation11 + $0xed8] sm:$0xff]
    %v3615 = vld [vmem:[#allocation11 + $0xee0] sm:$0xff]
    %v3616 = vld [vmem:[#allocation11 + $0xee8] sm:$0xff]
    %v3617 = vld [vmem:[#allocation11 + $0xef0] sm:$0xff]
    %v3618 = vld [vmem:[#allocation11 + $0xef8] sm:$0xff]
    %v3619 = vld [vmem:[#allocation11 + $0xf00] sm:$0xff]
    %v3620 = vld [vmem:[#allocation11 + $0xf08] sm:$0xff]
    %v3621 = vld [vmem:[#allocation11 + $0xf10] sm:$0xff]
    %v3622 = vld [vmem:[#allocation11 + $0xf18] sm:$0xff]
    %v3623 = vld [vmem:[#allocation11 + $0xf20] sm:$0xff]
    %v3624 = vld [vmem:[#allocation11 + $0xf28] sm:$0xff]
    %v3625 = vld [vmem:[#allocation11 + $0xf30] sm:$0xff]
    %v3626 = vld [vmem:[#allocation11 + $0xf38] sm:$0xff]
    %v3627 = vld [vmem:[#allocation11 + $0xf40] sm:$0xff]
    %v3628 = vld [vmem:[#allocation11 + $0xf48] sm:$0xff]
    %v3629 = vld [vmem:[#allocation11 + $0xf50] sm:$0xff]
    %v3630 = vld [vmem:[#allocation11 + $0xf58] sm:$0xff]
    %v3631 = vld [vmem:[#allocation11 + $0xf60] sm:$0xff]
    %v3632 = vld [vmem:[#allocation11 + $0xf68] sm:$0xff]
    %v3633 = vld [vmem:[#allocation11 + $0xf70] sm:$0xff]
    %v3634 = vld [vmem:[#allocation11 + $0xf78] sm:$0xff]
    %v3635 = vld [vmem:[#allocation11 + $0xf80] sm:$0xff]
    %v3636 = vld [vmem:[#allocation11 + $0xf88] sm:$0xff]
    %v3637 = vld [vmem:[#allocation11 + $0xf90] sm:$0xff]
    %v3638 = vld [vmem:[#allocation11 + $0xf98] sm:$0xff]
    %v3639 = vld [vmem:[#allocation11 + $0xfa0] sm:$0xff]
    %v3640 = vld [vmem:[#allocation11 + $0xfa8] sm:$0xff]
    %v3641 = vld [vmem:[#allocation11 + $0xfb0] sm:$0xff]
    %v3642 = vld [vmem:[#allocation11 + $0xfb8] sm:$0xff]
    %v3643 = vld [vmem:[#allocation11 + $0xfc0] sm:$0xff]
    %v3644 = vld [vmem:[#allocation11 + $0xfc8] sm:$0xff]
    %v3645 = vld [vmem:[#allocation11 + $0xfd0] sm:$0xff]
    %v3646 = vld [vmem:[#allocation11 + $0xfd8] sm:$0xff]
    %v3647 = vld [vmem:[#allocation11 + $0xfe0] sm:$0xff]
    %v3648 = vld [vmem:[#allocation11 + $0xfe8] sm:$0xff]
    %v3649 = vld [vmem:[#allocation11 + $0xff0] sm:$0xff]
    %v3650 = vld [vmem:[#allocation11 + $0xff8] sm:$0xff]
    %v3651 = vld [vmem:[#allocation11 + $0x1000] sm:$0xff]
    %v3652 = vld [vmem:[#allocation11 + $0x1008] sm:$0xff]
    %v3653 = vld [vmem:[#allocation11 + $0x1010] sm:$0xff]
    %v3654 = vld [vmem:[#allocation11 + $0x1018] sm:$0xff]
    %v3655 = vld [vmem:[#allocation11 + $0x1020] sm:$0xff]
    %v3656 = vld [vmem:[#allocation11 + $0x1028] sm:$0xff]
    %v3657 = vld [vmem:[#allocation11 + $0x1030] sm:$0xff]
    %v3658 = vld [vmem:[#allocation11 + $0x1038] sm:$0xff]
    %v3659 = vld [vmem:[#allocation11 + $0x1040] sm:$0xff]
    %v3660 = vld [vmem:[#allocation11 + $0x1048] sm:$0xff]
    %v3661 = vld [vmem:[#allocation11 + $0x1050] sm:$0xff]
    %v3662 = vld [vmem:[#allocation11 + $0x1058] sm:$0xff]
    %v3663 = vld [vmem:[#allocation11 + $0x1060] sm:$0xff]
    %v3664 = vld [vmem:[#allocation11 + $0x1068] sm:$0xff]
    %v3665 = vld [vmem:[#allocation11 + $0x1070] sm:$0xff]
    %v3666 = vld [vmem:[#allocation11 + $0x1078] sm:$0xff]
    %v3667 = vld [vmem:[#allocation11 + $0x1080] sm:$0xff]
    %v3668 = vld [vmem:[#allocation11 + $0x1088] sm:$0xff]
    %v3669 = vld [vmem:[#allocation11 + $0x1090] sm:$0xff]
    %v3670 = vld [vmem:[#allocation11 + $0x1098] sm:$0xff]
    %v3671 = vld [vmem:[#allocation11 + $0x10a0] sm:$0xff]
    %v3672 = vld [vmem:[#allocation11 + $0x10a8] sm:$0xff]
    %v3673 = vld [vmem:[#allocation11 + $0x10b0] sm:$0xff]
    %v3674 = vld [vmem:[#allocation11 + $0x10b8] sm:$0xff]
    %v3675 = vld [vmem:[#allocation11 + $0x10c0] sm:$0xff]
    %v3676 = vld [vmem:[#allocation11 + $0x10c8] sm:$0xff]
    %v3677 = vld [vmem:[#allocation11 + $0x10d0] sm:$0xff]
    %v3678 = vld [vmem:[#allocation11 + $0x10d8] sm:$0xff]
    %v3679 = vld [vmem:[#allocation11 + $0x10e0] sm:$0xff]
    %v3680 = vld [vmem:[#allocation11 + $0x10e8] sm:$0xff]
    %v3681 = vld [vmem:[#allocation11 + $0x10f0] sm:$0xff]
    %v3682 = vld [vmem:[#allocation11 + $0x10f8] sm:$0xff]
    %v3683 = vld [vmem:[#allocation11 + $0x1100] sm:$0xff]
    %v3684 = vld [vmem:[#allocation11 + $0x1108] sm:$0xff]
    %v3685 = vld [vmem:[#allocation11 + $0x1110] sm:$0xff]
    %v3686 = vld [vmem:[#allocation11 + $0x1118] sm:$0xff]
    %v3687 = vld [vmem:[#allocation11 + $0x1120] sm:$0xff]
    %v3688 = vld [vmem:[#allocation11 + $0x1128] sm:$0xff]
    %v3689 = vld [vmem:[#allocation11 + $0x1130] sm:$0xff]
    %v3690 = vld [vmem:[#allocation11 + $0x1138] sm:$0xff]
    %v3691 = vld [vmem:[#allocation11 + $0x1140] sm:$0xff]
    %v3692 = vld [vmem:[#allocation11 + $0x1148] sm:$0xff]
    %v3693 = vld [vmem:[#allocation11 + $0x1150] sm:$0xff]
    %v3694 = vld [vmem:[#allocation11 + $0x1158] sm:$0xff]
    %v3695 = vld [vmem:[#allocation11 + $0x1160] sm:$0xff]
    %v3696 = vld [vmem:[#allocation11 + $0x1168] sm:$0xff]
    %v3697 = vld [vmem:[#allocation11 + $0x1170] sm:$0xff]
    %v3698 = vld [vmem:[#allocation11 + $0x1178] sm:$0xff]
    %v3699 = vld [vmem:[#allocation11 + $0x1180] sm:$0xff]
    %v3700 = vld [vmem:[#allocation11 + $0x1188] sm:$0xff]
    %v3701 = vld [vmem:[#allocation11 + $0x1190] sm:$0xff]
    %v3702 = vld [vmem:[#allocation11 + $0x1198] sm:$0xff]
    %v3703 = vld [vmem:[#allocation11 + $0x11a0] sm:$0xff]
    %v3704 = vld [vmem:[#allocation11 + $0x11a8] sm:$0xff]
    %v3705 = vld [vmem:[#allocation11 + $0x11b0] sm:$0xff]
    %v3706 = vld [vmem:[#allocation11 + $0x11b8] sm:$0xff]
    %v3707 = vld [vmem:[#allocation11 + $0x11c0] sm:$0xff]
    %v3708 = vld [vmem:[#allocation11 + $0x11c8] sm:$0xff]
    %v3709 = vld [vmem:[#allocation11 + $0x11d0] sm:$0xff]
    %v3710 = vld [vmem:[#allocation11 + $0x11d8] sm:$0xff]
    %v3711 = vld [vmem:[#allocation11 + $0x11e0] sm:$0xff]
    %v3712 = vld [vmem:[#allocation11 + $0x11e8] sm:$0xff]
    %v3713 = vld [vmem:[#allocation11 + $0x11f0] sm:$0xff]
    %v3714 = vld [vmem:[#allocation11 + $0x11f8] sm:$0xff]
    %v3715 = vld [vmem:[#allocation11 + $0x1200] sm:$0xff]
    %v3716 = vld [vmem:[#allocation11 + $0x1208] sm:$0xff]
    %v3717 = vld [vmem:[#allocation11 + $0x1210] sm:$0xff]
    %v3718 = vld [vmem:[#allocation11 + $0x1218] sm:$0xff]
    %v3719 = vld [vmem:[#allocation11 + $0x1220] sm:$0xff]
    %v3720 = vld [vmem:[#allocation11 + $0x1228] sm:$0xff]
    %v3721 = vld [vmem:[#allocation11 + $0x1230] sm:$0xff]
    %v3722 = vld [vmem:[#allocation11 + $0x1238] sm:$0xff]
    %v3723 = vld [vmem:[#allocation11 + $0x1240] sm:$0xff]
    %v3724 = vld [vmem:[#allocation11 + $0x1248] sm:$0xff]
    %v3725 = vld [vmem:[#allocation11 + $0x1250] sm:$0xff]
    %v3726 = vld [vmem:[#allocation11 + $0x1258] sm:$0xff]
    %v3727 = vld [vmem:[#allocation11 + $0x1260] sm:$0xff]
    %v3728 = vld [vmem:[#allocation11 + $0x1268] sm:$0xff]
    %v3729 = vld [vmem:[#allocation11 + $0x1270] sm:$0xff]
    %v3730 = vld [vmem:[#allocation11 + $0x1278] sm:$0xff]
    %v3731 = vld [vmem:[#allocation11 + $0x1280] sm:$0xff]
    %v3732 = vld [vmem:[#allocation11 + $0x1288] sm:$0xff]
    %v3733 = vld [vmem:[#allocation11 + $0x1290] sm:$0xff]
    %v3734 = vld [vmem:[#allocation11 + $0x1298] sm:$0xff]
    %v3735 = vld [vmem:[#allocation11 + $0x12a0] sm:$0xff]
    %v3736 = vld [vmem:[#allocation11 + $0x12a8] sm:$0xff]
    %v3737 = vld [vmem:[#allocation11 + $0x12b0] sm:$0xff]
    %v3738 = vld [vmem:[#allocation11 + $0x12b8] sm:$0xff]
    %v3739 = vld [vmem:[#allocation11 + $0x12c0] sm:$0xff]
    %v3740 = vld [vmem:[#allocation11 + $0x12c8] sm:$0xff]
    %v3741 = vld [vmem:[#allocation11 + $0x12d0] sm:$0xff]
    %v3742 = vld [vmem:[#allocation11 + $0x12d8] sm:$0xff]
    %v3743 = vld [vmem:[#allocation11 + $0x12e0] sm:$0xff]
    %v3744 = vld [vmem:[#allocation11 + $0x12e8] sm:$0xff]
    %v3745 = vld [vmem:[#allocation11 + $0x12f0] sm:$0xff]
    %v3746 = vld [vmem:[#allocation11 + $0x12f8] sm:$0xff]
    %v3747 = vld [vmem:[#allocation11 + $0x1300] sm:$0xff]
    %v3748 = vld [vmem:[#allocation11 + $0x1308] sm:$0xff]
    %v3749 = vld [vmem:[#allocation11 + $0x1310] sm:$0xff]
    %v3750 = vld [vmem:[#allocation11 + $0x1318] sm:$0xff]
    %v3751 = vld [vmem:[#allocation11 + $0x1320] sm:$0xff]
    %v3752 = vld [vmem:[#allocation11 + $0x1328] sm:$0xff]
    %v3753 = vld [vmem:[#allocation11 + $0x1330] sm:$0xff]
    %v3754 = vld [vmem:[#allocation11 + $0x1338] sm:$0xff]
    %v3755 = vld [vmem:[#allocation11 + $0x1340] sm:$0xff]
    %v3756 = vld [vmem:[#allocation11 + $0x1348] sm:$0xff]
    %v3757 = vld [vmem:[#allocation11 + $0x1350] sm:$0xff]
    %v3758 = vld [vmem:[#allocation11 + $0x1358] sm:$0xff]
    %v3759 = vld [vmem:[#allocation11 + $0x1360] sm:$0xff]
    %v3760 = vld [vmem:[#allocation11 + $0x1368] sm:$0xff]
    %v3761 = vld [vmem:[#allocation11 + $0x1370] sm:$0xff]
    %v3762 = vld [vmem:[#allocation11 + $0x1378] sm:$0xff]
    %v3763 = vld [vmem:[#allocation11 + $0x1380] sm:$0xff]
    %v3764 = vld [vmem:[#allocation11 + $0x1388] sm:$0xff]
    %v3765 = vld [vmem:[#allocation11 + $0x1390] sm:$0xff]
    %v3766 = vld [vmem:[#allocation11 + $0x1398] sm:$0xff]
    %v3767 = vld [vmem:[#allocation11 + $0x13a0] sm:$0xff]
    %v3768 = vld [vmem:[#allocation11 + $0x13a8] sm:$0xff]
    %v3769 = vld [vmem:[#allocation11 + $0x13b0] sm:$0xff]
    %v3770 = vld [vmem:[#allocation11 + $0x13b8] sm:$0xff]
    %v3771 = vld [vmem:[#allocation11 + $0x13c0] sm:$0xff]
    %v3772 = vld [vmem:[#allocation11 + $0x13c8] sm:$0xff]
    %v3773 = vld [vmem:[#allocation11 + $0x13d0] sm:$0xff]
    %v3774 = vld [vmem:[#allocation11 + $0x13d8] sm:$0xff]
    %v3775 = vld [vmem:[#allocation11 + $0x13e0] sm:$0xff]
    %v3776 = vld [vmem:[#allocation11 + $0x13e8] sm:$0xff]
    %v3777 = vld [vmem:[#allocation11 + $0x13f0] sm:$0xff]
    %v3778 = vld [vmem:[#allocation11 + $0x13f8] sm:$0xff]
    %v3779 = vld [vmem:[#allocation12] sm:$0xf]
    %v3781 = vperm.slane %v3779, 0
    %v3782 = vperm.slane %v3779, 1
    %v3783 = vperm.slane %v3779, 2
    %v3784 = vperm.slane %v3779, 3
    %v4429 = vunpack.c.l.b16 %v3139
    %v4430 = vunpack.c.h.b16 %v3139
    %v4431 = vunpack.c.l.b16 %v3140
    %v4432 = vunpack.c.h.b16 %v3140
    %v4433 = vunpack.c.l.b16 %v3141
    %v4434 = vunpack.c.h.b16 %v3141
    %v4435 = vunpack.c.l.b16 %v3142
    %v4436 = vunpack.c.h.b16 %v3142
    %v4437 = vunpack.c.l.b16 %v3143
    %v4438 = vunpack.c.h.b16 %v3143
    %v4439 = vunpack.c.l.b16 %v3144
    %v4440 = vunpack.c.h.b16 %v3144
    %v4441 = vunpack.c.l.b16 %v3145
    %v4442 = vunpack.c.h.b16 %v3145
    %v4443 = vunpack.c.l.b16 %v3146
    %v4444 = vunpack.c.h.b16 %v3146
    %v4445 = vunpack.c.l.b16 %v3147
    %v4446 = vunpack.c.h.b16 %v3147
    %v4447 = vunpack.c.l.b16 %v3148
    %v4448 = vunpack.c.h.b16 %v3148
    %v4449 = vunpack.c.l.b16 %v3149
    %v4450 = vunpack.c.h.b16 %v3149
    %v4451 = vunpack.c.l.b16 %v3150
    %v4452 = vunpack.c.h.b16 %v3150
    %v4453 = vunpack.c.l.b16 %v3151
    %v4454 = vunpack.c.h.b16 %v3151
    %v4455 = vunpack.c.l.b16 %v3152
    %v4456 = vunpack.c.h.b16 %v3152
    %v4457 = vunpack.c.l.b16 %v3153
    %v4458 = vunpack.c.h.b16 %v3153
    %v4459 = vunpack.c.l.b16 %v3154
    %v4460 = vunpack.c.h.b16 %v3154
    %v4461 = vunpack.c.l.b16 %v3155
    %v4462 = vunpack.c.h.b16 %v3155
    %v4463 = vunpack.c.l.b16 %v3156
    %v4464 = vunpack.c.h.b16 %v3156
    %v4465 = vunpack.c.l.b16 %v3157
    %v4466 = vunpack.c.h.b16 %v3157
    %v4467 = vunpack.c.l.b16 %v3158
    %v4468 = vunpack.c.h.b16 %v3158
    %v4469 = vunpack.c.l.b16 %v3159
    %v4470 = vunpack.c.h.b16 %v3159
    %v4471 = vunpack.c.l.b16 %v3160
    %v4472 = vunpack.c.h.b16 %v3160
    %v4473 = vunpack.c.l.b16 %v3161
    %v4474 = vunpack.c.h.b16 %v3161
    %v4475 = vunpack.c.l.b16 %v3162
    %v4476 = vunpack.c.h.b16 %v3162
    %v4477 = vunpack.c.l.b16 %v3163
    %v4478 = vunpack.c.h.b16 %v3163
    %v4479 = vunpack.c.l.b16 %v3164
    %v4480 = vunpack.c.h.b16 %v3164
    %v4481 = vunpack.c.l.b16 %v3165
    %v4482 = vunpack.c.h.b16 %v3165
    %v4483 = vunpack.c.l.b16 %v3166
    %v4484 = vunpack.c.h.b16 %v3166
    %v4485 = vunpack.c.l.b16 %v3167
    %v4486 = vunpack.c.h.b16 %v3167
    %v4487 = vunpack.c.l.b16 %v3168
    %v4488 = vunpack.c.h.b16 %v3168
    %v4489 = vunpack.c.l.b16 %v3169
    %v4490 = vunpack.c.h.b16 %v3169
    %v4491 = vunpack.c.l.b16 %v3170
    %v4492 = vunpack.c.h.b16 %v3170
    %v4493 = vunpack.c.l.b16 %v3171
    %v4494 = vunpack.c.h.b16 %v3171
    %v4495 = vunpack.c.l.b16 %v3172
    %v4496 = vunpack.c.h.b16 %v3172
    %v4497 = vunpack.c.l.b16 %v3173
    %v4498 = vunpack.c.h.b16 %v3173
    %v4499 = vunpack.c.l.b16 %v3174
    %v4500 = vunpack.c.h.b16 %v3174
    %v4501 = vunpack.c.l.b16 %v3175
    %v4502 = vunpack.c.h.b16 %v3175
    %v4503 = vunpack.c.l.b16 %v3176
    %v4504 = vunpack.c.h.b16 %v3176
    %v4505 = vunpack.c.l.b16 %v3177
    %v4506 = vunpack.c.h.b16 %v3177
    %v4507 = vunpack.c.l.b16 %v3178
    %v4508 = vunpack.c.h.b16 %v3178
    %v4509 = vunpack.c.l.b16 %v3179
    %v4510 = vunpack.c.h.b16 %v3179
    %v4511 = vunpack.c.l.b16 %v3180
    %v4512 = vunpack.c.h.b16 %v3180
    %v4513 = vunpack.c.l.b16 %v3181
    %v4514 = vunpack.c.h.b16 %v3181
    %v4515 = vunpack.c.l.b16 %v3182
    %v4516 = vunpack.c.h.b16 %v3182
    %v4517 = vunpack.c.l.b16 %v3183
    %v4518 = vunpack.c.h.b16 %v3183
    %v4519 = vunpack.c.l.b16 %v3184
    %v4520 = vunpack.c.h.b16 %v3184
    %v4521 = vunpack.c.l.b16 %v3185
    %v4522 = vunpack.c.h.b16 %v3185
    %v4523 = vunpack.c.l.b16 %v3186
    %v4524 = vunpack.c.h.b16 %v3186
    %v4525 = vunpack.c.l.b16 %v3187
    %v4526 = vunpack.c.h.b16 %v3187
    %v4527 = vunpack.c.l.b16 %v3188
    %v4528 = vunpack.c.h.b16 %v3188
    %v4529 = vunpack.c.l.b16 %v3189
    %v4530 = vunpack.c.h.b16 %v3189
    %v4531 = vunpack.c.l.b16 %v3190
    %v4532 = vunpack.c.h.b16 %v3190
    %v4533 = vunpack.c.l.b16 %v3191
    %v4534 = vunpack.c.h.b16 %v3191
    %v4535 = vunpack.c.l.b16 %v3192
    %v4536 = vunpack.c.h.b16 %v3192
    %v4537 = vunpack.c.l.b16 %v3193
    %v4538 = vunpack.c.h.b16 %v3193
    %v4539 = vunpack.c.l.b16 %v3194
    %v4540 = vunpack.c.h.b16 %v3194
    %v4541 = vunpack.c.l.b16 %v3195
    %v4542 = vunpack.c.h.b16 %v3195
    %v4543 = vunpack.c.l.b16 %v3196
    %v4544 = vunpack.c.h.b16 %v3196
    %v4545 = vunpack.c.l.b16 %v3197
    %v4546 = vunpack.c.h.b16 %v3197
    %v4547 = vunpack.c.l.b16 %v3198
    %v4548 = vunpack.c.h.b16 %v3198
    %v4549 = vunpack.c.l.b16 %v3199
    %v4550 = vunpack.c.h.b16 %v3199
    %v4551 = vunpack.c.l.b16 %v3200
    %v4552 = vunpack.c.h.b16 %v3200
    %v4553 = vunpack.c.l.b16 %v3201
    %v4554 = vunpack.c.h.b16 %v3201
    %v4555 = vunpack.c.l.b16 %v3202
    %v4556 = vunpack.c.h.b16 %v3202
    %v4557 = vunpack.c.l.b16 %v3203
    %v4558 = vunpack.c.h.b16 %v3203
    %v4559 = vunpack.c.l.b16 %v3204
    %v4560 = vunpack.c.h.b16 %v3204
    %v4561 = vunpack.c.l.b16 %v3205
    %v4562 = vunpack.c.h.b16 %v3205
    %v4563 = vunpack.c.l.b16 %v3206
    %v4564 = vunpack.c.h.b16 %v3206
    %v4565 = vunpack.c.l.b16 %v3207
    %v4566 = vunpack.c.h.b16 %v3207
    %v4567 = vunpack.c.l.b16 %v3208
    %v4568 = vunpack.c.h.b16 %v3208
    %v4569 = vunpack.c.l.b16 %v3209
    %v4570 = vunpack.c.h.b16 %v3209
    %v4571 = vunpack.c.l.b16 %v3210
    %v4572 = vunpack.c.h.b16 %v3210
    %v4573 = vunpack.c.l.b16 %v3211
    %v4574 = vunpack.c.h.b16 %v3211
    %v4575 = vunpack.c.l.b16 %v3212
    %v4576 = vunpack.c.h.b16 %v3212
    %v4577 = vunpack.c.l.b16 %v3213
    %v4578 = vunpack.c.h.b16 %v3213
    %v4579 = vunpack.c.l.b16 %v3214
    %v4580 = vunpack.c.h.b16 %v3214
    %v4581 = vunpack.c.l.b16 %v3215
    %v4582 = vunpack.c.h.b16 %v3215
    %v4583 = vunpack.c.l.b16 %v3216
    %v4584 = vunpack.c.h.b16 %v3216
    %v4585 = vunpack.c.l.b16 %v3217
    %v4586 = vunpack.c.h.b16 %v3217
    %v4587 = vunpack.c.l.b16 %v3218
    %v4588 = vunpack.c.h.b16 %v3218
    %v4589 = vunpack.c.l.b16 %v3219
    %v4590 = vunpack.c.h.b16 %v3219
    %v4591 = vunpack.c.l.b16 %v3220
    %v4592 = vunpack.c.h.b16 %v3220
    %v4593 = vunpack.c.l.b16 %v3221
    %v4594 = vunpack.c.h.b16 %v3221
    %v4595 = vunpack.c.l.b16 %v3222
    %v4596 = vunpack.c.h.b16 %v3222
    %v4597 = vunpack.c.l.b16 %v3223
    %v4598 = vunpack.c.h.b16 %v3223
    %v4599 = vunpack.c.l.b16 %v3224
    %v4600 = vunpack.c.h.b16 %v3224
    %v4601 = vunpack.c.l.b16 %v3225
    %v4602 = vunpack.c.h.b16 %v3225
    %v4603 = vunpack.c.l.b16 %v3226
    %v4604 = vunpack.c.h.b16 %v3226
    %v4605 = vunpack.c.l.b16 %v3227
    %v4606 = vunpack.c.h.b16 %v3227
    %v4607 = vunpack.c.l.b16 %v3228
    %v4608 = vunpack.c.h.b16 %v3228
    %v4609 = vunpack.c.l.b16 %v3229
    %v4610 = vunpack.c.h.b16 %v3229
    %v4611 = vunpack.c.l.b16 %v3230
    %v4612 = vunpack.c.h.b16 %v3230
    %v4613 = vunpack.c.l.b16 %v3231
    %v4614 = vunpack.c.h.b16 %v3231
    %v4615 = vunpack.c.l.b16 %v3232
    %v4616 = vunpack.c.h.b16 %v3232
    %v4617 = vunpack.c.l.b16 %v3233
    %v4618 = vunpack.c.h.b16 %v3233
    %v4619 = vunpack.c.l.b16 %v3234
    %v4620 = vunpack.c.h.b16 %v3234
    %v4621 = vunpack.c.l.b16 %v3235
    %v4622 = vunpack.c.h.b16 %v3235
    %v4623 = vunpack.c.l.b16 %v3236
    %v4624 = vunpack.c.h.b16 %v3236
    %v4625 = vunpack.c.l.b16 %v3237
    %v4626 = vunpack.c.h.b16 %v3237
    %v4627 = vunpack.c.l.b16 %v3238
    %v4628 = vunpack.c.h.b16 %v3238
    %v4629 = vunpack.c.l.b16 %v3239
    %v4630 = vunpack.c.h.b16 %v3239
    %v4631 = vunpack.c.l.b16 %v3240
    %v4632 = vunpack.c.h.b16 %v3240
    %v4633 = vunpack.c.l.b16 %v3241
    %v4634 = vunpack.c.h.b16 %v3241
    %v4635 = vunpack.c.l.b16 %v3242
    %v4636 = vunpack.c.h.b16 %v3242
    %v4637 = vunpack.c.l.b16 %v3243
    %v4638 = vunpack.c.h.b16 %v3243
    %v4639 = vunpack.c.l.b16 %v3244
    %v4640 = vunpack.c.h.b16 %v3244
    %v4641 = vunpack.c.l.b16 %v3245
    %v4642 = vunpack.c.h.b16 %v3245
    %v4643 = vunpack.c.l.b16 %v3246
    %v4644 = vunpack.c.h.b16 %v3246
    %v4645 = vunpack.c.l.b16 %v3247
    %v4646 = vunpack.c.h.b16 %v3247
    %v4647 = vunpack.c.l.b16 %v3248
    %v4648 = vunpack.c.h.b16 %v3248
    %v4649 = vunpack.c.l.b16 %v3249
    %v4650 = vunpack.c.h.b16 %v3249
    %v4651 = vunpack.c.l.b16 %v3250
    %v4652 = vunpack.c.h.b16 %v3250
    %v4653 = vunpack.c.l.b16 %v3251
    %v4654 = vunpack.c.h.b16 %v3251
    %v4655 = vunpack.c.l.b16 %v3252
    %v4656 = vunpack.c.h.b16 %v3252
    %v4657 = vunpack.c.l.b16 %v3253
    %v4658 = vunpack.c.h.b16 %v3253
    %v4659 = vunpack.c.l.b16 %v3254
    %v4660 = vunpack.c.h.b16 %v3254
    %v4661 = vunpack.c.l.b16 %v3255
    %v4662 = vunpack.c.h.b16 %v3255
    %v4663 = vunpack.c.l.b16 %v3256
    %v4664 = vunpack.c.h.b16 %v3256
    %v4665 = vunpack.c.l.b16 %v3257
    %v4666 = vunpack.c.h.b16 %v3257
    %v4667 = vunpack.c.l.b16 %v3258
    %v4668 = vunpack.c.h.b16 %v3258
    %v4669 = vunpack.c.l.b16 %v3259
    %v4670 = vunpack.c.h.b16 %v3259
    %v4671 = vunpack.c.l.b16 %v3260
    %v4672 = vunpack.c.h.b16 %v3260
    %v4673 = vunpack.c.l.b16 %v3261
    %v4674 = vunpack.c.h.b16 %v3261
    %v4675 = vunpack.c.l.b16 %v3262
    %v4676 = vunpack.c.h.b16 %v3262
    %v4677 = vunpack.c.l.b16 %v3263
    %v4678 = vunpack.c.h.b16 %v3263
    %v4679 = vunpack.c.l.b16 %v3264
    %v4680 = vunpack.c.h.b16 %v3264
    %v4681 = vunpack.c.l.b16 %v3265
    %v4682 = vunpack.c.h.b16 %v3265
    %v4683 = vunpack.c.l.b16 %v3266
    %v4684 = vunpack.c.h.b16 %v3266
    %v4685 = vunpack.c.l.b16 %v3267
    %v4686 = vunpack.c.h.b16 %v3267
    %v4687 = vunpack.c.l.b16 %v3268
    %v4688 = vunpack.c.h.b16 %v3268
    %v4689 = vunpack.c.l.b16 %v3269
    %v4690 = vunpack.c.h.b16 %v3269
    %v4691 = vunpack.c.l.b16 %v3270
    %v4692 = vunpack.c.h.b16 %v3270
    %v4693 = vunpack.c.l.b16 %v3271
    %v4694 = vunpack.c.h.b16 %v3271
    %v4695 = vunpack.c.l.b16 %v3272
    %v4696 = vunpack.c.h.b16 %v3272
    %v4697 = vunpack.c.l.b16 %v3273
    %v4698 = vunpack.c.h.b16 %v3273
    %v4699 = vunpack.c.l.b16 %v3274
    %v4700 = vunpack.c.h.b16 %v3274
    %v4701 = vunpack.c.l.b16 %v3275
    %v4702 = vunpack.c.h.b16 %v3275
    %v4703 = vunpack.c.l.b16 %v3276
    %v4704 = vunpack.c.h.b16 %v3276
    %v4705 = vunpack.c.l.b16 %v3277
    %v4706 = vunpack.c.h.b16 %v3277
    %v4707 = vunpack.c.l.b16 %v3278
    %v4708 = vunpack.c.h.b16 %v3278
    %v4709 = vunpack.c.l.b16 %v3279
    %v4710 = vunpack.c.h.b16 %v3279
    %v4711 = vunpack.c.l.b16 %v3280
    %v4712 = vunpack.c.h.b16 %v3280
    %v4713 = vunpack.c.l.b16 %v3281
    %v4714 = vunpack.c.h.b16 %v3281
    %v4715 = vunpack.c.l.b16 %v3282
    %v4716 = vunpack.c.h.b16 %v3282
    %v4717 = vunpack.c.l.b16 %v3283
    %v4718 = vunpack.c.h.b16 %v3283
    %v4719 = vunpack.c.l.b16 %v3284
    %v4720 = vunpack.c.h.b16 %v3284
    %v4721 = vunpack.c.l.b16 %v3285
    %v4722 = vunpack.c.h.b16 %v3285
    %v4723 = vunpack.c.l.b16 %v3286
    %v4724 = vunpack.c.h.b16 %v3286
    %v4725 = vunpack.c.l.b16 %v3287
    %v4726 = vunpack.c.h.b16 %v3287
    %v4727 = vunpack.c.l.b16 %v3288
    %v4728 = vunpack.c.h.b16 %v3288
    %v4729 = vunpack.c.l.b16 %v3289
    %v4730 = vunpack.c.h.b16 %v3289
    %v4731 = vunpack.c.l.b16 %v3290
    %v4732 = vunpack.c.h.b16 %v3290
    %v4733 = vunpack.c.l.b16 %v3291
    %v4734 = vunpack.c.h.b16 %v3291
    %v4735 = vunpack.c.l.b16 %v3292
    %v4736 = vunpack.c.h.b16 %v3292
    %v4737 = vunpack.c.l.b16 %v3293
    %v4738 = vunpack.c.h.b16 %v3293
    %v4739 = vunpack.c.l.b16 %v3294
    %v4740 = vunpack.c.h.b16 %v3294
    %v4741 = vunpack.c.l.b16 %v3295
    %v4742 = vunpack.c.h.b16 %v3295
    %v4743 = vunpack.c.l.b16 %v3296
    %v4744 = vunpack.c.h.b16 %v3296
    %v4745 = vunpack.c.l.b16 %v3297
    %v4746 = vunpack.c.h.b16 %v3297
    %v4747 = vunpack.c.l.b16 %v3298
    %v4748 = vunpack.c.h.b16 %v3298
    %v4749 = vunpack.c.l.b16 %v3299
    %v4750 = vunpack.c.h.b16 %v3299
    %v4751 = vunpack.c.l.b16 %v3300
    %v4752 = vunpack.c.h.b16 %v3300
    %v4753 = vunpack.c.l.b16 %v3301
    %v4754 = vunpack.c.h.b16 %v3301
    %v4755 = vunpack.c.l.b16 %v3302
    %v4756 = vunpack.c.h.b16 %v3302
    %v4757 = vunpack.c.l.b16 %v3303
    %v4758 = vunpack.c.h.b16 %v3303
    %v4759 = vunpack.c.l.b16 %v3304
    %v4760 = vunpack.c.h.b16 %v3304
    %v4761 = vunpack.c.l.b16 %v3305
    %v4762 = vunpack.c.h.b16 %v3305
    %v4763 = vunpack.c.l.b16 %v3306
    %v4764 = vunpack.c.h.b16 %v3306
    %v4765 = vunpack.c.l.b16 %v3307
    %v4766 = vunpack.c.h.b16 %v3307
    %v4767 = vunpack.c.l.b16 %v3308
    %v4768 = vunpack.c.h.b16 %v3308
    %v4769 = vunpack.c.l.b16 %v3309
    %v4770 = vunpack.c.h.b16 %v3309
    %v4771 = vunpack.c.l.b16 %v3310
    %v4772 = vunpack.c.h.b16 %v3310
    %v4773 = vunpack.c.l.b16 %v3311
    %v4774 = vunpack.c.h.b16 %v3311
    %v4775 = vunpack.c.l.b16 %v3312
    %v4776 = vunpack.c.h.b16 %v3312
    %v4777 = vunpack.c.l.b16 %v3313
    %v4778 = vunpack.c.h.b16 %v3313
    %v4779 = vunpack.c.l.b16 %v3314
    %v4780 = vunpack.c.h.b16 %v3314
    %v4781 = vunpack.c.l.b16 %v3315
    %v4782 = vunpack.c.h.b16 %v3315
    %v4783 = vunpack.c.l.b16 %v3316
    %v4784 = vunpack.c.h.b16 %v3316
    %v4785 = vunpack.c.l.b16 %v3317
    %v4786 = vunpack.c.h.b16 %v3317
    %v4787 = vunpack.c.l.b16 %v3318
    %v4788 = vunpack.c.h.b16 %v3318
    %v4789 = vunpack.c.l.b16 %v3319
    %v4790 = vunpack.c.h.b16 %v3319
    %v4791 = vunpack.c.l.b16 %v3320
    %v4792 = vunpack.c.h.b16 %v3320
    %v4793 = vunpack.c.l.b16 %v3321
    %v4794 = vunpack.c.h.b16 %v3321
    %v4795 = vunpack.c.l.b16 %v3322
    %v4796 = vunpack.c.h.b16 %v3322
    %v4797 = vunpack.c.l.b16 %v3323
    %v4798 = vunpack.c.h.b16 %v3323
    %v4799 = vunpack.c.l.b16 %v3324
    %v4800 = vunpack.c.h.b16 %v3324
    %v4801 = vunpack.c.l.b16 %v3325
    %v4802 = vunpack.c.h.b16 %v3325
    %v4803 = vunpack.c.l.b16 %v3326
    %v4804 = vunpack.c.h.b16 %v3326
    %v4805 = vunpack.c.l.b16 %v3327
    %v4806 = vunpack.c.h.b16 %v3327
    %v4807 = vunpack.c.l.b16 %v3328
    %v4808 = vunpack.c.h.b16 %v3328
    %v4809 = vunpack.c.l.b16 %v3329
    %v4810 = vunpack.c.h.b16 %v3329
    %v4811 = vunpack.c.l.b16 %v3330
    %v4812 = vunpack.c.h.b16 %v3330
    %v4813 = vunpack.c.l.b16 %v3331
    %v4814 = vunpack.c.h.b16 %v3331
    %v4815 = vunpack.c.l.b16 %v3332
    %v4816 = vunpack.c.h.b16 %v3332
    %v4817 = vunpack.c.l.b16 %v3333
    %v4818 = vunpack.c.h.b16 %v3333
    %v4819 = vunpack.c.l.b16 %v3334
    %v4820 = vunpack.c.h.b16 %v3334
    %v4821 = vunpack.c.l.b16 %v3335
    %v4822 = vunpack.c.h.b16 %v3335
    %v4823 = vunpack.c.l.b16 %v3336
    %v4824 = vunpack.c.h.b16 %v3336
    %v4825 = vunpack.c.l.b16 %v3337
    %v4826 = vunpack.c.h.b16 %v3337
    %v4827 = vunpack.c.l.b16 %v3338
    %v4828 = vunpack.c.h.b16 %v3338
    %v4829 = vunpack.c.l.b16 %v3339
    %v4830 = vunpack.c.h.b16 %v3339
    %v4831 = vunpack.c.l.b16 %v3340
    %v4832 = vunpack.c.h.b16 %v3340
    %v4833 = vunpack.c.l.b16 %v3341
    %v4834 = vunpack.c.h.b16 %v3341
    %v4835 = vunpack.c.l.b16 %v3342
    %v4836 = vunpack.c.h.b16 %v3342
    %v4837 = vunpack.c.l.b16 %v3343
    %v4838 = vunpack.c.h.b16 %v3343
    %v4839 = vunpack.c.l.b16 %v3344
    %v4840 = vunpack.c.h.b16 %v3344
    %v4841 = vunpack.c.l.b16 %v3345
    %v4842 = vunpack.c.h.b16 %v3345
    %v4843 = vunpack.c.l.b16 %v3346
    %v4844 = vunpack.c.h.b16 %v3346
    %v4845 = vunpack.c.l.b16 %v3347
    %v4846 = vunpack.c.h.b16 %v3347
    %v4847 = vunpack.c.l.b16 %v3348
    %v4848 = vunpack.c.h.b16 %v3348
    %v4849 = vunpack.c.l.b16 %v3349
    %v4850 = vunpack.c.h.b16 %v3349
    %v4851 = vunpack.c.l.b16 %v3350
    %v4852 = vunpack.c.h.b16 %v3350
    %v4853 = vunpack.c.l.b16 %v3351
    %v4854 = vunpack.c.h.b16 %v3351
    %v4855 = vunpack.c.l.b16 %v3352
    %v4856 = vunpack.c.h.b16 %v3352
    %v4857 = vunpack.c.l.b16 %v3353
    %v4858 = vunpack.c.h.b16 %v3353
    %v4859 = vunpack.c.l.b16 %v3354
    %v4860 = vunpack.c.h.b16 %v3354
    %v4861 = vunpack.c.l.b16 %v3355
    %v4862 = vunpack.c.h.b16 %v3355
    %v4863 = vunpack.c.l.b16 %v3356
    %v4864 = vunpack.c.h.b16 %v3356
    %v4865 = vunpack.c.l.b16 %v3357
    %v4866 = vunpack.c.h.b16 %v3357
    %v4867 = vunpack.c.l.b16 %v3358
    %v4868 = vunpack.c.h.b16 %v3358
    %v4869 = vunpack.c.l.b16 %v3359
    %v4870 = vunpack.c.h.b16 %v3359
    %v4871 = vunpack.c.l.b16 %v3360
    %v4872 = vunpack.c.h.b16 %v3360
    %v4873 = vunpack.c.l.b16 %v3361
    %v4874 = vunpack.c.h.b16 %v3361
    %v4875 = vunpack.c.l.b16 %v3362
    %v4876 = vunpack.c.h.b16 %v3362
    %v4877 = vunpack.c.l.b16 %v3363
    %v4878 = vunpack.c.h.b16 %v3363
    %v4879 = vunpack.c.l.b16 %v3364
    %v4880 = vunpack.c.h.b16 %v3364
    %v4881 = vunpack.c.l.b16 %v3365
    %v4882 = vunpack.c.h.b16 %v3365
    %v4883 = vunpack.c.l.b16 %v3366
    %v4884 = vunpack.c.h.b16 %v3366
    %v4885 = vunpack.c.l.b16 %v3367
    %v4886 = vunpack.c.h.b16 %v3367
    %v4887 = vunpack.c.l.b16 %v3368
    %v4888 = vunpack.c.h.b16 %v3368
    %v4889 = vunpack.c.l.b16 %v3369
    %v4890 = vunpack.c.h.b16 %v3369
    %v4891 = vunpack.c.l.b16 %v3370
    %v4892 = vunpack.c.h.b16 %v3370
    %v4893 = vunpack.c.l.b16 %v3371
    %v4894 = vunpack.c.h.b16 %v3371
    %v4895 = vunpack.c.l.b16 %v3372
    %v4896 = vunpack.c.h.b16 %v3372
    %v4897 = vunpack.c.l.b16 %v3373
    %v4898 = vunpack.c.h.b16 %v3373
    %v4899 = vunpack.c.l.b16 %v3374
    %v4900 = vunpack.c.h.b16 %v3374
    %v4901 = vunpack.c.l.b16 %v3375
    %v4902 = vunpack.c.h.b16 %v3375
    %v4903 = vunpack.c.l.b16 %v3376
    %v4904 = vunpack.c.h.b16 %v3376
    %v4905 = vunpack.c.l.b16 %v3377
    %v4906 = vunpack.c.h.b16 %v3377
    %v4907 = vunpack.c.l.b16 %v3378
    %v4908 = vunpack.c.h.b16 %v3378
    %v4909 = vunpack.c.l.b16 %v3379
    %v4910 = vunpack.c.h.b16 %v3379
    %v4911 = vunpack.c.l.b16 %v3380
    %v4912 = vunpack.c.h.b16 %v3380
    %v4913 = vunpack.c.l.b16 %v3381
    %v4914 = vunpack.c.h.b16 %v3381
    %v4915 = vunpack.c.l.b16 %v3382
    %v4916 = vunpack.c.h.b16 %v3382
    %v4917 = vunpack.c.l.b16 %v3383
    %v4918 = vunpack.c.h.b16 %v3383
    %v4919 = vunpack.c.l.b16 %v3384
    %v4920 = vunpack.c.h.b16 %v3384
    %v4921 = vunpack.c.l.b16 %v3385
    %v4922 = vunpack.c.h.b16 %v3385
    %v4923 = vunpack.c.l.b16 %v3386
    %v4924 = vunpack.c.h.b16 %v3386
    %v4925 = vunpack.c.l.b16 %v3387
    %v4926 = vunpack.c.h.b16 %v3387
    %v4927 = vunpack.c.l.b16 %v3388
    %v4928 = vunpack.c.h.b16 %v3388
    %v4929 = vunpack.c.l.b16 %v3389
    %v4930 = vunpack.c.h.b16 %v3389
    %v4931 = vunpack.c.l.b16 %v3390
    %v4932 = vunpack.c.h.b16 %v3390
    %v4933 = vunpack.c.l.b16 %v3391
    %v4934 = vunpack.c.h.b16 %v3391
    %v4935 = vunpack.c.l.b16 %v3392
    %v4936 = vunpack.c.h.b16 %v3392
    %v4937 = vunpack.c.l.b16 %v3393
    %v4938 = vunpack.c.h.b16 %v3393
    %v4939 = vunpack.c.l.b16 %v3394
    %v4940 = vunpack.c.h.b16 %v3394
    %v4941 = vunpack.c.l.b16 %v3395
    %v4942 = vunpack.c.h.b16 %v3395
    %v4943 = vunpack.c.l.b16 %v3396
    %v4944 = vunpack.c.h.b16 %v3396
    %v4945 = vunpack.c.l.b16 %v3397
    %v4946 = vunpack.c.h.b16 %v3397
    %v4947 = vunpack.c.l.b16 %v3398
    %v4948 = vunpack.c.h.b16 %v3398
    %v4949 = vunpack.c.l.b16 %v3399
    %v4950 = vunpack.c.h.b16 %v3399
    %v4951 = vunpack.c.l.b16 %v3400
    %v4952 = vunpack.c.h.b16 %v3400
    %v4953 = vunpack.c.l.b16 %v3401
    %v4954 = vunpack.c.h.b16 %v3401
    %v4955 = vunpack.c.l.b16 %v3402
    %v4956 = vunpack.c.h.b16 %v3402
    %v4957 = vunpack.c.l.b16 %v3403
    %v4958 = vunpack.c.h.b16 %v3403
    %v4959 = vunpack.c.l.b16 %v3404
    %v4960 = vunpack.c.h.b16 %v3404
    %v4961 = vunpack.c.l.b16 %v3405
    %v4962 = vunpack.c.h.b16 %v3405
    %v4963 = vunpack.c.l.b16 %v3406
    %v4964 = vunpack.c.h.b16 %v3406
    %v4965 = vunpack.c.l.b16 %v3407
    %v4966 = vunpack.c.h.b16 %v3407
    %v4967 = vunpack.c.l.b16 %v3408
    %v4968 = vunpack.c.h.b16 %v3408
    %v4969 = vunpack.c.l.b16 %v3409
    %v4970 = vunpack.c.h.b16 %v3409
    %v4971 = vunpack.c.l.b16 %v3410
    %v4972 = vunpack.c.h.b16 %v3410
    %v4973 = vunpack.c.l.b16 %v3411
    %v4974 = vunpack.c.h.b16 %v3411
    %v4975 = vunpack.c.l.b16 %v3412
    %v4976 = vunpack.c.h.b16 %v3412
    %v4977 = vunpack.c.l.b16 %v3413
    %v4978 = vunpack.c.h.b16 %v3413
    %v4979 = vunpack.c.l.b16 %v3414
    %v4980 = vunpack.c.h.b16 %v3414
    %v4981 = vunpack.c.l.b16 %v3415
    %v4982 = vunpack.c.h.b16 %v3415
    %v4983 = vunpack.c.l.b16 %v3416
    %v4984 = vunpack.c.h.b16 %v3416
    %v4985 = vunpack.c.l.b16 %v3417
    %v4986 = vunpack.c.h.b16 %v3417
    %v4987 = vunpack.c.l.b16 %v3418
    %v4988 = vunpack.c.h.b16 %v3418
    %v4989 = vunpack.c.l.b16 %v3419
    %v4990 = vunpack.c.h.b16 %v3419
    %v4991 = vunpack.c.l.b16 %v3420
    %v4992 = vunpack.c.h.b16 %v3420
    %v4993 = vunpack.c.l.b16 %v3421
    %v4994 = vunpack.c.h.b16 %v3421
    %v4995 = vunpack.c.l.b16 %v3422
    %v4996 = vunpack.c.h.b16 %v3422
    %v4997 = vunpack.c.l.b16 %v3423
    %v4998 = vunpack.c.h.b16 %v3423
    %v4999 = vunpack.c.l.b16 %v3424
    %v5000 = vunpack.c.h.b16 %v3424
    %v5001 = vunpack.c.l.b16 %v3425
    %v5002 = vunpack.c.h.b16 %v3425
    %v5003 = vunpack.c.l.b16 %v3426
    %v5004 = vunpack.c.h.b16 %v3426
    %v5005 = vunpack.c.l.b16 %v3427
    %v5006 = vunpack.c.h.b16 %v3427
    %v5007 = vunpack.c.l.b16 %v3428
    %v5008 = vunpack.c.h.b16 %v3428
    %v5009 = vunpack.c.l.b16 %v3429
    %v5010 = vunpack.c.h.b16 %v3429
    %v5011 = vunpack.c.l.b16 %v3430
    %v5012 = vunpack.c.h.b16 %v3430
    %v5013 = vunpack.c.l.b16 %v3431
    %v5014 = vunpack.c.h.b16 %v3431
    %v5015 = vunpack.c.l.b16 %v3432
    %v5016 = vunpack.c.h.b16 %v3432
    %v5017 = vunpack.c.l.b16 %v3433
    %v5018 = vunpack.c.h.b16 %v3433
    %v5019 = vunpack.c.l.b16 %v3434
    %v5020 = vunpack.c.h.b16 %v3434
    %v5021 = vunpack.c.l.b16 %v3435
    %v5022 = vunpack.c.h.b16 %v3435
    %v5023 = vunpack.c.l.b16 %v3436
    %v5024 = vunpack.c.h.b16 %v3436
    %v5025 = vunpack.c.l.b16 %v3437
    %v5026 = vunpack.c.h.b16 %v3437
    %v5027 = vunpack.c.l.b16 %v3438
    %v5028 = vunpack.c.h.b16 %v3438
    %v5029 = vunpack.c.l.b16 %v3439
    %v5030 = vunpack.c.h.b16 %v3439
    %v5031 = vunpack.c.l.b16 %v3440
    %v5032 = vunpack.c.h.b16 %v3440
    %v5033 = vunpack.c.l.b16 %v3441
    %v5034 = vunpack.c.h.b16 %v3441
    %v5035 = vunpack.c.l.b16 %v3442
    %v5036 = vunpack.c.h.b16 %v3442
    %v5037 = vunpack.c.l.b16 %v3443
    %v5038 = vunpack.c.h.b16 %v3443
    %v5039 = vunpack.c.l.b16 %v3444
    %v5040 = vunpack.c.h.b16 %v3444
    %v5041 = vunpack.c.l.b16 %v3445
    %v5042 = vunpack.c.h.b16 %v3445
    %v5043 = vunpack.c.l.b16 %v3446
    %v5044 = vunpack.c.h.b16 %v3446
    %v5045 = vunpack.c.l.b16 %v3447
    %v5046 = vunpack.c.h.b16 %v3447
    %v5047 = vunpack.c.l.b16 %v3448
    %v5048 = vunpack.c.h.b16 %v3448
    %v5049 = vunpack.c.l.b16 %v3449
    %v5050 = vunpack.c.h.b16 %v3449
    %v5051 = vunpack.c.l.b16 %v3450
    %v5052 = vunpack.c.h.b16 %v3450
    %v5053 = vunpack.c.l.b16 %v3451
    %v5054 = vunpack.c.h.b16 %v3451
    %v5055 = vunpack.c.l.b16 %v3452
    %v5056 = vunpack.c.h.b16 %v3452
    %v5057 = vunpack.c.l.b16 %v3453
    %v5058 = vunpack.c.h.b16 %v3453
    %v5059 = vunpack.c.l.b16 %v3454
    %v5060 = vunpack.c.h.b16 %v3454
    %v5061 = vunpack.c.l.b16 %v3455
    %v5062 = vunpack.c.h.b16 %v3455
    %v5063 = vunpack.c.l.b16 %v3456
    %v5064 = vunpack.c.h.b16 %v3456
    %v5065 = vunpack.c.l.b16 %v3457
    %v5066 = vunpack.c.h.b16 %v3457
    %v5067 = vunpack.c.l.b16 %v3458
    %v5068 = vunpack.c.h.b16 %v3458
    %v5069 = vunpack.c.l.b16 %v3459
    %v5070 = vunpack.c.h.b16 %v3459
    %v5071 = vunpack.c.l.b16 %v3460
    %v5072 = vunpack.c.h.b16 %v3460
    %v5073 = vunpack.c.l.b16 %v3461
    %v5074 = vunpack.c.h.b16 %v3461
    %v5075 = vunpack.c.l.b16 %v3462
    %v5076 = vunpack.c.h.b16 %v3462
    %v5077 = vunpack.c.l.b16 %v3463
    %v5078 = vunpack.c.h.b16 %v3463
    %v5079 = vunpack.c.l.b16 %v3464
    %v5080 = vunpack.c.h.b16 %v3464
    %v5081 = vunpack.c.l.b16 %v3465
    %v5082 = vunpack.c.h.b16 %v3465
    %v5083 = vunpack.c.l.b16 %v3466
    %v5084 = vunpack.c.h.b16 %v3466
    %v5085 = vunpack.c.l.b16 %v3467
    %v5086 = vunpack.c.h.b16 %v3467
    %v5087 = vunpack.c.l.b16 %v3468
    %v5088 = vunpack.c.h.b16 %v3468
    %v5089 = vunpack.c.l.b16 %v3469
    %v5090 = vunpack.c.h.b16 %v3469
    %v5091 = vunpack.c.l.b16 %v3470
    %v5092 = vunpack.c.h.b16 %v3470
    %v5093 = vunpack.c.l.b16 %v3471
    %v5094 = vunpack.c.h.b16 %v3471
    %v5095 = vunpack.c.l.b16 %v3472
    %v5096 = vunpack.c.h.b16 %v3472
    %v5097 = vunpack.c.l.b16 %v3473
    %v5098 = vunpack.c.h.b16 %v3473
    %v5099 = vunpack.c.l.b16 %v3474
    %v5100 = vunpack.c.h.b16 %v3474
    %v5101 = vunpack.c.l.b16 %v3475
    %v5102 = vunpack.c.h.b16 %v3475
    %v5103 = vunpack.c.l.b16 %v3476
    %v5104 = vunpack.c.h.b16 %v3476
    %v5105 = vunpack.c.l.b16 %v3477
    %v5106 = vunpack.c.h.b16 %v3477
    %v5107 = vunpack.c.l.b16 %v3478
    %v5108 = vunpack.c.h.b16 %v3478
    %v5109 = vunpack.c.l.b16 %v3479
    %v5110 = vunpack.c.h.b16 %v3479
    %v5111 = vunpack.c.l.b16 %v3480
    %v5112 = vunpack.c.h.b16 %v3480
    %v5113 = vunpack.c.l.b16 %v3481
    %v5114 = vunpack.c.h.b16 %v3481
    %v5115 = vunpack.c.l.b16 %v3482
    %v5116 = vunpack.c.h.b16 %v3482
    %v5117 = vunpack.c.l.b16 %v3483
    %v5118 = vunpack.c.h.b16 %v3483
    %v5119 = vunpack.c.l.b16 %v3484
    %v5120 = vunpack.c.h.b16 %v3484
    %v5121 = vunpack.c.l.b16 %v3485
    %v5122 = vunpack.c.h.b16 %v3485
    %v5123 = vunpack.c.l.b16 %v3486
    %v5124 = vunpack.c.h.b16 %v3486
    %v5125 = vunpack.c.l.b16 %v3487
    %v5126 = vunpack.c.h.b16 %v3487
    %v5127 = vunpack.c.l.b16 %v3488
    %v5128 = vunpack.c.h.b16 %v3488
    %v5129 = vunpack.c.l.b16 %v3489
    %v5130 = vunpack.c.h.b16 %v3489
    %v5131 = vunpack.c.l.b16 %v3490
    %v5132 = vunpack.c.h.b16 %v3490
    %v5133 = vunpack.c.l.b16 %v3491
    %v5134 = vunpack.c.h.b16 %v3491
    %v5135 = vunpack.c.l.b16 %v3492
    %v5136 = vunpack.c.h.b16 %v3492
    %v5137 = vunpack.c.l.b16 %v3493
    %v5138 = vunpack.c.h.b16 %v3493
    %v5139 = vunpack.c.l.b16 %v3494
    %v5140 = vunpack.c.h.b16 %v3494
    %v5141 = vunpack.c.l.b16 %v3495
    %v5142 = vunpack.c.h.b16 %v3495
    %v5143 = vunpack.c.l.b16 %v3496
    %v5144 = vunpack.c.h.b16 %v3496
    %v5145 = vunpack.c.l.b16 %v3497
    %v5146 = vunpack.c.h.b16 %v3497
    %v5147 = vunpack.c.l.b16 %v3498
    %v5148 = vunpack.c.h.b16 %v3498
    %v5149 = vunpack.c.l.b16 %v3499
    %v5150 = vunpack.c.h.b16 %v3499
    %v5151 = vunpack.c.l.b16 %v3500
    %v5152 = vunpack.c.h.b16 %v3500
    %v5153 = vunpack.c.l.b16 %v3501
    %v5154 = vunpack.c.h.b16 %v3501
    %v5155 = vunpack.c.l.b16 %v3502
    %v5156 = vunpack.c.h.b16 %v3502
    %v5157 = vunpack.c.l.b16 %v3503
    %v5158 = vunpack.c.h.b16 %v3503
    %v5159 = vunpack.c.l.b16 %v3504
    %v5160 = vunpack.c.h.b16 %v3504
    %v5161 = vunpack.c.l.b16 %v3505
    %v5162 = vunpack.c.h.b16 %v3505
    %v5163 = vunpack.c.l.b16 %v3506
    %v5164 = vunpack.c.h.b16 %v3506
    %v5165 = vunpack.c.l.b16 %v3507
    %v5166 = vunpack.c.h.b16 %v3507
    %v5167 = vunpack.c.l.b16 %v3508
    %v5168 = vunpack.c.h.b16 %v3508
    %v5169 = vunpack.c.l.b16 %v3509
    %v5170 = vunpack.c.h.b16 %v3509
    %v5171 = vunpack.c.l.b16 %v3510
    %v5172 = vunpack.c.h.b16 %v3510
    %v5173 = vunpack.c.l.b16 %v3511
    %v5174 = vunpack.c.h.b16 %v3511
    %v5175 = vunpack.c.l.b16 %v3512
    %v5176 = vunpack.c.h.b16 %v3512
    %v5177 = vunpack.c.l.b16 %v3513
    %v5178 = vunpack.c.h.b16 %v3513
    %v5179 = vunpack.c.l.b16 %v3514
    %v5180 = vunpack.c.h.b16 %v3514
    %v5181 = vunpack.c.l.b16 %v3515
    %v5182 = vunpack.c.h.b16 %v3515
    %v5183 = vunpack.c.l.b16 %v3516
    %v5184 = vunpack.c.h.b16 %v3516
    %v5185 = vunpack.c.l.b16 %v3517
    %v5186 = vunpack.c.h.b16 %v3517
    %v5187 = vunpack.c.l.b16 %v3518
    %v5188 = vunpack.c.h.b16 %v3518
    %v5189 = vunpack.c.l.b16 %v3519
    %v5190 = vunpack.c.h.b16 %v3519
    %v5191 = vunpack.c.l.b16 %v3520
    %v5192 = vunpack.c.h.b16 %v3520
    %v5193 = vunpack.c.l.b16 %v3521
    %v5194 = vunpack.c.h.b16 %v3521
    %v5195 = vunpack.c.l.b16 %v3522
    %v5196 = vunpack.c.h.b16 %v3522
    %v5197 = vunpack.c.l.b16 %v3523
    %v5198 = vunpack.c.h.b16 %v3523
    %v5199 = vunpack.c.l.b16 %v3524
    %v5200 = vunpack.c.h.b16 %v3524
    %v5201 = vunpack.c.l.b16 %v3525
    %v5202 = vunpack.c.h.b16 %v3525
    %v5203 = vunpack.c.l.b16 %v3526
    %v5204 = vunpack.c.h.b16 %v3526
    %v5205 = vunpack.c.l.b16 %v3527
    %v5206 = vunpack.c.h.b16 %v3527
    %v5207 = vunpack.c.l.b16 %v3528
    %v5208 = vunpack.c.h.b16 %v3528
    %v5209 = vunpack.c.l.b16 %v3529
    %v5210 = vunpack.c.h.b16 %v3529
    %v5211 = vunpack.c.l.b16 %v3530
    %v5212 = vunpack.c.h.b16 %v3530
    %v5213 = vunpack.c.l.b16 %v3531
    %v5214 = vunpack.c.h.b16 %v3531
    %v5215 = vunpack.c.l.b16 %v3532
    %v5216 = vunpack.c.h.b16 %v3532
    %v5217 = vunpack.c.l.b16 %v3533
    %v5218 = vunpack.c.h.b16 %v3533
    %v5219 = vunpack.c.l.b16 %v3534
    %v5220 = vunpack.c.h.b16 %v3534
    %v5221 = vunpack.c.l.b16 %v3535
    %v5222 = vunpack.c.h.b16 %v3535
    %v5223 = vunpack.c.l.b16 %v3536
    %v5224 = vunpack.c.h.b16 %v3536
    %v5225 = vunpack.c.l.b16 %v3537
    %v5226 = vunpack.c.h.b16 %v3537
    %v5227 = vunpack.c.l.b16 %v3538
    %v5228 = vunpack.c.h.b16 %v3538
    %v5229 = vunpack.c.l.b16 %v3539
    %v5230 = vunpack.c.h.b16 %v3539
    %v5231 = vunpack.c.l.b16 %v3540
    %v5232 = vunpack.c.h.b16 %v3540
    %v5233 = vunpack.c.l.b16 %v3541
    %v5234 = vunpack.c.h.b16 %v3541
    %v5235 = vunpack.c.l.b16 %v3542
    %v5236 = vunpack.c.h.b16 %v3542
    %v5237 = vunpack.c.l.b16 %v3543
    %v5238 = vunpack.c.h.b16 %v3543
    %v5239 = vunpack.c.l.b16 %v3544
    %v5240 = vunpack.c.h.b16 %v3544
    %v5241 = vunpack.c.l.b16 %v3545
    %v5242 = vunpack.c.h.b16 %v3545
    %v5243 = vunpack.c.l.b16 %v3546
    %v5244 = vunpack.c.h.b16 %v3546
    %v5245 = vunpack.c.l.b16 %v3547
    %v5246 = vunpack.c.h.b16 %v3547
    %v5247 = vunpack.c.l.b16 %v3548
    %v5248 = vunpack.c.h.b16 %v3548
    %v5249 = vunpack.c.l.b16 %v3549
    %v5250 = vunpack.c.h.b16 %v3549
    %v5251 = vunpack.c.l.b16 %v3550
    %v5252 = vunpack.c.h.b16 %v3550
    %v5253 = vunpack.c.l.b16 %v3551
    %v5254 = vunpack.c.h.b16 %v3551
    %v5255 = vunpack.c.l.b16 %v3552
    %v5256 = vunpack.c.h.b16 %v3552
    %v5257 = vunpack.c.l.b16 %v3553
    %v5258 = vunpack.c.h.b16 %v3553
    %v5259 = vunpack.c.l.b16 %v3554
    %v5260 = vunpack.c.h.b16 %v3554
    %v5261 = vunpack.c.l.b16 %v3555
    %v5262 = vunpack.c.h.b16 %v3555
    %v5263 = vunpack.c.l.b16 %v3556
    %v5264 = vunpack.c.h.b16 %v3556
    %v5265 = vunpack.c.l.b16 %v3557
    %v5266 = vunpack.c.h.b16 %v3557
    %v5267 = vunpack.c.l.b16 %v3558
    %v5268 = vunpack.c.h.b16 %v3558
    %v5269 = vunpack.c.l.b16 %v3559
    %v5270 = vunpack.c.h.b16 %v3559
    %v5271 = vunpack.c.l.b16 %v3560
    %v5272 = vunpack.c.h.b16 %v3560
    %v5273 = vunpack.c.l.b16 %v3561
    %v5274 = vunpack.c.h.b16 %v3561
    %v5275 = vunpack.c.l.b16 %v3562
    %v5276 = vunpack.c.h.b16 %v3562
    %v5277 = vunpack.c.l.b16 %v3563
    %v5278 = vunpack.c.h.b16 %v3563
    %v5279 = vunpack.c.l.b16 %v3564
    %v5280 = vunpack.c.h.b16 %v3564
    %v5281 = vunpack.c.l.b16 %v3565
    %v5282 = vunpack.c.h.b16 %v3565
    %v5283 = vunpack.c.l.b16 %v3566
    %v5284 = vunpack.c.h.b16 %v3566
    %v5285 = vunpack.c.l.b16 %v3567
    %v5286 = vunpack.c.h.b16 %v3567
    %v5287 = vunpack.c.l.b16 %v3568
    %v5288 = vunpack.c.h.b16 %v3568
    %v5289 = vunpack.c.l.b16 %v3569
    %v5290 = vunpack.c.h.b16 %v3569
    %v5291 = vunpack.c.l.b16 %v3570
    %v5292 = vunpack.c.h.b16 %v3570
    %v5293 = vunpack.c.l.b16 %v3571
    %v5294 = vunpack.c.h.b16 %v3571
    %v5295 = vunpack.c.l.b16 %v3572
    %v5296 = vunpack.c.h.b16 %v3572
    %v5297 = vunpack.c.l.b16 %v3573
    %v5298 = vunpack.c.h.b16 %v3573
    %v5299 = vunpack.c.l.b16 %v3574
    %v5300 = vunpack.c.h.b16 %v3574
    %v5301 = vunpack.c.l.b16 %v3575
    %v5302 = vunpack.c.h.b16 %v3575
    %v5303 = vunpack.c.l.b16 %v3576
    %v5304 = vunpack.c.h.b16 %v3576
    %v5305 = vunpack.c.l.b16 %v3577
    %v5306 = vunpack.c.h.b16 %v3577
    %v5307 = vunpack.c.l.b16 %v3578
    %v5308 = vunpack.c.h.b16 %v3578
    %v5309 = vunpack.c.l.b16 %v3579
    %v5310 = vunpack.c.h.b16 %v3579
    %v5311 = vunpack.c.l.b16 %v3580
    %v5312 = vunpack.c.h.b16 %v3580
    %v5313 = vunpack.c.l.b16 %v3581
    %v5314 = vunpack.c.h.b16 %v3581
    %v5315 = vunpack.c.l.b16 %v3582
    %v5316 = vunpack.c.h.b16 %v3582
    %v5317 = vunpack.c.l.b16 %v3583
    %v5318 = vunpack.c.h.b16 %v3583
    %v5319 = vunpack.c.l.b16 %v3584
    %v5320 = vunpack.c.h.b16 %v3584
    %v5321 = vunpack.c.l.b16 %v3585
    %v5322 = vunpack.c.h.b16 %v3585
    %v5323 = vunpack.c.l.b16 %v3586
    %v5324 = vunpack.c.h.b16 %v3586
    %v5325 = vunpack.c.l.b16 %v3587
    %v5326 = vunpack.c.h.b16 %v3587
    %v5327 = vunpack.c.l.b16 %v3588
    %v5328 = vunpack.c.h.b16 %v3588
    %v5329 = vunpack.c.l.b16 %v3589
    %v5330 = vunpack.c.h.b16 %v3589
    %v5331 = vunpack.c.l.b16 %v3590
    %v5332 = vunpack.c.h.b16 %v3590
    %v5333 = vunpack.c.l.b16 %v3591
    %v5334 = vunpack.c.h.b16 %v3591
    %v5335 = vunpack.c.l.b16 %v3592
    %v5336 = vunpack.c.h.b16 %v3592
    %v5337 = vunpack.c.l.b16 %v3593
    %v5338 = vunpack.c.h.b16 %v3593
    %v5339 = vunpack.c.l.b16 %v3594
    %v5340 = vunpack.c.h.b16 %v3594
    %v5341 = vunpack.c.l.b16 %v3595
    %v5342 = vunpack.c.h.b16 %v3595
    %v5343 = vunpack.c.l.b16 %v3596
    %v5344 = vunpack.c.h.b16 %v3596
    %v5345 = vunpack.c.l.b16 %v3597
    %v5346 = vunpack.c.h.b16 %v3597
    %v5347 = vunpack.c.l.b16 %v3598
    %v5348 = vunpack.c.h.b16 %v3598
    %v5349 = vunpack.c.l.b16 %v3599
    %v5350 = vunpack.c.h.b16 %v3599
    %v5351 = vunpack.c.l.b16 %v3600
    %v5352 = vunpack.c.h.b16 %v3600
    %v5353 = vunpack.c.l.b16 %v3601
    %v5354 = vunpack.c.h.b16 %v3601
    %v5355 = vunpack.c.l.b16 %v3602
    %v5356 = vunpack.c.h.b16 %v3602
    %v5357 = vunpack.c.l.b16 %v3603
    %v5358 = vunpack.c.h.b16 %v3603
    %v5359 = vunpack.c.l.b16 %v3604
    %v5360 = vunpack.c.h.b16 %v3604
    %v5361 = vunpack.c.l.b16 %v3605
    %v5362 = vunpack.c.h.b16 %v3605
    %v5363 = vunpack.c.l.b16 %v3606
    %v5364 = vunpack.c.h.b16 %v3606
    %v5365 = vunpack.c.l.b16 %v3607
    %v5366 = vunpack.c.h.b16 %v3607
    %v5367 = vunpack.c.l.b16 %v3608
    %v5368 = vunpack.c.h.b16 %v3608
    %v5369 = vunpack.c.l.b16 %v3609
    %v5370 = vunpack.c.h.b16 %v3609
    %v5371 = vunpack.c.l.b16 %v3610
    %v5372 = vunpack.c.h.b16 %v3610
    %v5373 = vunpack.c.l.b16 %v3611
    %v5374 = vunpack.c.h.b16 %v3611
    %v5375 = vunpack.c.l.b16 %v3612
    %v5376 = vunpack.c.h.b16 %v3612
    %v5377 = vunpack.c.l.b16 %v3613
    %v5378 = vunpack.c.h.b16 %v3613
    %v5379 = vunpack.c.l.b16 %v3614
    %v5380 = vunpack.c.h.b16 %v3614
    %v5381 = vunpack.c.l.b16 %v3615
    %v5382 = vunpack.c.h.b16 %v3615
    %v5383 = vunpack.c.l.b16 %v3616
    %v5384 = vunpack.c.h.b16 %v3616
    %v5385 = vunpack.c.l.b16 %v3617
    %v5386 = vunpack.c.h.b16 %v3617
    %v5387 = vunpack.c.l.b16 %v3618
    %v5388 = vunpack.c.h.b16 %v3618
    %v5389 = vunpack.c.l.b16 %v3619
    %v5390 = vunpack.c.h.b16 %v3619
    %v5391 = vunpack.c.l.b16 %v3620
    %v5392 = vunpack.c.h.b16 %v3620
    %v5393 = vunpack.c.l.b16 %v3621
    %v5394 = vunpack.c.h.b16 %v3621
    %v5395 = vunpack.c.l.b16 %v3622
    %v5396 = vunpack.c.h.b16 %v3622
    %v5397 = vunpack.c.l.b16 %v3623
    %v5398 = vunpack.c.h.b16 %v3623
    %v5399 = vunpack.c.l.b16 %v3624
    %v5400 = vunpack.c.h.b16 %v3624
    %v5401 = vunpack.c.l.b16 %v3625
    %v5402 = vunpack.c.h.b16 %v3625
    %v5403 = vunpack.c.l.b16 %v3626
    %v5404 = vunpack.c.h.b16 %v3626
    %v5405 = vunpack.c.l.b16 %v3627
    %v5406 = vunpack.c.h.b16 %v3627
    %v5407 = vunpack.c.l.b16 %v3628
    %v5408 = vunpack.c.h.b16 %v3628
    %v5409 = vunpack.c.l.b16 %v3629
    %v5410 = vunpack.c.h.b16 %v3629
    %v5411 = vunpack.c.l.b16 %v3630
    %v5412 = vunpack.c.h.b16 %v3630
    %v5413 = vunpack.c.l.b16 %v3631
    %v5414 = vunpack.c.h.b16 %v3631
    %v5415 = vunpack.c.l.b16 %v3632
    %v5416 = vunpack.c.h.b16 %v3632
    %v5417 = vunpack.c.l.b16 %v3633
    %v5418 = vunpack.c.h.b16 %v3633
    %v5419 = vunpack.c.l.b16 %v3634
    %v5420 = vunpack.c.h.b16 %v3634
    %v5421 = vunpack.c.l.b16 %v3635
    %v5422 = vunpack.c.h.b16 %v3635
    %v5423 = vunpack.c.l.b16 %v3636
    %v5424 = vunpack.c.h.b16 %v3636
    %v5425 = vunpack.c.l.b16 %v3637
    %v5426 = vunpack.c.h.b16 %v3637
    %v5427 = vunpack.c.l.b16 %v3638
    %v5428 = vunpack.c.h.b16 %v3638
    %v5429 = vunpack.c.l.b16 %v3639
    %v5430 = vunpack.c.h.b16 %v3639
    %v5431 = vunpack.c.l.b16 %v3640
    %v5432 = vunpack.c.h.b16 %v3640
    %v5433 = vunpack.c.l.b16 %v3641
    %v5434 = vunpack.c.h.b16 %v3641
    %v5435 = vunpack.c.l.b16 %v3642
    %v5436 = vunpack.c.h.b16 %v3642
    %v5437 = vunpack.c.l.b16 %v3643
    %v5438 = vunpack.c.h.b16 %v3643
    %v5439 = vunpack.c.l.b16 %v3644
    %v5440 = vunpack.c.h.b16 %v3644
    %v5441 = vunpack.c.l.b16 %v3645
    %v5442 = vunpack.c.h.b16 %v3645
    %v5443 = vunpack.c.l.b16 %v3646
    %v5444 = vunpack.c.h.b16 %v3646
    %v5445 = vunpack.c.l.b16 %v3647
    %v5446 = vunpack.c.h.b16 %v3647
    %v5447 = vunpack.c.l.b16 %v3648
    %v5448 = vunpack.c.h.b16 %v3648
    %v5449 = vunpack.c.l.b16 %v3649
    %v5450 = vunpack.c.h.b16 %v3649
    %v5451 = vunpack.c.l.b16 %v3650
    %v5452 = vunpack.c.h.b16 %v3650
    %v5453 = vunpack.c.l.b16 %v3651
    %v5454 = vunpack.c.h.b16 %v3651
    %v5455 = vunpack.c.l.b16 %v3652
    %v5456 = vunpack.c.h.b16 %v3652
    %v5457 = vunpack.c.l.b16 %v3653
    %v5458 = vunpack.c.h.b16 %v3653
    %v5459 = vunpack.c.l.b16 %v3654
    %v5460 = vunpack.c.h.b16 %v3654
    %v5461 = vunpack.c.l.b16 %v3655
    %v5462 = vunpack.c.h.b16 %v3655
    %v5463 = vunpack.c.l.b16 %v3656
    %v5464 = vunpack.c.h.b16 %v3656
    %v5465 = vunpack.c.l.b16 %v3657
    %v5466 = vunpack.c.h.b16 %v3657
    %v5467 = vunpack.c.l.b16 %v3658
    %v5468 = vunpack.c.h.b16 %v3658
    %v5469 = vunpack.c.l.b16 %v3659
    %v5470 = vunpack.c.h.b16 %v3659
    %v5471 = vunpack.c.l.b16 %v3660
    %v5472 = vunpack.c.h.b16 %v3660
    %v5473 = vunpack.c.l.b16 %v3661
    %v5474 = vunpack.c.h.b16 %v3661
    %v5475 = vunpack.c.l.b16 %v3662
    %v5476 = vunpack.c.h.b16 %v3662
    %v5477 = vunpack.c.l.b16 %v3663
    %v5478 = vunpack.c.h.b16 %v3663
    %v5479 = vunpack.c.l.b16 %v3664
    %v5480 = vunpack.c.h.b16 %v3664
    %v5481 = vunpack.c.l.b16 %v3665
    %v5482 = vunpack.c.h.b16 %v3665
    %v5483 = vunpack.c.l.b16 %v3666
    %v5484 = vunpack.c.h.b16 %v3666
    %v5485 = vunpack.c.l.b16 %v3667
    %v5486 = vunpack.c.h.b16 %v3667
    %v5487 = vunpack.c.l.b16 %v3668
    %v5488 = vunpack.c.h.b16 %v3668
    %v5489 = vunpack.c.l.b16 %v3669
    %v5490 = vunpack.c.h.b16 %v3669
    %v5491 = vunpack.c.l.b16 %v3670
    %v5492 = vunpack.c.h.b16 %v3670
    %v5493 = vunpack.c.l.b16 %v3671
    %v5494 = vunpack.c.h.b16 %v3671
    %v5495 = vunpack.c.l.b16 %v3672
    %v5496 = vunpack.c.h.b16 %v3672
    %v5497 = vunpack.c.l.b16 %v3673
    %v5498 = vunpack.c.h.b16 %v3673
    %v5499 = vunpack.c.l.b16 %v3674
    %v5500 = vunpack.c.h.b16 %v3674
    %v5501 = vunpack.c.l.b16 %v3675
    %v5502 = vunpack.c.h.b16 %v3675
    %v5503 = vunpack.c.l.b16 %v3676
    %v5504 = vunpack.c.h.b16 %v3676
    %v5505 = vunpack.c.l.b16 %v3677
    %v5506 = vunpack.c.h.b16 %v3677
    %v5507 = vunpack.c.l.b16 %v3678
    %v5508 = vunpack.c.h.b16 %v3678
    %v5509 = vunpack.c.l.b16 %v3679
    %v5510 = vunpack.c.h.b16 %v3679
    %v5511 = vunpack.c.l.b16 %v3680
    %v5512 = vunpack.c.h.b16 %v3680
    %v5513 = vunpack.c.l.b16 %v3681
    %v5514 = vunpack.c.h.b16 %v3681
    %v5515 = vunpack.c.l.b16 %v3682
    %v5516 = vunpack.c.h.b16 %v3682
    %v5517 = vunpack.c.l.b16 %v3683
    %v5518 = vunpack.c.h.b16 %v3683
    %v5519 = vunpack.c.l.b16 %v3684
    %v5520 = vunpack.c.h.b16 %v3684
    %v5521 = vunpack.c.l.b16 %v3685
    %v5522 = vunpack.c.h.b16 %v3685
    %v5523 = vunpack.c.l.b16 %v3686
    %v5524 = vunpack.c.h.b16 %v3686
    %v5525 = vunpack.c.l.b16 %v3687
    %v5526 = vunpack.c.h.b16 %v3687
    %v5527 = vunpack.c.l.b16 %v3688
    %v5528 = vunpack.c.h.b16 %v3688
    %v5529 = vunpack.c.l.b16 %v3689
    %v5530 = vunpack.c.h.b16 %v3689
    %v5531 = vunpack.c.l.b16 %v3690
    %v5532 = vunpack.c.h.b16 %v3690
    %v5533 = vunpack.c.l.b16 %v3691
    %v5534 = vunpack.c.h.b16 %v3691
    %v5535 = vunpack.c.l.b16 %v3692
    %v5536 = vunpack.c.h.b16 %v3692
    %v5537 = vunpack.c.l.b16 %v3693
    %v5538 = vunpack.c.h.b16 %v3693
    %v5539 = vunpack.c.l.b16 %v3694
    %v5540 = vunpack.c.h.b16 %v3694
    %v5541 = vunpack.c.l.b16 %v3695
    %v5542 = vunpack.c.h.b16 %v3695
    %v5543 = vunpack.c.l.b16 %v3696
    %v5544 = vunpack.c.h.b16 %v3696
    %v5545 = vunpack.c.l.b16 %v3697
    %v5546 = vunpack.c.h.b16 %v3697
    %v5547 = vunpack.c.l.b16 %v3698
    %v5548 = vunpack.c.h.b16 %v3698
    %v5549 = vunpack.c.l.b16 %v3699
    %v5550 = vunpack.c.h.b16 %v3699
    %v5551 = vunpack.c.l.b16 %v3700
    %v5552 = vunpack.c.h.b16 %v3700
    %v5553 = vunpack.c.l.b16 %v3701
    %v5554 = vunpack.c.h.b16 %v3701
    %v5555 = vunpack.c.l.b16 %v3702
    %v5556 = vunpack.c.h.b16 %v3702
    %v5557 = vunpack.c.l.b16 %v3703
    %v5558 = vunpack.c.h.b16 %v3703
    %v5559 = vunpack.c.l.b16 %v3704
    %v5560 = vunpack.c.h.b16 %v3704
    %v5561 = vunpack.c.l.b16 %v3705
    %v5562 = vunpack.c.h.b16 %v3705
    %v5563 = vunpack.c.l.b16 %v3706
    %v5564 = vunpack.c.h.b16 %v3706
    %v5565 = vunpack.c.l.b16 %v3707
    %v5566 = vunpack.c.h.b16 %v3707
    %v5567 = vunpack.c.l.b16 %v3708
    %v5568 = vunpack.c.h.b16 %v3708
    %v5569 = vunpack.c.l.b16 %v3709
    %v5570 = vunpack.c.h.b16 %v3709
    %v5571 = vunpack.c.l.b16 %v3710
    %v5572 = vunpack.c.h.b16 %v3710
    %v5573 = vunpack.c.l.b16 %v3711
    %v5574 = vunpack.c.h.b16 %v3711
    %v5575 = vunpack.c.l.b16 %v3712
    %v5576 = vunpack.c.h.b16 %v3712
    %v5577 = vunpack.c.l.b16 %v3713
    %v5578 = vunpack.c.h.b16 %v3713
    %v5579 = vunpack.c.l.b16 %v3714
    %v5580 = vunpack.c.h.b16 %v3714
    %v5581 = vunpack.c.l.b16 %v3715
    %v5582 = vunpack.c.h.b16 %v3715
    %v5583 = vunpack.c.l.b16 %v3716
    %v5584 = vunpack.c.h.b16 %v3716
    %v5585 = vunpack.c.l.b16 %v3717
    %v5586 = vunpack.c.h.b16 %v3717
    %v5587 = vunpack.c.l.b16 %v3718
    %v5588 = vunpack.c.h.b16 %v3718
    %v5589 = vunpack.c.l.b16 %v3719
    %v5590 = vunpack.c.h.b16 %v3719
    %v5591 = vunpack.c.l.b16 %v3720
    %v5592 = vunpack.c.h.b16 %v3720
    %v5593 = vunpack.c.l.b16 %v3721
    %v5594 = vunpack.c.h.b16 %v3721
    %v5595 = vunpack.c.l.b16 %v3722
    %v5596 = vunpack.c.h.b16 %v3722
    %v5597 = vunpack.c.l.b16 %v3723
    %v5598 = vunpack.c.h.b16 %v3723
    %v5599 = vunpack.c.l.b16 %v3724
    %v5600 = vunpack.c.h.b16 %v3724
    %v5601 = vunpack.c.l.b16 %v3725
    %v5602 = vunpack.c.h.b16 %v3725
    %v5603 = vunpack.c.l.b16 %v3726
    %v5604 = vunpack.c.h.b16 %v3726
    %v5605 = vunpack.c.l.b16 %v3727
    %v5606 = vunpack.c.h.b16 %v3727
    %v5607 = vunpack.c.l.b16 %v3728
    %v5608 = vunpack.c.h.b16 %v3728
    %v5609 = vunpack.c.l.b16 %v3729
    %v5610 = vunpack.c.h.b16 %v3729
    %v5611 = vunpack.c.l.b16 %v3730
    %v5612 = vunpack.c.h.b16 %v3730
    %v5613 = vunpack.c.l.b16 %v3731
    %v5614 = vunpack.c.h.b16 %v3731
    %v5615 = vunpack.c.l.b16 %v3732
    %v5616 = vunpack.c.h.b16 %v3732
    %v5617 = vunpack.c.l.b16 %v3733
    %v5618 = vunpack.c.h.b16 %v3733
    %v5619 = vunpack.c.l.b16 %v3734
    %v5620 = vunpack.c.h.b16 %v3734
    %v5621 = vunpack.c.l.b16 %v3735
    %v5622 = vunpack.c.h.b16 %v3735
    %v5623 = vunpack.c.l.b16 %v3736
    %v5624 = vunpack.c.h.b16 %v3736
    %v5625 = vunpack.c.l.b16 %v3737
    %v5626 = vunpack.c.h.b16 %v3737
    %v5627 = vunpack.c.l.b16 %v3738
    %v5628 = vunpack.c.h.b16 %v3738
    %v5629 = vunpack.c.l.b16 %v3739
    %v5630 = vunpack.c.h.b16 %v3739
    %v5631 = vunpack.c.l.b16 %v3740
    %v5632 = vunpack.c.h.b16 %v3740
    %v5633 = vunpack.c.l.b16 %v3741
    %v5634 = vunpack.c.h.b16 %v3741
    %v5635 = vunpack.c.l.b16 %v3742
    %v5636 = vunpack.c.h.b16 %v3742
    %v5637 = vunpack.c.l.b16 %v3743
    %v5638 = vunpack.c.h.b16 %v3743
    %v5639 = vunpack.c.l.b16 %v3744
    %v5640 = vunpack.c.h.b16 %v3744
    %v5641 = vunpack.c.l.b16 %v3745
    %v5642 = vunpack.c.h.b16 %v3745
    %v5643 = vunpack.c.l.b16 %v3746
    %v5644 = vunpack.c.h.b16 %v3746
    %v5645 = vunpack.c.l.b16 %v3747
    %v5646 = vunpack.c.h.b16 %v3747
    %v5647 = vunpack.c.l.b16 %v3748
    %v5648 = vunpack.c.h.b16 %v3748
    %v5649 = vunpack.c.l.b16 %v3749
    %v5650 = vunpack.c.h.b16 %v3749
    %v5651 = vunpack.c.l.b16 %v3750
    %v5652 = vunpack.c.h.b16 %v3750
    %v5653 = vunpack.c.l.b16 %v3751
    %v5654 = vunpack.c.h.b16 %v3751
    %v5655 = vunpack.c.l.b16 %v3752
    %v5656 = vunpack.c.h.b16 %v3752
    %v5657 = vunpack.c.l.b16 %v3753
    %v5658 = vunpack.c.h.b16 %v3753
    %v5659 = vunpack.c.l.b16 %v3754
    %v5660 = vunpack.c.h.b16 %v3754
    %v5661 = vunpack.c.l.b16 %v3755
    %v5662 = vunpack.c.h.b16 %v3755
    %v5663 = vunpack.c.l.b16 %v3756
    %v5664 = vunpack.c.h.b16 %v3756
    %v5665 = vunpack.c.l.b16 %v3757
    %v5666 = vunpack.c.h.b16 %v3757
    %v5667 = vunpack.c.l.b16 %v3758
    %v5668 = vunpack.c.h.b16 %v3758
    %v5669 = vunpack.c.l.b16 %v3759
    %v5670 = vunpack.c.h.b16 %v3759
    %v5671 = vunpack.c.l.b16 %v3760
    %v5672 = vunpack.c.h.b16 %v3760
    %v5673 = vunpack.c.l.b16 %v3761
    %v5674 = vunpack.c.h.b16 %v3761
    %v5675 = vunpack.c.l.b16 %v3762
    %v5676 = vunpack.c.h.b16 %v3762
    %v5677 = vunpack.c.l.b16 %v3763
    %v5678 = vunpack.c.h.b16 %v3763
    %v5679 = vunpack.c.l.b16 %v3764
    %v5680 = vunpack.c.h.b16 %v3764
    %v5681 = vunpack.c.l.b16 %v3765
    %v5682 = vunpack.c.h.b16 %v3765
    %v5683 = vunpack.c.l.b16 %v3766
    %v5684 = vunpack.c.h.b16 %v3766
    %v5685 = vunpack.c.l.b16 %v3767
    %v5686 = vunpack.c.h.b16 %v3767
    %v5687 = vunpack.c.l.b16 %v3768
    %v5688 = vunpack.c.h.b16 %v3768
    %v5689 = vunpack.c.l.b16 %v3769
    %v5690 = vunpack.c.h.b16 %v3769
    %v5691 = vunpack.c.l.b16 %v3770
    %v5692 = vunpack.c.h.b16 %v3770
    %v5693 = vunpack.c.l.b16 %v3771
    %v5694 = vunpack.c.h.b16 %v3771
    %v5695 = vunpack.c.l.b16 %v3772
    %v5696 = vunpack.c.h.b16 %v3772
    %v5697 = vunpack.c.l.b16 %v3773
    %v5698 = vunpack.c.h.b16 %v3773
    %v5699 = vunpack.c.l.b16 %v3774
    %v5700 = vunpack.c.h.b16 %v3774
    %v5701 = vunpack.c.l.b16 %v3775
    %v5702 = vunpack.c.h.b16 %v3775
    %v5703 = vunpack.c.l.b16 %v3776
    %v5704 = vunpack.c.h.b16 %v3776
    %v5705 = vunpack.c.l.b16 %v3777
    %v5706 = vunpack.c.h.b16 %v3777
    %v5707 = vunpack.c.l.b16 %v3778
    %v5708 = vunpack.c.h.b16 %v3778
    %v5709 = vpack.c.b16 %v4433, %v4429
    %v5710 = vpack.c.b16 %v4434, %v4430
    %v5711 = vpack.c.b16 %v4435, %v4431
    %v5712 = vpack.c.b16 %v4436, %v4432
    %v5713 = vpack.c.b16 %v4441, %v4437
    %v5714 = vpack.c.b16 %v4442, %v4438
    %v5715 = vpack.c.b16 %v4443, %v4439
    %v5716 = vpack.c.b16 %v4444, %v4440
    %v5717 = vpack.c.b16 %v4449, %v4445
    %v5718 = vpack.c.b16 %v4450, %v4446
    %v5719 = vpack.c.b16 %v4451, %v4447
    %v5720 = vpack.c.b16 %v4452, %v4448
    %v5721 = vpack.c.b16 %v4457, %v4453
    %v5722 = vpack.c.b16 %v4458, %v4454
    %v5723 = vpack.c.b16 %v4459, %v4455
    %v5724 = vpack.c.b16 %v4460, %v4456
    %v5725 = vpack.c.b16 %v4465, %v4461
    %v5726 = vpack.c.b16 %v4466, %v4462
    %v5727 = vpack.c.b16 %v4467, %v4463
    %v5728 = vpack.c.b16 %v4468, %v4464
    %v5729 = vpack.c.b16 %v4473, %v4469
    %v5730 = vpack.c.b16 %v4474, %v4470
    %v5731 = vpack.c.b16 %v4475, %v4471
    %v5732 = vpack.c.b16 %v4476, %v4472
    %v5733 = vpack.c.b16 %v4481, %v4477
    %v5734 = vpack.c.b16 %v4482, %v4478
    %v5735 = vpack.c.b16 %v4483, %v4479
    %v5736 = vpack.c.b16 %v4484, %v4480
    %v5737 = vpack.c.b16 %v4489, %v4485
    %v5738 = vpack.c.b16 %v4490, %v4486
    %v5739 = vpack.c.b16 %v4491, %v4487
    %v5740 = vpack.c.b16 %v4492, %v4488
    %v5741 = vpack.c.b16 %v4497, %v4493
    %v5742 = vpack.c.b16 %v4498, %v4494
    %v5743 = vpack.c.b16 %v4499, %v4495
    %v5744 = vpack.c.b16 %v4500, %v4496
    %v5745 = vpack.c.b16 %v4505, %v4501
    %v5746 = vpack.c.b16 %v4506, %v4502
    %v5747 = vpack.c.b16 %v4507, %v4503
    %v5748 = vpack.c.b16 %v4508, %v4504
    %v5749 = vpack.c.b16 %v4513, %v4509
    %v5750 = vpack.c.b16 %v4514, %v4510
    %v5751 = vpack.c.b16 %v4515, %v4511
    %v5752 = vpack.c.b16 %v4516, %v4512
    %v5753 = vpack.c.b16 %v4521, %v4517
    %v5754 = vpack.c.b16 %v4522, %v4518
    %v5755 = vpack.c.b16 %v4523, %v4519
    %v5756 = vpack.c.b16 %v4524, %v4520
    %v5757 = vpack.c.b16 %v4529, %v4525
    %v5758 = vpack.c.b16 %v4530, %v4526
    %v5759 = vpack.c.b16 %v4531, %v4527
    %v5760 = vpack.c.b16 %v4532, %v4528
    %v5761 = vpack.c.b16 %v4537, %v4533
    %v5762 = vpack.c.b16 %v4538, %v4534
    %v5763 = vpack.c.b16 %v4539, %v4535
    %v5764 = vpack.c.b16 %v4540, %v4536
    %v5765 = vpack.c.b16 %v4545, %v4541
    %v5766 = vpack.c.b16 %v4546, %v4542
    %v5767 = vpack.c.b16 %v4547, %v4543
    %v5768 = vpack.c.b16 %v4548, %v4544
    %v5769 = vpack.c.b16 %v4553, %v4549
    %v5770 = vpack.c.b16 %v4554, %v4550
    %v5771 = vpack.c.b16 %v4555, %v4551
    %v5772 = vpack.c.b16 %v4556, %v4552
    %v5773 = vpack.c.b16 %v4561, %v4557
    %v5774 = vpack.c.b16 %v4562, %v4558
    %v5775 = vpack.c.b16 %v4563, %v4559
    %v5776 = vpack.c.b16 %v4564, %v4560
    %v5777 = vpack.c.b16 %v4569, %v4565
    %v5778 = vpack.c.b16 %v4570, %v4566
    %v5779 = vpack.c.b16 %v4571, %v4567
    %v5780 = vpack.c.b16 %v4572, %v4568
    %v5781 = vpack.c.b16 %v4577, %v4573
    %v5782 = vpack.c.b16 %v4578, %v4574
    %v5783 = vpack.c.b16 %v4579, %v4575
    %v5784 = vpack.c.b16 %v4580, %v4576
    %v5785 = vpack.c.b16 %v4585, %v4581
    %v5786 = vpack.c.b16 %v4586, %v4582
    %v5787 = vpack.c.b16 %v4587, %v4583
    %v5788 = vpack.c.b16 %v4588, %v4584
    %v5789 = vpack.c.b16 %v4593, %v4589
    %v5790 = vpack.c.b16 %v4594, %v4590
    %v5791 = vpack.c.b16 %v4595, %v4591
    %v5792 = vpack.c.b16 %v4596, %v4592
    %v5793 = vpack.c.b16 %v4601, %v4597
    %v5794 = vpack.c.b16 %v4602, %v4598
    %v5795 = vpack.c.b16 %v4603, %v4599
    %v5796 = vpack.c.b16 %v4604, %v4600
    %v5797 = vpack.c.b16 %v4609, %v4605
    %v5798 = vpack.c.b16 %v4610, %v4606
    %v5799 = vpack.c.b16 %v4611, %v4607
    %v5800 = vpack.c.b16 %v4612, %v4608
    %v5801 = vpack.c.b16 %v4617, %v4613
    %v5802 = vpack.c.b16 %v4618, %v4614
    %v5803 = vpack.c.b16 %v4619, %v4615
    %v5804 = vpack.c.b16 %v4620, %v4616
    %v5805 = vpack.c.b16 %v4625, %v4621
    %v5806 = vpack.c.b16 %v4626, %v4622
    %v5807 = vpack.c.b16 %v4627, %v4623
    %v5808 = vpack.c.b16 %v4628, %v4624
    %v5809 = vpack.c.b16 %v4633, %v4629
    %v5810 = vpack.c.b16 %v4634, %v4630
    %v5811 = vpack.c.b16 %v4635, %v4631
    %v5812 = vpack.c.b16 %v4636, %v4632
    %v5813 = vpack.c.b16 %v4641, %v4637
    %v5814 = vpack.c.b16 %v4642, %v4638
    %v5815 = vpack.c.b16 %v4643, %v4639
    %v5816 = vpack.c.b16 %v4644, %v4640
    %v5817 = vpack.c.b16 %v4649, %v4645
    %v5818 = vpack.c.b16 %v4650, %v4646
    %v5819 = vpack.c.b16 %v4651, %v4647
    %v5820 = vpack.c.b16 %v4652, %v4648
    %v5821 = vpack.c.b16 %v4657, %v4653
    %v5822 = vpack.c.b16 %v4658, %v4654
    %v5823 = vpack.c.b16 %v4659, %v4655
    %v5824 = vpack.c.b16 %v4660, %v4656
    %v5825 = vpack.c.b16 %v4665, %v4661
    %v5826 = vpack.c.b16 %v4666, %v4662
    %v5827 = vpack.c.b16 %v4667, %v4663
    %v5828 = vpack.c.b16 %v4668, %v4664
    %v5829 = vpack.c.b16 %v4673, %v4669
    %v5830 = vpack.c.b16 %v4674, %v4670
    %v5831 = vpack.c.b16 %v4675, %v4671
    %v5832 = vpack.c.b16 %v4676, %v4672
    %v5833 = vpack.c.b16 %v4681, %v4677
    %v5834 = vpack.c.b16 %v4682, %v4678
    %v5835 = vpack.c.b16 %v4683, %v4679
    %v5836 = vpack.c.b16 %v4684, %v4680
    %v5837 = vpack.c.b16 %v4689, %v4685
    %v5838 = vpack.c.b16 %v4690, %v4686
    %v5839 = vpack.c.b16 %v4691, %v4687
    %v5840 = vpack.c.b16 %v4692, %v4688
    %v5841 = vpack.c.b16 %v4697, %v4693
    %v5842 = vpack.c.b16 %v4698, %v4694
    %v5843 = vpack.c.b16 %v4699, %v4695
    %v5844 = vpack.c.b16 %v4700, %v4696
    %v5845 = vpack.c.b16 %v4705, %v4701
    %v5846 = vpack.c.b16 %v4706, %v4702
    %v5847 = vpack.c.b16 %v4707, %v4703
    %v5848 = vpack.c.b16 %v4708, %v4704
    %v5849 = vpack.c.b16 %v4713, %v4709
    %v5850 = vpack.c.b16 %v4714, %v4710
    %v5851 = vpack.c.b16 %v4715, %v4711
    %v5852 = vpack.c.b16 %v4716, %v4712
    %v5853 = vpack.c.b16 %v4721, %v4717
    %v5854 = vpack.c.b16 %v4722, %v4718
    %v5855 = vpack.c.b16 %v4723, %v4719
    %v5856 = vpack.c.b16 %v4724, %v4720
    %v5857 = vpack.c.b16 %v4729, %v4725
    %v5858 = vpack.c.b16 %v4730, %v4726
    %v5859 = vpack.c.b16 %v4731, %v4727
    %v5860 = vpack.c.b16 %v4732, %v4728
    %v5861 = vpack.c.b16 %v4737, %v4733
    %v5862 = vpack.c.b16 %v4738, %v4734
    %v5863 = vpack.c.b16 %v4739, %v4735
    %v5864 = vpack.c.b16 %v4740, %v4736
    %v5865 = vpack.c.b16 %v4745, %v4741
    %v5866 = vpack.c.b16 %v4746, %v4742
    %v5867 = vpack.c.b16 %v4747, %v4743
    %v5868 = vpack.c.b16 %v4748, %v4744
    %v5869 = vpack.c.b16 %v4753, %v4749
    %v5870 = vpack.c.b16 %v4754, %v4750
    %v5871 = vpack.c.b16 %v4755, %v4751
    %v5872 = vpack.c.b16 %v4756, %v4752
    %v5873 = vpack.c.b16 %v4761, %v4757
    %v5874 = vpack.c.b16 %v4762, %v4758
    %v5875 = vpack.c.b16 %v4763, %v4759
    %v5876 = vpack.c.b16 %v4764, %v4760
    %v5877 = vpack.c.b16 %v4769, %v4765
    %v5878 = vpack.c.b16 %v4770, %v4766
    %v5879 = vpack.c.b16 %v4771, %v4767
    %v5880 = vpack.c.b16 %v4772, %v4768
    %v5881 = vpack.c.b16 %v4777, %v4773
    %v5882 = vpack.c.b16 %v4778, %v4774
    %v5883 = vpack.c.b16 %v4779, %v4775
    %v5884 = vpack.c.b16 %v4780, %v4776
    %v5885 = vpack.c.b16 %v4785, %v4781
    %v5886 = vpack.c.b16 %v4786, %v4782
    %v5887 = vpack.c.b16 %v4787, %v4783
    %v5888 = vpack.c.b16 %v4788, %v4784
    %v5889 = vpack.c.b16 %v4793, %v4789
    %v5890 = vpack.c.b16 %v4794, %v4790
    %v5891 = vpack.c.b16 %v4795, %v4791
    %v5892 = vpack.c.b16 %v4796, %v4792
    %v5893 = vpack.c.b16 %v4801, %v4797
    %v5894 = vpack.c.b16 %v4802, %v4798
    %v5895 = vpack.c.b16 %v4803, %v4799
    %v5896 = vpack.c.b16 %v4804, %v4800
    %v5897 = vpack.c.b16 %v4809, %v4805
    %v5898 = vpack.c.b16 %v4810, %v4806
    %v5899 = vpack.c.b16 %v4811, %v4807
    %v5900 = vpack.c.b16 %v4812, %v4808
    %v5901 = vpack.c.b16 %v4817, %v4813
    %v5902 = vpack.c.b16 %v4818, %v4814
    %v5903 = vpack.c.b16 %v4819, %v4815
    %v5904 = vpack.c.b16 %v4820, %v4816
    %v5905 = vpack.c.b16 %v4825, %v4821
    %v5906 = vpack.c.b16 %v4826, %v4822
    %v5907 = vpack.c.b16 %v4827, %v4823
    %v5908 = vpack.c.b16 %v4828, %v4824
    %v5909 = vpack.c.b16 %v4833, %v4829
    %v5910 = vpack.c.b16 %v4834, %v4830
    %v5911 = vpack.c.b16 %v4835, %v4831
    %v5912 = vpack.c.b16 %v4836, %v4832
    %v5913 = vpack.c.b16 %v4841, %v4837
    %v5914 = vpack.c.b16 %v4842, %v4838
    %v5915 = vpack.c.b16 %v4843, %v4839
    %v5916 = vpack.c.b16 %v4844, %v4840
    %v5917 = vpack.c.b16 %v4849, %v4845
    %v5918 = vpack.c.b16 %v4850, %v4846
    %v5919 = vpack.c.b16 %v4851, %v4847
    %v5920 = vpack.c.b16 %v4852, %v4848
    %v5921 = vpack.c.b16 %v4857, %v4853
    %v5922 = vpack.c.b16 %v4858, %v4854
    %v5923 = vpack.c.b16 %v4859, %v4855
    %v5924 = vpack.c.b16 %v4860, %v4856
    %v5925 = vpack.c.b16 %v4865, %v4861
    %v5926 = vpack.c.b16 %v4866, %v4862
    %v5927 = vpack.c.b16 %v4867, %v4863
    %v5928 = vpack.c.b16 %v4868, %v4864
    %v5929 = vpack.c.b16 %v4873, %v4869
    %v5930 = vpack.c.b16 %v4874, %v4870
    %v5931 = vpack.c.b16 %v4875, %v4871
    %v5932 = vpack.c.b16 %v4876, %v4872
    %v5933 = vpack.c.b16 %v4881, %v4877
    %v5934 = vpack.c.b16 %v4882, %v4878
    %v5935 = vpack.c.b16 %v4883, %v4879
    %v5936 = vpack.c.b16 %v4884, %v4880
    %v5937 = vpack.c.b16 %v4889, %v4885
    %v5938 = vpack.c.b16 %v4890, %v4886
    %v5939 = vpack.c.b16 %v4891, %v4887
    %v5940 = vpack.c.b16 %v4892, %v4888
    %v5941 = vpack.c.b16 %v4897, %v4893
    %v5942 = vpack.c.b16 %v4898, %v4894
    %v5943 = vpack.c.b16 %v4899, %v4895
    %v5944 = vpack.c.b16 %v4900, %v4896
    %v5945 = vpack.c.b16 %v4905, %v4901
    %v5946 = vpack.c.b16 %v4906, %v4902
    %v5947 = vpack.c.b16 %v4907, %v4903
    %v5948 = vpack.c.b16 %v4908, %v4904
    %v5949 = vpack.c.b16 %v4913, %v4909
    %v5950 = vpack.c.b16 %v4914, %v4910
    %v5951 = vpack.c.b16 %v4915, %v4911
    %v5952 = vpack.c.b16 %v4916, %v4912
    %v5953 = vpack.c.b16 %v4921, %v4917
    %v5954 = vpack.c.b16 %v4922, %v4918
    %v5955 = vpack.c.b16 %v4923, %v4919
    %v5956 = vpack.c.b16 %v4924, %v4920
    %v5957 = vpack.c.b16 %v4929, %v4925
    %v5958 = vpack.c.b16 %v4930, %v4926
    %v5959 = vpack.c.b16 %v4931, %v4927
    %v5960 = vpack.c.b16 %v4932, %v4928
    %v5961 = vpack.c.b16 %v4937, %v4933
    %v5962 = vpack.c.b16 %v4938, %v4934
    %v5963 = vpack.c.b16 %v4939, %v4935
    %v5964 = vpack.c.b16 %v4940, %v4936
    %v5965 = vpack.c.b16 %v4945, %v4941
    %v5966 = vpack.c.b16 %v4946, %v4942
    %v5967 = vpack.c.b16 %v4947, %v4943
    %v5968 = vpack.c.b16 %v4948, %v4944
    %v5969 = vpack.c.b16 %v4953, %v4949
    %v5970 = vpack.c.b16 %v4954, %v4950
    %v5971 = vpack.c.b16 %v4955, %v4951
    %v5972 = vpack.c.b16 %v4956, %v4952
    %v5973 = vpack.c.b16 %v4961, %v4957
    %v5974 = vpack.c.b16 %v4962, %v4958
    %v5975 = vpack.c.b16 %v4963, %v4959
    %v5976 = vpack.c.b16 %v4964, %v4960
    %v5977 = vpack.c.b16 %v4969, %v4965
    %v5978 = vpack.c.b16 %v4970, %v4966
    %v5979 = vpack.c.b16 %v4971, %v4967
    %v5980 = vpack.c.b16 %v4972, %v4968
    %v5981 = vpack.c.b16 %v4977, %v4973
    %v5982 = vpack.c.b16 %v4978, %v4974
    %v5983 = vpack.c.b16 %v4979, %v4975
    %v5984 = vpack.c.b16 %v4980, %v4976
    %v5985 = vpack.c.b16 %v4985, %v4981
    %v5986 = vpack.c.b16 %v4986, %v4982
    %v5987 = vpack.c.b16 %v4987, %v4983
    %v5988 = vpack.c.b16 %v4988, %v4984
    %v5989 = vpack.c.b16 %v4993, %v4989
    %v5990 = vpack.c.b16 %v4994, %v4990
    %v5991 = vpack.c.b16 %v4995, %v4991
    %v5992 = vpack.c.b16 %v4996, %v4992
    %v5993 = vpack.c.b16 %v5001, %v4997
    %v5994 = vpack.c.b16 %v5002, %v4998
    %v5995 = vpack.c.b16 %v5003, %v4999
    %v5996 = vpack.c.b16 %v5004, %v5000
    %v5997 = vpack.c.b16 %v5009, %v5005
    %v5998 = vpack.c.b16 %v5010, %v5006
    %v5999 = vpack.c.b16 %v5011, %v5007
    %v6000 = vpack.c.b16 %v5012, %v5008
    %v6001 = vpack.c.b16 %v5017, %v5013
    %v6002 = vpack.c.b16 %v5018, %v5014
    %v6003 = vpack.c.b16 %v5019, %v5015
    %v6004 = vpack.c.b16 %v5020, %v5016
    %v6005 = vpack.c.b16 %v5025, %v5021
    %v6006 = vpack.c.b16 %v5026, %v5022
    %v6007 = vpack.c.b16 %v5027, %v5023
    %v6008 = vpack.c.b16 %v5028, %v5024
    %v6009 = vpack.c.b16 %v5033, %v5029
    %v6010 = vpack.c.b16 %v5034, %v5030
    %v6011 = vpack.c.b16 %v5035, %v5031
    %v6012 = vpack.c.b16 %v5036, %v5032
    %v6013 = vpack.c.b16 %v5041, %v5037
    %v6014 = vpack.c.b16 %v5042, %v5038
    %v6015 = vpack.c.b16 %v5043, %v5039
    %v6016 = vpack.c.b16 %v5044, %v5040
    %v6017 = vpack.c.b16 %v5049, %v5045
    %v6018 = vpack.c.b16 %v5050, %v5046
    %v6019 = vpack.c.b16 %v5051, %v5047
    %v6020 = vpack.c.b16 %v5052, %v5048
    %v6021 = vpack.c.b16 %v5057, %v5053
    %v6022 = vpack.c.b16 %v5058, %v5054
    %v6023 = vpack.c.b16 %v5059, %v5055
    %v6024 = vpack.c.b16 %v5060, %v5056
    %v6025 = vpack.c.b16 %v5065, %v5061
    %v6026 = vpack.c.b16 %v5066, %v5062
    %v6027 = vpack.c.b16 %v5067, %v5063
    %v6028 = vpack.c.b16 %v5068, %v5064
    %v6029 = vpack.c.b16 %v5073, %v5069
    %v6030 = vpack.c.b16 %v5074, %v5070
    %v6031 = vpack.c.b16 %v5075, %v5071
    %v6032 = vpack.c.b16 %v5076, %v5072
    %v6033 = vpack.c.b16 %v5081, %v5077
    %v6034 = vpack.c.b16 %v5082, %v5078
    %v6035 = vpack.c.b16 %v5083, %v5079
    %v6036 = vpack.c.b16 %v5084, %v5080
    %v6037 = vpack.c.b16 %v5089, %v5085
    %v6038 = vpack.c.b16 %v5090, %v5086
    %v6039 = vpack.c.b16 %v5091, %v5087
    %v6040 = vpack.c.b16 %v5092, %v5088
    %v6041 = vpack.c.b16 %v5097, %v5093
    %v6042 = vpack.c.b16 %v5098, %v5094
    %v6043 = vpack.c.b16 %v5099, %v5095
    %v6044 = vpack.c.b16 %v5100, %v5096
    %v6045 = vpack.c.b16 %v5105, %v5101
    %v6046 = vpack.c.b16 %v5106, %v5102
    %v6047 = vpack.c.b16 %v5107, %v5103
    %v6048 = vpack.c.b16 %v5108, %v5104
    %v6049 = vpack.c.b16 %v5113, %v5109
    %v6050 = vpack.c.b16 %v5114, %v5110
    %v6051 = vpack.c.b16 %v5115, %v5111
    %v6052 = vpack.c.b16 %v5116, %v5112
    %v6053 = vpack.c.b16 %v5121, %v5117
    %v6054 = vpack.c.b16 %v5122, %v5118
    %v6055 = vpack.c.b16 %v5123, %v5119
    %v6056 = vpack.c.b16 %v5124, %v5120
    %v6057 = vpack.c.b16 %v5129, %v5125
    %v6058 = vpack.c.b16 %v5130, %v5126
    %v6059 = vpack.c.b16 %v5131, %v5127
    %v6060 = vpack.c.b16 %v5132, %v5128
    %v6061 = vpack.c.b16 %v5137, %v5133
    %v6062 = vpack.c.b16 %v5138, %v5134
    %v6063 = vpack.c.b16 %v5139, %v5135
    %v6064 = vpack.c.b16 %v5140, %v5136
    %v6065 = vpack.c.b16 %v5145, %v5141
    %v6066 = vpack.c.b16 %v5146, %v5142
    %v6067 = vpack.c.b16 %v5147, %v5143
    %v6068 = vpack.c.b16 %v5148, %v5144
    %v6069 = vpack.c.b16 %v5153, %v5149
    %v6070 = vpack.c.b16 %v5154, %v5150
    %v6071 = vpack.c.b16 %v5155, %v5151
    %v6072 = vpack.c.b16 %v5156, %v5152
    %v6073 = vpack.c.b16 %v5161, %v5157
    %v6074 = vpack.c.b16 %v5162, %v5158
    %v6075 = vpack.c.b16 %v5163, %v5159
    %v6076 = vpack.c.b16 %v5164, %v5160
    %v6077 = vpack.c.b16 %v5169, %v5165
    %v6078 = vpack.c.b16 %v5170, %v5166
    %v6079 = vpack.c.b16 %v5171, %v5167
    %v6080 = vpack.c.b16 %v5172, %v5168
    %v6081 = vpack.c.b16 %v5177, %v5173
    %v6082 = vpack.c.b16 %v5178, %v5174
    %v6083 = vpack.c.b16 %v5179, %v5175
    %v6084 = vpack.c.b16 %v5180, %v5176
    %v6085 = vpack.c.b16 %v5185, %v5181
    %v6086 = vpack.c.b16 %v5186, %v5182
    %v6087 = vpack.c.b16 %v5187, %v5183
    %v6088 = vpack.c.b16 %v5188, %v5184
    %v6089 = vpack.c.b16 %v5193, %v5189
    %v6090 = vpack.c.b16 %v5194, %v5190
    %v6091 = vpack.c.b16 %v5195, %v5191
    %v6092 = vpack.c.b16 %v5196, %v5192
    %v6093 = vpack.c.b16 %v5201, %v5197
    %v6094 = vpack.c.b16 %v5202, %v5198
    %v6095 = vpack.c.b16 %v5203, %v5199
    %v6096 = vpack.c.b16 %v5204, %v5200
    %v6097 = vpack.c.b16 %v5209, %v5205
    %v6098 = vpack.c.b16 %v5210, %v5206
    %v6099 = vpack.c.b16 %v5211, %v5207
    %v6100 = vpack.c.b16 %v5212, %v5208
    %v6101 = vpack.c.b16 %v5217, %v5213
    %v6102 = vpack.c.b16 %v5218, %v5214
    %v6103 = vpack.c.b16 %v5219, %v5215
    %v6104 = vpack.c.b16 %v5220, %v5216
    %v6105 = vpack.c.b16 %v5225, %v5221
    %v6106 = vpack.c.b16 %v5226, %v5222
    %v6107 = vpack.c.b16 %v5227, %v5223
    %v6108 = vpack.c.b16 %v5228, %v5224
    %v6109 = vpack.c.b16 %v5233, %v5229
    %v6110 = vpack.c.b16 %v5234, %v5230
    %v6111 = vpack.c.b16 %v5235, %v5231
    %v6112 = vpack.c.b16 %v5236, %v5232
    %v6113 = vpack.c.b16 %v5241, %v5237
    %v6114 = vpack.c.b16 %v5242, %v5238
    %v6115 = vpack.c.b16 %v5243, %v5239
    %v6116 = vpack.c.b16 %v5244, %v5240
    %v6117 = vpack.c.b16 %v5249, %v5245
    %v6118 = vpack.c.b16 %v5250, %v5246
    %v6119 = vpack.c.b16 %v5251, %v5247
    %v6120 = vpack.c.b16 %v5252, %v5248
    %v6121 = vpack.c.b16 %v5257, %v5253
    %v6122 = vpack.c.b16 %v5258, %v5254
    %v6123 = vpack.c.b16 %v5259, %v5255
    %v6124 = vpack.c.b16 %v5260, %v5256
    %v6125 = vpack.c.b16 %v5265, %v5261
    %v6126 = vpack.c.b16 %v5266, %v5262
    %v6127 = vpack.c.b16 %v5267, %v5263
    %v6128 = vpack.c.b16 %v5268, %v5264
    %v6129 = vpack.c.b16 %v5273, %v5269
    %v6130 = vpack.c.b16 %v5274, %v5270
    %v6131 = vpack.c.b16 %v5275, %v5271
    %v6132 = vpack.c.b16 %v5276, %v5272
    %v6133 = vpack.c.b16 %v5281, %v5277
    %v6134 = vpack.c.b16 %v5282, %v5278
    %v6135 = vpack.c.b16 %v5283, %v5279
    %v6136 = vpack.c.b16 %v5284, %v5280
    %v6137 = vpack.c.b16 %v5289, %v5285
    %v6138 = vpack.c.b16 %v5290, %v5286
    %v6139 = vpack.c.b16 %v5291, %v5287
    %v6140 = vpack.c.b16 %v5292, %v5288
    %v6141 = vpack.c.b16 %v5297, %v5293
    %v6142 = vpack.c.b16 %v5298, %v5294
    %v6143 = vpack.c.b16 %v5299, %v5295
    %v6144 = vpack.c.b16 %v5300, %v5296
    %v6145 = vpack.c.b16 %v5305, %v5301
    %v6146 = vpack.c.b16 %v5306, %v5302
    %v6147 = vpack.c.b16 %v5307, %v5303
    %v6148 = vpack.c.b16 %v5308, %v5304
    %v6149 = vpack.c.b16 %v5313, %v5309
    %v6150 = vpack.c.b16 %v5314, %v5310
    %v6151 = vpack.c.b16 %v5315, %v5311
    %v6152 = vpack.c.b16 %v5316, %v5312
    %v6153 = vpack.c.b16 %v5321, %v5317
    %v6154 = vpack.c.b16 %v5322, %v5318
    %v6155 = vpack.c.b16 %v5323, %v5319
    %v6156 = vpack.c.b16 %v5324, %v5320
    %v6157 = vpack.c.b16 %v5329, %v5325
    %v6158 = vpack.c.b16 %v5330, %v5326
    %v6159 = vpack.c.b16 %v5331, %v5327
    %v6160 = vpack.c.b16 %v5332, %v5328
    %v6161 = vpack.c.b16 %v5337, %v5333
    %v6162 = vpack.c.b16 %v5338, %v5334
    %v6163 = vpack.c.b16 %v5339, %v5335
    %v6164 = vpack.c.b16 %v5340, %v5336
    %v6165 = vpack.c.b16 %v5345, %v5341
    %v6166 = vpack.c.b16 %v5346, %v5342
    %v6167 = vpack.c.b16 %v5347, %v5343
    %v6168 = vpack.c.b16 %v5348, %v5344
    %v6169 = vpack.c.b16 %v5353, %v5349
    %v6170 = vpack.c.b16 %v5354, %v5350
    %v6171 = vpack.c.b16 %v5355, %v5351
    %v6172 = vpack.c.b16 %v5356, %v5352
    %v6173 = vpack.c.b16 %v5361, %v5357
    %v6174 = vpack.c.b16 %v5362, %v5358
    %v6175 = vpack.c.b16 %v5363, %v5359
    %v6176 = vpack.c.b16 %v5364, %v5360
    %v6177 = vpack.c.b16 %v5369, %v5365
    %v6178 = vpack.c.b16 %v5370, %v5366
    %v6179 = vpack.c.b16 %v5371, %v5367
    %v6180 = vpack.c.b16 %v5372, %v5368
    %v6181 = vpack.c.b16 %v5377, %v5373
    %v6182 = vpack.c.b16 %v5378, %v5374
    %v6183 = vpack.c.b16 %v5379, %v5375
    %v6184 = vpack.c.b16 %v5380, %v5376
    %v6185 = vpack.c.b16 %v5385, %v5381
    %v6186 = vpack.c.b16 %v5386, %v5382
    %v6187 = vpack.c.b16 %v5387, %v5383
    %v6188 = vpack.c.b16 %v5388, %v5384
    %v6189 = vpack.c.b16 %v5393, %v5389
    %v6190 = vpack.c.b16 %v5394, %v5390
    %v6191 = vpack.c.b16 %v5395, %v5391
    %v6192 = vpack.c.b16 %v5396, %v5392
    %v6193 = vpack.c.b16 %v5401, %v5397
    %v6194 = vpack.c.b16 %v5402, %v5398
    %v6195 = vpack.c.b16 %v5403, %v5399
    %v6196 = vpack.c.b16 %v5404, %v5400
    %v6197 = vpack.c.b16 %v5409, %v5405
    %v6198 = vpack.c.b16 %v5410, %v5406
    %v6199 = vpack.c.b16 %v5411, %v5407
    %v6200 = vpack.c.b16 %v5412, %v5408
    %v6201 = vpack.c.b16 %v5417, %v5413
    %v6202 = vpack.c.b16 %v5418, %v5414
    %v6203 = vpack.c.b16 %v5419, %v5415
    %v6204 = vpack.c.b16 %v5420, %v5416
    %v6205 = vpack.c.b16 %v5425, %v5421
    %v6206 = vpack.c.b16 %v5426, %v5422
    %v6207 = vpack.c.b16 %v5427, %v5423
    %v6208 = vpack.c.b16 %v5428, %v5424
    %v6209 = vpack.c.b16 %v5433, %v5429
    %v6210 = vpack.c.b16 %v5434, %v5430
    %v6211 = vpack.c.b16 %v5435, %v5431
    %v6212 = vpack.c.b16 %v5436, %v5432
    %v6213 = vpack.c.b16 %v5441, %v5437
    %v6214 = vpack.c.b16 %v5442, %v5438
    %v6215 = vpack.c.b16 %v5443, %v5439
    %v6216 = vpack.c.b16 %v5444, %v5440
    %v6217 = vpack.c.b16 %v5449, %v5445
    %v6218 = vpack.c.b16 %v5450, %v5446
    %v6219 = vpack.c.b16 %v5451, %v5447
    %v6220 = vpack.c.b16 %v5452, %v5448
    %v6221 = vpack.c.b16 %v5457, %v5453
    %v6222 = vpack.c.b16 %v5458, %v5454
    %v6223 = vpack.c.b16 %v5459, %v5455
    %v6224 = vpack.c.b16 %v5460, %v5456
    %v6225 = vpack.c.b16 %v5465, %v5461
    %v6226 = vpack.c.b16 %v5466, %v5462
    %v6227 = vpack.c.b16 %v5467, %v5463
    %v6228 = vpack.c.b16 %v5468, %v5464
    %v6229 = vpack.c.b16 %v5473, %v5469
    %v6230 = vpack.c.b16 %v5474, %v5470
    %v6231 = vpack.c.b16 %v5475, %v5471
    %v6232 = vpack.c.b16 %v5476, %v5472
    %v6233 = vpack.c.b16 %v5481, %v5477
    %v6234 = vpack.c.b16 %v5482, %v5478
    %v6235 = vpack.c.b16 %v5483, %v5479
    %v6236 = vpack.c.b16 %v5484, %v5480
    %v6237 = vpack.c.b16 %v5489, %v5485
    %v6238 = vpack.c.b16 %v5490, %v5486
    %v6239 = vpack.c.b16 %v5491, %v5487
    %v6240 = vpack.c.b16 %v5492, %v5488
    %v6241 = vpack.c.b16 %v5497, %v5493
    %v6242 = vpack.c.b16 %v5498, %v5494
    %v6243 = vpack.c.b16 %v5499, %v5495
    %v6244 = vpack.c.b16 %v5500, %v5496
    %v6245 = vpack.c.b16 %v5505, %v5501
    %v6246 = vpack.c.b16 %v5506, %v5502
    %v6247 = vpack.c.b16 %v5507, %v5503
    %v6248 = vpack.c.b16 %v5508, %v5504
    %v6249 = vpack.c.b16 %v5513, %v5509
    %v6250 = vpack.c.b16 %v5514, %v5510
    %v6251 = vpack.c.b16 %v5515, %v5511
    %v6252 = vpack.c.b16 %v5516, %v5512
    %v6253 = vpack.c.b16 %v5521, %v5517
    %v6254 = vpack.c.b16 %v5522, %v5518
    %v6255 = vpack.c.b16 %v5523, %v5519
    %v6256 = vpack.c.b16 %v5524, %v5520
    %v6257 = vpack.c.b16 %v5529, %v5525
    %v6258 = vpack.c.b16 %v5530, %v5526
    %v6259 = vpack.c.b16 %v5531, %v5527
    %v6260 = vpack.c.b16 %v5532, %v5528
    %v6261 = vpack.c.b16 %v5537, %v5533
    %v6262 = vpack.c.b16 %v5538, %v5534
    %v6263 = vpack.c.b16 %v5539, %v5535
    %v6264 = vpack.c.b16 %v5540, %v5536
    %v6265 = vpack.c.b16 %v5545, %v5541
    %v6266 = vpack.c.b16 %v5546, %v5542
    %v6267 = vpack.c.b16 %v5547, %v5543
    %v6268 = vpack.c.b16 %v5548, %v5544
    %v6269 = vpack.c.b16 %v5553, %v5549
    %v6270 = vpack.c.b16 %v5554, %v5550
    %v6271 = vpack.c.b16 %v5555, %v5551
    %v6272 = vpack.c.b16 %v5556, %v5552
    %v6273 = vpack.c.b16 %v5561, %v5557
    %v6274 = vpack.c.b16 %v5562, %v5558
    %v6275 = vpack.c.b16 %v5563, %v5559
    %v6276 = vpack.c.b16 %v5564, %v5560
    %v6277 = vpack.c.b16 %v5569, %v5565
    %v6278 = vpack.c.b16 %v5570, %v5566
    %v6279 = vpack.c.b16 %v5571, %v5567
    %v6280 = vpack.c.b16 %v5572, %v5568
    %v6281 = vpack.c.b16 %v5577, %v5573
    %v6282 = vpack.c.b16 %v5578, %v5574
    %v6283 = vpack.c.b16 %v5579, %v5575
    %v6284 = vpack.c.b16 %v5580, %v5576
    %v6285 = vpack.c.b16 %v5585, %v5581
    %v6286 = vpack.c.b16 %v5586, %v5582
    %v6287 = vpack.c.b16 %v5587, %v5583
    %v6288 = vpack.c.b16 %v5588, %v5584
    %v6289 = vpack.c.b16 %v5593, %v5589
    %v6290 = vpack.c.b16 %v5594, %v5590
    %v6291 = vpack.c.b16 %v5595, %v5591
    %v6292 = vpack.c.b16 %v5596, %v5592
    %v6293 = vpack.c.b16 %v5601, %v5597
    %v6294 = vpack.c.b16 %v5602, %v5598
    %v6295 = vpack.c.b16 %v5603, %v5599
    %v6296 = vpack.c.b16 %v5604, %v5600
    %v6297 = vpack.c.b16 %v5609, %v5605
    %v6298 = vpack.c.b16 %v5610, %v5606
    %v6299 = vpack.c.b16 %v5611, %v5607
    %v6300 = vpack.c.b16 %v5612, %v5608
    %v6301 = vpack.c.b16 %v5617, %v5613
    %v6302 = vpack.c.b16 %v5618, %v5614
    %v6303 = vpack.c.b16 %v5619, %v5615
    %v6304 = vpack.c.b16 %v5620, %v5616
    %v6305 = vpack.c.b16 %v5625, %v5621
    %v6306 = vpack.c.b16 %v5626, %v5622
    %v6307 = vpack.c.b16 %v5627, %v5623
    %v6308 = vpack.c.b16 %v5628, %v5624
    %v6309 = vpack.c.b16 %v5633, %v5629
    %v6310 = vpack.c.b16 %v5634, %v5630
    %v6311 = vpack.c.b16 %v5635, %v5631
    %v6312 = vpack.c.b16 %v5636, %v5632
    %v6313 = vpack.c.b16 %v5641, %v5637
    %v6314 = vpack.c.b16 %v5642, %v5638
    %v6315 = vpack.c.b16 %v5643, %v5639
    %v6316 = vpack.c.b16 %v5644, %v5640
    %v6317 = vpack.c.b16 %v5649, %v5645
    %v6318 = vpack.c.b16 %v5650, %v5646
    %v6319 = vpack.c.b16 %v5651, %v5647
    %v6320 = vpack.c.b16 %v5652, %v5648
    %v6321 = vpack.c.b16 %v5657, %v5653
    %v6322 = vpack.c.b16 %v5658, %v5654
    %v6323 = vpack.c.b16 %v5659, %v5655
    %v6324 = vpack.c.b16 %v5660, %v5656
    %v6325 = vpack.c.b16 %v5665, %v5661
    %v6326 = vpack.c.b16 %v5666, %v5662
    %v6327 = vpack.c.b16 %v5667, %v5663
    %v6328 = vpack.c.b16 %v5668, %v5664
    %v6329 = vpack.c.b16 %v5673, %v5669
    %v6330 = vpack.c.b16 %v5674, %v5670
    %v6331 = vpack.c.b16 %v5675, %v5671
    %v6332 = vpack.c.b16 %v5676, %v5672
    %v6333 = vpack.c.b16 %v5681, %v5677
    %v6334 = vpack.c.b16 %v5682, %v5678
    %v6335 = vpack.c.b16 %v5683, %v5679
    %v6336 = vpack.c.b16 %v5684, %v5680
    %v6337 = vpack.c.b16 %v5689, %v5685
    %v6338 = vpack.c.b16 %v5690, %v5686
    %v6339 = vpack.c.b16 %v5691, %v5687
    %v6340 = vpack.c.b16 %v5692, %v5688
    %v6341 = vpack.c.b16 %v5697, %v5693
    %v6342 = vpack.c.b16 %v5698, %v5694
    %v6343 = vpack.c.b16 %v5699, %v5695
    %v6344 = vpack.c.b16 %v5700, %v5696
    %v6345 = vpack.c.b16 %v5705, %v5701
    %v6346 = vpack.c.b16 %v5706, %v5702
    %v6347 = vpack.c.b16 %v5707, %v5703
    %v6348 = vpack.c.b16 %v5708, %v5704
    %6989 = vmatpush.bf16.msra.mxu0 %v5737
    %6990 = vmatpush.bf16.msra.mxu0 %v5733
    %6991 = vmatpush.bf16.msra.mxu0 %v5729
    %6992 = vmatpush.bf16.msra.mxu0 %v5725
    %6993 = vmatpush.bf16.msra.mxu0 %v5721
    %6994 = vmatpush.bf16.msra.mxu0 %v5717
    %6995 = vmatpush.bf16.msra.mxu0 %v5713
    %6996 = vmatpush.bf16.msra.mxu0 %v5709
    %6997 = vmatmul.bf16.gmra.mxu0 %v3119
    %v6998 = vpop.f32.mrf.mxu0
    %v6999 = vadd.f32 %v3781, %v6998
    %v7000 = vpop.f32.mrf.mxu0
    %7001 = vdwg.mxu0
    %7002 = vmatpush.bf16.msra.mxu0 %v5769
    %7003 = vmatpush.bf16.msra.mxu0 %v5765
    %7004 = vmatpush.bf16.msra.mxu0 %v5761
    %7005 = vmatpush.bf16.msra.mxu0 %v5757
    %7006 = vmatpush.bf16.msra.mxu0 %v5753
    %7007 = vmatpush.bf16.msra.mxu0 %v5749
    %7008 = vmatpush.bf16.msra.mxu0 %v5745
    %7009 = vmatpush.bf16.msra.mxu0 %v5741
    %7010 = vmatmul.bf16.gmra.mxu0 %v3120
    %v7011 = vpop.f32.mrf.mxu0
    %v7012 = vadd.f32 %v6999, %v7011
    %v7013 = vpop.f32.mrf.mxu0
    %7014 = vdwg.mxu0
    %7015 = vmatpush.bf16.msra.mxu0 %v5801
    %7016 = vmatpush.bf16.msra.mxu0 %v5797
    %7017 = vmatpush.bf16.msra.mxu0 %v5793
    %7018 = vmatpush.bf16.msra.mxu0 %v5789
    %7019 = vmatpush.bf16.msra.mxu0 %v5785
    %7020 = vmatpush.bf16.msra.mxu0 %v5781
    %7021 = vmatpush.bf16.msra.mxu0 %v5777
    %7022 = vmatpush.bf16.msra.mxu0 %v5773
    %7023 = vmatmul.bf16.gmra.mxu0 %v3121
    %v7024 = vpop.f32.mrf.mxu0
    %v7025 = vadd.f32 %v7012, %v7024
    %v7026 = vpop.f32.mrf.mxu0
    %7027 = vdwg.mxu0
    %7028 = vmatpush.bf16.msra.mxu0 %v5833
    %7029 = vmatpush.bf16.msra.mxu0 %v5829
    %7030 = vmatpush.bf16.msra.mxu0 %v5825
    %7031 = vmatpush.bf16.msra.mxu0 %v5821
    %7032 = vmatpush.bf16.msra.mxu0 %v5817
    %7033 = vmatpush.bf16.msra.mxu0 %v5813
    %7034 = vmatpush.bf16.msra.mxu0 %v5809
    %7035 = vmatpush.bf16.msra.mxu0 %v5805
    %7036 = vmatmul.bf16.gmra.mxu0 %v3122
    %v7037 = vpop.f32.mrf.mxu0
    %v7038 = vadd.f32 %v7025, %v7037
    %v7039 = vpop.f32.mrf.mxu0
    %7040 = vdwg.mxu0
    %7041 = vmatpush.bf16.msra.mxu0 %v5865
    %7042 = vmatpush.bf16.msra.mxu0 %v5861
    %7043 = vmatpush.bf16.msra.mxu0 %v5857
    %7044 = vmatpush.bf16.msra.mxu0 %v5853
    %7045 = vmatpush.bf16.msra.mxu0 %v5849
    %7046 = vmatpush.bf16.msra.mxu0 %v5845
    %7047 = vmatpush.bf16.msra.mxu0 %v5841
    %7048 = vmatpush.bf16.msra.mxu0 %v5837
    %7049 = vmatmul.bf16.gmra.mxu0 %v3123
    %v7050 = vpop.f32.mrf.mxu0
    %v7051 = vadd.f32 %v7038, %v7050
    %v7052 = vpop.f32.mrf.mxu0
    %7053 = vdwg.mxu0
    %7054 = vmatpush.bf16.msra.mxu0 %v5897
    %7055 = vmatpush.bf16.msra.mxu0 %v5893
    %7056 = vmatpush.bf16.msra.mxu0 %v5889
    %7057 = vmatpush.bf16.msra.mxu0 %v5885
    %7058 = vmatpush.bf16.msra.mxu0 %v5881
    %7059 = vmatpush.bf16.msra.mxu0 %v5877
    %7060 = vmatpush.bf16.msra.mxu0 %v5873
    %7061 = vmatpush.bf16.msra.mxu0 %v5869
    %7062 = vmatmul.bf16.gmra.mxu0 %v3124
    %v7063 = vpop.f32.mrf.mxu0
    %v7064 = vadd.f32 %v7051, %v7063
    %v7065 = vpop.f32.mrf.mxu0
    %7066 = vdwg.mxu0
    %7067 = vmatpush.bf16.msra.mxu0 %v5929
    %7068 = vmatpush.bf16.msra.mxu0 %v5925
    %7069 = vmatpush.bf16.msra.mxu0 %v5921
    %7070 = vmatpush.bf16.msra.mxu0 %v5917
    %7071 = vmatpush.bf16.msra.mxu0 %v5913
    %7072 = vmatpush.bf16.msra.mxu0 %v5909
    %7073 = vmatpush.bf16.msra.mxu0 %v5905
    %7074 = vmatpush.bf16.msra.mxu0 %v5901
    %7075 = vmatmul.bf16.gmra.mxu0 %v3125
    %v7076 = vpop.f32.mrf.mxu0
    %v7077 = vadd.f32 %v7064, %v7076
    %v7078 = vpop.f32.mrf.mxu0
    %7079 = vdwg.mxu0
    %7080 = vmatpush.bf16.msra.mxu0 %v5961
    %7081 = vmatpush.bf16.msra.mxu0 %v5957
    %7082 = vmatpush.bf16.msra.mxu0 %v5953
    %7083 = vmatpush.bf16.msra.mxu0 %v5949
    %7084 = vmatpush.bf16.msra.mxu0 %v5945
    %7085 = vmatpush.bf16.msra.mxu0 %v5941
    %7086 = vmatpush.bf16.msra.mxu0 %v5937
    %7087 = vmatpush.bf16.msra.mxu0 %v5933
    %7088 = vmatmul.bf16.gmra.mxu0 %v3126
    %v7089 = vpop.f32.mrf.mxu0
    %v7090 = vadd.f32 %v7077, %v7089
    %v7091 = vpop.f32.mrf.mxu0
    %7092 = vdwg.mxu0
    %7093 = vmatpush.bf16.msra.mxu0 %v5993
    %7094 = vmatpush.bf16.msra.mxu0 %v5989
    %7095 = vmatpush.bf16.msra.mxu0 %v5985
    %7096 = vmatpush.bf16.msra.mxu0 %v5981
    %7097 = vmatpush.bf16.msra.mxu0 %v5977
    %7098 = vmatpush.bf16.msra.mxu0 %v5973
    %7099 = vmatpush.bf16.msra.mxu0 %v5969
    %7100 = vmatpush.bf16.msra.mxu0 %v5965
    %7101 = vmatmul.bf16.gmra.mxu0 %v3127
    %v7102 = vpop.f32.mrf.mxu0
    %v7103 = vadd.f32 %v7090, %v7102
    %v7104 = vpop.f32.mrf.mxu0
    %7105 = vdwg.mxu0
    %7106 = vmatpush.bf16.msra.mxu0 %v6025
    %7107 = vmatpush.bf16.msra.mxu0 %v6021
    %7108 = vmatpush.bf16.msra.mxu0 %v6017
    %7109 = vmatpush.bf16.msra.mxu0 %v6013
    %7110 = vmatpush.bf16.msra.mxu0 %v6009
    %7111 = vmatpush.bf16.msra.mxu0 %v6005
    %7112 = vmatpush.bf16.msra.mxu0 %v6001
    %7113 = vmatpush.bf16.msra.mxu0 %v5997
    %7114 = vmatmul.bf16.gmra.mxu0 %v3128
    %v7115 = vpop.f32.mrf.mxu0
    %v7116 = vadd.f32 %v7103, %v7115
    %v7117 = vpop.f32.mrf.mxu0
    %7118 = vdwg.mxu0
    %7119 = vmatpush.bf16.msra.mxu0 %v6057
    %7120 = vmatpush.bf16.msra.mxu0 %v6053
    %7121 = vmatpush.bf16.msra.mxu0 %v6049
    %7122 = vmatpush.bf16.msra.mxu0 %v6045
    %7123 = vmatpush.bf16.msra.mxu0 %v6041
    %7124 = vmatpush.bf16.msra.mxu0 %v6037
    %7125 = vmatpush.bf16.msra.mxu0 %v6033
    %7126 = vmatpush.bf16.msra.mxu0 %v6029
    %7127 = vmatmul.bf16.gmra.mxu0 %v3129
    %v7128 = vpop.f32.mrf.mxu0
    %v7129 = vadd.f32 %v7116, %v7128
    %v7130 = vpop.f32.mrf.mxu0
    %7131 = vdwg.mxu0
    %7132 = vmatpush.bf16.msra.mxu0 %v6089
    %7133 = vmatpush.bf16.msra.mxu0 %v6085
    %7134 = vmatpush.bf16.msra.mxu0 %v6081
    %7135 = vmatpush.bf16.msra.mxu0 %v6077
    %7136 = vmatpush.bf16.msra.mxu0 %v6073
    %7137 = vmatpush.bf16.msra.mxu0 %v6069
    %7138 = vmatpush.bf16.msra.mxu0 %v6065
    %7139 = vmatpush.bf16.msra.mxu0 %v6061
    %7140 = vmatmul.bf16.gmra.mxu0 %v3130
    %v7141 = vpop.f32.mrf.mxu0
    %v7142 = vadd.f32 %v7129, %v7141
    %v7143 = vpop.f32.mrf.mxu0
    %7144 = vdwg.mxu0
    %7145 = vmatpush.bf16.msra.mxu0 %v6121
    %7146 = vmatpush.bf16.msra.mxu0 %v6117
    %7147 = vmatpush.bf16.msra.mxu0 %v6113
    %7148 = vmatpush.bf16.msra.mxu0 %v6109
    %7149 = vmatpush.bf16.msra.mxu0 %v6105
    %7150 = vmatpush.bf16.msra.mxu0 %v6101
    %7151 = vmatpush.bf16.msra.mxu0 %v6097
    %7152 = vmatpush.bf16.msra.mxu0 %v6093
    %7153 = vmatmul.bf16.gmra.mxu0 %v3131
    %v7154 = vpop.f32.mrf.mxu0
    %v7155 = vadd.f32 %v7142, %v7154
    %v7156 = vpop.f32.mrf.mxu0
    %7157 = vdwg.mxu0
    %7158 = vmatpush.bf16.msra.mxu0 %v6153
    %7159 = vmatpush.bf16.msra.mxu0 %v6149
    %7160 = vmatpush.bf16.msra.mxu0 %v6145
    %7161 = vmatpush.bf16.msra.mxu0 %v6141
    %7162 = vmatpush.bf16.msra.mxu0 %v6137
    %7163 = vmatpush.bf16.msra.mxu0 %v6133
    %7164 = vmatpush.bf16.msra.mxu0 %v6129
    %7165 = vmatpush.bf16.msra.mxu0 %v6125
    %7166 = vmatmul.bf16.gmra.mxu0 %v3132
    %v7167 = vpop.f32.mrf.mxu0
    %v7168 = vadd.f32 %v7155, %v7167
    %v7169 = vpop.f32.mrf.mxu0
    %7170 = vdwg.mxu0
    %7171 = vmatpush.bf16.msra.mxu0 %v6185
    %7172 = vmatpush.bf16.msra.mxu0 %v6181
    %7173 = vmatpush.bf16.msra.mxu0 %v6177
    %7174 = vmatpush.bf16.msra.mxu0 %v6173
    %7175 = vmatpush.bf16.msra.mxu0 %v6169
    %7176 = vmatpush.bf16.msra.mxu0 %v6165
    %7177 = vmatpush.bf16.msra.mxu0 %v6161
    %7178 = vmatpush.bf16.msra.mxu0 %v6157
    %7179 = vmatmul.bf16.gmra.mxu0 %v3133
    %v7180 = vpop.f32.mrf.mxu0
    %v7181 = vadd.f32 %v7168, %v7180
    %v7182 = vpop.f32.mrf.mxu0
    %7183 = vdwg.mxu0
    %7184 = vmatpush.bf16.msra.mxu0 %v6217
    %7185 = vmatpush.bf16.msra.mxu0 %v6213
    %7186 = vmatpush.bf16.msra.mxu0 %v6209
    %7187 = vmatpush.bf16.msra.mxu0 %v6205
    %7188 = vmatpush.bf16.msra.mxu0 %v6201
    %7189 = vmatpush.bf16.msra.mxu0 %v6197
    %7190 = vmatpush.bf16.msra.mxu0 %v6193
    %7191 = vmatpush.bf16.msra.mxu0 %v6189
    %7192 = vmatmul.bf16.gmra.mxu0 %v3134
    %v7193 = vpop.f32.mrf.mxu0
    %v7194 = vadd.f32 %v7181, %v7193
    %v7195 = vpop.f32.mrf.mxu0
    %7196 = vdwg.mxu0
    %7197 = vmatpush.bf16.msra.mxu0 %v6249
    %7198 = vmatpush.bf16.msra.mxu0 %v6245
    %7199 = vmatpush.bf16.msra.mxu0 %v6241
    %7200 = vmatpush.bf16.msra.mxu0 %v6237
    %7201 = vmatpush.bf16.msra.mxu0 %v6233
    %7202 = vmatpush.bf16.msra.mxu0 %v6229
    %7203 = vmatpush.bf16.msra.mxu0 %v6225
    %7204 = vmatpush.bf16.msra.mxu0 %v6221
    %7205 = vmatmul.bf16.gmra.mxu0 %v3135
    %v7206 = vpop.f32.mrf.mxu0
    %v7207 = vadd.f32 %v7194, %v7206
    %v7208 = vpop.f32.mrf.mxu0
    %7209 = vdwg.mxu0
    %7210 = vmatpush.bf16.msra.mxu0 %v6281
    %7211 = vmatpush.bf16.msra.mxu0 %v6277
    %7212 = vmatpush.bf16.msra.mxu0 %v6273
    %7213 = vmatpush.bf16.msra.mxu0 %v6269
    %7214 = vmatpush.bf16.msra.mxu0 %v6265
    %7215 = vmatpush.bf16.msra.mxu0 %v6261
    %7216 = vmatpush.bf16.msra.mxu0 %v6257
    %7217 = vmatpush.bf16.msra.mxu0 %v6253
    %7218 = vmatmul.bf16.gmra.mxu0 %v3136
    %v7219 = vpop.f32.mrf.mxu0
    %v7220 = vadd.f32 %v7207, %v7219
    %v7221 = vpop.f32.mrf.mxu0
    %7222 = vdwg.mxu0
    %7223 = vmatpush.bf16.msra.mxu0 %v6313
    %7224 = vmatpush.bf16.msra.mxu0 %v6309
    %7225 = vmatpush.bf16.msra.mxu0 %v6305
    %7226 = vmatpush.bf16.msra.mxu0 %v6301
    %7227 = vmatpush.bf16.msra.mxu0 %v6297
    %7228 = vmatpush.bf16.msra.mxu0 %v6293
    %7229 = vmatpush.bf16.msra.mxu0 %v6289
    %7230 = vmatpush.bf16.msra.mxu0 %v6285
    %7231 = vmatmul.bf16.gmra.mxu0 %v3137
    %v7232 = vpop.f32.mrf.mxu0
    %v7233 = vadd.f32 %v7220, %v7232
    %v7234 = vpop.f32.mrf.mxu0
    %7235 = vdwg.mxu0
    %7236 = vmatpush.bf16.msra.mxu0 %v6345
    %7237 = vmatpush.bf16.msra.mxu0 %v6341
    %7238 = vmatpush.bf16.msra.mxu0 %v6337
    %7239 = vmatpush.bf16.msra.mxu0 %v6333
    %7240 = vmatpush.bf16.msra.mxu0 %v6329
    %7241 = vmatpush.bf16.msra.mxu0 %v6325
    %7242 = vmatpush.bf16.msra.mxu0 %v6321
    %7243 = vmatpush.bf16.msra.mxu0 %v6317
    %7244 = vmatmul.bf16.gmra.mxu0 %v3138
    %v7245 = vpop.f32.mrf.mxu0
    %v7246 = vadd.f32 %v7233, %v7245
    %v7247 = vpop.f32.mrf.mxu0
    %7248 = vdwg.mxu0
    %7249 = vmatpush.bf16.msra.mxu0 %v5738
    %7250 = vmatpush.bf16.msra.mxu0 %v5734
    %7251 = vmatpush.bf16.msra.mxu0 %v5730
    %7252 = vmatpush.bf16.msra.mxu0 %v5726
    %7253 = vmatpush.bf16.msra.mxu0 %v5722
    %7254 = vmatpush.bf16.msra.mxu0 %v5718
    %7255 = vmatpush.bf16.msra.mxu0 %v5714
    %7256 = vmatpush.bf16.msra.mxu0 %v5710
    %7257 = vmatmul.bf16.gmra.mxu0 %v3119
    %v7258 = vpop.f32.mrf.mxu0
    %v7259 = vadd.f32 %v3782, %v7258
    %v7260 = vpop.f32.mrf.mxu0
    %7261 = vdwg.mxu0
    %7262 = vmatpush.bf16.msra.mxu0 %v5770
    %7263 = vmatpush.bf16.msra.mxu0 %v5766
    %7264 = vmatpush.bf16.msra.mxu0 %v5762
    %7265 = vmatpush.bf16.msra.mxu0 %v5758
    %7266 = vmatpush.bf16.msra.mxu0 %v5754
    %7267 = vmatpush.bf16.msra.mxu0 %v5750
    %7268 = vmatpush.bf16.msra.mxu0 %v5746
    %7269 = vmatpush.bf16.msra.mxu0 %v5742
    %7270 = vmatmul.bf16.gmra.mxu0 %v3120
    %v7271 = vpop.f32.mrf.mxu0
    %v7272 = vadd.f32 %v7259, %v7271
    %v7273 = vpop.f32.mrf.mxu0
    %7274 = vdwg.mxu0
    %7275 = vmatpush.bf16.msra.mxu0 %v5802
    %7276 = vmatpush.bf16.msra.mxu0 %v5798
    %7277 = vmatpush.bf16.msra.mxu0 %v5794
    %7278 = vmatpush.bf16.msra.mxu0 %v5790
    %7279 = vmatpush.bf16.msra.mxu0 %v5786
    %7280 = vmatpush.bf16.msra.mxu0 %v5782
    %7281 = vmatpush.bf16.msra.mxu0 %v5778
    %7282 = vmatpush.bf16.msra.mxu0 %v5774
    %7283 = vmatmul.bf16.gmra.mxu0 %v3121
    %v7284 = vpop.f32.mrf.mxu0
    %v7285 = vadd.f32 %v7272, %v7284
    %v7286 = vpop.f32.mrf.mxu0
    %7287 = vdwg.mxu0
    %7288 = vmatpush.bf16.msra.mxu0 %v5834
    %7289 = vmatpush.bf16.msra.mxu0 %v5830
    %7290 = vmatpush.bf16.msra.mxu0 %v5826
    %7291 = vmatpush.bf16.msra.mxu0 %v5822
    %7292 = vmatpush.bf16.msra.mxu0 %v5818
    %7293 = vmatpush.bf16.msra.mxu0 %v5814
    %7294 = vmatpush.bf16.msra.mxu0 %v5810
    %7295 = vmatpush.bf16.msra.mxu0 %v5806
    %7296 = vmatmul.bf16.gmra.mxu0 %v3122
    %v7297 = vpop.f32.mrf.mxu0
    %v7298 = vadd.f32 %v7285, %v7297
    %v7299 = vpop.f32.mrf.mxu0
    %7300 = vdwg.mxu0
    %7301 = vmatpush.bf16.msra.mxu0 %v5866
    %7302 = vmatpush.bf16.msra.mxu0 %v5862
    %7303 = vmatpush.bf16.msra.mxu0 %v5858
    %7304 = vmatpush.bf16.msra.mxu0 %v5854
    %7305 = vmatpush.bf16.msra.mxu0 %v5850
    %7306 = vmatpush.bf16.msra.mxu0 %v5846
    %7307 = vmatpush.bf16.msra.mxu0 %v5842
    %7308 = vmatpush.bf16.msra.mxu0 %v5838
    %7309 = vmatmul.bf16.gmra.mxu0 %v3123
    %v7310 = vpop.f32.mrf.mxu0
    %v7311 = vadd.f32 %v7298, %v7310
    %v7312 = vpop.f32.mrf.mxu0
    %7313 = vdwg.mxu0
    %7314 = vmatpush.bf16.msra.mxu0 %v5898
    %7315 = vmatpush.bf16.msra.mxu0 %v5894
    %7316 = vmatpush.bf16.msra.mxu0 %v5890
    %7317 = vmatpush.bf16.msra.mxu0 %v5886
    %7318 = vmatpush.bf16.msra.mxu0 %v5882
    %7319 = vmatpush.bf16.msra.mxu0 %v5878
    %7320 = vmatpush.bf16.msra.mxu0 %v5874
    %7321 = vmatpush.bf16.msra.mxu0 %v5870
    %7322 = vmatmul.bf16.gmra.mxu0 %v3124
    %v7323 = vpop.f32.mrf.mxu0
    %v7324 = vadd.f32 %v7311, %v7323
    %v7325 = vpop.f32.mrf.mxu0
    %7326 = vdwg.mxu0
    %7327 = vmatpush.bf16.msra.mxu0 %v5930
    %7328 = vmatpush.bf16.msra.mxu0 %v5926
    %7329 = vmatpush.bf16.msra.mxu0 %v5922
    %7330 = vmatpush.bf16.msra.mxu0 %v5918
    %7331 = vmatpush.bf16.msra.mxu0 %v5914
    %7332 = vmatpush.bf16.msra.mxu0 %v5910
    %7333 = vmatpush.bf16.msra.mxu0 %v5906
    %7334 = vmatpush.bf16.msra.mxu0 %v5902
    %7335 = vmatmul.bf16.gmra.mxu0 %v3125
    %v7336 = vpop.f32.mrf.mxu0
    %v7337 = vadd.f32 %v7324, %v7336
    %v7338 = vpop.f32.mrf.mxu0
    %7339 = vdwg.mxu0
    %7340 = vmatpush.bf16.msra.mxu0 %v5962
    %7341 = vmatpush.bf16.msra.mxu0 %v5958
    %7342 = vmatpush.bf16.msra.mxu0 %v5954
    %7343 = vmatpush.bf16.msra.mxu0 %v5950
    %7344 = vmatpush.bf16.msra.mxu0 %v5946
    %7345 = vmatpush.bf16.msra.mxu0 %v5942
    %7346 = vmatpush.bf16.msra.mxu0 %v5938
    %7347 = vmatpush.bf16.msra.mxu0 %v5934
    %7348 = vmatmul.bf16.gmra.mxu0 %v3126
    %v7349 = vpop.f32.mrf.mxu0
    %v7350 = vadd.f32 %v7337, %v7349
    %v7351 = vpop.f32.mrf.mxu0
    %7352 = vdwg.mxu0
    %7353 = vmatpush.bf16.msra.mxu0 %v5994
    %7354 = vmatpush.bf16.msra.mxu0 %v5990
    %7355 = vmatpush.bf16.msra.mxu0 %v5986
    %7356 = vmatpush.bf16.msra.mxu0 %v5982
    %7357 = vmatpush.bf16.msra.mxu0 %v5978
    %7358 = vmatpush.bf16.msra.mxu0 %v5974
    %7359 = vmatpush.bf16.msra.mxu0 %v5970
    %7360 = vmatpush.bf16.msra.mxu0 %v5966
    %7361 = vmatmul.bf16.gmra.mxu0 %v3127
    %v7362 = vpop.f32.mrf.mxu0
    %v7363 = vadd.f32 %v7350, %v7362
    %v7364 = vpop.f32.mrf.mxu0
    %7365 = vdwg.mxu0
    %7366 = vmatpush.bf16.msra.mxu0 %v6026
    %7367 = vmatpush.bf16.msra.mxu0 %v6022
    %7368 = vmatpush.bf16.msra.mxu0 %v6018
    %7369 = vmatpush.bf16.msra.mxu0 %v6014
    %7370 = vmatpush.bf16.msra.mxu0 %v6010
    %7371 = vmatpush.bf16.msra.mxu0 %v6006
    %7372 = vmatpush.bf16.msra.mxu0 %v6002
    %7373 = vmatpush.bf16.msra.mxu0 %v5998
    %7374 = vmatmul.bf16.gmra.mxu0 %v3128
    %v7375 = vpop.f32.mrf.mxu0
    %v7376 = vadd.f32 %v7363, %v7375
    %v7377 = vpop.f32.mrf.mxu0
    %7378 = vdwg.mxu0
    %7379 = vmatpush.bf16.msra.mxu0 %v6058
    %7380 = vmatpush.bf16.msra.mxu0 %v6054
    %7381 = vmatpush.bf16.msra.mxu0 %v6050
    %7382 = vmatpush.bf16.msra.mxu0 %v6046
    %7383 = vmatpush.bf16.msra.mxu0 %v6042
    %7384 = vmatpush.bf16.msra.mxu0 %v6038
    %7385 = vmatpush.bf16.msra.mxu0 %v6034
    %7386 = vmatpush.bf16.msra.mxu0 %v6030
    %7387 = vmatmul.bf16.gmra.mxu0 %v3129
    %v7388 = vpop.f32.mrf.mxu0
    %v7389 = vadd.f32 %v7376, %v7388
    %v7390 = vpop.f32.mrf.mxu0
    %7391 = vdwg.mxu0
    %7392 = vmatpush.bf16.msra.mxu0 %v6090
    %7393 = vmatpush.bf16.msra.mxu0 %v6086
    %7394 = vmatpush.bf16.msra.mxu0 %v6082
    %7395 = vmatpush.bf16.msra.mxu0 %v6078
    %7396 = vmatpush.bf16.msra.mxu0 %v6074
    %7397 = vmatpush.bf16.msra.mxu0 %v6070
    %7398 = vmatpush.bf16.msra.mxu0 %v6066
    %7399 = vmatpush.bf16.msra.mxu0 %v6062
    %7400 = vmatmul.bf16.gmra.mxu0 %v3130
    %v7401 = vpop.f32.mrf.mxu0
    %v7402 = vadd.f32 %v7389, %v7401
    %v7403 = vpop.f32.mrf.mxu0
    %7404 = vdwg.mxu0
    %7405 = vmatpush.bf16.msra.mxu0 %v6122
    %7406 = vmatpush.bf16.msra.mxu0 %v6118
    %7407 = vmatpush.bf16.msra.mxu0 %v6114
    %7408 = vmatpush.bf16.msra.mxu0 %v6110
    %7409 = vmatpush.bf16.msra.mxu0 %v6106
    %7410 = vmatpush.bf16.msra.mxu0 %v6102
    %7411 = vmatpush.bf16.msra.mxu0 %v6098
    %7412 = vmatpush.bf16.msra.mxu0 %v6094
    %7413 = vmatmul.bf16.gmra.mxu0 %v3131
    %v7414 = vpop.f32.mrf.mxu0
    %v7415 = vadd.f32 %v7402, %v7414
    %v7416 = vpop.f32.mrf.mxu0
    %7417 = vdwg.mxu0
    %7418 = vmatpush.bf16.msra.mxu0 %v6154
    %7419 = vmatpush.bf16.msra.mxu0 %v6150
    %7420 = vmatpush.bf16.msra.mxu0 %v6146
    %7421 = vmatpush.bf16.msra.mxu0 %v6142
    %7422 = vmatpush.bf16.msra.mxu0 %v6138
    %7423 = vmatpush.bf16.msra.mxu0 %v6134
    %7424 = vmatpush.bf16.msra.mxu0 %v6130
    %7425 = vmatpush.bf16.msra.mxu0 %v6126
    %7426 = vmatmul.bf16.gmra.mxu0 %v3132
    %v7427 = vpop.f32.mrf.mxu0
    %v7428 = vadd.f32 %v7415, %v7427
    %v7429 = vpop.f32.mrf.mxu0
    %7430 = vdwg.mxu0
    %7431 = vmatpush.bf16.msra.mxu0 %v6186
    %7432 = vmatpush.bf16.msra.mxu0 %v6182
    %7433 = vmatpush.bf16.msra.mxu0 %v6178
    %7434 = vmatpush.bf16.msra.mxu0 %v6174
    %7435 = vmatpush.bf16.msra.mxu0 %v6170
    %7436 = vmatpush.bf16.msra.mxu0 %v6166
    %7437 = vmatpush.bf16.msra.mxu0 %v6162
    %7438 = vmatpush.bf16.msra.mxu0 %v6158
    %7439 = vmatmul.bf16.gmra.mxu0 %v3133
    %v7440 = vpop.f32.mrf.mxu0
    %v7441 = vadd.f32 %v7428, %v7440
    %v7442 = vpop.f32.mrf.mxu0
    %7443 = vdwg.mxu0
    %7444 = vmatpush.bf16.msra.mxu0 %v6218
    %7445 = vmatpush.bf16.msra.mxu0 %v6214
    %7446 = vmatpush.bf16.msra.mxu0 %v6210
    %7447 = vmatpush.bf16.msra.mxu0 %v6206
    %7448 = vmatpush.bf16.msra.mxu0 %v6202
    %7449 = vmatpush.bf16.msra.mxu0 %v6198
    %7450 = vmatpush.bf16.msra.mxu0 %v6194
    %7451 = vmatpush.bf16.msra.mxu0 %v6190
    %7452 = vmatmul.bf16.gmra.mxu0 %v3134
    %v7453 = vpop.f32.mrf.mxu0
    %v7454 = vadd.f32 %v7441, %v7453
    %v7455 = vpop.f32.mrf.mxu0
    %7456 = vdwg.mxu0
    %7457 = vmatpush.bf16.msra.mxu0 %v6250
    %7458 = vmatpush.bf16.msra.mxu0 %v6246
    %7459 = vmatpush.bf16.msra.mxu0 %v6242
    %7460 = vmatpush.bf16.msra.mxu0 %v6238
    %7461 = vmatpush.bf16.msra.mxu0 %v6234
    %7462 = vmatpush.bf16.msra.mxu0 %v6230
    %7463 = vmatpush.bf16.msra.mxu0 %v6226
    %7464 = vmatpush.bf16.msra.mxu0 %v6222
    %7465 = vmatmul.bf16.gmra.mxu0 %v3135
    %v7466 = vpop.f32.mrf.mxu0
    %v7467 = vadd.f32 %v7454, %v7466
    %v7468 = vpop.f32.mrf.mxu0
    %7469 = vdwg.mxu0
    %7470 = vmatpush.bf16.msra.mxu0 %v6282
    %7471 = vmatpush.bf16.msra.mxu0 %v6278
    %7472 = vmatpush.bf16.msra.mxu0 %v6274
    %7473 = vmatpush.bf16.msra.mxu0 %v6270
    %7474 = vmatpush.bf16.msra.mxu0 %v6266
    %7475 = vmatpush.bf16.msra.mxu0 %v6262
    %7476 = vmatpush.bf16.msra.mxu0 %v6258
    %7477 = vmatpush.bf16.msra.mxu0 %v6254
    %7478 = vmatmul.bf16.gmra.mxu0 %v3136
    %v7479 = vpop.f32.mrf.mxu0
    %v7480 = vadd.f32 %v7467, %v7479
    %v7481 = vpop.f32.mrf.mxu0
    %7482 = vdwg.mxu0
    %7483 = vmatpush.bf16.msra.mxu0 %v6314
    %7484 = vmatpush.bf16.msra.mxu0 %v6310
    %7485 = vmatpush.bf16.msra.mxu0 %v6306
    %7486 = vmatpush.bf16.msra.mxu0 %v6302
    %7487 = vmatpush.bf16.msra.mxu0 %v6298
    %7488 = vmatpush.bf16.msra.mxu0 %v6294
    %7489 = vmatpush.bf16.msra.mxu0 %v6290
    %7490 = vmatpush.bf16.msra.mxu0 %v6286
    %7491 = vmatmul.bf16.gmra.mxu0 %v3137
    %v7492 = vpop.f32.mrf.mxu0
    %v7493 = vadd.f32 %v7480, %v7492
    %v7494 = vpop.f32.mrf.mxu0
    %7495 = vdwg.mxu0
    %7496 = vmatpush.bf16.msra.mxu0 %v6346
    %7497 = vmatpush.bf16.msra.mxu0 %v6342
    %7498 = vmatpush.bf16.msra.mxu0 %v6338
    %7499 = vmatpush.bf16.msra.mxu0 %v6334
    %7500 = vmatpush.bf16.msra.mxu0 %v6330
    %7501 = vmatpush.bf16.msra.mxu0 %v6326
    %7502 = vmatpush.bf16.msra.mxu0 %v6322
    %7503 = vmatpush.bf16.msra.mxu0 %v6318
    %7504 = vmatmul.bf16.gmra.mxu0 %v3138
    %v7505 = vpop.f32.mrf.mxu0
    %v7506 = vadd.f32 %v7493, %v7505
    %v7507 = vpop.f32.mrf.mxu0
    %7508 = vdwg.mxu0
    %7509 = vmatpush.bf16.msra.mxu0 %v5739
    %7510 = vmatpush.bf16.msra.mxu0 %v5735
    %7511 = vmatpush.bf16.msra.mxu0 %v5731
    %7512 = vmatpush.bf16.msra.mxu0 %v5727
    %7513 = vmatpush.bf16.msra.mxu0 %v5723
    %7514 = vmatpush.bf16.msra.mxu0 %v5719
    %7515 = vmatpush.bf16.msra.mxu0 %v5715
    %7516 = vmatpush.bf16.msra.mxu0 %v5711
    %7517 = vmatmul.bf16.gmra.mxu0 %v3119
    %v7518 = vpop.f32.mrf.mxu0
    %v7519 = vadd.f32 %v3783, %v7518
    %v7520 = vpop.f32.mrf.mxu0
    %7521 = vdwg.mxu0
    %7522 = vmatpush.bf16.msra.mxu0 %v5771
    %7523 = vmatpush.bf16.msra.mxu0 %v5767
    %7524 = vmatpush.bf16.msra.mxu0 %v5763
    %7525 = vmatpush.bf16.msra.mxu0 %v5759
    %7526 = vmatpush.bf16.msra.mxu0 %v5755
    %7527 = vmatpush.bf16.msra.mxu0 %v5751
    %7528 = vmatpush.bf16.msra.mxu0 %v5747
    %7529 = vmatpush.bf16.msra.mxu0 %v5743
    %7530 = vmatmul.bf16.gmra.mxu0 %v3120
    %v7531 = vpop.f32.mrf.mxu0
    %v7532 = vadd.f32 %v7519, %v7531
    %v7533 = vpop.f32.mrf.mxu0
    %7534 = vdwg.mxu0
    %7535 = vmatpush.bf16.msra.mxu0 %v5803
    %7536 = vmatpush.bf16.msra.mxu0 %v5799
    %7537 = vmatpush.bf16.msra.mxu0 %v5795
    %7538 = vmatpush.bf16.msra.mxu0 %v5791
    %7539 = vmatpush.bf16.msra.mxu0 %v5787
    %7540 = vmatpush.bf16.msra.mxu0 %v5783
    %7541 = vmatpush.bf16.msra.mxu0 %v5779
    %7542 = vmatpush.bf16.msra.mxu0 %v5775
    %7543 = vmatmul.bf16.gmra.mxu0 %v3121
    %v7544 = vpop.f32.mrf.mxu0
    %v7545 = vadd.f32 %v7532, %v7544
    %v7546 = vpop.f32.mrf.mxu0
    %7547 = vdwg.mxu0
    %7548 = vmatpush.bf16.msra.mxu0 %v5835
    %7549 = vmatpush.bf16.msra.mxu0 %v5831
    %7550 = vmatpush.bf16.msra.mxu0 %v5827
    %7551 = vmatpush.bf16.msra.mxu0 %v5823
    %7552 = vmatpush.bf16.msra.mxu0 %v5819
    %7553 = vmatpush.bf16.msra.mxu0 %v5815
    %7554 = vmatpush.bf16.msra.mxu0 %v5811
    %7555 = vmatpush.bf16.msra.mxu0 %v5807
    %7556 = vmatmul.bf16.gmra.mxu0 %v3122
    %v7557 = vpop.f32.mrf.mxu0
    %v7558 = vadd.f32 %v7545, %v7557
    %v7559 = vpop.f32.mrf.mxu0
    %7560 = vdwg.mxu0
    %7561 = vmatpush.bf16.msra.mxu0 %v5867
    %7562 = vmatpush.bf16.msra.mxu0 %v5863
    %7563 = vmatpush.bf16.msra.mxu0 %v5859
    %7564 = vmatpush.bf16.msra.mxu0 %v5855
    %7565 = vmatpush.bf16.msra.mxu0 %v5851
    %7566 = vmatpush.bf16.msra.mxu0 %v5847
    %7567 = vmatpush.bf16.msra.mxu0 %v5843
    %7568 = vmatpush.bf16.msra.mxu0 %v5839
    %7569 = vmatmul.bf16.gmra.mxu0 %v3123
    %v7570 = vpop.f32.mrf.mxu0
    %v7571 = vadd.f32 %v7558, %v7570
    %v7572 = vpop.f32.mrf.mxu0
    %7573 = vdwg.mxu0
    %7574 = vmatpush.bf16.msra.mxu0 %v5899
    %7575 = vmatpush.bf16.msra.mxu0 %v5895
    %7576 = vmatpush.bf16.msra.mxu0 %v5891
    %7577 = vmatpush.bf16.msra.mxu0 %v5887
    %7578 = vmatpush.bf16.msra.mxu0 %v5883
    %7579 = vmatpush.bf16.msra.mxu0 %v5879
    %7580 = vmatpush.bf16.msra.mxu0 %v5875
    %7581 = vmatpush.bf16.msra.mxu0 %v5871
    %7582 = vmatmul.bf16.gmra.mxu0 %v3124
    %v7583 = vpop.f32.mrf.mxu0
    %v7584 = vadd.f32 %v7571, %v7583
    %v7585 = vpop.f32.mrf.mxu0
    %7586 = vdwg.mxu0
    %7587 = vmatpush.bf16.msra.mxu0 %v5931
    %7588 = vmatpush.bf16.msra.mxu0 %v5927
    %7589 = vmatpush.bf16.msra.mxu0 %v5923
    %7590 = vmatpush.bf16.msra.mxu0 %v5919
    %7591 = vmatpush.bf16.msra.mxu0 %v5915
    %7592 = vmatpush.bf16.msra.mxu0 %v5911
    %7593 = vmatpush.bf16.msra.mxu0 %v5907
    %7594 = vmatpush.bf16.msra.mxu0 %v5903
    %7595 = vmatmul.bf16.gmra.mxu0 %v3125
    %v7596 = vpop.f32.mrf.mxu0
    %v7597 = vadd.f32 %v7584, %v7596
    %v7598 = vpop.f32.mrf.mxu0
    %7599 = vdwg.mxu0
    %7600 = vmatpush.bf16.msra.mxu0 %v5963
    %7601 = vmatpush.bf16.msra.mxu0 %v5959
    %7602 = vmatpush.bf16.msra.mxu0 %v5955
    %7603 = vmatpush.bf16.msra.mxu0 %v5951
    %7604 = vmatpush.bf16.msra.mxu0 %v5947
    %7605 = vmatpush.bf16.msra.mxu0 %v5943
    %7606 = vmatpush.bf16.msra.mxu0 %v5939
    %7607 = vmatpush.bf16.msra.mxu0 %v5935
    %7608 = vmatmul.bf16.gmra.mxu0 %v3126
    %v7609 = vpop.f32.mrf.mxu0
    %v7610 = vadd.f32 %v7597, %v7609
    %v7611 = vpop.f32.mrf.mxu0
    %7612 = vdwg.mxu0
    %7613 = vmatpush.bf16.msra.mxu0 %v5995
    %7614 = vmatpush.bf16.msra.mxu0 %v5991
    %7615 = vmatpush.bf16.msra.mxu0 %v5987
    %7616 = vmatpush.bf16.msra.mxu0 %v5983
    %7617 = vmatpush.bf16.msra.mxu0 %v5979
    %7618 = vmatpush.bf16.msra.mxu0 %v5975
    %7619 = vmatpush.bf16.msra.mxu0 %v5971
    %7620 = vmatpush.bf16.msra.mxu0 %v5967
    %7621 = vmatmul.bf16.gmra.mxu0 %v3127
    %v7622 = vpop.f32.mrf.mxu0
    %v7623 = vadd.f32 %v7610, %v7622
    %v7624 = vpop.f32.mrf.mxu0
    %7625 = vdwg.mxu0
    %7626 = vmatpush.bf16.msra.mxu0 %v6027
    %7627 = vmatpush.bf16.msra.mxu0 %v6023
    %7628 = vmatpush.bf16.msra.mxu0 %v6019
    %7629 = vmatpush.bf16.msra.mxu0 %v6015
    %7630 = vmatpush.bf16.msra.mxu0 %v6011
    %7631 = vmatpush.bf16.msra.mxu0 %v6007
    %7632 = vmatpush.bf16.msra.mxu0 %v6003
    %7633 = vmatpush.bf16.msra.mxu0 %v5999
    %7634 = vmatmul.bf16.gmra.mxu0 %v3128
    %v7635 = vpop.f32.mrf.mxu0
    %v7636 = vadd.f32 %v7623, %v7635
    %v7637 = vpop.f32.mrf.mxu0
    %7638 = vdwg.mxu0
    %7639 = vmatpush.bf16.msra.mxu0 %v6059
    %7640 = vmatpush.bf16.msra.mxu0 %v6055
    %7641 = vmatpush.bf16.msra.mxu0 %v6051
    %7642 = vmatpush.bf16.msra.mxu0 %v6047
    %7643 = vmatpush.bf16.msra.mxu0 %v6043
    %7644 = vmatpush.bf16.msra.mxu0 %v6039
    %7645 = vmatpush.bf16.msra.mxu0 %v6035
    %7646 = vmatpush.bf16.msra.mxu0 %v6031
    %7647 = vmatmul.bf16.gmra.mxu0 %v3129
    %v7648 = vpop.f32.mrf.mxu0
    %v7649 = vadd.f32 %v7636, %v7648
    %v7650 = vpop.f32.mrf.mxu0
    %7651 = vdwg.mxu0
    %7652 = vmatpush.bf16.msra.mxu0 %v6091
    %7653 = vmatpush.bf16.msra.mxu0 %v6087
    %7654 = vmatpush.bf16.msra.mxu0 %v6083
    %7655 = vmatpush.bf16.msra.mxu0 %v6079
    %7656 = vmatpush.bf16.msra.mxu0 %v6075
    %7657 = vmatpush.bf16.msra.mxu0 %v6071
    %7658 = vmatpush.bf16.msra.mxu0 %v6067
    %7659 = vmatpush.bf16.msra.mxu0 %v6063
    %7660 = vmatmul.bf16.gmra.mxu0 %v3130
    %v7661 = vpop.f32.mrf.mxu0
    %v7662 = vadd.f32 %v7649, %v7661
    %v7663 = vpop.f32.mrf.mxu0
    %7664 = vdwg.mxu0
    %7665 = vmatpush.bf16.msra.mxu0 %v6123
    %7666 = vmatpush.bf16.msra.mxu0 %v6119
    %7667 = vmatpush.bf16.msra.mxu0 %v6115
    %7668 = vmatpush.bf16.msra.mxu0 %v6111
    %7669 = vmatpush.bf16.msra.mxu0 %v6107
    %7670 = vmatpush.bf16.msra.mxu0 %v6103
    %7671 = vmatpush.bf16.msra.mxu0 %v6099
    %7672 = vmatpush.bf16.msra.mxu0 %v6095
    %7673 = vmatmul.bf16.gmra.mxu0 %v3131
    %v7674 = vpop.f32.mrf.mxu0
    %v7675 = vadd.f32 %v7662, %v7674
    %v7676 = vpop.f32.mrf.mxu0
    %7677 = vdwg.mxu0
    %7678 = vmatpush.bf16.msra.mxu0 %v6155
    %7679 = vmatpush.bf16.msra.mxu0 %v6151
    %7680 = vmatpush.bf16.msra.mxu0 %v6147
    %7681 = vmatpush.bf16.msra.mxu0 %v6143
    %7682 = vmatpush.bf16.msra.mxu0 %v6139
    %7683 = vmatpush.bf16.msra.mxu0 %v6135
    %7684 = vmatpush.bf16.msra.mxu0 %v6131
    %7685 = vmatpush.bf16.msra.mxu0 %v6127
    %7686 = vmatmul.bf16.gmra.mxu0 %v3132
    %v7687 = vpop.f32.mrf.mxu0
    %v7688 = vadd.f32 %v7675, %v7687
    %v7689 = vpop.f32.mrf.mxu0
    %7690 = vdwg.mxu0
    %7691 = vmatpush.bf16.msra.mxu0 %v6187
    %7692 = vmatpush.bf16.msra.mxu0 %v6183
    %7693 = vmatpush.bf16.msra.mxu0 %v6179
    %7694 = vmatpush.bf16.msra.mxu0 %v6175
    %7695 = vmatpush.bf16.msra.mxu0 %v6171
    %7696 = vmatpush.bf16.msra.mxu0 %v6167
    %7697 = vmatpush.bf16.msra.mxu0 %v6163
    %7698 = vmatpush.bf16.msra.mxu0 %v6159
    %7699 = vmatmul.bf16.gmra.mxu0 %v3133
    %v7700 = vpop.f32.mrf.mxu0
    %v7701 = vadd.f32 %v7688, %v7700
    %v7702 = vpop.f32.mrf.mxu0
    %7703 = vdwg.mxu0
    %7704 = vmatpush.bf16.msra.mxu0 %v6219
    %7705 = vmatpush.bf16.msra.mxu0 %v6215
    %7706 = vmatpush.bf16.msra.mxu0 %v6211
    %7707 = vmatpush.bf16.msra.mxu0 %v6207
    %7708 = vmatpush.bf16.msra.mxu0 %v6203
    %7709 = vmatpush.bf16.msra.mxu0 %v6199
    %7710 = vmatpush.bf16.msra.mxu0 %v6195
    %7711 = vmatpush.bf16.msra.mxu0 %v6191
    %7712 = vmatmul.bf16.gmra.mxu0 %v3134
    %v7713 = vpop.f32.mrf.mxu0
    %v7714 = vadd.f32 %v7701, %v7713
    %v7715 = vpop.f32.mrf.mxu0
    %7716 = vdwg.mxu0
    %7717 = vmatpush.bf16.msra.mxu0 %v6251
    %7718 = vmatpush.bf16.msra.mxu0 %v6247
    %7719 = vmatpush.bf16.msra.mxu0 %v6243
    %7720 = vmatpush.bf16.msra.mxu0 %v6239
    %7721 = vmatpush.bf16.msra.mxu0 %v6235
    %7722 = vmatpush.bf16.msra.mxu0 %v6231
    %7723 = vmatpush.bf16.msra.mxu0 %v6227
    %7724 = vmatpush.bf16.msra.mxu0 %v6223
    %7725 = vmatmul.bf16.gmra.mxu0 %v3135
    %v7726 = vpop.f32.mrf.mxu0
    %v7727 = vadd.f32 %v7714, %v7726
    %v7728 = vpop.f32.mrf.mxu0
    %7729 = vdwg.mxu0
    %7730 = vmatpush.bf16.msra.mxu0 %v6283
    %7731 = vmatpush.bf16.msra.mxu0 %v6279
    %7732 = vmatpush.bf16.msra.mxu0 %v6275
    %7733 = vmatpush.bf16.msra.mxu0 %v6271
    %7734 = vmatpush.bf16.msra.mxu0 %v6267
    %7735 = vmatpush.bf16.msra.mxu0 %v6263
    %7736 = vmatpush.bf16.msra.mxu0 %v6259
    %7737 = vmatpush.bf16.msra.mxu0 %v6255
    %7738 = vmatmul.bf16.gmra.mxu0 %v3136
    %v7739 = vpop.f32.mrf.mxu0
    %v7740 = vadd.f32 %v7727, %v7739
    %v7741 = vpop.f32.mrf.mxu0
    %7742 = vdwg.mxu0
    %7743 = vmatpush.bf16.msra.mxu0 %v6315
    %7744 = vmatpush.bf16.msra.mxu0 %v6311
    %7745 = vmatpush.bf16.msra.mxu0 %v6307
    %7746 = vmatpush.bf16.msra.mxu0 %v6303
    %7747 = vmatpush.bf16.msra.mxu0 %v6299
    %7748 = vmatpush.bf16.msra.mxu0 %v6295
    %7749 = vmatpush.bf16.msra.mxu0 %v6291
    %7750 = vmatpush.bf16.msra.mxu0 %v6287
    %7751 = vmatmul.bf16.gmra.mxu0 %v3137
    %v7752 = vpop.f32.mrf.mxu0
    %v7753 = vadd.f32 %v7740, %v7752
    %v7754 = vpop.f32.mrf.mxu0
    %7755 = vdwg.mxu0
    %7756 = vmatpush.bf16.msra.mxu0 %v6347
    %7757 = vmatpush.bf16.msra.mxu0 %v6343
    %7758 = vmatpush.bf16.msra.mxu0 %v6339
    %7759 = vmatpush.bf16.msra.mxu0 %v6335
    %7760 = vmatpush.bf16.msra.mxu0 %v6331
    %7761 = vmatpush.bf16.msra.mxu0 %v6327
    %7762 = vmatpush.bf16.msra.mxu0 %v6323
    %7763 = vmatpush.bf16.msra.mxu0 %v6319
    %7764 = vmatmul.bf16.gmra.mxu0 %v3138
    %v7765 = vpop.f32.mrf.mxu0
    %v7766 = vadd.f32 %v7753, %v7765
    %v7767 = vpop.f32.mrf.mxu0
    %7768 = vdwg.mxu0
    %7769 = vmatpush.bf16.msra.mxu0 %v5740
    %7770 = vmatpush.bf16.msra.mxu0 %v5736
    %7771 = vmatpush.bf16.msra.mxu0 %v5732
    %7772 = vmatpush.bf16.msra.mxu0 %v5728
    %7773 = vmatpush.bf16.msra.mxu0 %v5724
    %7774 = vmatpush.bf16.msra.mxu0 %v5720
    %7775 = vmatpush.bf16.msra.mxu0 %v5716
    %7776 = vmatpush.bf16.msra.mxu0 %v5712
    %7777 = vmatmul.bf16.gmra.mxu0 %v3119
    %v7778 = vpop.f32.mrf.mxu0
    %v7779 = vadd.f32 %v3784, %v7778
    %v7780 = vpop.f32.mrf.mxu0
    %7781 = vdwg.mxu0
    %7782 = vmatpush.bf16.msra.mxu0 %v5772
    %7783 = vmatpush.bf16.msra.mxu0 %v5768
    %7784 = vmatpush.bf16.msra.mxu0 %v5764
    %7785 = vmatpush.bf16.msra.mxu0 %v5760
    %7786 = vmatpush.bf16.msra.mxu0 %v5756
    %7787 = vmatpush.bf16.msra.mxu0 %v5752
    %7788 = vmatpush.bf16.msra.mxu0 %v5748
    %7789 = vmatpush.bf16.msra.mxu0 %v5744
    %7790 = vmatmul.bf16.gmra.mxu0 %v3120
    %v7791 = vpop.f32.mrf.mxu0
    %v7792 = vadd.f32 %v7779, %v7791
    %v7793 = vpop.f32.mrf.mxu0
    %7794 = vdwg.mxu0
    %7795 = vmatpush.bf16.msra.mxu0 %v5804
    %7796 = vmatpush.bf16.msra.mxu0 %v5800
    %7797 = vmatpush.bf16.msra.mxu0 %v5796
    %7798 = vmatpush.bf16.msra.mxu0 %v5792
    %7799 = vmatpush.bf16.msra.mxu0 %v5788
    %7800 = vmatpush.bf16.msra.mxu0 %v5784
    %7801 = vmatpush.bf16.msra.mxu0 %v5780
    %7802 = vmatpush.bf16.msra.mxu0 %v5776
    %7803 = vmatmul.bf16.gmra.mxu0 %v3121
    %v7804 = vpop.f32.mrf.mxu0
    %v7805 = vadd.f32 %v7792, %v7804
    %v7806 = vpop.f32.mrf.mxu0
    %7807 = vdwg.mxu0
    %7808 = vmatpush.bf16.msra.mxu0 %v5836
    %7809 = vmatpush.bf16.msra.mxu0 %v5832
    %7810 = vmatpush.bf16.msra.mxu0 %v5828
    %7811 = vmatpush.bf16.msra.mxu0 %v5824
    %7812 = vmatpush.bf16.msra.mxu0 %v5820
    %7813 = vmatpush.bf16.msra.mxu0 %v5816
    %7814 = vmatpush.bf16.msra.mxu0 %v5812
    %7815 = vmatpush.bf16.msra.mxu0 %v5808
    %7816 = vmatmul.bf16.gmra.mxu0 %v3122
    %v7817 = vpop.f32.mrf.mxu0
    %v7818 = vadd.f32 %v7805, %v7817
    %v7819 = vpop.f32.mrf.mxu0
    %7820 = vdwg.mxu0
    %7821 = vmatpush.bf16.msra.mxu0 %v5868
    %7822 = vmatpush.bf16.msra.mxu0 %v5864
    %7823 = vmatpush.bf16.msra.mxu0 %v5860
    %7824 = vmatpush.bf16.msra.mxu0 %v5856
    %7825 = vmatpush.bf16.msra.mxu0 %v5852
    %7826 = vmatpush.bf16.msra.mxu0 %v5848
    %7827 = vmatpush.bf16.msra.mxu0 %v5844
    %7828 = vmatpush.bf16.msra.mxu0 %v5840
    %7829 = vmatmul.bf16.gmra.mxu0 %v3123
    %v7830 = vpop.f32.mrf.mxu0
    %v7831 = vadd.f32 %v7818, %v7830
    %v7832 = vpop.f32.mrf.mxu0
    %7833 = vdwg.mxu0
    %7834 = vmatpush.bf16.msra.mxu0 %v5900
    %7835 = vmatpush.bf16.msra.mxu0 %v5896
    %7836 = vmatpush.bf16.msra.mxu0 %v5892
    %7837 = vmatpush.bf16.msra.mxu0 %v5888
    %7838 = vmatpush.bf16.msra.mxu0 %v5884
    %7839 = vmatpush.bf16.msra.mxu0 %v5880
    %7840 = vmatpush.bf16.msra.mxu0 %v5876
    %7841 = vmatpush.bf16.msra.mxu0 %v5872
    %7842 = vmatmul.bf16.gmra.mxu0 %v3124
    %v7843 = vpop.f32.mrf.mxu0
    %v7844 = vadd.f32 %v7831, %v7843
    %v7845 = vpop.f32.mrf.mxu0
    %7846 = vdwg.mxu0
    %7847 = vmatpush.bf16.msra.mxu0 %v5932
    %7848 = vmatpush.bf16.msra.mxu0 %v5928
    %7849 = vmatpush.bf16.msra.mxu0 %v5924
    %7850 = vmatpush.bf16.msra.mxu0 %v5920
    %7851 = vmatpush.bf16.msra.mxu0 %v5916
    %7852 = vmatpush.bf16.msra.mxu0 %v5912
    %7853 = vmatpush.bf16.msra.mxu0 %v5908
    %7854 = vmatpush.bf16.msra.mxu0 %v5904
    %7855 = vmatmul.bf16.gmra.mxu0 %v3125
    %v7856 = vpop.f32.mrf.mxu0
    %v7857 = vadd.f32 %v7844, %v7856
    %v7858 = vpop.f32.mrf.mxu0
    %7859 = vdwg.mxu0
    %7860 = vmatpush.bf16.msra.mxu0 %v5964
    %7861 = vmatpush.bf16.msra.mxu0 %v5960
    %7862 = vmatpush.bf16.msra.mxu0 %v5956
    %7863 = vmatpush.bf16.msra.mxu0 %v5952
    %7864 = vmatpush.bf16.msra.mxu0 %v5948
    %7865 = vmatpush.bf16.msra.mxu0 %v5944
    %7866 = vmatpush.bf16.msra.mxu0 %v5940
    %7867 = vmatpush.bf16.msra.mxu0 %v5936
    %7868 = vmatmul.bf16.gmra.mxu0 %v3126
    %v7869 = vpop.f32.mrf.mxu0
    %v7870 = vadd.f32 %v7857, %v7869
    %v7871 = vpop.f32.mrf.mxu0
    %7872 = vdwg.mxu0
    %7873 = vmatpush.bf16.msra.mxu0 %v5996
    %7874 = vmatpush.bf16.msra.mxu0 %v5992
    %7875 = vmatpush.bf16.msra.mxu0 %v5988
    %7876 = vmatpush.bf16.msra.mxu0 %v5984
    %7877 = vmatpush.bf16.msra.mxu0 %v5980
    %7878 = vmatpush.bf16.msra.mxu0 %v5976
    %7879 = vmatpush.bf16.msra.mxu0 %v5972
    %7880 = vmatpush.bf16.msra.mxu0 %v5968
    %7881 = vmatmul.bf16.gmra.mxu0 %v3127
    %v7882 = vpop.f32.mrf.mxu0
    %v7883 = vadd.f32 %v7870, %v7882
    %v7884 = vpop.f32.mrf.mxu0
    %7885 = vdwg.mxu0
    %7886 = vmatpush.bf16.msra.mxu0 %v6028
    %7887 = vmatpush.bf16.msra.mxu0 %v6024
    %7888 = vmatpush.bf16.msra.mxu0 %v6020
    %7889 = vmatpush.bf16.msra.mxu0 %v6016
    %7890 = vmatpush.bf16.msra.mxu0 %v6012
    %7891 = vmatpush.bf16.msra.mxu0 %v6008
    %7892 = vmatpush.bf16.msra.mxu0 %v6004
    %7893 = vmatpush.bf16.msra.mxu0 %v6000
    %7894 = vmatmul.bf16.gmra.mxu0 %v3128
    %v7895 = vpop.f32.mrf.mxu0
    %v7896 = vadd.f32 %v7883, %v7895
    %v7897 = vpop.f32.mrf.mxu0
    %7898 = vdwg.mxu0
    %7899 = vmatpush.bf16.msra.mxu0 %v6060
    %7900 = vmatpush.bf16.msra.mxu0 %v6056
    %7901 = vmatpush.bf16.msra.mxu0 %v6052
    %7902 = vmatpush.bf16.msra.mxu0 %v6048
    %7903 = vmatpush.bf16.msra.mxu0 %v6044
    %7904 = vmatpush.bf16.msra.mxu0 %v6040
    %7905 = vmatpush.bf16.msra.mxu0 %v6036
    %7906 = vmatpush.bf16.msra.mxu0 %v6032
    %7907 = vmatmul.bf16.gmra.mxu0 %v3129
    %v7908 = vpop.f32.mrf.mxu0
    %v7909 = vadd.f32 %v7896, %v7908
    %v7910 = vpop.f32.mrf.mxu0
    %7911 = vdwg.mxu0
    %7912 = vmatpush.bf16.msra.mxu0 %v6092
    %7913 = vmatpush.bf16.msra.mxu0 %v6088
    %7914 = vmatpush.bf16.msra.mxu0 %v6084
    %7915 = vmatpush.bf16.msra.mxu0 %v6080
    %7916 = vmatpush.bf16.msra.mxu0 %v6076
    %7917 = vmatpush.bf16.msra.mxu0 %v6072
    %7918 = vmatpush.bf16.msra.mxu0 %v6068
    %7919 = vmatpush.bf16.msra.mxu0 %v6064
    %7920 = vmatmul.bf16.gmra.mxu0 %v3130
    %v7921 = vpop.f32.mrf.mxu0
    %v7922 = vadd.f32 %v7909, %v7921
    %v7923 = vpop.f32.mrf.mxu0
    %7924 = vdwg.mxu0
    %7925 = vmatpush.bf16.msra.mxu0 %v6124
    %7926 = vmatpush.bf16.msra.mxu0 %v6120
    %7927 = vmatpush.bf16.msra.mxu0 %v6116
    %7928 = vmatpush.bf16.msra.mxu0 %v6112
    %7929 = vmatpush.bf16.msra.mxu0 %v6108
    %7930 = vmatpush.bf16.msra.mxu0 %v6104
    %7931 = vmatpush.bf16.msra.mxu0 %v6100
    %7932 = vmatpush.bf16.msra.mxu0 %v6096
    %7933 = vmatmul.bf16.gmra.mxu0 %v3131
    %v7934 = vpop.f32.mrf.mxu0
    %v7935 = vadd.f32 %v7922, %v7934
    %v7936 = vpop.f32.mrf.mxu0
    %7937 = vdwg.mxu0
    %7938 = vmatpush.bf16.msra.mxu0 %v6156
    %7939 = vmatpush.bf16.msra.mxu0 %v6152
    %7940 = vmatpush.bf16.msra.mxu0 %v6148
    %7941 = vmatpush.bf16.msra.mxu0 %v6144
    %7942 = vmatpush.bf16.msra.mxu0 %v6140
    %7943 = vmatpush.bf16.msra.mxu0 %v6136
    %7944 = vmatpush.bf16.msra.mxu0 %v6132
    %7945 = vmatpush.bf16.msra.mxu0 %v6128
    %7946 = vmatmul.bf16.gmra.mxu0 %v3132
    %v7947 = vpop.f32.mrf.mxu0
    %v7948 = vadd.f32 %v7935, %v7947
    %v7949 = vpop.f32.mrf.mxu0
    %7950 = vdwg.mxu0
    %7951 = vmatpush.bf16.msra.mxu0 %v6188
    %7952 = vmatpush.bf16.msra.mxu0 %v6184
    %7953 = vmatpush.bf16.msra.mxu0 %v6180
    %7954 = vmatpush.bf16.msra.mxu0 %v6176
    %7955 = vmatpush.bf16.msra.mxu0 %v6172
    %7956 = vmatpush.bf16.msra.mxu0 %v6168
    %7957 = vmatpush.bf16.msra.mxu0 %v6164
    %7958 = vmatpush.bf16.msra.mxu0 %v6160
    %7959 = vmatmul.bf16.gmra.mxu0 %v3133
    %v7960 = vpop.f32.mrf.mxu0
    %v7961 = vadd.f32 %v7948, %v7960
    %v7962 = vpop.f32.mrf.mxu0
    %7963 = vdwg.mxu0
    %7964 = vmatpush.bf16.msra.mxu0 %v6220
    %7965 = vmatpush.bf16.msra.mxu0 %v6216
    %7966 = vmatpush.bf16.msra.mxu0 %v6212
    %7967 = vmatpush.bf16.msra.mxu0 %v6208
    %7968 = vmatpush.bf16.msra.mxu0 %v6204
    %7969 = vmatpush.bf16.msra.mxu0 %v6200
    %7970 = vmatpush.bf16.msra.mxu0 %v6196
    %7971 = vmatpush.bf16.msra.mxu0 %v6192
    %7972 = vmatmul.bf16.gmra.mxu0 %v3134
    %v7973 = vpop.f32.mrf.mxu0
    %v7974 = vadd.f32 %v7961, %v7973
    %v7975 = vpop.f32.mrf.mxu0
    %7976 = vdwg.mxu0
    %7977 = vmatpush.bf16.msra.mxu0 %v6252
    %7978 = vmatpush.bf16.msra.mxu0 %v6248
    %7979 = vmatpush.bf16.msra.mxu0 %v6244
    %7980 = vmatpush.bf16.msra.mxu0 %v6240
    %7981 = vmatpush.bf16.msra.mxu0 %v6236
    %7982 = vmatpush.bf16.msra.mxu0 %v6232
    %7983 = vmatpush.bf16.msra.mxu0 %v6228
    %7984 = vmatpush.bf16.msra.mxu0 %v6224
    %7985 = vmatmul.bf16.gmra.mxu0 %v3135
    %v7986 = vpop.f32.mrf.mxu0
    %v7987 = vadd.f32 %v7974, %v7986
    %v7988 = vpop.f32.mrf.mxu0
    %7989 = vdwg.mxu0
    %7990 = vmatpush.bf16.msra.mxu0 %v6284
    %7991 = vmatpush.bf16.msra.mxu0 %v6280
    %7992 = vmatpush.bf16.msra.mxu0 %v6276
    %7993 = vmatpush.bf16.msra.mxu0 %v6272
    %7994 = vmatpush.bf16.msra.mxu0 %v6268
    %7995 = vmatpush.bf16.msra.mxu0 %v6264
    %7996 = vmatpush.bf16.msra.mxu0 %v6260
    %7997 = vmatpush.bf16.msra.mxu0 %v6256
    %7998 = vmatmul.bf16.gmra.mxu0 %v3136
    %v7999 = vpop.f32.mrf.mxu0
    %v8000 = vadd.f32 %v7987, %v7999
    %v8001 = vpop.f32.mrf.mxu0
    %8002 = vdwg.mxu0
    %8003 = vmatpush.bf16.msra.mxu0 %v6316
    %8004 = vmatpush.bf16.msra.mxu0 %v6312
    %8005 = vmatpush.bf16.msra.mxu0 %v6308
    %8006 = vmatpush.bf16.msra.mxu0 %v6304
    %8007 = vmatpush.bf16.msra.mxu0 %v6300
    %8008 = vmatpush.bf16.msra.mxu0 %v6296
    %8009 = vmatpush.bf16.msra.mxu0 %v6292
    %8010 = vmatpush.bf16.msra.mxu0 %v6288
    %8011 = vmatmul.bf16.gmra.mxu0 %v3137
    %v8012 = vpop.f32.mrf.mxu0
    %v8013 = vadd.f32 %v8000, %v8012
    %v8014 = vpop.f32.mrf.mxu0
    %8015 = vdwg.mxu0
    %8016 = vmatpush.bf16.msra.mxu0 %v6348
    %8017 = vmatpush.bf16.msra.mxu0 %v6344
    %8018 = vmatpush.bf16.msra.mxu0 %v6340
    %8019 = vmatpush.bf16.msra.mxu0 %v6336
    %8020 = vmatpush.bf16.msra.mxu0 %v6332
    %8021 = vmatpush.bf16.msra.mxu0 %v6328
    %8022 = vmatpush.bf16.msra.mxu0 %v6324
    %8023 = vmatpush.bf16.msra.mxu0 %v6320
    %8024 = vmatmul.bf16.gmra.mxu0 %v3138
    %v8025 = vpop.f32.mrf.mxu0
    %v8026 = vadd.f32 %v8013, %v8025
    %v8027 = vpop.f32.mrf.mxu0
    %8028 = vdwg.mxu0
    %v8029 = vmax.f32 %v7246, 0.0
    %v8030 = vmax.f32 %v7506, 0.0
    %v8031 = vmax.f32 %v7766, 0.0
    %v8032 = vmax.f32 %v8026, 0.0
    %v8033 = vpack.c.bf16 %v8029, %v8029
    %v8034 = vpack.c.bf16 %v8030, %v8030
    %v8035 = vpack.c.bf16 %v8031, %v8031
    %v8036 = vpack.c.bf16 %v8032, %v8032
    %v8037 = vld [vmem:[%s7] sm:$0xf]
    %v8038 = vld [vmem:[%s7 + $0x4] sm:$0xf]
    %v8039 = vld [vmem:[%s7 + $0x8] sm:$0xf]
    %v8040 = vld [vmem:[%s7 + $0xc] sm:$0xf]
    %v8041 = vld [vmem:[%s7 + $0x10] sm:$0xf]
    %v8042 = vld [vmem:[%s7 + $0x14] sm:$0xf]
    %v8043 = vld [vmem:[%s7 + $0x18] sm:$0xf]
    %v8044 = vld [vmem:[%s7 + $0x1c] sm:$0xf]
    %v8045 = vld [vmem:[%s7 + $0x20] sm:$0xf]
    %v8046 = vld [vmem:[%s7 + $0x24] sm:$0xf]
    %v8047 = vld [vmem:[%s7 + $0x28] sm:$0xf]
    %v8048 = vld [vmem:[%s7 + $0x2c] sm:$0xf]
    %v8049 = vld [vmem:[%s7 + $0x30] sm:$0xf]
    %v8050 = vld [vmem:[%s7 + $0x34] sm:$0xf]
    %v8051 = vld [vmem:[%s7 + $0x38] sm:$0xf]
    %v8052 = vld [vmem:[%s7 + $0x3c] sm:$0xf]
    %v8053 = vld [vmem:[%s7 + $0x40] sm:$0xf]
    %v8054 = vld [vmem:[%s7 + $0x44] sm:$0xf]
    %v8055 = vld [vmem:[%s7 + $0x48] sm:$0xf]
    %v8056 = vld [vmem:[%s7 + $0x4c] sm:$0xf]
    %v8057 = vld [vmem:[%s7 + $0x50] sm:$0xf]
    %v8058 = vld [vmem:[%s7 + $0x54] sm:$0xf]
    %v8059 = vld [vmem:[%s7 + $0x58] sm:$0xf]
    %v8060 = vld [vmem:[%s7 + $0x5c] sm:$0xf]
    %v8061 = vld [vmem:[%s7 + $0x60] sm:$0xf]
    %v8062 = vld [vmem:[%s7 + $0x64] sm:$0xf]
    %v8063 = vld [vmem:[%s7 + $0x68] sm:$0xf]
    %v8064 = vld [vmem:[%s7 + $0x6c] sm:$0xf]
    %v8065 = vld [vmem:[%s7 + $0x70] sm:$0xf]
    %v8066 = vld [vmem:[%s7 + $0x74] sm:$0xf]
    %v8067 = vld [vmem:[%s7 + $0x78] sm:$0xf]
    %v8068 = vld [vmem:[%s7 + $0x7c] sm:$0xf]
    %v8069 = vld [vmem:[%s7 + $0x80] sm:$0xf]
    %v8070 = vld [vmem:[%s7 + $0x84] sm:$0xf]
    %v8071 = vld [vmem:[%s7 + $0x88] sm:$0xf]
    %v8072 = vld [vmem:[%s7 + $0x8c] sm:$0xf]
    %v8073 = vld [vmem:[%s7 + $0x90] sm:$0xf]
    %v8074 = vld [vmem:[%s7 + $0x94] sm:$0xf]
    %v8075 = vld [vmem:[%s7 + $0x98] sm:$0xf]
    %v8076 = vld [vmem:[%s7 + $0x9c] sm:$0xf]
    %v8077 = vld [vmem:[%s7 + $0xa0] sm:$0xf]
    %v8078 = vld [vmem:[%s7 + $0xa4] sm:$0xf]
    %v8079 = vld [vmem:[%s7 + $0xa8] sm:$0xf]
    %v8080 = vld [vmem:[%s7 + $0xac] sm:$0xf]
    %v8081 = vld [vmem:[%s7 + $0xb0] sm:$0xf]
    %v8082 = vld [vmem:[%s7 + $0xb4] sm:$0xf]
    %v8083 = vld [vmem:[%s7 + $0xb8] sm:$0xf]
    %v8084 = vld [vmem:[%s7 + $0xbc] sm:$0xf]
    %v8085 = vld [vmem:[%s7 + $0xc0] sm:$0xf]
    %v8086 = vld [vmem:[%s7 + $0xc4] sm:$0xf]
    %v8087 = vld [vmem:[%s7 + $0xc8] sm:$0xf]
    %v8088 = vld [vmem:[%s7 + $0xcc] sm:$0xf]
    %v8089 = vld [vmem:[%s7 + $0xd0] sm:$0xf]
    %v8090 = vld [vmem:[%s7 + $0xd4] sm:$0xf]
    %v8091 = vld [vmem:[%s7 + $0xd8] sm:$0xf]
    %v8092 = vld [vmem:[%s7 + $0xdc] sm:$0xf]
    %v8093 = vld [vmem:[%s7 + $0xe0] sm:$0xf]
    %v8094 = vld [vmem:[%s7 + $0xe4] sm:$0xf]
    %v8095 = vld [vmem:[%s7 + $0xe8] sm:$0xf]
    %v8096 = vld [vmem:[%s7 + $0xec] sm:$0xf]
    %v8097 = vld [vmem:[%s7 + $0xf0] sm:$0xf]
    %v8098 = vld [vmem:[%s7 + $0xf4] sm:$0xf]
    %v8099 = vld [vmem:[%s7 + $0xf8] sm:$0xf]
    %v8100 = vld [vmem:[%s7 + $0xfc] sm:$0xf]
    %v8101 = vld [vmem:[#allocation14] sm:$0x1]
    %v8103 = vperm.slane %v8101, 0
    %v8169 = vunpack.c.l.b16 %v8037
    %v8170 = vunpack.c.l.b16 %v8038
    %v8171 = vunpack.c.l.b16 %v8039
    %v8172 = vunpack.c.l.b16 %v8040
    %v8173 = vunpack.c.l.b16 %v8041
    %v8174 = vunpack.c.l.b16 %v8042
    %v8175 = vunpack.c.l.b16 %v8043
    %v8176 = vunpack.c.l.b16 %v8044
    %v8177 = vunpack.c.l.b16 %v8045
    %v8178 = vunpack.c.l.b16 %v8046
    %v8179 = vunpack.c.l.b16 %v8047
    %v8180 = vunpack.c.l.b16 %v8048
    %v8181 = vunpack.c.l.b16 %v8049
    %v8182 = vunpack.c.l.b16 %v8050
    %v8183 = vunpack.c.l.b16 %v8051
    %v8184 = vunpack.c.l.b16 %v8052
    %v8185 = vunpack.c.l.b16 %v8053
    %v8186 = vunpack.c.l.b16 %v8054
    %v8187 = vunpack.c.l.b16 %v8055
    %v8188 = vunpack.c.l.b16 %v8056
    %v8189 = vunpack.c.l.b16 %v8057
    %v8190 = vunpack.c.l.b16 %v8058
    %v8191 = vunpack.c.l.b16 %v8059
    %v8192 = vunpack.c.l.b16 %v8060
    %v8193 = vunpack.c.l.b16 %v8061
    %v8194 = vunpack.c.l.b16 %v8062
    %v8195 = vunpack.c.l.b16 %v8063
    %v8196 = vunpack.c.l.b16 %v8064
    %v8197 = vunpack.c.l.b16 %v8065
    %v8198 = vunpack.c.l.b16 %v8066
    %v8199 = vunpack.c.l.b16 %v8067
    %v8200 = vunpack.c.l.b16 %v8068
    %v8201 = vunpack.c.l.b16 %v8069
    %v8202 = vunpack.c.l.b16 %v8070
    %v8203 = vunpack.c.l.b16 %v8071
    %v8204 = vunpack.c.l.b16 %v8072
    %v8205 = vunpack.c.l.b16 %v8073
    %v8206 = vunpack.c.l.b16 %v8074
    %v8207 = vunpack.c.l.b16 %v8075
    %v8208 = vunpack.c.l.b16 %v8076
    %v8209 = vunpack.c.l.b16 %v8077
    %v8210 = vunpack.c.l.b16 %v8078
    %v8211 = vunpack.c.l.b16 %v8079
    %v8212 = vunpack.c.l.b16 %v8080
    %v8213 = vunpack.c.l.b16 %v8081
    %v8214 = vunpack.c.l.b16 %v8082
    %v8215 = vunpack.c.l.b16 %v8083
    %v8216 = vunpack.c.l.b16 %v8084
    %v8217 = vunpack.c.l.b16 %v8085
    %v8218 = vunpack.c.l.b16 %v8086
    %v8219 = vunpack.c.l.b16 %v8087
    %v8220 = vunpack.c.l.b16 %v8088
    %v8221 = vunpack.c.l.b16 %v8089
    %v8222 = vunpack.c.l.b16 %v8090
    %v8223 = vunpack.c.l.b16 %v8091
    %v8224 = vunpack.c.l.b16 %v8092
    %v8225 = vunpack.c.l.b16 %v8093
    %v8226 = vunpack.c.l.b16 %v8094
    %v8227 = vunpack.c.l.b16 %v8095
    %v8228 = vunpack.c.l.b16 %v8096
    %v8229 = vunpack.c.l.b16 %v8097
    %v8230 = vunpack.c.l.b16 %v8098
    %v8231 = vunpack.c.l.b16 %v8099
    %v8232 = vunpack.c.l.b16 %v8100
    %v8233 = vpack.c.b16 %v8170, %v8169
    %v8234 = vpack.c.b16 %v8172, %v8171
    %v8235 = vpack.c.b16 %v8174, %v8173
    %v8236 = vpack.c.b16 %v8176, %v8175
    %v8237 = vpack.c.b16 %v8178, %v8177
    %v8238 = vpack.c.b16 %v8180, %v8179
    %v8239 = vpack.c.b16 %v8182, %v8181
    %v8240 = vpack.c.b16 %v8184, %v8183
    %v8241 = vpack.c.b16 %v8186, %v8185
    %v8242 = vpack.c.b16 %v8188, %v8187
    %v8243 = vpack.c.b16 %v8190, %v8189
    %v8244 = vpack.c.b16 %v8192, %v8191
    %v8245 = vpack.c.b16 %v8194, %v8193
    %v8246 = vpack.c.b16 %v8196, %v8195
    %v8247 = vpack.c.b16 %v8198, %v8197
    %v8248 = vpack.c.b16 %v8200, %v8199
    %v8249 = vpack.c.b16 %v8202, %v8201
    %v8250 = vpack.c.b16 %v8204, %v8203
    %v8251 = vpack.c.b16 %v8206, %v8205
    %v8252 = vpack.c.b16 %v8208, %v8207
    %v8253 = vpack.c.b16 %v8210, %v8209
    %v8254 = vpack.c.b16 %v8212, %v8211
    %v8255 = vpack.c.b16 %v8214, %v8213
    %v8256 = vpack.c.b16 %v8216, %v8215
    %v8257 = vpack.c.b16 %v8218, %v8217
    %v8258 = vpack.c.b16 %v8220, %v8219
    %v8259 = vpack.c.b16 %v8222, %v8221
    %v8260 = vpack.c.b16 %v8224, %v8223
    %v8261 = vpack.c.b16 %v8226, %v8225
    %v8262 = vpack.c.b16 %v8228, %v8227
    %v8263 = vpack.c.b16 %v8230, %v8229
    %v8264 = vpack.c.b16 %v8232, %v8231
    %8297 = vmatpush.bf16.msra.mxu0 %v8240
    %8298 = vmatpush.bf16.msra.mxu0 %v8239
    %8299 = vmatpush.bf16.msra.mxu0 %v8238
    %8300 = vmatpush.bf16.msra.mxu0 %v8237
    %8301 = vmatpush.bf16.msra.mxu0 %v8236
    %8302 = vmatpush.bf16.msra.mxu0 %v8235
    %8303 = vmatpush.bf16.msra.mxu0 %v8234
    %8304 = vmatpush.bf16.msra.mxu0 %v8233
    %8305 = vmatmul.bf16.gmra.mxu0 %v8033
    %v8306 = vpop.f32.mrf.mxu0
    %v8307 = vadd.f32 %v8103, %v8306
    %v8308 = vpop.f32.mrf.mxu0
    %8309 = vdwg.mxu0
    %8310 = vmatpush.bf16.msra.mxu0 %v8248
    %8311 = vmatpush.bf16.msra.mxu0 %v8247
    %8312 = vmatpush.bf16.msra.mxu0 %v8246
    %8313 = vmatpush.bf16.msra.mxu0 %v8245
    %8314 = vmatpush.bf16.msra.mxu0 %v8244
    %8315 = vmatpush.bf16.msra.mxu0 %v8243
    %8316 = vmatpush.bf16.msra.mxu0 %v8242
    %8317 = vmatpush.bf16.msra.mxu0 %v8241
    %8318 = vmatmul.bf16.gmra.mxu0 %v8034
    %v8319 = vpop.f32.mrf.mxu0
    %v8320 = vadd.f32 %v8307, %v8319
    %v8321 = vpop.f32.mrf.mxu0
    %8322 = vdwg.mxu0
    %8323 = vmatpush.bf16.msra.mxu0 %v8256
    %8324 = vmatpush.bf16.msra.mxu0 %v8255
    %8325 = vmatpush.bf16.msra.mxu0 %v8254
    %8326 = vmatpush.bf16.msra.mxu0 %v8253
    %8327 = vmatpush.bf16.msra.mxu0 %v8252
    %8328 = vmatpush.bf16.msra.mxu0 %v8251
    %8329 = vmatpush.bf16.msra.mxu0 %v8250
    %8330 = vmatpush.bf16.msra.mxu0 %v8249
    %8331 = vmatmul.bf16.gmra.mxu0 %v8035
    %v8332 = vpop.f32.mrf.mxu0
    %v8333 = vadd.f32 %v8320, %v8332
    %v8334 = vpop.f32.mrf.mxu0
    %8335 = vdwg.mxu0
    %8336 = vmatpush.bf16.msra.mxu0 %v8264
    %8337 = vmatpush.bf16.msra.mxu0 %v8263
    %8338 = vmatpush.bf16.msra.mxu0 %v8262
    %8339 = vmatpush.bf16.msra.mxu0 %v8261
    %8340 = vmatpush.bf16.msra.mxu0 %v8260
    %8341 = vmatpush.bf16.msra.mxu0 %v8259
    %8342 = vmatpush.bf16.msra.mxu0 %v8258
    %8343 = vmatpush.bf16.msra.mxu0 %v8257
    %8344 = vmatmul.bf16.gmra.mxu0 %v8036
    %v8345 = vpop.f32.mrf.mxu0
    %v8346 = vadd.f32 %v8333, %v8345
    %v8347 = vpop.f32.mrf.mxu0
    %8348 = vdwg.mxu0
    %vm8349 = vcmask 80896
    %v8350 = vsel %vm8349, %v8346, -inf
    %8351 = vmax.xlane.f32.xlu0 %v8350
    %v8352 = vpop.xlane.xlu0 %8351
    %v8353 = vsub.f32 %v8346, %v8352
    %v8354 = vmul.f32 %v8353, 1.442695
    %v8355 = vpow.pop %v8354
    %v8356 = vsel %vm8349, %v8355, 0.0
    %8357 = vadd.xlane.f32.xlu0 %v8356
    %v8358 = vpop.xlane.xlu0 %8357
    %v8359 = vlog2.pop %v8358
    %v8360 = vmul.f32 %v8359, 0.6931472
    %v8361 = vsub.f32 %v8353, %v8360
    %8362 = vst.msk [vmem:[%s9] sm:$0xff] %vm8349, %v8361
    // Predicated region
    $region66: #{convnet_forward.1} parent=1 // pred_check
      _
    $region67: #{convnet_forward.1} parent=1 // pred_check_branch
      %8364 = sbr.rel (0) target = $region69
    $region68: #{convnet_forward.1} parent=1 // pred_region
      _
    $region69: #{convnet_forward.1} parent=1 // pred_fallthru
      _
    // Predicated region
    $region70: #{convnet_forward.1} parent=1 // pred_check
      _
    $region71: #{convnet_forward.1} parent=1 // pred_check_branch
      %8366 = sbr.rel (0) target = $region73
    $region72: #{convnet_forward.1} parent=1 // pred_region
      _
    $region73: #{convnet_forward.1} parent=1 // pred_fallthru
      _
    %8367 = vsyncpa [#allocation5], 1
    %8368 = vsyncpa [#allocation7], 1
    %8369 = vsyncpa [#allocation10], 1
    %8370 = vsyncpa [#allocation13], 1

</llo_original>
